<compile_context>
chip_gen: v7x
topology: tpu7x:2x2x1
jax: 0.10.0
libtpu: 0.0.40
codegen_flags: <defaults>
</compile_context>

<pallas_src>
import functools

import numpy as np
import jax
import jax.numpy as jnp
from jax import lax
from jax.experimental import pallas as pl
from jax.experimental.pallas import tpu as pltpu  # noqa: F401  (TPU backend)

FEAT_DIM = 512
VOTING_ALPHA = 1000.0
QP_ITERS = 400
QP_PROJ_ITERS = 15


# ----------------------------------------------------------------------------- glue ---
def gh(n):
    """Fully-connected (no self-loop) incidence matrices, as in the torch gh()."""
    A = np.ones((n, n)) - np.eye(n)
    edge_num = int(np.sum(A))
    G = np.zeros((n, edge_num), dtype=np.float32)
    H = np.zeros((n, edge_num), dtype=np.float32)
    e = 0
    for i in range(n):
        for j in range(n):
            if A[i, j] == 1:
                G[i, e] = 1.0
                H[j, e] = 1.0
                e += 1
    return G, H, edge_num


# ---------------------------------------------------------------------- fused kernel ---
def _gmnet_kernel(x1_ref, x2_ref, wt_ref, b_ref,
                  g1_ref, g1t_ref, h1t_ref,
                  g2w_ref, h2w_ref, h1til_ref,
                  sel1_ref, sel2_ref, sel1t_ref,
                  rexp_ref, cexp_ref,
                  out_ref, *,
                  n1, n2, k_val, alpha, square, p_cols, iters, proj_iters):
    f32 = jnp.float32
    NN = n1 * n2
    # A @ B^T form (contract last dims) -- avoids in-kernel transposes of operands.
    dn_bt = (((1,), (1,)), ((), ()))

    emb1 = x1_ref[...]                       # (n1, D)
    emb2 = x2_ref[...]                       # (n2, D)
    wt = wt_ref[...]                         # (D, D) = W^T (pre-transposed Linear weight)
    bias = b_ref[...]                        # (1, D)

    # ---------------- cross-graph embedding update --------------------------------
    mp0 = lax.dot_general(emb1, emb2, dn_bt, preferred_element_type=f32)     # (n1, n2)
    mp0_t = lax.dot_general(emb2, emb1, dn_bt, preferred_element_type=f32)   # (n2, n1)
    m1 = jnp.dot(mp0, emb2, preferred_element_type=f32)                      # (n1, D)
    m2 = jnp.dot(mp0_t, emb1, preferred_element_type=f32)                    # (n2, D)

    # lambda = ||emb|| / ||m_emb||   (rsqrt on EUP; tiny guard against zero rows)
    lam1 = (jnp.sqrt(jnp.sum(emb1 * emb1, axis=1, keepdims=True)) *
            lax.rsqrt(jnp.maximum(jnp.sum(m1 * m1, axis=1, keepdims=True), 1e-30)))
    lam2 = (jnp.sqrt(jnp.sum(emb2 * emb2, axis=1, keepdims=True)) *
            lax.rsqrt(jnp.maximum(jnp.sum(m2 * m2, axis=1, keepdims=True), 1e-30)))

    # Fused Linear for both graphs: one (n1+n2, D) x (D, D) matmul, then relu + l2-norm.
    u = jnp.concatenate([emb1 + lam1 * m1, emb2 + lam2 * m2], axis=0)        # (n1+n2, D)
    z = jnp.dot(u, wt, preferred_element_type=f32) + bias
    z = jnp.maximum(z, 0.0)
    z = z * lax.rsqrt(jnp.maximum(jnp.sum(z * z, axis=1, keepdims=True), 1e-24))
    z1 = z[:n1, :]                           # (n1, D)
    z2 = z[n1:, :]                           # (n2, D)

    # Mp = z1 z2^T  and  q = -vec(Mp^T) as a (1, NN) row (selector constants, no reshape)
    mp = lax.dot_general(z1, z2, dn_bt, preferred_element_type=f32)          # (n1, n2)
    sel1 = sel1_ref[...]                     # (n1, NN): sel1[i, a*n1+i'] = [i==i']
    sel2 = sel2_ref[...]                     # (n2, NN): sel2[a, a'*n1+i] = [a==a']
    mp_exp = jnp.dot(mp, sel2, preferred_element_type=f32)                   # (n1, NN)
    q = -jnp.sum(mp_exp * sel1, axis=0, keepdims=True)                       # (1, NN)

    # ---------------- structured affinity  M = k*I - KG diag(vec Me^T) KH^T --------
    # Kronecker-factorized: per row-block a,
    #   M_raw[(a,i),(c,j)] = sum_{b1} G1[i,b1] H1[j,b1] * sum_{b2} Me[b1,b2] G2[a,b2] H2[c,b2]
    # with Me folded into Mp:  Me = 0.5*(G1^T Mp G2 + H1^T Mp H2).
    g1 = g1_ref[...]                         # (n1, e1)
    g1t = g1t_ref[...]                       # (e1, n1)
    h1t = h1t_ref[...]                       # (e1, n1)
    h1til = h1til_ref[...]                   # (e1, NN):  h1til[b1, c*n1+j] = H1[j, b1]

    blocks = []
    for a in range(n2):                      # static unroll, n2 is small
        g2w_a = g2w_ref[:, a * NN:(a + 1) * NN]                              # (n2, NN)
        h2w_a = h2w_ref[:, a * NN:(a + 1) * NN]                              # (n2, NN)
        tg = jnp.dot(mp, g2w_a, preferred_element_type=f32)                  # (n1, NN)
        th = jnp.dot(mp, h2w_a, preferred_element_type=f32)                  # (n1, NN)
        kf = 0.5 * (jnp.dot(g1t, tg, preferred_element_type=f32) +
                    jnp.dot(h1t, th, preferred_element_type=f32))            # (e1, NN)
        blocks.append(jnp.dot(g1, kf * h1til, preferred_element_type=f32))   # (n1, NN)
    m_raw = jnp.concatenate(blocks, axis=0)                                  # (NN, NN)

    eye = (lax.broadcasted_iota(jnp.int32, (NN, NN), 0) ==
           lax.broadcasted_iota(jnp.int32, (NN, NN), 1)).astype(f32)
    M = k_val * eye - m_raw

    # ---------------- projected-gradient QP, entirely in VMEM ----------------------
    # TODO(synk): qpth.QPFunction (OptNet interior-point QP) has no clean Pallas
    # equivalent; approximated with projected gradient descent + alternating row/col
    # renormalization onto the original (doubly-)stochastic constraint polytope.
    rexp = rexp_ref[...]                     # (NN, NN): 1 iff same row of X=(m_rows,p_cols)
    cexp = cexp_ref[...]                     # (NN, NN): 1 iff same column
    row_l1 = jnp.sum(jnp.abs(M), axis=1, keepdims=True)                      # (NN, 1)
    step = 1.0 / (jnp.max(row_l1, axis=0, keepdims=True) + 1.0)              # (1, 1)
    x0 = jnp.full((1, NN), 1.0 / float(p_cols), dtype=f32)

    def proj_body(_, x):
        rs = jnp.dot(x, rexp, preferred_element_type=f32)                    # row sums exp.
        x = x / rs                                                           # row sums == 1
        cs = jnp.dot(x, cexp, preferred_element_type=f32)                    # col sums exp.
        if square:
            x = x / cs                                                       # col sums == 1
        else:
            x = x / jnp.maximum(cs, 1.0)                                     # col sums <= 1
        return x

    def outer_body(_, x):
        g = lax.dot_general(x, M, dn_bt, preferred_element_type=f32) + q     # (M x)^T + q
        x = jnp.maximum(x - step * g, 1e-9)
        return lax.fori_loop(0, proj_iters, proj_body, x)

    x = lax.fori_loop(0, iters, outer_body, x0)                              # (1, NN)

    # ---------------- clamp + Voting(alpha) softmax epilogue -----------------------
    # Un-vec x into S[a, i] = x[a*n1 + i]  (== x.reshape(n2, n1)) via selector matmuls.
    xb = jnp.broadcast_to(x, (n2, NN))
    S = jnp.dot(xb * sel2, sel1t_ref[...], preferred_element_type=f32)       # (n2, n1)

    def clamp_softmax(s):
        s = jnp.maximum(s, 0.0) - jnp.maximum(s - 1.0, 0.0)                  # clamp [0,1]
        zl = alpha * s
        zl = zl - jnp.max(zl, axis=-1, keepdims=True)
        ez = jnp.exp(zl)
        return ez / jnp.sum(ez, axis=-1, keepdims=True)

    if n1 > n2:
        out = jnp.transpose(clamp_softmax(S))            # voting over n1, then permute
    else:
        out = clamp_softmax(jnp.transpose(S))            # (n1, n2), voting over n2
    out_ref[...] = out


# --------------------------------------------------------------------- GMNet forward ---
def gmnet_forward(data1, data2, weight, bias, alpha=VOTING_ALPHA,
                  qp_iters=QP_ITERS, qp_proj_iters=QP_PROJ_ITERS):
    n1, _ = data1.shape
    n2, _ = data2.shape
    G1, H1, _ = gh(n1)
    G2, H2, en2 = gh(n2)
    NN = n1 * n2
    L = n2 * NN

    # ---- trace-time numpy constants (graph structure only) ------------------------
    g1t = np.ascontiguousarray(G1.T)                                   # (e1, n1)
    h1t = np.ascontiguousarray(H1.T)                                   # (e1, n1)
    # w2rep[b2, a*NN + c*n1 + j] = G2[a,b2] * H2[c,b2]   (independent of j)
    w2pair = np.einsum('ab,cb->acb', G2, H2).reshape(n2 * n2, en2)     # [(a,c), b2]
    w2rep = np.repeat(np.ascontiguousarray(w2pair.T), n1, axis=1)      # (e2, L)
    g2w = np.ascontiguousarray(G2 @ w2rep).astype(np.float32)          # (n2, L)
    h2w = np.ascontiguousarray(H2 @ w2rep).astype(np.float32)          # (n2, L)
    h1til = np.tile(H1.T, (1, n2)).astype(np.float32)                  # (e1, NN)

    sel1 = np.tile(np.eye(n1, dtype=np.float32), (1, n2))              # (n1, NN)
    sel2 = np.repeat(np.eye(n2, dtype=np.float32), n1, axis=1)         # (n2, NN)
    sel1t = np.ascontiguousarray(sel1.T)                               # (NN, n1)

    # QP projection structure (matches the original constraint sets per branch).
    if n1 > n2:
        p_cols = n1
    else:
        p_cols = n2
    square = (n1 == n2)
    ridx = np.arange(NN) // p_cols
    cidx = np.arange(NN) % p_cols
    rexp = (ridx[:, None] == ridx[None, :]).astype(np.float32)         # (NN, NN)
    cexp = (cidx[:, None] == cidx[None, :]).astype(np.float32)         # (NN, NN)

    k_val = float((n1 - 1) * (n2 - 1))
    wt = jnp.transpose(weight)        # Linear applies x @ W^T; transpose once, outside

    kernel = functools.partial(
        _gmnet_kernel, n1=n1, n2=n2, k_val=k_val, alpha=float(alpha),
        square=square, p_cols=p_cols, iters=qp_iters, proj_iters=qp_proj_iters)

    # Single launch, no grid: every operand is a whole-array VMEM block (no
    # double-buffering); total VMEM footprint is ~1.5 MB at n=8, far below any
    # v5e/v6e/v7x limit, and all intermediates (Mp, Me, M, QP state) never touch HBM.
    out = pl.pallas_call(
        kernel,
        out_shape=jax.ShapeDtypeStruct((n1, n2), jnp.float32),
    )(data1, data2, wt, bias,
      jnp.asarray(G1), jnp.asarray(g1t), jnp.asarray(h1t),
      jnp.asarray(g2w), jnp.asarray(h2w), jnp.asarray(h1til),
      jnp.asarray(sel1), jnp.asarray(sel2), jnp.asarray(sel1t),
      jnp.asarray(rexp), jnp.asarray(cexp))

    return out[None]                                                   # (1, n1, n2)


# --------------------------------------------------------------------------- driver ---
if __name__ == "__main__":
    # Deterministic parameters (as in __init__): cross_graph = eye(512) weight, zero bias.
    weight = jnp.eye(FEAT_DIM, dtype=jnp.float32)
    bias = jnp.zeros((1, FEAT_DIM), dtype=jnp.float32)

    key = jax.random.PRNGKey(0)
    k1, k2 = jax.random.split(key)
    n_nodes = 8  # small graph; feature dim fixed at 512 by the module's Linear(512, 512)
    data1 = jax.random.normal(k1, (n_nodes, FEAT_DIM), dtype=jnp.float32)
    data2 = jax.random.normal(k2, (n_nodes, FEAT_DIM), dtype=jnp.float32)

    s = gmnet_forward(data1, data2, weight, bias)
    s = jax.block_until_ready(s)
    assert s.shape == (1, n_nodes, n_nodes)
    assert bool(jnp.all(jnp.isfinite(s)))
    print("KERNEL_OK")
</pallas_src>

<mosaic_0001>
module attributes {stable_mosaic.version = 11 : i64} {
  func.func @_gmnet_kernel(%arg0: memref<8x512xf32, #tpu.memory_space<vmem>>, %arg1: memref<8x512xf32, #tpu.memory_space<vmem>>, %arg2: memref<512x512xf32, #tpu.memory_space<vmem>>, %arg3: memref<1x512xf32, #tpu.memory_space<vmem>>, %arg4: memref<8x56xf32, #tpu.memory_space<vmem>>, %arg5: memref<56x8xf32, #tpu.memory_space<vmem>>, %arg6: memref<56x8xf32, #tpu.memory_space<vmem>>, %arg7: memref<8x512xf32, #tpu.memory_space<vmem>>, %arg8: memref<8x512xf32, #tpu.memory_space<vmem>>, %arg9: memref<56x64xf32, #tpu.memory_space<vmem>>, %arg10: memref<8x64xf32, #tpu.memory_space<vmem>>, %arg11: memref<8x64xf32, #tpu.memory_space<vmem>>, %arg12: memref<64x8xf32, #tpu.memory_space<vmem>>, %arg13: memref<64x64xf32, #tpu.memory_space<vmem>>, %arg14: memref<64x64xf32, #tpu.memory_space<vmem>>, %arg15: memref<8x8xf32, #tpu.memory_space<vmem>>) attributes {dimension_semantics = [], scalar_prefetch = 0 : i64, scratch_operands = 0 : i64, tpu.core_type = #tpu.core_type<tc>} {
    %c0 = arith.constant 0 : index
    %c0_0 = arith.constant 0 : index
    %0 = vector.load %arg0[%c0, %c0_0] : memref<8x512xf32, #tpu.memory_space<vmem>>, vector<8x512xf32>
    %c0_1 = arith.constant 0 : index
    %c0_2 = arith.constant 0 : index
    %1 = vector.load %arg1[%c0_1, %c0_2] : memref<8x512xf32, #tpu.memory_space<vmem>>, vector<8x512xf32>
    %c0_3 = arith.constant 0 : index
    %c0_4 = arith.constant 0 : index
    %2 = vector.load %arg2[%c0_3, %c0_4] : memref<512x512xf32, #tpu.memory_space<vmem>>, vector<512x512xf32>
    %c0_5 = arith.constant 0 : index
    %c0_6 = arith.constant 0 : index
    %3 = vector.load %arg3[%c0_5, %c0_6] : memref<1x512xf32, #tpu.memory_space<vmem>>, vector<1x512xf32>
    %cst = arith.constant dense<0.000000e+00> : vector<8x8xf32>
    %4 = tpu.matmul %0, %1, %cst {dimension_numbers = #tpu.dot_dimension_numbers<[1], [1], [0], [0], [0, 0, 1, 0], [], []>} : vector<8x512xf32>, vector<8x512xf32>, vector<8x8xf32> -> vector<8x8xf32>
    %cst_7 = arith.constant dense<0.000000e+00> : vector<8x8xf32>
    %5 = tpu.matmul %1, %0, %cst_7 {dimension_numbers = #tpu.dot_dimension_numbers<[1], [1], [0], [0], [0, 0, 1, 0], [], []>} : vector<8x512xf32>, vector<8x512xf32>, vector<8x8xf32> -> vector<8x8xf32>
    %cst_8 = arith.constant dense<0.000000e+00> : vector<8x512xf32>
    %6 = tpu.matmul %4, %1, %cst_8 {dimension_numbers = #tpu.dot_dimension_numbers<[1], [0], [0], [1], [0, 0, 1, 1], [], []>} : vector<8x8xf32>, vector<8x512xf32>, vector<8x512xf32> -> vector<8x512xf32>
    %cst_9 = arith.constant dense<0.000000e+00> : vector<8x512xf32>
    %7 = tpu.matmul %5, %0, %cst_9 {dimension_numbers = #tpu.dot_dimension_numbers<[1], [0], [0], [1], [0, 0, 1, 1], [], []>} : vector<8x8xf32>, vector<8x512xf32>, vector<8x512xf32> -> vector<8x512xf32>
    %8 = arith.mulf %0, %0 : vector<8x512xf32>
    %cst_10 = arith.constant dense<0.000000e+00> : vector<8xf32>
    %9 = vector.multi_reduction <add>, %8, %cst_10 [1] : vector<8x512xf32> to vector<8xf32>
    %10 = vector.shape_cast %9 : vector<8xf32> to vector<8x1xf32>
    %11 = math.sqrt %10 : vector<8x1xf32>
    %12 = arith.mulf %6, %6 : vector<8x512xf32>
    %cst_11 = arith.constant dense<0.000000e+00> : vector<8xf32>
    %13 = vector.multi_reduction <add>, %12, %cst_11 [1] : vector<8x512xf32> to vector<8xf32>
    %14 = vector.shape_cast %13 : vector<8xf32> to vector<8x1xf32>
    %cst_12 = arith.constant 1.000000e-30 : f32
    %15 = vector.broadcast %cst_12 : f32 to vector<8x1xf32>
    %16 = arith.maximumf %14, %15 : vector<8x1xf32>
    %17 = math.rsqrt %16 : vector<8x1xf32>
    %18 = arith.mulf %11, %17 : vector<8x1xf32>
    %19 = arith.mulf %1, %1 : vector<8x512xf32>
    %cst_13 = arith.constant dense<0.000000e+00> : vector<8xf32>
    %20 = vector.multi_reduction <add>, %19, %cst_13 [1] : vector<8x512xf32> to vector<8xf32>
    %21 = vector.shape_cast %20 : vector<8xf32> to vector<8x1xf32>
    %22 = math.sqrt %21 : vector<8x1xf32>
    %23 = arith.mulf %7, %7 : vector<8x512xf32>
    %cst_14 = arith.constant dense<0.000000e+00> : vector<8xf32>
    %24 = vector.multi_reduction <add>, %23, %cst_14 [1] : vector<8x512xf32> to vector<8xf32>
    %25 = vector.shape_cast %24 : vector<8xf32> to vector<8x1xf32>
    %cst_15 = arith.constant 1.000000e-30 : f32
    %26 = vector.broadcast %cst_15 : f32 to vector<8x1xf32>
    %27 = arith.maximumf %25, %26 : vector<8x1xf32>
    %28 = math.rsqrt %27 : vector<8x1xf32>
    %29 = arith.mulf %22, %28 : vector<8x1xf32>
    %30 = vector.broadcast %18 : vector<8x1xf32> to vector<8x512xf32>
    %31 = arith.mulf %30, %6 : vector<8x512xf32>
    %32 = arith.addf %0, %31 : vector<8x512xf32>
    %33 = vector.broadcast %29 : vector<8x1xf32> to vector<8x512xf32>
    %34 = arith.mulf %33, %7 : vector<8x512xf32>
    %35 = arith.addf %1, %34 : vector<8x512xf32>
    %36 = tpu.concatenate %32, %35 in 0 : vector<8x512xf32>, vector<8x512xf32> -> vector<16x512xf32>
    %cst_16 = arith.constant dense<0.000000e+00> : vector<16x512xf32>
    %37 = tpu.matmul %36, %2, %cst_16 {dimension_numbers = #tpu.dot_dimension_numbers<[1], [0], [0], [1], [0, 0, 1, 1], [], []>} : vector<16x512xf32>, vector<512x512xf32>, vector<16x512xf32> -> vector<16x512xf32>
    %38 = vector.broadcast %3 : vector<1x512xf32> to vector<16x512xf32>
    %39 = arith.addf %37, %38 : vector<16x512xf32>
    %cst_17 = arith.constant 0.000000e+00 : f32
    %40 = vector.broadcast %cst_17 : f32 to vector<16x512xf32>
    %41 = arith.maximumf %39, %40 : vector<16x512xf32>
    %42 = arith.mulf %41, %41 : vector<16x512xf32>
    %cst_18 = arith.constant dense<0.000000e+00> : vector<16xf32>
    %43 = vector.multi_reduction <add>, %42, %cst_18 [1] : vector<16x512xf32> to vector<16xf32>
    %44 = vector.shape_cast %43 : vector<16xf32> to vector<16x1xf32>
    %cst_19 = arith.constant 1.000000e-24 : f32
    %45 = vector.broadcast %cst_19 : f32 to vector<16x1xf32>
    %46 = arith.maximumf %44, %45 : vector<16x1xf32>
    %47 = math.rsqrt %46 : vector<16x1xf32>
    %48 = vector.broadcast %47 : vector<16x1xf32> to vector<16x512xf32>
    %49 = arith.mulf %41, %48 : vector<16x512xf32>
    %50 = vector.extract_strided_slice %49 {offsets = [0, 0], sizes = [8, 512], strides = [1, 1]} : vector<16x512xf32> to vector<8x512xf32>
    %51 = vector.extract_strided_slice %49 {offsets = [8, 0], sizes = [8, 512], strides = [1, 1]} : vector<16x512xf32> to vector<8x512xf32>
    %cst_20 = arith.constant dense<0.000000e+00> : vector<8x8xf32>
    %52 = tpu.matmul %50, %51, %cst_20 {dimension_numbers = #tpu.dot_dimension_numbers<[1], [1], [0], [0], [0, 0, 1, 0], [], []>} : vector<8x512xf32>, vector<8x512xf32>, vector<8x8xf32> -> vector<8x8xf32>
    %c0_21 = arith.constant 0 : index
    %c0_22 = arith.constant 0 : index
    %53 = vector.load %arg10[%c0_21, %c0_22] : memref<8x64xf32, #tpu.memory_space<vmem>>, vector<8x64xf32>
    %c0_23 = arith.constant 0 : index
    %c0_24 = arith.constant 0 : index
    %54 = vector.load %arg11[%c0_23, %c0_24] : memref<8x64xf32, #tpu.memory_space<vmem>>, vector<8x64xf32>
    %cst_25 = arith.constant dense<0.000000e+00> : vector<8x64xf32>
    %55 = tpu.matmul %52, %54, %cst_25 {dimension_numbers = #tpu.dot_dimension_numbers<[1], [0], [0], [1], [0, 0, 1, 1], [], []>} : vector<8x8xf32>, vector<8x64xf32>, vector<8x64xf32> -> vector<8x64xf32>
    %56 = arith.mulf %55, %53 : vector<8x64xf32>
    %cst_26 = arith.constant dense<0.000000e+00> : vector<64xf32>
    %57 = vector.multi_reduction <add>, %56, %cst_26 [0] : vector<8x64xf32> to vector<64xf32>
    %58 = vector.shape_cast %57 : vector<64xf32> to vector<1x64xf32>
    %cst_27 = arith.constant 0.000000e+00 : f32
    %59 = vector.broadcast %cst_27 : f32 to vector<1x64xf32>
    %60 = arith.subf %59, %58 : vector<1x64xf32>
    %c0_28 = arith.constant 0 : index
    %c0_29 = arith.constant 0 : index
    %61 = vector.load %arg4[%c0_28, %c0_29] : memref<8x56xf32, #tpu.memory_space<vmem>>, vector<8x56xf32>
    %c0_30 = arith.constant 0 : index
    %c0_31 = arith.constant 0 : index
    %62 = vector.load %arg5[%c0_30, %c0_31] : memref<56x8xf32, #tpu.memory_space<vmem>>, vector<56x8xf32>
    %c0_32 = arith.constant 0 : index
    %c0_33 = arith.constant 0 : index
    %63 = vector.load %arg6[%c0_32, %c0_33] : memref<56x8xf32, #tpu.memory_space<vmem>>, vector<56x8xf32>
    %c0_34 = arith.constant 0 : index
    %c0_35 = arith.constant 0 : index
    %64 = vector.load %arg9[%c0_34, %c0_35] : memref<56x64xf32, #tpu.memory_space<vmem>>, vector<56x64xf32>
    %c0_36 = arith.constant 0 : index
    %c0_37 = arith.constant 0 : index
    %65 = vector.load %arg7[%c0_36, %c0_37] : memref<8x512xf32, #tpu.memory_space<vmem>>, vector<8x64xf32>
    %c0_38 = arith.constant 0 : index
    %c0_39 = arith.constant 0 : index
    %66 = vector.load %arg8[%c0_38, %c0_39] : memref<8x512xf32, #tpu.memory_space<vmem>>, vector<8x64xf32>
    %cst_40 = arith.constant dense<0.000000e+00> : vector<8x64xf32>
    %67 = tpu.matmul %52, %65, %cst_40 {dimension_numbers = #tpu.dot_dimension_numbers<[1], [0], [0], [1], [0, 0, 1, 1], [], []>} : vector<8x8xf32>, vector<8x64xf32>, vector<8x64xf32> -> vector<8x64xf32>
    %cst_41 = arith.constant dense<0.000000e+00> : vector<8x64xf32>
    %68 = tpu.matmul %52, %66, %cst_41 {dimension_numbers = #tpu.dot_dimension_numbers<[1], [0], [0], [1], [0, 0, 1, 1], [], []>} : vector<8x8xf32>, vector<8x64xf32>, vector<8x64xf32> -> vector<8x64xf32>
    %cst_42 = arith.constant dense<0.000000e+00> : vector<56x64xf32>
    %69 = tpu.matmul %62, %67, %cst_42 {dimension_numbers = #tpu.dot_dimension_numbers<[1], [0], [0], [1], [0, 0, 1, 1], [], []>} : vector<56x8xf32>, vector<8x64xf32>, vector<56x64xf32> -> vector<56x64xf32>
    %cst_43 = arith.constant dense<0.000000e+00> : vector<56x64xf32>
    %70 = tpu.matmul %63, %68, %cst_43 {dimension_numbers = #tpu.dot_dimension_numbers<[1], [0], [0], [1], [0, 0, 1, 1], [], []>} : vector<56x8xf32>, vector<8x64xf32>, vector<56x64xf32> -> vector<56x64xf32>
    %71 = arith.addf %69, %70 : vector<56x64xf32>
    %cst_44 = arith.constant 5.000000e-01 : f32
    %72 = vector.broadcast %cst_44 : f32 to vector<56x64xf32>
    %73 = arith.mulf %72, %71 : vector<56x64xf32>
    %74 = arith.mulf %73, %64 : vector<56x64xf32>
    %cst_45 = arith.constant dense<0.000000e+00> : vector<8x64xf32>
    %75 = tpu.matmul %61, %74, %cst_45 {dimension_numbers = #tpu.dot_dimension_numbers<[1], [0], [0], [1], [0, 0, 1, 1], [], []>} : vector<8x56xf32>, vector<56x64xf32>, vector<8x64xf32> -> vector<8x64xf32>
    %c0_46 = arith.constant 0 : index
    %c64 = arith.constant 64 : index
    %76 = vector.load %arg7[%c0_46, %c64] : memref<8x512xf32, #tpu.memory_space<vmem>>, vector<8x64xf32>
    %c0_47 = arith.constant 0 : index
    %c64_48 = arith.constant 64 : index
    %77 = vector.load %arg8[%c0_47, %c64_48] : memref<8x512xf32, #tpu.memory_space<vmem>>, vector<8x64xf32>
    %cst_49 = arith.constant dense<0.000000e+00> : vector<8x64xf32>
    %78 = tpu.matmul %52, %76, %cst_49 {dimension_numbers = #tpu.dot_dimension_numbers<[1], [0], [0], [1], [0, 0, 1, 1], [], []>} : vector<8x8xf32>, vector<8x64xf32>, vector<8x64xf32> -> vector<8x64xf32>
    %cst_50 = arith.constant dense<0.000000e+00> : vector<8x64xf32>
    %79 = tpu.matmul %52, %77, %cst_50 {dimension_numbers = #tpu.dot_dimension_numbers<[1], [0], [0], [1], [0, 0, 1, 1], [], []>} : vector<8x8xf32>, vector<8x64xf32>, vector<8x64xf32> -> vector<8x64xf32>
    %cst_51 = arith.constant dense<0.000000e+00> : vector<56x64xf32>
    %80 = tpu.matmul %62, %78, %cst_51 {dimension_numbers = #tpu.dot_dimension_numbers<[1], [0], [0], [1], [0, 0, 1, 1], [], []>} : vector<56x8xf32>, vector<8x64xf32>, vector<56x64xf32> -> vector<56x64xf32>
    %cst_52 = arith.constant dense<0.000000e+00> : vector<56x64xf32>
    %81 = tpu.matmul %63, %79, %cst_52 {dimension_numbers = #tpu.dot_dimension_numbers<[1], [0], [0], [1], [0, 0, 1, 1], [], []>} : vector<56x8xf32>, vector<8x64xf32>, vector<56x64xf32> -> vector<56x64xf32>
    %82 = arith.addf %80, %81 : vector<56x64xf32>
    %cst_53 = arith.constant 5.000000e-01 : f32
    %83 = vector.broadcast %cst_53 : f32 to vector<56x64xf32>
    %84 = arith.mulf %83, %82 : vector<56x64xf32>
    %85 = arith.mulf %84, %64 : vector<56x64xf32>
    %cst_54 = arith.constant dense<0.000000e+00> : vector<8x64xf32>
    %86 = tpu.matmul %61, %85, %cst_54 {dimension_numbers = #tpu.dot_dimension_numbers<[1], [0], [0], [1], [0, 0, 1, 1], [], []>} : vector<8x56xf32>, vector<56x64xf32>, vector<8x64xf32> -> vector<8x64xf32>
    %c0_55 = arith.constant 0 : index
    %c128 = arith.constant 128 : index
    %87 = vector.load %arg7[%c0_55, %c128] : memref<8x512xf32, #tpu.memory_space<vmem>>, vector<8x64xf32>
    %c0_56 = arith.constant 0 : index
    %c128_57 = arith.constant 128 : index
    %88 = vector.load %arg8[%c0_56, %c128_57] : memref<8x512xf32, #tpu.memory_space<vmem>>, vector<8x64xf32>
    %cst_58 = arith.constant dense<0.000000e+00> : vector<8x64xf32>
    %89 = tpu.matmul %52, %87, %cst_58 {dimension_numbers = #tpu.dot_dimension_numbers<[1], [0], [0], [1], [0, 0, 1, 1], [], []>} : vector<8x8xf32>, vector<8x64xf32>, vector<8x64xf32> -> vector<8x64xf32>
    %cst_59 = arith.constant dense<0.000000e+00> : vector<8x64xf32>
    %90 = tpu.matmul %52, %88, %cst_59 {dimension_numbers = #tpu.dot_dimension_numbers<[1], [0], [0], [1], [0, 0, 1, 1], [], []>} : vector<8x8xf32>, vector<8x64xf32>, vector<8x64xf32> -> vector<8x64xf32>
    %cst_60 = arith.constant dense<0.000000e+00> : vector<56x64xf32>
    %91 = tpu.matmul %62, %89, %cst_60 {dimension_numbers = #tpu.dot_dimension_numbers<[1], [0], [0], [1], [0, 0, 1, 1], [], []>} : vector<56x8xf32>, vector<8x64xf32>, vector<56x64xf32> -> vector<56x64xf32>
    %cst_61 = arith.constant dense<0.000000e+00> : vector<56x64xf32>
    %92 = tpu.matmul %63, %90, %cst_61 {dimension_numbers = #tpu.dot_dimension_numbers<[1], [0], [0], [1], [0, 0, 1, 1], [], []>} : vector<56x8xf32>, vector<8x64xf32>, vector<56x64xf32> -> vector<56x64xf32>
    %93 = arith.addf %91, %92 : vector<56x64xf32>
    %cst_62 = arith.constant 5.000000e-01 : f32
    %94 = vector.broadcast %cst_62 : f32 to vector<56x64xf32>
    %95 = arith.mulf %94, %93 : vector<56x64xf32>
    %96 = arith.mulf %95, %64 : vector<56x64xf32>
    %cst_63 = arith.constant dense<0.000000e+00> : vector<8x64xf32>
    %97 = tpu.matmul %61, %96, %cst_63 {dimension_numbers = #tpu.dot_dimension_numbers<[1], [0], [0], [1], [0, 0, 1, 1], [], []>} : vector<8x56xf32>, vector<56x64xf32>, vector<8x64xf32> -> vector<8x64xf32>
    %c0_64 = arith.constant 0 : index
    %c192 = arith.constant 192 : index
    %98 = vector.load %arg7[%c0_64, %c192] : memref<8x512xf32, #tpu.memory_space<vmem>>, vector<8x64xf32>
    %c0_65 = arith.constant 0 : index
    %c192_66 = arith.constant 192 : index
    %99 = vector.load %arg8[%c0_65, %c192_66] : memref<8x512xf32, #tpu.memory_space<vmem>>, vector<8x64xf32>
    %cst_67 = arith.constant dense<0.000000e+00> : vector<8x64xf32>
    %100 = tpu.matmul %52, %98, %cst_67 {dimension_numbers = #tpu.dot_dimension_numbers<[1], [0], [0], [1], [0, 0, 1, 1], [], []>} : vector<8x8xf32>, vector<8x64xf32>, vector<8x64xf32> -> vector<8x64xf32>
    %cst_68 = arith.constant dense<0.000000e+00> : vector<8x64xf32>
    %101 = tpu.matmul %52, %99, %cst_68 {dimension_numbers = #tpu.dot_dimension_numbers<[1], [0], [0], [1], [0, 0, 1, 1], [], []>} : vector<8x8xf32>, vector<8x64xf32>, vector<8x64xf32> -> vector<8x64xf32>
    %cst_69 = arith.constant dense<0.000000e+00> : vector<56x64xf32>
    %102 = tpu.matmul %62, %100, %cst_69 {dimension_numbers = #tpu.dot_dimension_numbers<[1], [0], [0], [1], [0, 0, 1, 1], [], []>} : vector<56x8xf32>, vector<8x64xf32>, vector<56x64xf32> -> vector<56x64xf32>
    %cst_70 = arith.constant dense<0.000000e+00> : vector<56x64xf32>
    %103 = tpu.matmul %63, %101, %cst_70 {dimension_numbers = #tpu.dot_dimension_numbers<[1], [0], [0], [1], [0, 0, 1, 1], [], []>} : vector<56x8xf32>, vector<8x64xf32>, vector<56x64xf32> -> vector<56x64xf32>
    %104 = arith.addf %102, %103 : vector<56x64xf32>
    %cst_71 = arith.constant 5.000000e-01 : f32
    %105 = vector.broadcast %cst_71 : f32 to vector<56x64xf32>
    %106 = arith.mulf %105, %104 : vector<56x64xf32>
    %107 = arith.mulf %106, %64 : vector<56x64xf32>
    %cst_72 = arith.constant dense<0.000000e+00> : vector<8x64xf32>
    %108 = tpu.matmul %61, %107, %cst_72 {dimension_numbers = #tpu.dot_dimension_numbers<[1], [0], [0], [1], [0, 0, 1, 1], [], []>} : vector<8x56xf32>, vector<56x64xf32>, vector<8x64xf32> -> vector<8x64xf32>
    %c0_73 = arith.constant 0 : index
    %c256 = arith.constant 256 : index
    %109 = vector.load %arg7[%c0_73, %c256] : memref<8x512xf32, #tpu.memory_space<vmem>>, vector<8x64xf32>
    %c0_74 = arith.constant 0 : index
    %c256_75 = arith.constant 256 : index
    %110 = vector.load %arg8[%c0_74, %c256_75] : memref<8x512xf32, #tpu.memory_space<vmem>>, vector<8x64xf32>
    %cst_76 = arith.constant dense<0.000000e+00> : vector<8x64xf32>
    %111 = tpu.matmul %52, %109, %cst_76 {dimension_numbers = #tpu.dot_dimension_numbers<[1], [0], [0], [1], [0, 0, 1, 1], [], []>} : vector<8x8xf32>, vector<8x64xf32>, vector<8x64xf32> -> vector<8x64xf32>
    %cst_77 = arith.constant dense<0.000000e+00> : vector<8x64xf32>
    %112 = tpu.matmul %52, %110, %cst_77 {dimension_numbers = #tpu.dot_dimension_numbers<[1], [0], [0], [1], [0, 0, 1, 1], [], []>} : vector<8x8xf32>, vector<8x64xf32>, vector<8x64xf32> -> vector<8x64xf32>
    %cst_78 = arith.constant dense<0.000000e+00> : vector<56x64xf32>
    %113 = tpu.matmul %62, %111, %cst_78 {dimension_numbers = #tpu.dot_dimension_numbers<[1], [0], [0], [1], [0, 0, 1, 1], [], []>} : vector<56x8xf32>, vector<8x64xf32>, vector<56x64xf32> -> vector<56x64xf32>
    %cst_79 = arith.constant dense<0.000000e+00> : vector<56x64xf32>
    %114 = tpu.matmul %63, %112, %cst_79 {dimension_numbers = #tpu.dot_dimension_numbers<[1], [0], [0], [1], [0, 0, 1, 1], [], []>} : vector<56x8xf32>, vector<8x64xf32>, vector<56x64xf32> -> vector<56x64xf32>
    %115 = arith.addf %113, %114 : vector<56x64xf32>
    %cst_80 = arith.constant 5.000000e-01 : f32
    %116 = vector.broadcast %cst_80 : f32 to vector<56x64xf32>
    %117 = arith.mulf %116, %115 : vector<56x64xf32>
    %118 = arith.mulf %117, %64 : vector<56x64xf32>
    %cst_81 = arith.constant dense<0.000000e+00> : vector<8x64xf32>
    %119 = tpu.matmul %61, %118, %cst_81 {dimension_numbers = #tpu.dot_dimension_numbers<[1], [0], [0], [1], [0, 0, 1, 1], [], []>} : vector<8x56xf32>, vector<56x64xf32>, vector<8x64xf32> -> vector<8x64xf32>
    %c0_82 = arith.constant 0 : index
    %c320 = arith.constant 320 : index
    %120 = vector.load %arg7[%c0_82, %c320] : memref<8x512xf32, #tpu.memory_space<vmem>>, vector<8x64xf32>
    %c0_83 = arith.constant 0 : index
    %c320_84 = arith.constant 320 : index
    %121 = vector.load %arg8[%c0_83, %c320_84] : memref<8x512xf32, #tpu.memory_space<vmem>>, vector<8x64xf32>
    %cst_85 = arith.constant dense<0.000000e+00> : vector<8x64xf32>
    %122 = tpu.matmul %52, %120, %cst_85 {dimension_numbers = #tpu.dot_dimension_numbers<[1], [0], [0], [1], [0, 0, 1, 1], [], []>} : vector<8x8xf32>, vector<8x64xf32>, vector<8x64xf32> -> vector<8x64xf32>
    %cst_86 = arith.constant dense<0.000000e+00> : vector<8x64xf32>
    %123 = tpu.matmul %52, %121, %cst_86 {dimension_numbers = #tpu.dot_dimension_numbers<[1], [0], [0], [1], [0, 0, 1, 1], [], []>} : vector<8x8xf32>, vector<8x64xf32>, vector<8x64xf32> -> vector<8x64xf32>
    %cst_87 = arith.constant dense<0.000000e+00> : vector<56x64xf32>
    %124 = tpu.matmul %62, %122, %cst_87 {dimension_numbers = #tpu.dot_dimension_numbers<[1], [0], [0], [1], [0, 0, 1, 1], [], []>} : vector<56x8xf32>, vector<8x64xf32>, vector<56x64xf32> -> vector<56x64xf32>
    %cst_88 = arith.constant dense<0.000000e+00> : vector<56x64xf32>
    %125 = tpu.matmul %63, %123, %cst_88 {dimension_numbers = #tpu.dot_dimension_numbers<[1], [0], [0], [1], [0, 0, 1, 1], [], []>} : vector<56x8xf32>, vector<8x64xf32>, vector<56x64xf32> -> vector<56x64xf32>
    %126 = arith.addf %124, %125 : vector<56x64xf32>
    %cst_89 = arith.constant 5.000000e-01 : f32
    %127 = vector.broadcast %cst_89 : f32 to vector<56x64xf32>
    %128 = arith.mulf %127, %126 : vector<56x64xf32>
    %129 = arith.mulf %128, %64 : vector<56x64xf32>
    %cst_90 = arith.constant dense<0.000000e+00> : vector<8x64xf32>
    %130 = tpu.matmul %61, %129, %cst_90 {dimension_numbers = #tpu.dot_dimension_numbers<[1], [0], [0], [1], [0, 0, 1, 1], [], []>} : vector<8x56xf32>, vector<56x64xf32>, vector<8x64xf32> -> vector<8x64xf32>
    %c0_91 = arith.constant 0 : index
    %c384 = arith.constant 384 : index
    %131 = vector.load %arg7[%c0_91, %c384] : memref<8x512xf32, #tpu.memory_space<vmem>>, vector<8x64xf32>
    %c0_92 = arith.constant 0 : index
    %c384_93 = arith.constant 384 : index
    %132 = vector.load %arg8[%c0_92, %c384_93] : memref<8x512xf32, #tpu.memory_space<vmem>>, vector<8x64xf32>
    %cst_94 = arith.constant dense<0.000000e+00> : vector<8x64xf32>
    %133 = tpu.matmul %52, %131, %cst_94 {dimension_numbers = #tpu.dot_dimension_numbers<[1], [0], [0], [1], [0, 0, 1, 1], [], []>} : vector<8x8xf32>, vector<8x64xf32>, vector<8x64xf32> -> vector<8x64xf32>
    %cst_95 = arith.constant dense<0.000000e+00> : vector<8x64xf32>
    %134 = tpu.matmul %52, %132, %cst_95 {dimension_numbers = #tpu.dot_dimension_numbers<[1], [0], [0], [1], [0, 0, 1, 1], [], []>} : vector<8x8xf32>, vector<8x64xf32>, vector<8x64xf32> -> vector<8x64xf32>
    %cst_96 = arith.constant dense<0.000000e+00> : vector<56x64xf32>
    %135 = tpu.matmul %62, %133, %cst_96 {dimension_numbers = #tpu.dot_dimension_numbers<[1], [0], [0], [1], [0, 0, 1, 1], [], []>} : vector<56x8xf32>, vector<8x64xf32>, vector<56x64xf32> -> vector<56x64xf32>
    %cst_97 = arith.constant dense<0.000000e+00> : vector<56x64xf32>
    %136 = tpu.matmul %63, %134, %cst_97 {dimension_numbers = #tpu.dot_dimension_numbers<[1], [0], [0], [1], [0, 0, 1, 1], [], []>} : vector<56x8xf32>, vector<8x64xf32>, vector<56x64xf32> -> vector<56x64xf32>
    %137 = arith.addf %135, %136 : vector<56x64xf32>
    %cst_98 = arith.constant 5.000000e-01 : f32
    %138 = vector.broadcast %cst_98 : f32 to vector<56x64xf32>
    %139 = arith.mulf %138, %137 : vector<56x64xf32>
    %140 = arith.mulf %139, %64 : vector<56x64xf32>
    %cst_99 = arith.constant dense<0.000000e+00> : vector<8x64xf32>
    %141 = tpu.matmul %61, %140, %cst_99 {dimension_numbers = #tpu.dot_dimension_numbers<[1], [0], [0], [1], [0, 0, 1, 1], [], []>} : vector<8x56xf32>, vector<56x64xf32>, vector<8x64xf32> -> vector<8x64xf32>
    %c0_100 = arith.constant 0 : index
    %c448 = arith.constant 448 : index
    %142 = vector.load %arg7[%c0_100, %c448] : memref<8x512xf32, #tpu.memory_space<vmem>>, vector<8x64xf32>
    %c0_101 = arith.constant 0 : index
    %c448_102 = arith.constant 448 : index
    %143 = vector.load %arg8[%c0_101, %c448_102] : memref<8x512xf32, #tpu.memory_space<vmem>>, vector<8x64xf32>
    %cst_103 = arith.constant dense<0.000000e+00> : vector<8x64xf32>
    %144 = tpu.matmul %52, %142, %cst_103 {dimension_numbers = #tpu.dot_dimension_numbers<[1], [0], [0], [1], [0, 0, 1, 1], [], []>} : vector<8x8xf32>, vector<8x64xf32>, vector<8x64xf32> -> vector<8x64xf32>
    %cst_104 = arith.constant dense<0.000000e+00> : vector<8x64xf32>
    %145 = tpu.matmul %52, %143, %cst_104 {dimension_numbers = #tpu.dot_dimension_numbers<[1], [0], [0], [1], [0, 0, 1, 1], [], []>} : vector<8x8xf32>, vector<8x64xf32>, vector<8x64xf32> -> vector<8x64xf32>
    %cst_105 = arith.constant dense<0.000000e+00> : vector<56x64xf32>
    %146 = tpu.matmul %62, %144, %cst_105 {dimension_numbers = #tpu.dot_dimension_numbers<[1], [0], [0], [1], [0, 0, 1, 1], [], []>} : vector<56x8xf32>, vector<8x64xf32>, vector<56x64xf32> -> vector<56x64xf32>
    %cst_106 = arith.constant dense<0.000000e+00> : vector<56x64xf32>
    %147 = tpu.matmul %63, %145, %cst_106 {dimension_numbers = #tpu.dot_dimension_numbers<[1], [0], [0], [1], [0, 0, 1, 1], [], []>} : vector<56x8xf32>, vector<8x64xf32>, vector<56x64xf32> -> vector<56x64xf32>
    %148 = arith.addf %146, %147 : vector<56x64xf32>
    %cst_107 = arith.constant 5.000000e-01 : f32
    %149 = vector.broadcast %cst_107 : f32 to vector<56x64xf32>
    %150 = arith.mulf %149, %148 : vector<56x64xf32>
    %151 = arith.mulf %150, %64 : vector<56x64xf32>
    %cst_108 = arith.constant dense<0.000000e+00> : vector<8x64xf32>
    %152 = tpu.matmul %61, %151, %cst_108 {dimension_numbers = #tpu.dot_dimension_numbers<[1], [0], [0], [1], [0, 0, 1, 1], [], []>} : vector<8x56xf32>, vector<56x64xf32>, vector<8x64xf32> -> vector<8x64xf32>
    %153 = tpu.concatenate %75, %86, %97, %108, %119, %130, %141, %152 in 0 : vector<8x64xf32>, vector<8x64xf32>, vector<8x64xf32>, vector<8x64xf32>, vector<8x64xf32>, vector<8x64xf32>, vector<8x64xf32>, vector<8x64xf32> -> vector<64x64xf32>
    %154 = tpu.iota {dimensions = array<i32: 0>} : vector<64x64xi32>
    %155 = tpu.iota {dimensions = array<i32: 1>} : vector<64x64xi32>
    %156 = arith.cmpi eq, %154, %155 : vector<64x64xi32>
    %157 = arith.extui %156 : vector<64x64xi1> to vector<64x64xi32>
    %158 = arith.sitofp %157 : vector<64x64xi32> to vector<64x64xf32>
    %cst_109 = arith.constant 4.900000e+01 : f32
    %159 = vector.broadcast %cst_109 : f32 to vector<64x64xf32>
    %160 = arith.mulf %159, %158 : vector<64x64xf32>
    %161 = arith.subf %160, %153 : vector<64x64xf32>
    %c0_110 = arith.constant 0 : index
    %c0_111 = arith.constant 0 : index
    %162 = vector.load %arg13[%c0_110, %c0_111] : memref<64x64xf32, #tpu.memory_space<vmem>>, vector<64x64xf32>
    %c0_112 = arith.constant 0 : index
    %c0_113 = arith.constant 0 : index
    %163 = vector.load %arg14[%c0_112, %c0_113] : memref<64x64xf32, #tpu.memory_space<vmem>>, vector<64x64xf32>
    %164 = math.absf %161 : vector<64x64xf32>
    %cst_114 = arith.constant dense<0.000000e+00> : vector<64xf32>
    %165 = vector.multi_reduction <add>, %164, %cst_114 [1] : vector<64x64xf32> to vector<64xf32>
    %166 = vector.shape_cast %165 : vector<64xf32> to vector<64x1xf32>
    %cst_115 = arith.constant dense<0xFF800000> : vector<1xf32>
    %167 = vector.multi_reduction <maximumf>, %166, %cst_115 [0] : vector<64x1xf32> to vector<1xf32>
    %168 = vector.shape_cast %167 : vector<1xf32> to vector<1x1xf32>
    %cst_116 = arith.constant 1.000000e+00 : f32
    %169 = vector.broadcast %cst_116 : f32 to vector<1x1xf32>
    %170 = arith.addf %168, %169 : vector<1x1xf32>
    %cst_117 = arith.constant 1.000000e+00 : f32
    %171 = vector.broadcast %cst_117 : f32 to vector<1x1xf32>
    %172 = arith.divf %171, %170 : vector<1x1xf32>
    %cst_118 = arith.constant 1.250000e-01 : f32
    %173 = vector.broadcast %cst_118 : f32 to vector<1x64xf32>
    %c0_i32 = arith.constant 0 : i32
    %c400_i32 = arith.constant 400 : i32
    %174 = arith.addi %c0_i32, %c400_i32 : i32
    %c1_i32 = arith.constant 1 : i32
    %175 = scf.for %arg16 = %c0_i32 to %174 step %c1_i32 iter_args(%arg17 = %173) -> (vector<1x64xf32>)  : i32 {
      %cst_130 = arith.constant dense<0.000000e+00> : vector<1x64xf32>
      %201 = tpu.matmul %arg17, %161, %cst_130 {dimension_numbers = #tpu.dot_dimension_numbers<[1], [1], [0], [0], [0, 0, 1, 0], [], []>} : vector<1x64xf32>, vector<64x64xf32>, vector<1x64xf32> -> vector<1x64xf32>
      %202 = arith.addf %201, %60 : vector<1x64xf32>
      %203 = vector.broadcast %172 : vector<1x1xf32> to vector<1x64xf32>
      %204 = arith.mulf %203, %202 : vector<1x64xf32>
      %205 = arith.subf %arg17, %204 : vector<1x64xf32>
      %cst_131 = arith.constant 9.99999971E-10 : f32
      %206 = vector.broadcast %cst_131 : f32 to vector<1x64xf32>
      %207 = arith.maximumf %205, %206 : vector<1x64xf32>
      %c0_i32_132 = arith.constant 0 : i32
      %c15_i32 = arith.constant 15 : i32
      %208 = arith.addi %c0_i32_132, %c15_i32 : i32
      %c1_i32_133 = arith.constant 1 : i32
      %209 = scf.for %arg18 = %c0_i32_132 to %208 step %c1_i32_133 iter_args(%arg19 = %207) -> (vector<1x64xf32>)  : i32 {
        %cst_134 = arith.constant dense<0.000000e+00> : vector<1x64xf32>
        %210 = tpu.matmul %arg19, %162, %cst_134 {dimension_numbers = #tpu.dot_dimension_numbers<[1], [0], [0], [1], [0, 0, 1, 1], [], []>} : vector<1x64xf32>, vector<64x64xf32>, vector<1x64xf32> -> vector<1x64xf32>
        %211 = arith.divf %arg19, %210 : vector<1x64xf32>
        %cst_135 = arith.constant dense<0.000000e+00> : vector<1x64xf32>
        %212 = tpu.matmul %211, %163, %cst_135 {dimension_numbers = #tpu.dot_dimension_numbers<[1], [0], [0], [1], [0, 0, 1, 1], [], []>} : vector<1x64xf32>, vector<64x64xf32>, vector<1x64xf32> -> vector<1x64xf32>
        %213 = arith.divf %211, %212 : vector<1x64xf32>
        scf.yield %213 : vector<1x64xf32>
      }
      scf.yield %209 : vector<1x64xf32>
    }
    %176 = vector.shape_cast %175 : vector<1x64xf32> to vector<1x64xf32>
    %177 = vector.broadcast %176 : vector<1x64xf32> to vector<8x64xf32>
    %178 = arith.mulf %177, %54 : vector<8x64xf32>
    %c0_119 = arith.constant 0 : index
    %c0_120 = arith.constant 0 : index
    %179 = vector.load %arg12[%c0_119, %c0_120] : memref<64x8xf32, #tpu.memory_space<vmem>>, vector<64x8xf32>
    %cst_121 = arith.constant dense<0.000000e+00> : vector<8x8xf32>
    %180 = tpu.matmul %178, %179, %cst_121 {dimension_numbers = #tpu.dot_dimension_numbers<[1], [0], [0], [1], [0, 0, 1, 1], [], []>} : vector<8x64xf32>, vector<64x8xf32>, vector<8x8xf32> -> vector<8x8xf32>
    %181 = tpu.transpose %180, [1, 0] : vector<8x8xf32> -> vector<8x8xf32>
    %cst_122 = arith.constant 0.000000e+00 : f32
    %182 = vector.broadcast %cst_122 : f32 to vector<8x8xf32>
    %183 = arith.maximumf %181, %182 : vector<8x8xf32>
    %cst_123 = arith.constant 1.000000e+00 : f32
    %184 = vector.broadcast %cst_123 : f32 to vector<8x8xf32>
    %185 = arith.subf %181, %184 : vector<8x8xf32>
    %cst_124 = arith.constant 0.000000e+00 : f32
    %186 = vector.broadcast %cst_124 : f32 to vector<8x8xf32>
    %187 = arith.maximumf %185, %186 : vector<8x8xf32>
    %188 = arith.subf %183, %187 : vector<8x8xf32>
    %cst_125 = arith.constant 1.000000e+03 : f32
    %189 = vector.broadcast %cst_125 : f32 to vector<8x8xf32>
    %190 = arith.mulf %189, %188 : vector<8x8xf32>
    %cst_126 = arith.constant dense<0xFF800000> : vector<8xf32>
    %191 = vector.multi_reduction <maximumf>, %190, %cst_126 [1] : vector<8x8xf32> to vector<8xf32>
    %192 = vector.shape_cast %191 : vector<8xf32> to vector<8x1xf32>
    %193 = vector.broadcast %192 : vector<8x1xf32> to vector<8x8xf32>
    %194 = arith.subf %190, %193 : vector<8x8xf32>
    %195 = math.exp %194 : vector<8x8xf32>
    %cst_127 = arith.constant dense<0.000000e+00> : vector<8xf32>
    %196 = vector.multi_reduction <add>, %195, %cst_127 [1] : vector<8x8xf32> to vector<8xf32>
    %197 = vector.shape_cast %196 : vector<8xf32> to vector<8x1xf32>
    %198 = vector.broadcast %197 : vector<8x1xf32> to vector<8x8xf32>
    %199 = arith.divf %195, %198 : vector<8x8xf32>
    %c0_128 = arith.constant 0 : index
    %c0_129 = arith.constant 0 : index
    %200 = vector.load %arg15[%c0_128, %c0_129] : memref<8x8xf32, #tpu.memory_space<vmem>>, vector<8x8xf32>
    tpu.vector_store %arg15[%c0_128, %c0_129], %199 {strides = array<i32>} : memref<8x8xf32, #tpu.memory_space<vmem>>, vector<8x8xf32>,
    return
  }
}

</mosaic_0001>

<llo_original>
// kernel: tpu_custom_call.1
$region0: #{tpu_custom_call.1}
  #allocation0 [shape = 'u32[]', space=smem, size = 0x4, offset = 0x4, fixed_abs, tag = 'smem constant byte address 0x4 - core index']
  #allocation1 [shape = 'u32[144,128]{1,0:T(1,128)}', space=vmem, size = 0x12000, scoped, tag = 'internal scratch']
  %s0 = inlined_call_operand.hbm [shape: f32[8,512], index: 0, kind: input, shape index: {}]
  %s1 = inlined_call_operand.hbm [shape: f32[8,512], index: 1, kind: input, shape index: {}]
  %s2 = inlined_call_operand.hbm [shape: f32[512,512], index: 2, kind: input, shape index: {}]
  %s3 = inlined_call_operand.hbm [shape: f32[1,512], index: 3, kind: input, shape index: {}]
  %s4 = inlined_call_operand.hbm [shape: f32[8,56], index: 4, kind: input, shape index: {}]
  %s5 = inlined_call_operand.vmem [shape: f32[56,8], index: 5, kind: input, shape index: {}]
  %s6 = inlined_call_operand.vmem [shape: f32[56,8], index: 6, kind: input, shape index: {}]
  %s7 = inlined_call_operand.vmem [shape: f32[8,512], index: 7, kind: input, shape index: {}]
  %s8 = inlined_call_operand.hbm [shape: f32[8,512], index: 8, kind: input, shape index: {}]
  %s9 = inlined_call_operand.vmem [shape: f32[56,64], index: 9, kind: input, shape index: {}]
  %s10 = inlined_call_operand.vmem [shape: f32[8,64], index: 10, kind: input, shape index: {}]
  %s11 = inlined_call_operand.vmem [shape: f32[8,64], index: 11, kind: input, shape index: {}]
  %s12 = inlined_call_operand.vmem [shape: f32[64,8], index: 12, kind: input, shape index: {}]
  %s13 = inlined_call_operand.vmem [shape: f32[64,64], index: 13, kind: input, shape index: {}]
  %s14 = inlined_call_operand.vmem [shape: f32[64,64], index: 14, kind: input, shape index: {}]
  %s15 = inlined_call_operand.hbm [shape: f32[8,8], index: 15, kind: output, shape index: {}]
  %s16 = sld [smem:[#allocation0]]
  $region108: #{tpu_custom_call.1} parent=0
    _
  %s18 = ssub.s32 1, %s16
  %s19 = scalar_select 0, %s18, %s16
  $region1: #{tpu_custom_call.1} parent=0
    #allocation2 [shape = 'u8[16384]{0}', space=vmem, size = 0x4000, scoped, tag = 'input window, operand 0, single buffered']
    #allocation3 [shape = 's32[1]{0}', space=sflag, size = 0x4, scoped, tag = 'scoped memory for tpu_custom_call.1']
    #allocation4 [shape = 's32[1]{0}', space=sflag, size = 0x4, scoped, tag = 'scoped memory for tpu_custom_call.1']
    #allocation5 [shape = 'u8[16384]{0}', space=vmem, size = 0x4000, scoped, tag = 'input window, operand 1, single buffered']
    #allocation6 [shape = 's32[1]{0}', space=sflag, size = 0x4, scoped, tag = 'scoped memory for tpu_custom_call.1']
    #allocation7 [shape = 'u8[1048576]{0}', space=vmem, size = 0x100000, scoped, tag = 'input window, operand 2, single buffered']
    #allocation8 [shape = 'u8[2048]{0}', space=vmem, size = 0x800, scoped, tag = 'input window, operand 3, single buffered']
    #allocation9 [shape = 's32[1]{0}', space=sflag, size = 0x4, scoped, tag = 'scoped memory for tpu_custom_call.1']
    #allocation10 [shape = 'u8[4096]{0}', space=vmem, size = 0x1000, scoped, tag = 'input window, operand 4, single buffered']
    #allocation11 [shape = 'u8[16384]{0}', space=vmem, size = 0x4000, scoped, tag = 'input window, operand 8, single buffered']
    #allocation12 [shape = 's32[1]{0}', space=sflag, size = 0x4, scoped, tag = 'scoped memory for tpu_custom_call.1']
    #allocation13 [shape = 'u8[4096]{0}', space=vmem, size = 0x1000, scoped, tag = 'output window, operand 0, single buffered']
    %20 = vsyncpa [#allocation3], 0
    %21 = vsyncpa [#allocation6], 0
    %22 = vsyncpa [#allocation9], 0
    %23 = vsyncpa [#allocation12], 0
    %24 = vsyncpa [#allocation4], 0
    // Predicated region
    $region2: #{tpu_custom_call.1} parent=1 // pred_check
      _
    $region3: #{tpu_custom_call.1} parent=1 // pred_check_branch
      %26 = sbr.rel (0) target = $region5
    $region4: #{tpu_custom_call.1} parent=1 // pred_region
      %s28 = ssub.s32 512, 512
      %29 = vsyncadd [#allocation3], %s28
      %s31 = sshll.u32 [#allocation2], 4
      %s32 = int_to_ptr.vmem [resolvable:$true] %s31
      %34 = dma.hbm_to_vmem [thread:$0]  %s0, 512, %s32, [#allocation3]
    $region5: #{tpu_custom_call.1} parent=1 // pred_fallthru
      _
    // Predicated region
    $region6: #{tpu_custom_call.1} parent=1 // pred_check
      _
    $region7: #{tpu_custom_call.1} parent=1 // pred_check_branch
      %36 = sbr.rel (0) target = $region9
    $region8: #{tpu_custom_call.1} parent=1 // pred_region
      %s38 = ssub.s32 512, 512
      %39 = vsyncadd [#allocation6], %s38
      %s41 = sshll.u32 [#allocation5], 4
      %s42 = int_to_ptr.vmem [resolvable:$true] %s41
      %44 = dma.hbm_to_vmem [thread:$0]  %s1, 512, %s42, [#allocation6]
    $region9: #{tpu_custom_call.1} parent=1 // pred_fallthru
      _
    // Predicated region
    $region10: #{tpu_custom_call.1} parent=1 // pred_check
      _
    $region11: #{tpu_custom_call.1} parent=1 // pred_check_branch
      %46 = sbr.rel (0) target = $region13
    $region12: #{tpu_custom_call.1} parent=1 // pred_region
      %s48 = ssub.s32 32768, 32768
      %49 = vsyncadd [#allocation6], %s48
      %s50 = sshll.u32 [#allocation7], 4
      %s51 = int_to_ptr.vmem [resolvable:$true] %s50
      %56 = dma.hbm_to_vmem [thread:$0]  %s2, 32768, %s51, [#allocation6], 512, 512, 32
    $region13: #{tpu_custom_call.1} parent=1 // pred_fallthru
      _
    // Predicated region
    $region14: #{tpu_custom_call.1} parent=1 // pred_check
      _
    $region15: #{tpu_custom_call.1} parent=1 // pred_check_branch
      %58 = sbr.rel (0) target = $region17
    $region16: #{tpu_custom_call.1} parent=1 // pred_region
      %s60 = ssub.s32 64, 64
      %61 = vsyncadd [#allocation9], %s60
      %s63 = sshll.u32 [#allocation8], 4
      %s64 = int_to_ptr.vmem [resolvable:$true] %s63
      %66 = dma.hbm_to_vmem [thread:$0]  %s3, 64, %s64, [#allocation9]
    $region17: #{tpu_custom_call.1} parent=1 // pred_fallthru
      _
    // Predicated region
    $region18: #{tpu_custom_call.1} parent=1 // pred_check
      _
    $region19: #{tpu_custom_call.1} parent=1 // pred_check_branch
      %68 = sbr.rel (0) target = $region21
    $region20: #{tpu_custom_call.1} parent=1 // pred_region
      %s70 = ssub.s32 128, 128
      %71 = vsyncadd [#allocation9], %s70
      %s73 = sshll.u32 [#allocation10], 4
      %s74 = int_to_ptr.vmem [resolvable:$true] %s73
      %76 = dma.hbm_to_vmem [thread:$0]  %s4, 128, %s74, [#allocation9]
    $region21: #{tpu_custom_call.1} parent=1 // pred_fallthru
      _
    // Predicated region
    $region22: #{tpu_custom_call.1} parent=1 // pred_check
      _
    $region23: #{tpu_custom_call.1} parent=1 // pred_check_branch
      %78 = sbr.rel (0) target = $region25
    $region24: #{tpu_custom_call.1} parent=1 // pred_region
      _
    $region25: #{tpu_custom_call.1} parent=1 // pred_fallthru
      _
    // Predicated region
    $region26: #{tpu_custom_call.1} parent=1 // pred_check
      _
    $region27: #{tpu_custom_call.1} parent=1 // pred_check_branch
      %80 = sbr.rel (0) target = $region29
    $region28: #{tpu_custom_call.1} parent=1 // pred_region
      _
    $region29: #{tpu_custom_call.1} parent=1 // pred_fallthru
      _
    // Predicated region
    $region30: #{tpu_custom_call.1} parent=1 // pred_check
      _
    $region31: #{tpu_custom_call.1} parent=1 // pred_check_branch
      %82 = sbr.rel (0) target = $region33
    $region32: #{tpu_custom_call.1} parent=1 // pred_region
      _
    $region33: #{tpu_custom_call.1} parent=1 // pred_fallthru
      _
    // Predicated region
    $region34: #{tpu_custom_call.1} parent=1 // pred_check
      _
    $region35: #{tpu_custom_call.1} parent=1 // pred_check_branch
      %84 = sbr.rel (0) target = $region37
    $region36: #{tpu_custom_call.1} parent=1 // pred_region
      %s86 = ssub.s32 512, 512
      %87 = vsyncadd [#allocation12], %s86
      %s89 = sshll.u32 [#allocation11], 4
      %s90 = int_to_ptr.vmem [resolvable:$true] %s89
      %92 = dma.hbm_to_vmem [thread:$0]  %s8, 512, %s90, [#allocation12]
    $region37: #{tpu_custom_call.1} parent=1 // pred_fallthru
      _
    // Predicated region
    $region38: #{tpu_custom_call.1} parent=1 // pred_check
      _
    $region39: #{tpu_custom_call.1} parent=1 // pred_check_branch
      %94 = sbr.rel (0) target = $region41
    $region40: #{tpu_custom_call.1} parent=1 // pred_region
      _
    $region41: #{tpu_custom_call.1} parent=1 // pred_fallthru
      _
    // Predicated region
    $region42: #{tpu_custom_call.1} parent=1 // pred_check
      _
    $region43: #{tpu_custom_call.1} parent=1 // pred_check_branch
      %96 = sbr.rel (0) target = $region45
    $region44: #{tpu_custom_call.1} parent=1 // pred_region
      _
    $region45: #{tpu_custom_call.1} parent=1 // pred_fallthru
      _
    // Predicated region
    $region46: #{tpu_custom_call.1} parent=1 // pred_check
      _
    $region47: #{tpu_custom_call.1} parent=1 // pred_check_branch
      %98 = sbr.rel (0) target = $region49
    $region48: #{tpu_custom_call.1} parent=1 // pred_region
      _
    $region49: #{tpu_custom_call.1} parent=1 // pred_fallthru
      _
    // Predicated region
    $region50: #{tpu_custom_call.1} parent=1 // pred_check
      _
    $region51: #{tpu_custom_call.1} parent=1 // pred_check_branch
      %100 = sbr.rel (0) target = $region53
    $region52: #{tpu_custom_call.1} parent=1 // pred_region
      _
    $region53: #{tpu_custom_call.1} parent=1 // pred_fallthru
      _
    // Predicated region
    $region54: #{tpu_custom_call.1} parent=1 // pred_check
      _
    $region55: #{tpu_custom_call.1} parent=1 // pred_check_branch
      %102 = sbr.rel (0) target = $region57
    $region56: #{tpu_custom_call.1} parent=1 // pred_region
      _
    $region57: #{tpu_custom_call.1} parent=1 // pred_fallthru
      _
    // Predicated region
    $region58: #{tpu_custom_call.1} parent=1 // pred_check
      _
    $region59: #{tpu_custom_call.1} parent=1 // pred_check_branch
      %104 = sbr.rel (0) target = $region61
    $region60: #{tpu_custom_call.1} parent=1 // pred_region
      _
    $region61: #{tpu_custom_call.1} parent=1 // pred_fallthru
      _
    // Predicated region
    $region62: #{tpu_custom_call.1} parent=1 // pred_check
      _
    $region63: #{tpu_custom_call.1} parent=1 // pred_check_branch
      %106 = sbr.rel (0) target = $region65
    $region64: #{tpu_custom_call.1} parent=1 // pred_region
      %107 = dma.done [#allocation3], 512
    $region65: #{tpu_custom_call.1} parent=1 // pred_fallthru
      _
    // Predicated region
    $region66: #{tpu_custom_call.1} parent=1 // pred_check
      _
    $region67: #{tpu_custom_call.1} parent=1 // pred_check_branch
      %109 = sbr.rel (0) target = $region69
    $region68: #{tpu_custom_call.1} parent=1 // pred_region
      %110 = dma.done [#allocation6], 512
    $region69: #{tpu_custom_call.1} parent=1 // pred_fallthru
      _
    // Predicated region
    $region70: #{tpu_custom_call.1} parent=1 // pred_check
      _
    $region71: #{tpu_custom_call.1} parent=1 // pred_check_branch
      %112 = sbr.rel (0) target = $region73
    $region72: #{tpu_custom_call.1} parent=1 // pred_region
      %113 = dma.done [#allocation6], 32768
    $region73: #{tpu_custom_call.1} parent=1 // pred_fallthru
      _
    // Predicated region
    $region74: #{tpu_custom_call.1} parent=1 // pred_check
      _
    $region75: #{tpu_custom_call.1} parent=1 // pred_check_branch
      %115 = sbr.rel (0) target = $region77
    $region76: #{tpu_custom_call.1} parent=1 // pred_region
      %116 = dma.done [#allocation9], 64
    $region77: #{tpu_custom_call.1} parent=1 // pred_fallthru
      _
    // Predicated region
    $region78: #{tpu_custom_call.1} parent=1 // pred_check
      _
    $region79: #{tpu_custom_call.1} parent=1 // pred_check_branch
      %118 = sbr.rel (0) target = $region81
    $region80: #{tpu_custom_call.1} parent=1 // pred_region
      %119 = dma.done [#allocation9], 128
    $region81: #{tpu_custom_call.1} parent=1 // pred_fallthru
      _
    // Predicated region
    $region82: #{tpu_custom_call.1} parent=1 // pred_check
      _
    $region83: #{tpu_custom_call.1} parent=1 // pred_check_branch
      %121 = sbr.rel (0) target = $region85
    $region84: #{tpu_custom_call.1} parent=1 // pred_region
      %122 = dma.done [#allocation12], 512
    $region85: #{tpu_custom_call.1} parent=1 // pred_fallthru
      _
    %v123 = vld [vmem:[#allocation2] sm:$0xff]
    %v124 = vld [vmem:[#allocation2 + $0x8] sm:$0xff]
    %v125 = vld [vmem:[#allocation2 + $0x10] sm:$0xff]
    %v126 = vld [vmem:[#allocation2 + $0x18] sm:$0xff]
    %v127 = vld [vmem:[#allocation5] sm:$0xff]
    %v128 = vld [vmem:[#allocation5 + $0x8] sm:$0xff]
    %v129 = vld [vmem:[#allocation5 + $0x10] sm:$0xff]
    %v130 = vld [vmem:[#allocation5 + $0x18] sm:$0xff]
    %v131 = vld [vmem:[#allocation7] sm:$0xff]
    %v132 = vld [vmem:[#allocation7 + $0x8] sm:$0xff]
    %v133 = vld [vmem:[#allocation7 + $0x10] sm:$0xff]
    %v134 = vld [vmem:[#allocation7 + $0x18] sm:$0xff]
    %v135 = vld [vmem:[#allocation7 + $0x20] sm:$0xff]
    %v136 = vld [vmem:[#allocation7 + $0x28] sm:$0xff]
    %v137 = vld [vmem:[#allocation7 + $0x30] sm:$0xff]
    %v138 = vld [vmem:[#allocation7 + $0x38] sm:$0xff]
    %v139 = vld [vmem:[#allocation7 + $0x40] sm:$0xff]
    %v140 = vld [vmem:[#allocation7 + $0x48] sm:$0xff]
    %v141 = vld [vmem:[#allocation7 + $0x50] sm:$0xff]
    %v142 = vld [vmem:[#allocation7 + $0x58] sm:$0xff]
    %v143 = vld [vmem:[#allocation7 + $0x60] sm:$0xff]
    %v144 = vld [vmem:[#allocation7 + $0x68] sm:$0xff]
    %v145 = vld [vmem:[#allocation7 + $0x70] sm:$0xff]
    %v146 = vld [vmem:[#allocation7 + $0x78] sm:$0xff]
    %v147 = vld [vmem:[#allocation7 + $0x80] sm:$0xff]
    %v148 = vld [vmem:[#allocation7 + $0x88] sm:$0xff]
    %v149 = vld [vmem:[#allocation7 + $0x90] sm:$0xff]
    %v150 = vld [vmem:[#allocation7 + $0x98] sm:$0xff]
    %v151 = vld [vmem:[#allocation7 + $0xa0] sm:$0xff]
    %v152 = vld [vmem:[#allocation7 + $0xa8] sm:$0xff]
    %v153 = vld [vmem:[#allocation7 + $0xb0] sm:$0xff]
    %v154 = vld [vmem:[#allocation7 + $0xb8] sm:$0xff]
    %v155 = vld [vmem:[#allocation7 + $0xc0] sm:$0xff]
    %v156 = vld [vmem:[#allocation7 + $0xc8] sm:$0xff]
    %v157 = vld [vmem:[#allocation7 + $0xd0] sm:$0xff]
    %v158 = vld [vmem:[#allocation7 + $0xd8] sm:$0xff]
    %v159 = vld [vmem:[#allocation7 + $0xe0] sm:$0xff]
    %v160 = vld [vmem:[#allocation7 + $0xe8] sm:$0xff]
    %v161 = vld [vmem:[#allocation7 + $0xf0] sm:$0xff]
    %v162 = vld [vmem:[#allocation7 + $0xf8] sm:$0xff]
    %v163 = vld [vmem:[#allocation7 + $0x100] sm:$0xff]
    %v164 = vld [vmem:[#allocation7 + $0x108] sm:$0xff]
    %v165 = vld [vmem:[#allocation7 + $0x110] sm:$0xff]
    %v166 = vld [vmem:[#allocation7 + $0x118] sm:$0xff]
    %v167 = vld [vmem:[#allocation7 + $0x120] sm:$0xff]
    %v168 = vld [vmem:[#allocation7 + $0x128] sm:$0xff]
    %v169 = vld [vmem:[#allocation7 + $0x130] sm:$0xff]
    %v170 = vld [vmem:[#allocation7 + $0x138] sm:$0xff]
    %v171 = vld [vmem:[#allocation7 + $0x140] sm:$0xff]
    %v172 = vld [vmem:[#allocation7 + $0x148] sm:$0xff]
    %v173 = vld [vmem:[#allocation7 + $0x150] sm:$0xff]
    %v174 = vld [vmem:[#allocation7 + $0x158] sm:$0xff]
    %v175 = vld [vmem:[#allocation7 + $0x160] sm:$0xff]
    %v176 = vld [vmem:[#allocation7 + $0x168] sm:$0xff]
    %v177 = vld [vmem:[#allocation7 + $0x170] sm:$0xff]
    %v178 = vld [vmem:[#allocation7 + $0x178] sm:$0xff]
    %v179 = vld [vmem:[#allocation7 + $0x180] sm:$0xff]
    %v180 = vld [vmem:[#allocation7 + $0x188] sm:$0xff]
    %v181 = vld [vmem:[#allocation7 + $0x190] sm:$0xff]
    %v182 = vld [vmem:[#allocation7 + $0x198] sm:$0xff]
    %v183 = vld [vmem:[#allocation7 + $0x1a0] sm:$0xff]
    %v184 = vld [vmem:[#allocation7 + $0x1a8] sm:$0xff]
    %v185 = vld [vmem:[#allocation7 + $0x1b0] sm:$0xff]
    %v186 = vld [vmem:[#allocation7 + $0x1b8] sm:$0xff]
    %v187 = vld [vmem:[#allocation7 + $0x1c0] sm:$0xff]
    %v188 = vld [vmem:[#allocation7 + $0x1c8] sm:$0xff]
    %v189 = vld [vmem:[#allocation7 + $0x1d0] sm:$0xff]
    %v190 = vld [vmem:[#allocation7 + $0x1d8] sm:$0xff]
    %v191 = vld [vmem:[#allocation7 + $0x1e0] sm:$0xff]
    %v192 = vld [vmem:[#allocation7 + $0x1e8] sm:$0xff]
    %v193 = vld [vmem:[#allocation7 + $0x1f0] sm:$0xff]
    %v194 = vld [vmem:[#allocation7 + $0x1f8] sm:$0xff]
    %v195 = vld [vmem:[#allocation7 + $0x200] sm:$0xff]
    %v196 = vld [vmem:[#allocation7 + $0x208] sm:$0xff]
    %v197 = vld [vmem:[#allocation7 + $0x210] sm:$0xff]
    %v198 = vld [vmem:[#allocation7 + $0x218] sm:$0xff]
    %v199 = vld [vmem:[#allocation7 + $0x220] sm:$0xff]
    %v200 = vld [vmem:[#allocation7 + $0x228] sm:$0xff]
    %v201 = vld [vmem:[#allocation7 + $0x230] sm:$0xff]
    %v202 = vld [vmem:[#allocation7 + $0x238] sm:$0xff]
    %v203 = vld [vmem:[#allocation7 + $0x240] sm:$0xff]
    %v204 = vld [vmem:[#allocation7 + $0x248] sm:$0xff]
    %v205 = vld [vmem:[#allocation7 + $0x250] sm:$0xff]
    %v206 = vld [vmem:[#allocation7 + $0x258] sm:$0xff]
    %v207 = vld [vmem:[#allocation7 + $0x260] sm:$0xff]
    %v208 = vld [vmem:[#allocation7 + $0x268] sm:$0xff]
    %v209 = vld [vmem:[#allocation7 + $0x270] sm:$0xff]
    %v210 = vld [vmem:[#allocation7 + $0x278] sm:$0xff]
    %v211 = vld [vmem:[#allocation7 + $0x280] sm:$0xff]
    %v212 = vld [vmem:[#allocation7 + $0x288] sm:$0xff]
    %v213 = vld [vmem:[#allocation7 + $0x290] sm:$0xff]
    %v214 = vld [vmem:[#allocation7 + $0x298] sm:$0xff]
    %v215 = vld [vmem:[#allocation7 + $0x2a0] sm:$0xff]
    %v216 = vld [vmem:[#allocation7 + $0x2a8] sm:$0xff]
    %v217 = vld [vmem:[#allocation7 + $0x2b0] sm:$0xff]
    %v218 = vld [vmem:[#allocation7 + $0x2b8] sm:$0xff]
    %v219 = vld [vmem:[#allocation7 + $0x2c0] sm:$0xff]
    %v220 = vld [vmem:[#allocation7 + $0x2c8] sm:$0xff]
    %v221 = vld [vmem:[#allocation7 + $0x2d0] sm:$0xff]
    %v222 = vld [vmem:[#allocation7 + $0x2d8] sm:$0xff]
    %v223 = vld [vmem:[#allocation7 + $0x2e0] sm:$0xff]
    %v224 = vld [vmem:[#allocation7 + $0x2e8] sm:$0xff]
    %v225 = vld [vmem:[#allocation7 + $0x2f0] sm:$0xff]
    %v226 = vld [vmem:[#allocation7 + $0x2f8] sm:$0xff]
    %v227 = vld [vmem:[#allocation7 + $0x300] sm:$0xff]
    %v228 = vld [vmem:[#allocation7 + $0x308] sm:$0xff]
    %v229 = vld [vmem:[#allocation7 + $0x310] sm:$0xff]
    %v230 = vld [vmem:[#allocation7 + $0x318] sm:$0xff]
    %v231 = vld [vmem:[#allocation7 + $0x320] sm:$0xff]
    %v232 = vld [vmem:[#allocation7 + $0x328] sm:$0xff]
    %v233 = vld [vmem:[#allocation7 + $0x330] sm:$0xff]
    %v234 = vld [vmem:[#allocation7 + $0x338] sm:$0xff]
    %v235 = vld [vmem:[#allocation7 + $0x340] sm:$0xff]
    %v236 = vld [vmem:[#allocation7 + $0x348] sm:$0xff]
    %v237 = vld [vmem:[#allocation7 + $0x350] sm:$0xff]
    %v238 = vld [vmem:[#allocation7 + $0x358] sm:$0xff]
    %v239 = vld [vmem:[#allocation7 + $0x360] sm:$0xff]
    %v240 = vld [vmem:[#allocation7 + $0x368] sm:$0xff]
    %v241 = vld [vmem:[#allocation7 + $0x370] sm:$0xff]
    %v242 = vld [vmem:[#allocation7 + $0x378] sm:$0xff]
    %v243 = vld [vmem:[#allocation7 + $0x380] sm:$0xff]
    %v244 = vld [vmem:[#allocation7 + $0x388] sm:$0xff]
    %v245 = vld [vmem:[#allocation7 + $0x390] sm:$0xff]
    %v246 = vld [vmem:[#allocation7 + $0x398] sm:$0xff]
    %v247 = vld [vmem:[#allocation7 + $0x3a0] sm:$0xff]
    %v248 = vld [vmem:[#allocation7 + $0x3a8] sm:$0xff]
    %v249 = vld [vmem:[#allocation7 + $0x3b0] sm:$0xff]
    %v250 = vld [vmem:[#allocation7 + $0x3b8] sm:$0xff]
    %v251 = vld [vmem:[#allocation7 + $0x3c0] sm:$0xff]
    %v252 = vld [vmem:[#allocation7 + $0x3c8] sm:$0xff]
    %v253 = vld [vmem:[#allocation7 + $0x3d0] sm:$0xff]
    %v254 = vld [vmem:[#allocation7 + $0x3d8] sm:$0xff]
    %v255 = vld [vmem:[#allocation7 + $0x3e0] sm:$0xff]
    %v256 = vld [vmem:[#allocation7 + $0x3e8] sm:$0xff]
    %v257 = vld [vmem:[#allocation7 + $0x3f0] sm:$0xff]
    %v258 = vld [vmem:[#allocation7 + $0x3f8] sm:$0xff]
    %v259 = vld [vmem:[#allocation7 + $0x400] sm:$0xff]
    %v260 = vld [vmem:[#allocation7 + $0x408] sm:$0xff]
    %v261 = vld [vmem:[#allocation7 + $0x410] sm:$0xff]
    %v262 = vld [vmem:[#allocation7 + $0x418] sm:$0xff]
    %v263 = vld [vmem:[#allocation7 + $0x420] sm:$0xff]
    %v264 = vld [vmem:[#allocation7 + $0x428] sm:$0xff]
    %v265 = vld [vmem:[#allocation7 + $0x430] sm:$0xff]
    %v266 = vld [vmem:[#allocation7 + $0x438] sm:$0xff]
    %v267 = vld [vmem:[#allocation7 + $0x440] sm:$0xff]
    %v268 = vld [vmem:[#allocation7 + $0x448] sm:$0xff]
    %v269 = vld [vmem:[#allocation7 + $0x450] sm:$0xff]
    %v270 = vld [vmem:[#allocation7 + $0x458] sm:$0xff]
    %v271 = vld [vmem:[#allocation7 + $0x460] sm:$0xff]
    %v272 = vld [vmem:[#allocation7 + $0x468] sm:$0xff]
    %v273 = vld [vmem:[#allocation7 + $0x470] sm:$0xff]
    %v274 = vld [vmem:[#allocation7 + $0x478] sm:$0xff]
    %v275 = vld [vmem:[#allocation7 + $0x480] sm:$0xff]
    %v276 = vld [vmem:[#allocation7 + $0x488] sm:$0xff]
    %v277 = vld [vmem:[#allocation7 + $0x490] sm:$0xff]
    %v278 = vld [vmem:[#allocation7 + $0x498] sm:$0xff]
    %v279 = vld [vmem:[#allocation7 + $0x4a0] sm:$0xff]
    %v280 = vld [vmem:[#allocation7 + $0x4a8] sm:$0xff]
    %v281 = vld [vmem:[#allocation7 + $0x4b0] sm:$0xff]
    %v282 = vld [vmem:[#allocation7 + $0x4b8] sm:$0xff]
    %v283 = vld [vmem:[#allocation7 + $0x4c0] sm:$0xff]
    %v284 = vld [vmem:[#allocation7 + $0x4c8] sm:$0xff]
    %v285 = vld [vmem:[#allocation7 + $0x4d0] sm:$0xff]
    %v286 = vld [vmem:[#allocation7 + $0x4d8] sm:$0xff]
    %v287 = vld [vmem:[#allocation7 + $0x4e0] sm:$0xff]
    %v288 = vld [vmem:[#allocation7 + $0x4e8] sm:$0xff]
    %v289 = vld [vmem:[#allocation7 + $0x4f0] sm:$0xff]
    %v290 = vld [vmem:[#allocation7 + $0x4f8] sm:$0xff]
    %v291 = vld [vmem:[#allocation7 + $0x500] sm:$0xff]
    %v292 = vld [vmem:[#allocation7 + $0x508] sm:$0xff]
    %v293 = vld [vmem:[#allocation7 + $0x510] sm:$0xff]
    %v294 = vld [vmem:[#allocation7 + $0x518] sm:$0xff]
    %v295 = vld [vmem:[#allocation7 + $0x520] sm:$0xff]
    %v296 = vld [vmem:[#allocation7 + $0x528] sm:$0xff]
    %v297 = vld [vmem:[#allocation7 + $0x530] sm:$0xff]
    %v298 = vld [vmem:[#allocation7 + $0x538] sm:$0xff]
    %v299 = vld [vmem:[#allocation7 + $0x540] sm:$0xff]
    %v300 = vld [vmem:[#allocation7 + $0x548] sm:$0xff]
    %v301 = vld [vmem:[#allocation7 + $0x550] sm:$0xff]
    %v302 = vld [vmem:[#allocation7 + $0x558] sm:$0xff]
    %v303 = vld [vmem:[#allocation7 + $0x560] sm:$0xff]
    %v304 = vld [vmem:[#allocation7 + $0x568] sm:$0xff]
    %v305 = vld [vmem:[#allocation7 + $0x570] sm:$0xff]
    %v306 = vld [vmem:[#allocation7 + $0x578] sm:$0xff]
    %v307 = vld [vmem:[#allocation7 + $0x580] sm:$0xff]
    %v308 = vld [vmem:[#allocation7 + $0x588] sm:$0xff]
    %v309 = vld [vmem:[#allocation7 + $0x590] sm:$0xff]
    %v310 = vld [vmem:[#allocation7 + $0x598] sm:$0xff]
    %v311 = vld [vmem:[#allocation7 + $0x5a0] sm:$0xff]
    %v312 = vld [vmem:[#allocation7 + $0x5a8] sm:$0xff]
    %v313 = vld [vmem:[#allocation7 + $0x5b0] sm:$0xff]
    %v314 = vld [vmem:[#allocation7 + $0x5b8] sm:$0xff]
    %v315 = vld [vmem:[#allocation7 + $0x5c0] sm:$0xff]
    %v316 = vld [vmem:[#allocation7 + $0x5c8] sm:$0xff]
    %v317 = vld [vmem:[#allocation7 + $0x5d0] sm:$0xff]
    %v318 = vld [vmem:[#allocation7 + $0x5d8] sm:$0xff]
    %v319 = vld [vmem:[#allocation7 + $0x5e0] sm:$0xff]
    %v320 = vld [vmem:[#allocation7 + $0x5e8] sm:$0xff]
    %v321 = vld [vmem:[#allocation7 + $0x5f0] sm:$0xff]
    %v322 = vld [vmem:[#allocation7 + $0x5f8] sm:$0xff]
    %v323 = vld [vmem:[#allocation7 + $0x600] sm:$0xff]
    %v324 = vld [vmem:[#allocation7 + $0x608] sm:$0xff]
    %v325 = vld [vmem:[#allocation7 + $0x610] sm:$0xff]
    %v326 = vld [vmem:[#allocation7 + $0x618] sm:$0xff]
    %v327 = vld [vmem:[#allocation7 + $0x620] sm:$0xff]
    %v328 = vld [vmem:[#allocation7 + $0x628] sm:$0xff]
    %v329 = vld [vmem:[#allocation7 + $0x630] sm:$0xff]
    %v330 = vld [vmem:[#allocation7 + $0x638] sm:$0xff]
    %v331 = vld [vmem:[#allocation7 + $0x640] sm:$0xff]
    %v332 = vld [vmem:[#allocation7 + $0x648] sm:$0xff]
    %v333 = vld [vmem:[#allocation7 + $0x650] sm:$0xff]
    %v334 = vld [vmem:[#allocation7 + $0x658] sm:$0xff]
    %v335 = vld [vmem:[#allocation7 + $0x660] sm:$0xff]
    %v336 = vld [vmem:[#allocation7 + $0x668] sm:$0xff]
    %v337 = vld [vmem:[#allocation7 + $0x670] sm:$0xff]
    %v338 = vld [vmem:[#allocation7 + $0x678] sm:$0xff]
    %v339 = vld [vmem:[#allocation7 + $0x680] sm:$0xff]
    %v340 = vld [vmem:[#allocation7 + $0x688] sm:$0xff]
    %v341 = vld [vmem:[#allocation7 + $0x690] sm:$0xff]
    %v342 = vld [vmem:[#allocation7 + $0x698] sm:$0xff]
    %v343 = vld [vmem:[#allocation7 + $0x6a0] sm:$0xff]
    %v344 = vld [vmem:[#allocation7 + $0x6a8] sm:$0xff]
    %v345 = vld [vmem:[#allocation7 + $0x6b0] sm:$0xff]
    %v346 = vld [vmem:[#allocation7 + $0x6b8] sm:$0xff]
    %v347 = vld [vmem:[#allocation7 + $0x6c0] sm:$0xff]
    %v348 = vld [vmem:[#allocation7 + $0x6c8] sm:$0xff]
    %v349 = vld [vmem:[#allocation7 + $0x6d0] sm:$0xff]
    %v350 = vld [vmem:[#allocation7 + $0x6d8] sm:$0xff]
    %v351 = vld [vmem:[#allocation7 + $0x6e0] sm:$0xff]
    %v352 = vld [vmem:[#allocation7 + $0x6e8] sm:$0xff]
    %v353 = vld [vmem:[#allocation7 + $0x6f0] sm:$0xff]
    %v354 = vld [vmem:[#allocation7 + $0x6f8] sm:$0xff]
    %v355 = vld [vmem:[#allocation7 + $0x700] sm:$0xff]
    %v356 = vld [vmem:[#allocation7 + $0x708] sm:$0xff]
    %v357 = vld [vmem:[#allocation7 + $0x710] sm:$0xff]
    %v358 = vld [vmem:[#allocation7 + $0x718] sm:$0xff]
    %v359 = vld [vmem:[#allocation7 + $0x720] sm:$0xff]
    %v360 = vld [vmem:[#allocation7 + $0x728] sm:$0xff]
    %v361 = vld [vmem:[#allocation7 + $0x730] sm:$0xff]
    %v362 = vld [vmem:[#allocation7 + $0x738] sm:$0xff]
    %v363 = vld [vmem:[#allocation7 + $0x740] sm:$0xff]
    %v364 = vld [vmem:[#allocation7 + $0x748] sm:$0xff]
    %v365 = vld [vmem:[#allocation7 + $0x750] sm:$0xff]
    %v366 = vld [vmem:[#allocation7 + $0x758] sm:$0xff]
    %v367 = vld [vmem:[#allocation7 + $0x760] sm:$0xff]
    %v368 = vld [vmem:[#allocation7 + $0x768] sm:$0xff]
    %v369 = vld [vmem:[#allocation7 + $0x770] sm:$0xff]
    %v370 = vld [vmem:[#allocation7 + $0x778] sm:$0xff]
    %v371 = vld [vmem:[#allocation7 + $0x780] sm:$0xff]
    %v372 = vld [vmem:[#allocation7 + $0x788] sm:$0xff]
    %v373 = vld [vmem:[#allocation7 + $0x790] sm:$0xff]
    %v374 = vld [vmem:[#allocation7 + $0x798] sm:$0xff]
    %v375 = vld [vmem:[#allocation7 + $0x7a0] sm:$0xff]
    %v376 = vld [vmem:[#allocation7 + $0x7a8] sm:$0xff]
    %v377 = vld [vmem:[#allocation7 + $0x7b0] sm:$0xff]
    %v378 = vld [vmem:[#allocation7 + $0x7b8] sm:$0xff]
    %v379 = vld [vmem:[#allocation7 + $0x7c0] sm:$0xff]
    %v380 = vld [vmem:[#allocation7 + $0x7c8] sm:$0xff]
    %v381 = vld [vmem:[#allocation7 + $0x7d0] sm:$0xff]
    %v382 = vld [vmem:[#allocation7 + $0x7d8] sm:$0xff]
    %v383 = vld [vmem:[#allocation7 + $0x7e0] sm:$0xff]
    %v384 = vld [vmem:[#allocation7 + $0x7e8] sm:$0xff]
    %v385 = vld [vmem:[#allocation7 + $0x7f0] sm:$0xff]
    %v386 = vld [vmem:[#allocation7 + $0x7f8] sm:$0xff]
    %v387 = vld [vmem:[#allocation8] sm:$0xf]
    %388 = vmatprep.subr.mxu0 %v128
    %389 = vmatpush1.xpose.msra.mxu0 %v127
    %390 = vmatprep.subr.mxu0 0.0
    %391 = vmatpush1.xpose.msra.mxu0 0.0
    %392 = vmatprep.subr.mxu0 0.0
    %393 = vmatpush1.xpose.msra.mxu0 0.0
    %394 = vmatprep.subr.mxu0 0.0
    %395 = vmatpush1.xpose.msra.mxu0 0.0
    %396 = vmatprep.subr.mxu0 0.0
    %397 = vmatpush1.xpose.msra.mxu0 0.0
    %398 = vmatprep.subr.mxu0 0.0
    %399 = vmatpush1.xpose.msra.mxu0 0.0
    %400 = vmatprep.subr.mxu0 0.0
    %401 = vmatpush1.xpose.msra.mxu0 0.0
    %402 = vmatprep.subr.mxu0 0.0
    %403 = vmatpush1.xpose.msra.mxu0 0.0
    %404 = vmatprep.subr.mxu0 0.0
    %405 = vmatpush1.xpose.msra.mxu0 0.0
    %406 = vmatprep.subr.mxu0 0.0
    %407 = vmatpush1.xpose.msra.mxu0 0.0
    %408 = vmatprep.subr.mxu0 0.0
    %409 = vmatpush1.xpose.msra.mxu0 0.0
    %410 = vmatprep.subr.mxu0 0.0
    %411 = vmatpush1.xpose.msra.mxu0 0.0
    %412 = vmatprep.subr.mxu0 0.0
    %413 = vmatpush1.xpose.msra.mxu0 0.0
    %414 = vmatprep.subr.mxu0 0.0
    %415 = vmatpush1.xpose.msra.mxu0 0.0
    %416 = vmatprep.subr.mxu0 0.0
    %417 = vmatpush1.xpose.msra.mxu0 0.0
    %418 = vmatprep.subr.mxu0 0.0
    %419 = vmatpush1.xpose.msra.mxu0 0.0
    %420 = vmatprep.subr.mxu0 0.0
    %421 = vmatpush1.xpose.msra.mxu0 0.0
    %422 = vmatprep.subr.mxu0 0.0
    %423 = vmatpush1.xpose.msra.mxu0 0.0
    %424 = vmatprep.subr.mxu0 0.0
    %425 = vmatpush1.xpose.msra.mxu0 0.0
    %426 = vmatprep.subr.mxu0 0.0
    %427 = vmatpush1.xpose.msra.mxu0 0.0
    %428 = vmatprep.subr.mxu0 0.0
    %429 = vmatpush1.xpose.msra.mxu0 0.0
    %430 = vmatprep.subr.mxu0 0.0
    %431 = vmatpush1.xpose.msra.mxu0 0.0
    %432 = vmatprep.subr.mxu0 0.0
    %433 = vmatpush1.xpose.msra.mxu0 0.0
    %434 = vmatprep.subr.mxu0 0.0
    %435 = vmatpush1.xpose.msra.mxu0 0.0
    %436 = vmatprep.subr.mxu0 0.0
    %437 = vmatpush1.xpose.msra.mxu0 0.0
    %438 = vmatprep.subr.mxu0 0.0
    %439 = vmatpush1.xpose.msra.mxu0 0.0
    %440 = vmatprep.subr.mxu0 0.0
    %441 = vmatpush1.xpose.msra.mxu0 0.0
    %442 = vmatprep.subr.mxu0 0.0
    %443 = vmatpush1.xpose.msra.mxu0 0.0
    %444 = vmatprep.subr.mxu0 0.0
    %445 = vmatpush1.xpose.msra.mxu0 0.0
    %446 = vmatprep.subr.mxu0 0.0
    %447 = vmatpush1.xpose.msra.mxu0 0.0
    %448 = vmatprep.subr.mxu0 0.0
    %449 = vmatpush1.xpose.msra.mxu0 0.0
    %450 = vmatprep.subr.mxu0 0.0
    %451 = vmatpush1.xpose.msra.mxu0 0.0
    %452 = vmatprep.mubr.f32.mxu0 %v124
    %453 = vmatmul.mubr.f32.gmra.mrb[0].mxu0 %v123
    %v454 = vpop.f32.mrb[0].mxu0
    %v455 = vadd.f32 0.0, %v454
    %v456 = vpop.f32.mrb[0].mxu0
    %457 = vdwg.mxu0
    %458 = vmatprep.subr.mxu0 %v130
    %459 = vmatpush1.xpose.msra.mxu0 %v129
    %460 = vmatprep.subr.mxu0 0.0
    %461 = vmatpush1.xpose.msra.mxu0 0.0
    %462 = vmatprep.subr.mxu0 0.0
    %463 = vmatpush1.xpose.msra.mxu0 0.0
    %464 = vmatprep.subr.mxu0 0.0
    %465 = vmatpush1.xpose.msra.mxu0 0.0
    %466 = vmatprep.subr.mxu0 0.0
    %467 = vmatpush1.xpose.msra.mxu0 0.0
    %468 = vmatprep.subr.mxu0 0.0
    %469 = vmatpush1.xpose.msra.mxu0 0.0
    %470 = vmatprep.subr.mxu0 0.0
    %471 = vmatpush1.xpose.msra.mxu0 0.0
    %472 = vmatprep.subr.mxu0 0.0
    %473 = vmatpush1.xpose.msra.mxu0 0.0
    %474 = vmatprep.subr.mxu0 0.0
    %475 = vmatpush1.xpose.msra.mxu0 0.0
    %476 = vmatprep.subr.mxu0 0.0
    %477 = vmatpush1.xpose.msra.mxu0 0.0
    %478 = vmatprep.subr.mxu0 0.0
    %479 = vmatpush1.xpose.msra.mxu0 0.0
    %480 = vmatprep.subr.mxu0 0.0
    %481 = vmatpush1.xpose.msra.mxu0 0.0
    %482 = vmatprep.subr.mxu0 0.0
    %483 = vmatpush1.xpose.msra.mxu0 0.0
    %484 = vmatprep.subr.mxu0 0.0
    %485 = vmatpush1.xpose.msra.mxu0 0.0
    %486 = vmatprep.subr.mxu0 0.0
    %487 = vmatpush1.xpose.msra.mxu0 0.0
    %488 = vmatprep.subr.mxu0 0.0
    %489 = vmatpush1.xpose.msra.mxu0 0.0
    %490 = vmatprep.subr.mxu0 0.0
    %491 = vmatpush1.xpose.msra.mxu0 0.0
    %492 = vmatprep.subr.mxu0 0.0
    %493 = vmatpush1.xpose.msra.mxu0 0.0
    %494 = vmatprep.subr.mxu0 0.0
    %495 = vmatpush1.xpose.msra.mxu0 0.0
    %496 = vmatprep.subr.mxu0 0.0
    %497 = vmatpush1.xpose.msra.mxu0 0.0
    %498 = vmatprep.subr.mxu0 0.0
    %499 = vmatpush1.xpose.msra.mxu0 0.0
    %500 = vmatprep.subr.mxu0 0.0
    %501 = vmatpush1.xpose.msra.mxu0 0.0
    %502 = vmatprep.subr.mxu0 0.0
    %503 = vmatpush1.xpose.msra.mxu0 0.0
    %504 = vmatprep.subr.mxu0 0.0
    %505 = vmatpush1.xpose.msra.mxu0 0.0
    %506 = vmatprep.subr.mxu0 0.0
    %507 = vmatpush1.xpose.msra.mxu0 0.0
    %508 = vmatprep.subr.mxu0 0.0
    %509 = vmatpush1.xpose.msra.mxu0 0.0
    %510 = vmatprep.subr.mxu0 0.0
    %511 = vmatpush1.xpose.msra.mxu0 0.0
    %512 = vmatprep.subr.mxu0 0.0
    %513 = vmatpush1.xpose.msra.mxu0 0.0
    %514 = vmatprep.subr.mxu0 0.0
    %515 = vmatpush1.xpose.msra.mxu0 0.0
    %516 = vmatprep.subr.mxu0 0.0
    %517 = vmatpush1.xpose.msra.mxu0 0.0
    %518 = vmatprep.subr.mxu0 0.0
    %519 = vmatpush1.xpose.msra.mxu0 0.0
    %520 = vmatprep.subr.mxu0 0.0
    %521 = vmatpush1.xpose.msra.mxu0 0.0
    %522 = vmatprep.mubr.f32.mxu0 %v126
    %523 = vmatmul.mubr.f32.gmra.mrb[0].mxu0 %v125
    %v524 = vpop.f32.mrb[0].mxu0
    %v525 = vadd.f32 %v455, %v524
    %v526 = vpop.f32.mrb[0].mxu0
    %527 = vdwg.mxu0
    %528 = vmatprep.subr.mxu0 %v124
    %529 = vmatpush1.xpose.msra.mxu0 %v123
    %530 = vmatprep.subr.mxu0 0.0
    %531 = vmatpush1.xpose.msra.mxu0 0.0
    %532 = vmatprep.subr.mxu0 0.0
    %533 = vmatpush1.xpose.msra.mxu0 0.0
    %534 = vmatprep.subr.mxu0 0.0
    %535 = vmatpush1.xpose.msra.mxu0 0.0
    %536 = vmatprep.subr.mxu0 0.0
    %537 = vmatpush1.xpose.msra.mxu0 0.0
    %538 = vmatprep.subr.mxu0 0.0
    %539 = vmatpush1.xpose.msra.mxu0 0.0
    %540 = vmatprep.subr.mxu0 0.0
    %541 = vmatpush1.xpose.msra.mxu0 0.0
    %542 = vmatprep.subr.mxu0 0.0
    %543 = vmatpush1.xpose.msra.mxu0 0.0
    %544 = vmatprep.subr.mxu0 0.0
    %545 = vmatpush1.xpose.msra.mxu0 0.0
    %546 = vmatprep.subr.mxu0 0.0
    %547 = vmatpush1.xpose.msra.mxu0 0.0
    %548 = vmatprep.subr.mxu0 0.0
    %549 = vmatpush1.xpose.msra.mxu0 0.0
    %550 = vmatprep.subr.mxu0 0.0
    %551 = vmatpush1.xpose.msra.mxu0 0.0
    %552 = vmatprep.subr.mxu0 0.0
    %553 = vmatpush1.xpose.msra.mxu0 0.0
    %554 = vmatprep.subr.mxu0 0.0
    %555 = vmatpush1.xpose.msra.mxu0 0.0
    %556 = vmatprep.subr.mxu0 0.0
    %557 = vmatpush1.xpose.msra.mxu0 0.0
    %558 = vmatprep.subr.mxu0 0.0
    %559 = vmatpush1.xpose.msra.mxu0 0.0
    %560 = vmatprep.subr.mxu0 0.0
    %561 = vmatpush1.xpose.msra.mxu0 0.0
    %562 = vmatprep.subr.mxu0 0.0
    %563 = vmatpush1.xpose.msra.mxu0 0.0
    %564 = vmatprep.subr.mxu0 0.0
    %565 = vmatpush1.xpose.msra.mxu0 0.0
    %566 = vmatprep.subr.mxu0 0.0
    %567 = vmatpush1.xpose.msra.mxu0 0.0
    %568 = vmatprep.subr.mxu0 0.0
    %569 = vmatpush1.xpose.msra.mxu0 0.0
    %570 = vmatprep.subr.mxu0 0.0
    %571 = vmatpush1.xpose.msra.mxu0 0.0
    %572 = vmatprep.subr.mxu0 0.0
    %573 = vmatpush1.xpose.msra.mxu0 0.0
    %574 = vmatprep.subr.mxu0 0.0
    %575 = vmatpush1.xpose.msra.mxu0 0.0
    %576 = vmatprep.subr.mxu0 0.0
    %577 = vmatpush1.xpose.msra.mxu0 0.0
    %578 = vmatprep.subr.mxu0 0.0
    %579 = vmatpush1.xpose.msra.mxu0 0.0
    %580 = vmatprep.subr.mxu0 0.0
    %581 = vmatpush1.xpose.msra.mxu0 0.0
    %582 = vmatprep.subr.mxu0 0.0
    %583 = vmatpush1.xpose.msra.mxu0 0.0
    %584 = vmatprep.subr.mxu0 0.0
    %585 = vmatpush1.xpose.msra.mxu0 0.0
    %586 = vmatprep.subr.mxu0 0.0
    %587 = vmatpush1.xpose.msra.mxu0 0.0
    %588 = vmatprep.subr.mxu0 0.0
    %589 = vmatpush1.xpose.msra.mxu0 0.0
    %590 = vmatprep.subr.mxu0 0.0
    %591 = vmatpush1.xpose.msra.mxu0 0.0
    %592 = vmatprep.mubr.f32.mxu0 %v128
    %593 = vmatmul.mubr.f32.gmra.mrb[0].mxu0 %v127
    %v594 = vpop.f32.mrb[0].mxu0
    %v595 = vadd.f32 0.0, %v594
    %v596 = vpop.f32.mrb[0].mxu0
    %597 = vdwg.mxu0
    %598 = vmatprep.subr.mxu0 %v126
    %599 = vmatpush1.xpose.msra.mxu0 %v125
    %600 = vmatprep.subr.mxu0 0.0
    %601 = vmatpush1.xpose.msra.mxu0 0.0
    %602 = vmatprep.subr.mxu0 0.0
    %603 = vmatpush1.xpose.msra.mxu0 0.0
    %604 = vmatprep.subr.mxu0 0.0
    %605 = vmatpush1.xpose.msra.mxu0 0.0
    %606 = vmatprep.subr.mxu0 0.0
    %607 = vmatpush1.xpose.msra.mxu0 0.0
    %608 = vmatprep.subr.mxu0 0.0
    %609 = vmatpush1.xpose.msra.mxu0 0.0
    %610 = vmatprep.subr.mxu0 0.0
    %611 = vmatpush1.xpose.msra.mxu0 0.0
    %612 = vmatprep.subr.mxu0 0.0
    %613 = vmatpush1.xpose.msra.mxu0 0.0
    %614 = vmatprep.subr.mxu0 0.0
    %615 = vmatpush1.xpose.msra.mxu0 0.0
    %616 = vmatprep.subr.mxu0 0.0
    %617 = vmatpush1.xpose.msra.mxu0 0.0
    %618 = vmatprep.subr.mxu0 0.0
    %619 = vmatpush1.xpose.msra.mxu0 0.0
    %620 = vmatprep.subr.mxu0 0.0
    %621 = vmatpush1.xpose.msra.mxu0 0.0
    %622 = vmatprep.subr.mxu0 0.0
    %623 = vmatpush1.xpose.msra.mxu0 0.0
    %624 = vmatprep.subr.mxu0 0.0
    %625 = vmatpush1.xpose.msra.mxu0 0.0
    %626 = vmatprep.subr.mxu0 0.0
    %627 = vmatpush1.xpose.msra.mxu0 0.0
    %628 = vmatprep.subr.mxu0 0.0
    %629 = vmatpush1.xpose.msra.mxu0 0.0
    %630 = vmatprep.subr.mxu0 0.0
    %631 = vmatpush1.xpose.msra.mxu0 0.0
    %632 = vmatprep.subr.mxu0 0.0
    %633 = vmatpush1.xpose.msra.mxu0 0.0
    %634 = vmatprep.subr.mxu0 0.0
    %635 = vmatpush1.xpose.msra.mxu0 0.0
    %636 = vmatprep.subr.mxu0 0.0
    %637 = vmatpush1.xpose.msra.mxu0 0.0
    %638 = vmatprep.subr.mxu0 0.0
    %639 = vmatpush1.xpose.msra.mxu0 0.0
    %640 = vmatprep.subr.mxu0 0.0
    %641 = vmatpush1.xpose.msra.mxu0 0.0
    %642 = vmatprep.subr.mxu0 0.0
    %643 = vmatpush1.xpose.msra.mxu0 0.0
    %644 = vmatprep.subr.mxu0 0.0
    %645 = vmatpush1.xpose.msra.mxu0 0.0
    %646 = vmatprep.subr.mxu0 0.0
    %647 = vmatpush1.xpose.msra.mxu0 0.0
    %648 = vmatprep.subr.mxu0 0.0
    %649 = vmatpush1.xpose.msra.mxu0 0.0
    %650 = vmatprep.subr.mxu0 0.0
    %651 = vmatpush1.xpose.msra.mxu0 0.0
    %652 = vmatprep.subr.mxu0 0.0
    %653 = vmatpush1.xpose.msra.mxu0 0.0
    %654 = vmatprep.subr.mxu0 0.0
    %655 = vmatpush1.xpose.msra.mxu0 0.0
    %656 = vmatprep.subr.mxu0 0.0
    %657 = vmatpush1.xpose.msra.mxu0 0.0
    %658 = vmatprep.subr.mxu0 0.0
    %659 = vmatpush1.xpose.msra.mxu0 0.0
    %660 = vmatprep.subr.mxu0 0.0
    %661 = vmatpush1.xpose.msra.mxu0 0.0
    %662 = vmatprep.mubr.f32.mxu0 %v130
    %663 = vmatmul.mubr.f32.gmra.mrb[0].mxu0 %v129
    %v664 = vpop.f32.mrb[0].mxu0
    %v665 = vadd.f32 %v595, %v664
    %v666 = vpop.f32.mrb[0].mxu0
    %667 = vdwg.mxu0
    %vm668 = vcmask 64512
    %v670 = vsel %vm668, %v525, 0
    %672 = vmatprep.subr.mxu0 %v128
    %673 = vmatpush1.msra.mxu0 %v127
    %674 = vmatprep.subr.mxu0 0.0
    %675 = vmatpush1.msra.mxu0 0.0
    %676 = vmatprep.subr.mxu0 0.0
    %677 = vmatpush1.msra.mxu0 0.0
    %678 = vmatprep.subr.mxu0 0.0
    %679 = vmatpush1.msra.mxu0 0.0
    %680 = vmatprep.subr.mxu0 0.0
    %681 = vmatpush1.msra.mxu0 0.0
    %682 = vmatprep.subr.mxu0 0.0
    %683 = vmatpush1.msra.mxu0 0.0
    %684 = vmatprep.subr.mxu0 0.0
    %685 = vmatpush1.msra.mxu0 0.0
    %686 = vmatprep.subr.mxu0 0.0
    %687 = vmatpush1.msra.mxu0 0.0
    %688 = vmatprep.subr.mxu0 0.0
    %689 = vmatpush1.msra.mxu0 0.0
    %690 = vmatprep.subr.mxu0 0.0
    %691 = vmatpush1.msra.mxu0 0.0
    %692 = vmatprep.subr.mxu0 0.0
    %693 = vmatpush1.msra.mxu0 0.0
    %694 = vmatprep.subr.mxu0 0.0
    %695 = vmatpush1.msra.mxu0 0.0
    %696 = vmatprep.subr.mxu0 0.0
    %697 = vmatpush1.msra.mxu0 0.0
    %698 = vmatprep.subr.mxu0 0.0
    %699 = vmatpush1.msra.mxu0 0.0
    %700 = vmatprep.subr.mxu0 0.0
    %701 = vmatpush1.msra.mxu0 0.0
    %702 = vmatprep.subr.mxu0 0.0
    %703 = vmatpush1.msra.mxu0 0.0
    %704 = vmatprep.subr.mxu0 0.0
    %705 = vmatpush1.msra.mxu0 0.0
    %706 = vmatprep.subr.mxu0 0.0
    %707 = vmatpush1.msra.mxu0 0.0
    %708 = vmatprep.subr.mxu0 0.0
    %709 = vmatpush1.msra.mxu0 0.0
    %710 = vmatprep.subr.mxu0 0.0
    %711 = vmatpush1.msra.mxu0 0.0
    %712 = vmatprep.subr.mxu0 0.0
    %713 = vmatpush1.msra.mxu0 0.0
    %714 = vmatprep.subr.mxu0 0.0
    %715 = vmatpush1.msra.mxu0 0.0
    %716 = vmatprep.subr.mxu0 0.0
    %717 = vmatpush1.msra.mxu0 0.0
    %718 = vmatprep.subr.mxu0 0.0
    %719 = vmatpush1.msra.mxu0 0.0
    %720 = vmatprep.subr.mxu0 0.0
    %721 = vmatpush1.msra.mxu0 0.0
    %722 = vmatprep.subr.mxu0 0.0
    %723 = vmatpush1.msra.mxu0 0.0
    %724 = vmatprep.subr.mxu0 0.0
    %725 = vmatpush1.msra.mxu0 0.0
    %726 = vmatprep.subr.mxu0 0.0
    %727 = vmatpush1.msra.mxu0 0.0
    %728 = vmatprep.subr.mxu0 0.0
    %729 = vmatpush1.msra.mxu0 0.0
    %730 = vmatprep.subr.mxu0 0.0
    %731 = vmatpush1.msra.mxu0 0.0
    %732 = vmatprep.subr.mxu0 0.0
    %733 = vmatpush1.msra.mxu0 0.0
    %734 = vmatprep.subr.mxu0 0.0
    %735 = vmatpush1.msra.mxu0 0.0
    %736 = vmatprep.mubr.f32.mxu0 0.0
    %737 = vmatmul.mubr.f32.gmra.mrb[0].mxu0 %v670
    %v738 = vpop.f32.mrb[0].mxu0
    %v739 = vadd.f32 0.0, %v738
    %v740 = vpop.f32.mrb[0].mxu0
    %v741 = vadd.f32 0.0, %v740
    %742 = vdwg.mxu0
    %743 = vmatprep.subr.mxu0 %v130
    %744 = vmatpush1.msra.mxu0 %v129
    %745 = vmatprep.subr.mxu0 0.0
    %746 = vmatpush1.msra.mxu0 0.0
    %747 = vmatprep.subr.mxu0 0.0
    %748 = vmatpush1.msra.mxu0 0.0
    %749 = vmatprep.subr.mxu0 0.0
    %750 = vmatpush1.msra.mxu0 0.0
    %751 = vmatprep.subr.mxu0 0.0
    %752 = vmatpush1.msra.mxu0 0.0
    %753 = vmatprep.subr.mxu0 0.0
    %754 = vmatpush1.msra.mxu0 0.0
    %755 = vmatprep.subr.mxu0 0.0
    %756 = vmatpush1.msra.mxu0 0.0
    %757 = vmatprep.subr.mxu0 0.0
    %758 = vmatpush1.msra.mxu0 0.0
    %759 = vmatprep.subr.mxu0 0.0
    %760 = vmatpush1.msra.mxu0 0.0
    %761 = vmatprep.subr.mxu0 0.0
    %762 = vmatpush1.msra.mxu0 0.0
    %763 = vmatprep.subr.mxu0 0.0
    %764 = vmatpush1.msra.mxu0 0.0
    %765 = vmatprep.subr.mxu0 0.0
    %766 = vmatpush1.msra.mxu0 0.0
    %767 = vmatprep.subr.mxu0 0.0
    %768 = vmatpush1.msra.mxu0 0.0
    %769 = vmatprep.subr.mxu0 0.0
    %770 = vmatpush1.msra.mxu0 0.0
    %771 = vmatprep.subr.mxu0 0.0
    %772 = vmatpush1.msra.mxu0 0.0
    %773 = vmatprep.subr.mxu0 0.0
    %774 = vmatpush1.msra.mxu0 0.0
    %775 = vmatprep.subr.mxu0 0.0
    %776 = vmatpush1.msra.mxu0 0.0
    %777 = vmatprep.subr.mxu0 0.0
    %778 = vmatpush1.msra.mxu0 0.0
    %779 = vmatprep.subr.mxu0 0.0
    %780 = vmatpush1.msra.mxu0 0.0
    %781 = vmatprep.subr.mxu0 0.0
    %782 = vmatpush1.msra.mxu0 0.0
    %783 = vmatprep.subr.mxu0 0.0
    %784 = vmatpush1.msra.mxu0 0.0
    %785 = vmatprep.subr.mxu0 0.0
    %786 = vmatpush1.msra.mxu0 0.0
    %787 = vmatprep.subr.mxu0 0.0
    %788 = vmatpush1.msra.mxu0 0.0
    %789 = vmatprep.subr.mxu0 0.0
    %790 = vmatpush1.msra.mxu0 0.0
    %791 = vmatprep.subr.mxu0 0.0
    %792 = vmatpush1.msra.mxu0 0.0
    %793 = vmatprep.subr.mxu0 0.0
    %794 = vmatpush1.msra.mxu0 0.0
    %795 = vmatprep.subr.mxu0 0.0
    %796 = vmatpush1.msra.mxu0 0.0
    %797 = vmatprep.subr.mxu0 0.0
    %798 = vmatpush1.msra.mxu0 0.0
    %799 = vmatprep.subr.mxu0 0.0
    %800 = vmatpush1.msra.mxu0 0.0
    %801 = vmatprep.subr.mxu0 0.0
    %802 = vmatpush1.msra.mxu0 0.0
    %803 = vmatprep.subr.mxu0 0.0
    %804 = vmatpush1.msra.mxu0 0.0
    %805 = vmatprep.subr.mxu0 0.0
    %806 = vmatpush1.msra.mxu0 0.0
    %807 = vmatprep.mubr.f32.mxu0 0.0
    %808 = vmatmul.mubr.f32.gmra.mrb[0].mxu0 %v670
    %v809 = vpop.f32.mrb[0].mxu0
    %v810 = vadd.f32 0.0, %v809
    %v811 = vpop.f32.mrb[0].mxu0
    %v812 = vadd.f32 0.0, %v811
    %813 = vdwg.mxu0
    %v815 = vsel %vm668, %v665, 0
    %817 = vmatprep.subr.mxu0 %v124
    %818 = vmatpush1.msra.mxu0 %v123
    %819 = vmatprep.subr.mxu0 0.0
    %820 = vmatpush1.msra.mxu0 0.0
    %821 = vmatprep.subr.mxu0 0.0
    %822 = vmatpush1.msra.mxu0 0.0
    %823 = vmatprep.subr.mxu0 0.0
    %824 = vmatpush1.msra.mxu0 0.0
    %825 = vmatprep.subr.mxu0 0.0
    %826 = vmatpush1.msra.mxu0 0.0
    %827 = vmatprep.subr.mxu0 0.0
    %828 = vmatpush1.msra.mxu0 0.0
    %829 = vmatprep.subr.mxu0 0.0
    %830 = vmatpush1.msra.mxu0 0.0
    %831 = vmatprep.subr.mxu0 0.0
    %832 = vmatpush1.msra.mxu0 0.0
    %833 = vmatprep.subr.mxu0 0.0
    %834 = vmatpush1.msra.mxu0 0.0
    %835 = vmatprep.subr.mxu0 0.0
    %836 = vmatpush1.msra.mxu0 0.0
    %837 = vmatprep.subr.mxu0 0.0
    %838 = vmatpush1.msra.mxu0 0.0
    %839 = vmatprep.subr.mxu0 0.0
    %840 = vmatpush1.msra.mxu0 0.0
    %841 = vmatprep.subr.mxu0 0.0
    %842 = vmatpush1.msra.mxu0 0.0
    %843 = vmatprep.subr.mxu0 0.0
    %844 = vmatpush1.msra.mxu0 0.0
    %845 = vmatprep.subr.mxu0 0.0
    %846 = vmatpush1.msra.mxu0 0.0
    %847 = vmatprep.subr.mxu0 0.0
    %848 = vmatpush1.msra.mxu0 0.0
    %849 = vmatprep.subr.mxu0 0.0
    %850 = vmatpush1.msra.mxu0 0.0
    %851 = vmatprep.subr.mxu0 0.0
    %852 = vmatpush1.msra.mxu0 0.0
    %853 = vmatprep.subr.mxu0 0.0
    %854 = vmatpush1.msra.mxu0 0.0
    %855 = vmatprep.subr.mxu0 0.0
    %856 = vmatpush1.msra.mxu0 0.0
    %857 = vmatprep.subr.mxu0 0.0
    %858 = vmatpush1.msra.mxu0 0.0
    %859 = vmatprep.subr.mxu0 0.0
    %860 = vmatpush1.msra.mxu0 0.0
    %861 = vmatprep.subr.mxu0 0.0
    %862 = vmatpush1.msra.mxu0 0.0
    %863 = vmatprep.subr.mxu0 0.0
    %864 = vmatpush1.msra.mxu0 0.0
    %865 = vmatprep.subr.mxu0 0.0
    %866 = vmatpush1.msra.mxu0 0.0
    %867 = vmatprep.subr.mxu0 0.0
    %868 = vmatpush1.msra.mxu0 0.0
    %869 = vmatprep.subr.mxu0 0.0
    %870 = vmatpush1.msra.mxu0 0.0
    %871 = vmatprep.subr.mxu0 0.0
    %872 = vmatpush1.msra.mxu0 0.0
    %873 = vmatprep.subr.mxu0 0.0
    %874 = vmatpush1.msra.mxu0 0.0
    %875 = vmatprep.subr.mxu0 0.0
    %876 = vmatpush1.msra.mxu0 0.0
    %877 = vmatprep.subr.mxu0 0.0
    %878 = vmatpush1.msra.mxu0 0.0
    %879 = vmatprep.subr.mxu0 0.0
    %880 = vmatpush1.msra.mxu0 0.0
    %881 = vmatprep.mubr.f32.mxu0 0.0
    %882 = vmatmul.mubr.f32.gmra.mrb[0].mxu0 %v815
    %v883 = vpop.f32.mrb[0].mxu0
    %v884 = vadd.f32 0.0, %v883
    %v885 = vpop.f32.mrb[0].mxu0
    %v886 = vadd.f32 0.0, %v885
    %887 = vdwg.mxu0
    %888 = vmatprep.subr.mxu0 %v126
    %889 = vmatpush1.msra.mxu0 %v125
    %890 = vmatprep.subr.mxu0 0.0
    %891 = vmatpush1.msra.mxu0 0.0
    %892 = vmatprep.subr.mxu0 0.0
    %893 = vmatpush1.msra.mxu0 0.0
    %894 = vmatprep.subr.mxu0 0.0
    %895 = vmatpush1.msra.mxu0 0.0
    %896 = vmatprep.subr.mxu0 0.0
    %897 = vmatpush1.msra.mxu0 0.0
    %898 = vmatprep.subr.mxu0 0.0
    %899 = vmatpush1.msra.mxu0 0.0
    %900 = vmatprep.subr.mxu0 0.0
    %901 = vmatpush1.msra.mxu0 0.0
    %902 = vmatprep.subr.mxu0 0.0
    %903 = vmatpush1.msra.mxu0 0.0
    %904 = vmatprep.subr.mxu0 0.0
    %905 = vmatpush1.msra.mxu0 0.0
    %906 = vmatprep.subr.mxu0 0.0
    %907 = vmatpush1.msra.mxu0 0.0
    %908 = vmatprep.subr.mxu0 0.0
    %909 = vmatpush1.msra.mxu0 0.0
    %910 = vmatprep.subr.mxu0 0.0
    %911 = vmatpush1.msra.mxu0 0.0
    %912 = vmatprep.subr.mxu0 0.0
    %913 = vmatpush1.msra.mxu0 0.0
    %914 = vmatprep.subr.mxu0 0.0
    %915 = vmatpush1.msra.mxu0 0.0
    %916 = vmatprep.subr.mxu0 0.0
    %917 = vmatpush1.msra.mxu0 0.0
    %918 = vmatprep.subr.mxu0 0.0
    %919 = vmatpush1.msra.mxu0 0.0
    %920 = vmatprep.subr.mxu0 0.0
    %921 = vmatpush1.msra.mxu0 0.0
    %922 = vmatprep.subr.mxu0 0.0
    %923 = vmatpush1.msra.mxu0 0.0
    %924 = vmatprep.subr.mxu0 0.0
    %925 = vmatpush1.msra.mxu0 0.0
    %926 = vmatprep.subr.mxu0 0.0
    %927 = vmatpush1.msra.mxu0 0.0
    %928 = vmatprep.subr.mxu0 0.0
    %929 = vmatpush1.msra.mxu0 0.0
    %930 = vmatprep.subr.mxu0 0.0
    %931 = vmatpush1.msra.mxu0 0.0
    %932 = vmatprep.subr.mxu0 0.0
    %933 = vmatpush1.msra.mxu0 0.0
    %934 = vmatprep.subr.mxu0 0.0
    %935 = vmatpush1.msra.mxu0 0.0
    %936 = vmatprep.subr.mxu0 0.0
    %937 = vmatpush1.msra.mxu0 0.0
    %938 = vmatprep.subr.mxu0 0.0
    %939 = vmatpush1.msra.mxu0 0.0
    %940 = vmatprep.subr.mxu0 0.0
    %941 = vmatpush1.msra.mxu0 0.0
    %942 = vmatprep.subr.mxu0 0.0
    %943 = vmatpush1.msra.mxu0 0.0
    %944 = vmatprep.subr.mxu0 0.0
    %945 = vmatpush1.msra.mxu0 0.0
    %946 = vmatprep.subr.mxu0 0.0
    %947 = vmatpush1.msra.mxu0 0.0
    %948 = vmatprep.subr.mxu0 0.0
    %949 = vmatpush1.msra.mxu0 0.0
    %950 = vmatprep.subr.mxu0 0.0
    %951 = vmatpush1.msra.mxu0 0.0
    %952 = vmatprep.mubr.f32.mxu0 0.0
    %953 = vmatmul.mubr.f32.gmra.mrb[0].mxu0 %v815
    %v954 = vpop.f32.mrb[0].mxu0
    %v955 = vadd.f32 0.0, %v954
    %v956 = vpop.f32.mrb[0].mxu0
    %v957 = vadd.f32 0.0, %v956
    %958 = vdwg.mxu0
    %v959 = vmul.f32 %v123, %v123
    %v960 = vmul.f32 %v124, %v124
    %v961 = vmul.f32 %v125, %v125
    %v962 = vmul.f32 %v126, %v126
    %v963 = vadd.f32 %v959, %v960
    %v964 = vadd.f32 %v963, %v961
    %v965 = vadd.f32 %v964, %v962
    %966 = vadd.xlane.f32.xlu0 %v965
    %v967 = vpop.xlane.xlu0 %966
    %v968 = vrsqrt.pop %v967
    %v969 = vmul.f32 %v967, %v968
    %vm970 = vcmp.eq.f32.partialorder %v967, inf
    %v971 = vsel %vm970, %v967, %v969
    %vm972 = vcmp.eq.f32.partialorder %v967, 0.0
    %v973 = vand.u32 %v967, 2147483648
    %v974 = vsel %vm972, %v973, %v971
    %v975 = vmul.f32 %v739, %v739
    %v976 = vmul.f32 %v741, %v741
    %v977 = vmul.f32 %v810, %v810
    %v978 = vmul.f32 %v812, %v812
    %v979 = vadd.f32 %v975, %v976
    %v980 = vadd.f32 %v979, %v977
    %v981 = vadd.f32 %v980, %v978
    %982 = vadd.xlane.f32.xlu0 %v981
    %v983 = vpop.xlane.xlu0 %982
    %v984 = vmax.f32 %v983, 1e-30
    %v985 = vrsqrt.pop %v984
    %v986 = vmul.f32 %v974, %v985
    %v987 = vmul.f32 %v127, %v127
    %v988 = vmul.f32 %v128, %v128
    %v989 = vmul.f32 %v129, %v129
    %v990 = vmul.f32 %v130, %v130
    %v991 = vadd.f32 %v987, %v988
    %v992 = vadd.f32 %v991, %v989
    %v993 = vadd.f32 %v992, %v990
    %994 = vadd.xlane.f32.xlu0 %v993
    %v995 = vpop.xlane.xlu0 %994
    %v996 = vrsqrt.pop %v995
    %v997 = vmul.f32 %v995, %v996
    %vm998 = vcmp.eq.f32.partialorder %v995, inf
    %v999 = vsel %vm998, %v995, %v997
    %vm1000 = vcmp.eq.f32.partialorder %v995, 0.0
    %v1001 = vand.u32 %v995, 2147483648
    %v1002 = vsel %vm1000, %v1001, %v999
    %v1003 = vmul.f32 %v884, %v884
    %v1004 = vmul.f32 %v886, %v886
    %v1005 = vmul.f32 %v955, %v955
    %v1006 = vmul.f32 %v957, %v957
    %v1007 = vadd.f32 %v1003, %v1004
    %v1008 = vadd.f32 %v1007, %v1005
    %v1009 = vadd.f32 %v1008, %v1006
    %1010 = vadd.xlane.f32.xlu0 %v1009
    %v1011 = vpop.xlane.xlu0 %1010
    %v1012 = vmax.f32 %v1011, 1e-30
    %v1013 = vrsqrt.pop %v1012
    %v1014 = vmul.f32 %v1002, %v1013
    %v1015 = vmul.f32 %v986, %v739
    %v1016 = vmul.f32 %v986, %v741
    %v1017 = vmul.f32 %v986, %v810
    %v1018 = vmul.f32 %v986, %v812
    %v1019 = vadd.f32 %v123, %v1015
    %v1020 = vadd.f32 %v124, %v1016
    %v1021 = vadd.f32 %v125, %v1017
    %v1022 = vadd.f32 %v126, %v1018
    %v1023 = vmul.f32 %v1014, %v884
    %v1024 = vmul.f32 %v1014, %v886
    %v1025 = vmul.f32 %v1014, %v955
    %v1026 = vmul.f32 %v1014, %v957
    %v1027 = vadd.f32 %v127, %v1023
    %v1028 = vadd.f32 %v128, %v1024
    %v1029 = vadd.f32 %v129, %v1025
    %v1030 = vadd.f32 %v130, %v1026
    %v1032 = vlaneseq
    %v1033 = vshrl.u32 %v1032, 7
    %v1034 = vsub.s32 0, %v1033
    %v1035 = vrot.slane %v387, %v1034
    %v1036 = vlaneseq
    %v1037 = vshrl.u32 %v1036, 7
    %v1038 = vsub.s32 1, %v1037
    %v1039 = vrot.slane %v387, %v1038
    %v1040 = vlaneseq
    %v1041 = vshrl.u32 %v1040, 7
    %v1042 = vsub.s32 2, %v1041
    %v1043 = vrot.slane %v387, %v1042
    %v1044 = vlaneseq
    %v1045 = vshrl.u32 %v1044, 7
    %v1046 = vsub.s32 3, %v1045
    %v1047 = vrot.slane %v387, %v1046
    %1052 = vmatprep.subr.mxu0 %v132
    %1053 = vmatpush1.msra.mxu0 %v131
    %1054 = vmatprep.subr.mxu0 %v136
    %1055 = vmatpush1.msra.mxu0 %v135
    %1056 = vmatprep.subr.mxu0 %v140
    %1057 = vmatpush1.msra.mxu0 %v139
    %1058 = vmatprep.subr.mxu0 %v144
    %1059 = vmatpush1.msra.mxu0 %v143
    %1060 = vmatprep.subr.mxu0 %v148
    %1061 = vmatpush1.msra.mxu0 %v147
    %1062 = vmatprep.subr.mxu0 %v152
    %1063 = vmatpush1.msra.mxu0 %v151
    %1064 = vmatprep.subr.mxu0 %v156
    %1065 = vmatpush1.msra.mxu0 %v155
    %1066 = vmatprep.subr.mxu0 %v160
    %1067 = vmatpush1.msra.mxu0 %v159
    %1068 = vmatprep.subr.mxu0 %v164
    %1069 = vmatpush1.msra.mxu0 %v163
    %1070 = vmatprep.subr.mxu0 %v168
    %1071 = vmatpush1.msra.mxu0 %v167
    %1072 = vmatprep.subr.mxu0 %v172
    %1073 = vmatpush1.msra.mxu0 %v171
    %1074 = vmatprep.subr.mxu0 %v176
    %1075 = vmatpush1.msra.mxu0 %v175
    %1076 = vmatprep.subr.mxu0 %v180
    %1077 = vmatpush1.msra.mxu0 %v179
    %1078 = vmatprep.subr.mxu0 %v184
    %1079 = vmatpush1.msra.mxu0 %v183
    %1080 = vmatprep.subr.mxu0 %v188
    %1081 = vmatpush1.msra.mxu0 %v187
    %1082 = vmatprep.subr.mxu0 %v192
    %1083 = vmatpush1.msra.mxu0 %v191
    %1084 = vmatprep.subr.mxu0 %v196
    %1085 = vmatpush1.msra.mxu0 %v195
    %1086 = vmatprep.subr.mxu0 %v200
    %1087 = vmatpush1.msra.mxu0 %v199
    %1088 = vmatprep.subr.mxu0 %v204
    %1089 = vmatpush1.msra.mxu0 %v203
    %1090 = vmatprep.subr.mxu0 %v208
    %1091 = vmatpush1.msra.mxu0 %v207
    %1092 = vmatprep.subr.mxu0 %v212
    %1093 = vmatpush1.msra.mxu0 %v211
    %1094 = vmatprep.subr.mxu0 %v216
    %1095 = vmatpush1.msra.mxu0 %v215
    %1096 = vmatprep.subr.mxu0 %v220
    %1097 = vmatpush1.msra.mxu0 %v219
    %1098 = vmatprep.subr.mxu0 %v224
    %1099 = vmatpush1.msra.mxu0 %v223
    %1100 = vmatprep.subr.mxu0 %v228
    %1101 = vmatpush1.msra.mxu0 %v227
    %1102 = vmatprep.subr.mxu0 %v232
    %1103 = vmatpush1.msra.mxu0 %v231
    %1104 = vmatprep.subr.mxu0 %v236
    %1105 = vmatpush1.msra.mxu0 %v235
    %1106 = vmatprep.subr.mxu0 %v240
    %1107 = vmatpush1.msra.mxu0 %v239
    %1108 = vmatprep.subr.mxu0 %v244
    %1109 = vmatpush1.msra.mxu0 %v243
    %1110 = vmatprep.subr.mxu0 %v248
    %1111 = vmatpush1.msra.mxu0 %v247
    %1112 = vmatprep.subr.mxu0 %v252
    %1113 = vmatpush1.msra.mxu0 %v251
    %1114 = vmatprep.subr.mxu0 %v256
    %1115 = vmatpush1.msra.mxu0 %v255
    %1116 = vmatprep.mubr.f32.mxu0 %v1020
    %1117 = vmatmul.mubr.f32.gmra.mrb[0].mxu0 %v1019
    %v1118 = vpop.f32.mrb[0].mxu0
    %v1119 = vadd.f32 %v1035, %v1118
    %v1120 = vpop.f32.mrb[0].mxu0
    %v1121 = vadd.f32 %v1039, %v1120
    %1122 = vmatprep.mubr.f32.mxu0 %v1028
    %1123 = vmatmul.mubr.f32.gmra.mrb[0].mxu0 %v1027
    %v1124 = vpop.f32.mrb[0].mxu0
    %v1125 = vadd.f32 %v1035, %v1124
    %v1126 = vpop.f32.mrb[0].mxu0
    %v1127 = vadd.f32 %v1039, %v1126
    %1128 = vdwg.mxu0
    %1129 = vmatprep.subr.mxu0 %v260
    %1130 = vmatpush1.msra.mxu0 %v259
    %1131 = vmatprep.subr.mxu0 %v264
    %1132 = vmatpush1.msra.mxu0 %v263
    %1133 = vmatprep.subr.mxu0 %v268
    %1134 = vmatpush1.msra.mxu0 %v267
    %1135 = vmatprep.subr.mxu0 %v272
    %1136 = vmatpush1.msra.mxu0 %v271
    %1137 = vmatprep.subr.mxu0 %v276
    %1138 = vmatpush1.msra.mxu0 %v275
    %1139 = vmatprep.subr.mxu0 %v280
    %1140 = vmatpush1.msra.mxu0 %v279
    %1141 = vmatprep.subr.mxu0 %v284
    %1142 = vmatpush1.msra.mxu0 %v283
    %1143 = vmatprep.subr.mxu0 %v288
    %1144 = vmatpush1.msra.mxu0 %v287
    %1145 = vmatprep.subr.mxu0 %v292
    %1146 = vmatpush1.msra.mxu0 %v291
    %1147 = vmatprep.subr.mxu0 %v296
    %1148 = vmatpush1.msra.mxu0 %v295
    %1149 = vmatprep.subr.mxu0 %v300
    %1150 = vmatpush1.msra.mxu0 %v299
    %1151 = vmatprep.subr.mxu0 %v304
    %1152 = vmatpush1.msra.mxu0 %v303
    %1153 = vmatprep.subr.mxu0 %v308
    %1154 = vmatpush1.msra.mxu0 %v307
    %1155 = vmatprep.subr.mxu0 %v312
    %1156 = vmatpush1.msra.mxu0 %v311
    %1157 = vmatprep.subr.mxu0 %v316
    %1158 = vmatpush1.msra.mxu0 %v315
    %1159 = vmatprep.subr.mxu0 %v320
    %1160 = vmatpush1.msra.mxu0 %v319
    %1161 = vmatprep.subr.mxu0 %v324
    %1162 = vmatpush1.msra.mxu0 %v323
    %1163 = vmatprep.subr.mxu0 %v328
    %1164 = vmatpush1.msra.mxu0 %v327
    %1165 = vmatprep.subr.mxu0 %v332
    %1166 = vmatpush1.msra.mxu0 %v331
    %1167 = vmatprep.subr.mxu0 %v336
    %1168 = vmatpush1.msra.mxu0 %v335
    %1169 = vmatprep.subr.mxu0 %v340
    %1170 = vmatpush1.msra.mxu0 %v339
    %1171 = vmatprep.subr.mxu0 %v344
    %1172 = vmatpush1.msra.mxu0 %v343
    %1173 = vmatprep.subr.mxu0 %v348
    %1174 = vmatpush1.msra.mxu0 %v347
    %1175 = vmatprep.subr.mxu0 %v352
    %1176 = vmatpush1.msra.mxu0 %v351
    %1177 = vmatprep.subr.mxu0 %v356
    %1178 = vmatpush1.msra.mxu0 %v355
    %1179 = vmatprep.subr.mxu0 %v360
    %1180 = vmatpush1.msra.mxu0 %v359
    %1181 = vmatprep.subr.mxu0 %v364
    %1182 = vmatpush1.msra.mxu0 %v363
    %1183 = vmatprep.subr.mxu0 %v368
    %1184 = vmatpush1.msra.mxu0 %v367
    %1185 = vmatprep.subr.mxu0 %v372
    %1186 = vmatpush1.msra.mxu0 %v371
    %1187 = vmatprep.subr.mxu0 %v376
    %1188 = vmatpush1.msra.mxu0 %v375
    %1189 = vmatprep.subr.mxu0 %v380
    %1190 = vmatpush1.msra.mxu0 %v379
    %1191 = vmatprep.subr.mxu0 %v384
    %1192 = vmatpush1.msra.mxu0 %v383
    %1193 = vmatprep.mubr.f32.mxu0 %v1022
    %1194 = vmatmul.mubr.f32.gmra.mrb[0].mxu0 %v1021
    %v1195 = vpop.f32.mrb[0].mxu0
    %v1196 = vadd.f32 %v1119, %v1195
    %v1197 = vpop.f32.mrb[0].mxu0
    %v1198 = vadd.f32 %v1121, %v1197
    %1199 = vmatprep.mubr.f32.mxu0 %v1030
    %1200 = vmatmul.mubr.f32.gmra.mrb[0].mxu0 %v1029
    %v1201 = vpop.f32.mrb[0].mxu0
    %v1202 = vadd.f32 %v1125, %v1201
    %v1203 = vpop.f32.mrb[0].mxu0
    %v1204 = vadd.f32 %v1127, %v1203
    %1205 = vdwg.mxu0
    %1206 = vmatprep.subr.mxu0 %v134
    %1207 = vmatpush1.msra.mxu0 %v133
    %1208 = vmatprep.subr.mxu0 %v138
    %1209 = vmatpush1.msra.mxu0 %v137
    %1210 = vmatprep.subr.mxu0 %v142
    %1211 = vmatpush1.msra.mxu0 %v141
    %1212 = vmatprep.subr.mxu0 %v146
    %1213 = vmatpush1.msra.mxu0 %v145
    %1214 = vmatprep.subr.mxu0 %v150
    %1215 = vmatpush1.msra.mxu0 %v149
    %1216 = vmatprep.subr.mxu0 %v154
    %1217 = vmatpush1.msra.mxu0 %v153
    %1218 = vmatprep.subr.mxu0 %v158
    %1219 = vmatpush1.msra.mxu0 %v157
    %1220 = vmatprep.subr.mxu0 %v162
    %1221 = vmatpush1.msra.mxu0 %v161
    %1222 = vmatprep.subr.mxu0 %v166
    %1223 = vmatpush1.msra.mxu0 %v165
    %1224 = vmatprep.subr.mxu0 %v170
    %1225 = vmatpush1.msra.mxu0 %v169
    %1226 = vmatprep.subr.mxu0 %v174
    %1227 = vmatpush1.msra.mxu0 %v173
    %1228 = vmatprep.subr.mxu0 %v178
    %1229 = vmatpush1.msra.mxu0 %v177
    %1230 = vmatprep.subr.mxu0 %v182
    %1231 = vmatpush1.msra.mxu0 %v181
    %1232 = vmatprep.subr.mxu0 %v186
    %1233 = vmatpush1.msra.mxu0 %v185
    %1234 = vmatprep.subr.mxu0 %v190
    %1235 = vmatpush1.msra.mxu0 %v189
    %1236 = vmatprep.subr.mxu0 %v194
    %1237 = vmatpush1.msra.mxu0 %v193
    %1238 = vmatprep.subr.mxu0 %v198
    %1239 = vmatpush1.msra.mxu0 %v197
    %1240 = vmatprep.subr.mxu0 %v202
    %1241 = vmatpush1.msra.mxu0 %v201
    %1242 = vmatprep.subr.mxu0 %v206
    %1243 = vmatpush1.msra.mxu0 %v205
    %1244 = vmatprep.subr.mxu0 %v210
    %1245 = vmatpush1.msra.mxu0 %v209
    %1246 = vmatprep.subr.mxu0 %v214
    %1247 = vmatpush1.msra.mxu0 %v213
    %1248 = vmatprep.subr.mxu0 %v218
    %1249 = vmatpush1.msra.mxu0 %v217
    %1250 = vmatprep.subr.mxu0 %v222
    %1251 = vmatpush1.msra.mxu0 %v221
    %1252 = vmatprep.subr.mxu0 %v226
    %1253 = vmatpush1.msra.mxu0 %v225
    %1254 = vmatprep.subr.mxu0 %v230
    %1255 = vmatpush1.msra.mxu0 %v229
    %1256 = vmatprep.subr.mxu0 %v234
    %1257 = vmatpush1.msra.mxu0 %v233
    %1258 = vmatprep.subr.mxu0 %v238
    %1259 = vmatpush1.msra.mxu0 %v237
    %1260 = vmatprep.subr.mxu0 %v242
    %1261 = vmatpush1.msra.mxu0 %v241
    %1262 = vmatprep.subr.mxu0 %v246
    %1263 = vmatpush1.msra.mxu0 %v245
    %1264 = vmatprep.subr.mxu0 %v250
    %1265 = vmatpush1.msra.mxu0 %v249
    %1266 = vmatprep.subr.mxu0 %v254
    %1267 = vmatpush1.msra.mxu0 %v253
    %1268 = vmatprep.subr.mxu0 %v258
    %1269 = vmatpush1.msra.mxu0 %v257
    %1270 = vmatprep.mubr.f32.mxu0 %v1020
    %1271 = vmatmul.mubr.f32.gmra.mrb[0].mxu0 %v1019
    %v1272 = vpop.f32.mrb[0].mxu0
    %v1273 = vadd.f32 %v1043, %v1272
    %v1274 = vpop.f32.mrb[0].mxu0
    %v1275 = vadd.f32 %v1047, %v1274
    %1276 = vmatprep.mubr.f32.mxu0 %v1028
    %1277 = vmatmul.mubr.f32.gmra.mrb[0].mxu0 %v1027
    %v1278 = vpop.f32.mrb[0].mxu0
    %v1279 = vadd.f32 %v1043, %v1278
    %v1280 = vpop.f32.mrb[0].mxu0
    %v1281 = vadd.f32 %v1047, %v1280
    %1282 = vdwg.mxu0
    %1283 = vmatprep.subr.mxu0 %v262
    %1284 = vmatpush1.msra.mxu0 %v261
    %1285 = vmatprep.subr.mxu0 %v266
    %1286 = vmatpush1.msra.mxu0 %v265
    %1287 = vmatprep.subr.mxu0 %v270
    %1288 = vmatpush1.msra.mxu0 %v269
    %1289 = vmatprep.subr.mxu0 %v274
    %1290 = vmatpush1.msra.mxu0 %v273
    %1291 = vmatprep.subr.mxu0 %v278
    %1292 = vmatpush1.msra.mxu0 %v277
    %1293 = vmatprep.subr.mxu0 %v282
    %1294 = vmatpush1.msra.mxu0 %v281
    %1295 = vmatprep.subr.mxu0 %v286
    %1296 = vmatpush1.msra.mxu0 %v285
    %1297 = vmatprep.subr.mxu0 %v290
    %1298 = vmatpush1.msra.mxu0 %v289
    %1299 = vmatprep.subr.mxu0 %v294
    %1300 = vmatpush1.msra.mxu0 %v293
    %1301 = vmatprep.subr.mxu0 %v298
    %1302 = vmatpush1.msra.mxu0 %v297
    %1303 = vmatprep.subr.mxu0 %v302
    %1304 = vmatpush1.msra.mxu0 %v301
    %1305 = vmatprep.subr.mxu0 %v306
    %1306 = vmatpush1.msra.mxu0 %v305
    %1307 = vmatprep.subr.mxu0 %v310
    %1308 = vmatpush1.msra.mxu0 %v309
    %1309 = vmatprep.subr.mxu0 %v314
    %1310 = vmatpush1.msra.mxu0 %v313
    %1311 = vmatprep.subr.mxu0 %v318
    %1312 = vmatpush1.msra.mxu0 %v317
    %1313 = vmatprep.subr.mxu0 %v322
    %1314 = vmatpush1.msra.mxu0 %v321
    %1315 = vmatprep.subr.mxu0 %v326
    %1316 = vmatpush1.msra.mxu0 %v325
    %1317 = vmatprep.subr.mxu0 %v330
    %1318 = vmatpush1.msra.mxu0 %v329
    %1319 = vmatprep.subr.mxu0 %v334
    %1320 = vmatpush1.msra.mxu0 %v333
    %1321 = vmatprep.subr.mxu0 %v338
    %1322 = vmatpush1.msra.mxu0 %v337
    %1323 = vmatprep.subr.mxu0 %v342
    %1324 = vmatpush1.msra.mxu0 %v341
    %1325 = vmatprep.subr.mxu0 %v346
    %1326 = vmatpush1.msra.mxu0 %v345
    %1327 = vmatprep.subr.mxu0 %v350
    %1328 = vmatpush1.msra.mxu0 %v349
    %1329 = vmatprep.subr.mxu0 %v354
    %1330 = vmatpush1.msra.mxu0 %v353
    %1331 = vmatprep.subr.mxu0 %v358
    %1332 = vmatpush1.msra.mxu0 %v357
    %1333 = vmatprep.subr.mxu0 %v362
    %1334 = vmatpush1.msra.mxu0 %v361
    %1335 = vmatprep.subr.mxu0 %v366
    %1336 = vmatpush1.msra.mxu0 %v365
    %1337 = vmatprep.subr.mxu0 %v370
    %1338 = vmatpush1.msra.mxu0 %v369
    %1339 = vmatprep.subr.mxu0 %v374
    %1340 = vmatpush1.msra.mxu0 %v373
    %1341 = vmatprep.subr.mxu0 %v378
    %1342 = vmatpush1.msra.mxu0 %v377
    %1343 = vmatprep.subr.mxu0 %v382
    %1344 = vmatpush1.msra.mxu0 %v381
    %1345 = vmatprep.subr.mxu0 %v386
    %1346 = vmatpush1.msra.mxu0 %v385
    %1347 = vmatprep.mubr.f32.mxu0 %v1022
    %1348 = vmatmul.mubr.f32.gmra.mrb[0].mxu0 %v1021
    %v1349 = vpop.f32.mrb[0].mxu0
    %v1350 = vadd.f32 %v1273, %v1349
    %v1351 = vpop.f32.mrb[0].mxu0
    %v1352 = vadd.f32 %v1275, %v1351
    %1353 = vmatprep.mubr.f32.mxu0 %v1030
    %1354 = vmatmul.mubr.f32.gmra.mrb[0].mxu0 %v1029
    %v1355 = vpop.f32.mrb[0].mxu0
    %v1356 = vadd.f32 %v1279, %v1355
    %v1357 = vpop.f32.mrb[0].mxu0
    %v1358 = vadd.f32 %v1281, %v1357
    %1359 = vdwg.mxu0
    %v1360 = vmax.f32 %v1196, 0.0
    %v1361 = vmax.f32 %v1198, 0.0
    %v1362 = vmax.f32 %v1350, 0.0
    %v1363 = vmax.f32 %v1352, 0.0
    %v1364 = vmax.f32 %v1202, 0.0
    %v1365 = vmax.f32 %v1204, 0.0
    %v1366 = vmax.f32 %v1356, 0.0
    %v1367 = vmax.f32 %v1358, 0.0
    %v1368 = vmul.f32 %v1360, %v1360
    %v1369 = vmul.f32 %v1361, %v1361
    %v1370 = vmul.f32 %v1362, %v1362
    %v1371 = vmul.f32 %v1363, %v1363
    %v1372 = vmul.f32 %v1364, %v1364
    %v1373 = vmul.f32 %v1365, %v1365
    %v1374 = vmul.f32 %v1366, %v1366
    %v1375 = vmul.f32 %v1367, %v1367
    %v1376 = vadd.f32 %v1368, %v1369
    %v1377 = vadd.f32 %v1376, %v1370
    %v1378 = vadd.f32 %v1377, %v1371
    %1379 = vadd.xlane.f32.xlu0 %v1378
    %v1380 = vpop.xlane.xlu0 %1379
    %v1381 = vadd.f32 %v1372, %v1373
    %v1382 = vadd.f32 %v1381, %v1374
    %v1383 = vadd.f32 %v1382, %v1375
    %1384 = vadd.xlane.f32.xlu0 %v1383
    %v1385 = vpop.xlane.xlu0 %1384
    %v1386 = vmax.f32 %v1380, 1e-24
    %v1387 = vmax.f32 %v1385, 1e-24
    %v1388 = vrsqrt.pop %v1386
    %v1389 = vrsqrt.pop %v1387
    %v1390 = vmul.f32 %v1360, %v1388
    %v1391 = vmul.f32 %v1361, %v1388
    %v1392 = vmul.f32 %v1362, %v1388
    %v1393 = vmul.f32 %v1363, %v1388
    %v1394 = vmul.f32 %v1364, %v1389
    %v1395 = vmul.f32 %v1365, %v1389
    %v1396 = vmul.f32 %v1366, %v1389
    %v1397 = vmul.f32 %v1367, %v1389
    %1398 = vmatprep.subr.mxu0 %v1395
    %1399 = vmatpush1.xpose.msra.mxu0 %v1394
    %1400 = vmatprep.subr.mxu0 0.0
    %1401 = vmatpush1.xpose.msra.mxu0 0.0
    %1402 = vmatprep.subr.mxu0 0.0
    %1403 = vmatpush1.xpose.msra.mxu0 0.0
    %1404 = vmatprep.subr.mxu0 0.0
    %1405 = vmatpush1.xpose.msra.mxu0 0.0
    %1406 = vmatprep.subr.mxu0 0.0
    %1407 = vmatpush1.xpose.msra.mxu0 0.0
    %1408 = vmatprep.subr.mxu0 0.0
    %1409 = vmatpush1.xpose.msra.mxu0 0.0
    %1410 = vmatprep.subr.mxu0 0.0
    %1411 = vmatpush1.xpose.msra.mxu0 0.0
    %1412 = vmatprep.subr.mxu0 0.0
    %1413 = vmatpush1.xpose.msra.mxu0 0.0
    %1414 = vmatprep.subr.mxu0 0.0
    %1415 = vmatpush1.xpose.msra.mxu0 0.0
    %1416 = vmatprep.subr.mxu0 0.0
    %1417 = vmatpush1.xpose.msra.mxu0 0.0
    %1418 = vmatprep.subr.mxu0 0.0
    %1419 = vmatpush1.xpose.msra.mxu0 0.0
    %1420 = vmatprep.subr.mxu0 0.0
    %1421 = vmatpush1.xpose.msra.mxu0 0.0
    %1422 = vmatprep.subr.mxu0 0.0
    %1423 = vmatpush1.xpose.msra.mxu0 0.0
    %1424 = vmatprep.subr.mxu0 0.0
    %1425 = vmatpush1.xpose.msra.mxu0 0.0
    %1426 = vmatprep.subr.mxu0 0.0
    %1427 = vmatpush1.xpose.msra.mxu0 0.0
    %1428 = vmatprep.subr.mxu0 0.0
    %1429 = vmatpush1.xpose.msra.mxu0 0.0
    %1430 = vmatprep.subr.mxu0 0.0
    %1431 = vmatpush1.xpose.msra.mxu0 0.0
    %1432 = vmatprep.subr.mxu0 0.0
    %1433 = vmatpush1.xpose.msra.mxu0 0.0
    %1434 = vmatprep.subr.mxu0 0.0
    %1435 = vmatpush1.xpose.msra.mxu0 0.0
    %1436 = vmatprep.subr.mxu0 0.0
    %1437 = vmatpush1.xpose.msra.mxu0 0.0
    %1438 = vmatprep.subr.mxu0 0.0
    %1439 = vmatpush1.xpose.msra.mxu0 0.0
    %1440 = vmatprep.subr.mxu0 0.0
    %1441 = vmatpush1.xpose.msra.mxu0 0.0
    %1442 = vmatprep.subr.mxu0 0.0
    %1443 = vmatpush1.xpose.msra.mxu0 0.0
    %1444 = vmatprep.subr.mxu0 0.0
    %1445 = vmatpush1.xpose.msra.mxu0 0.0
    %1446 = vmatprep.subr.mxu0 0.0
    %1447 = vmatpush1.xpose.msra.mxu0 0.0
    %1448 = vmatprep.subr.mxu0 0.0
    %1449 = vmatpush1.xpose.msra.mxu0 0.0
    %1450 = vmatprep.subr.mxu0 0.0
    %1451 = vmatpush1.xpose.msra.mxu0 0.0
    %1452 = vmatprep.subr.mxu0 0.0
    %1453 = vmatpush1.xpose.msra.mxu0 0.0
    %1454 = vmatprep.subr.mxu0 0.0
    %1455 = vmatpush1.xpose.msra.mxu0 0.0
    %1456 = vmatprep.subr.mxu0 0.0
    %1457 = vmatpush1.xpose.msra.mxu0 0.0
    %1458 = vmatprep.subr.mxu0 0.0
    %1459 = vmatpush1.xpose.msra.mxu0 0.0
    %1460 = vmatprep.subr.mxu0 0.0
    %1461 = vmatpush1.xpose.msra.mxu0 0.0
    %1462 = vmatprep.mubr.f32.mxu0 %v1391
    %1463 = vmatmul.mubr.f32.gmra.mrb[0].mxu0 %v1390
    %v1464 = vpop.f32.mrb[0].mxu0
    %v1465 = vadd.f32 0.0, %v1464
    %v1466 = vpop.f32.mrb[0].mxu0
    %1467 = vdwg.mxu0
    %1468 = vmatprep.subr.mxu0 %v1397
    %1469 = vmatpush1.xpose.msra.mxu0 %v1396
    %1470 = vmatprep.subr.mxu0 0.0
    %1471 = vmatpush1.xpose.msra.mxu0 0.0
    %1472 = vmatprep.subr.mxu0 0.0
    %1473 = vmatpush1.xpose.msra.mxu0 0.0
    %1474 = vmatprep.subr.mxu0 0.0
    %1475 = vmatpush1.xpose.msra.mxu0 0.0
    %1476 = vmatprep.subr.mxu0 0.0
    %1477 = vmatpush1.xpose.msra.mxu0 0.0
    %1478 = vmatprep.subr.mxu0 0.0
    %1479 = vmatpush1.xpose.msra.mxu0 0.0
    %1480 = vmatprep.subr.mxu0 0.0
    %1481 = vmatpush1.xpose.msra.mxu0 0.0
    %1482 = vmatprep.subr.mxu0 0.0
    %1483 = vmatpush1.xpose.msra.mxu0 0.0
    %1484 = vmatprep.subr.mxu0 0.0
    %1485 = vmatpush1.xpose.msra.mxu0 0.0
    %1486 = vmatprep.subr.mxu0 0.0
    %1487 = vmatpush1.xpose.msra.mxu0 0.0
    %1488 = vmatprep.subr.mxu0 0.0
    %1489 = vmatpush1.xpose.msra.mxu0 0.0
    %1490 = vmatprep.subr.mxu0 0.0
    %1491 = vmatpush1.xpose.msra.mxu0 0.0
    %1492 = vmatprep.subr.mxu0 0.0
    %1493 = vmatpush1.xpose.msra.mxu0 0.0
    %1494 = vmatprep.subr.mxu0 0.0
    %1495 = vmatpush1.xpose.msra.mxu0 0.0
    %1496 = vmatprep.subr.mxu0 0.0
    %1497 = vmatpush1.xpose.msra.mxu0 0.0
    %1498 = vmatprep.subr.mxu0 0.0
    %1499 = vmatpush1.xpose.msra.mxu0 0.0
    %1500 = vmatprep.subr.mxu0 0.0
    %1501 = vmatpush1.xpose.msra.mxu0 0.0
    %1502 = vmatprep.subr.mxu0 0.0
    %1503 = vmatpush1.xpose.msra.mxu0 0.0
    %1504 = vmatprep.subr.mxu0 0.0
    %1505 = vmatpush1.xpose.msra.mxu0 0.0
    %1506 = vmatprep.subr.mxu0 0.0
    %1507 = vmatpush1.xpose.msra.mxu0 0.0
    %1508 = vmatprep.subr.mxu0 0.0
    %1509 = vmatpush1.xpose.msra.mxu0 0.0
    %1510 = vmatprep.subr.mxu0 0.0
    %1511 = vmatpush1.xpose.msra.mxu0 0.0
    %1512 = vmatprep.subr.mxu0 0.0
    %1513 = vmatpush1.xpose.msra.mxu0 0.0
    %1514 = vmatprep.subr.mxu0 0.0
    %1515 = vmatpush1.xpose.msra.mxu0 0.0
    %1516 = vmatprep.subr.mxu0 0.0
    %1517 = vmatpush1.xpose.msra.mxu0 0.0
    %1518 = vmatprep.subr.mxu0 0.0
    %1519 = vmatpush1.xpose.msra.mxu0 0.0
    %1520 = vmatprep.subr.mxu0 0.0
    %1521 = vmatpush1.xpose.msra.mxu0 0.0
    %1522 = vmatprep.subr.mxu0 0.0
    %1523 = vmatpush1.xpose.msra.mxu0 0.0
    %1524 = vmatprep.subr.mxu0 0.0
    %1525 = vmatpush1.xpose.msra.mxu0 0.0
    %1526 = vmatprep.subr.mxu0 0.0
    %1527 = vmatpush1.xpose.msra.mxu0 0.0
    %1528 = vmatprep.subr.mxu0 0.0
    %1529 = vmatpush1.xpose.msra.mxu0 0.0
    %1530 = vmatprep.subr.mxu0 0.0
    %1531 = vmatpush1.xpose.msra.mxu0 0.0
    %1532 = vmatprep.mubr.f32.mxu0 %v1393
    %1533 = vmatmul.mubr.f32.gmra.mrb[0].mxu0 %v1392
    %v1534 = vpop.f32.mrb[0].mxu0
    %v1535 = vadd.f32 %v1465, %v1534
    %v1536 = vpop.f32.mrb[0].mxu0
    %1537 = vdwg.mxu0
    %v1538 = vld [vmem:[%s10] sm:$0xff]
    %v1539 = vld [vmem:[%s11] sm:$0xff]
    %v1541 = vsel %vm668, %v1535, 0
    %1543 = vmatprep.subr.mxu0 0.0
    %1544 = vmatpush1.msra.mxu0 %v1539
    %1545 = vmatprep.subr.mxu0 0.0
    %1546 = vmatpush1.msra.mxu0 0.0
    %1547 = vmatprep.subr.mxu0 0.0
    %1548 = vmatpush1.msra.mxu0 0.0
    %1549 = vmatprep.subr.mxu0 0.0
    %1550 = vmatpush1.msra.mxu0 0.0
    %1551 = vmatprep.subr.mxu0 0.0
    %1552 = vmatpush1.msra.mxu0 0.0
    %1553 = vmatprep.subr.mxu0 0.0
    %1554 = vmatpush1.msra.mxu0 0.0
    %1555 = vmatprep.subr.mxu0 0.0
    %1556 = vmatpush1.msra.mxu0 0.0
    %1557 = vmatprep.subr.mxu0 0.0
    %1558 = vmatpush1.msra.mxu0 0.0
    %1559 = vmatprep.subr.mxu0 0.0
    %1560 = vmatpush1.msra.mxu0 0.0
    %1561 = vmatprep.subr.mxu0 0.0
    %1562 = vmatpush1.msra.mxu0 0.0
    %1563 = vmatprep.subr.mxu0 0.0
    %1564 = vmatpush1.msra.mxu0 0.0
    %1565 = vmatprep.subr.mxu0 0.0
    %1566 = vmatpush1.msra.mxu0 0.0
    %1567 = vmatprep.subr.mxu0 0.0
    %1568 = vmatpush1.msra.mxu0 0.0
    %1569 = vmatprep.subr.mxu0 0.0
    %1570 = vmatpush1.msra.mxu0 0.0
    %1571 = vmatprep.subr.mxu0 0.0
    %1572 = vmatpush1.msra.mxu0 0.0
    %1573 = vmatprep.subr.mxu0 0.0
    %1574 = vmatpush1.msra.mxu0 0.0
    %1575 = vmatprep.subr.mxu0 0.0
    %1576 = vmatpush1.msra.mxu0 0.0
    %1577 = vmatprep.subr.mxu0 0.0
    %1578 = vmatpush1.msra.mxu0 0.0
    %1579 = vmatprep.subr.mxu0 0.0
    %1580 = vmatpush1.msra.mxu0 0.0
    %1581 = vmatprep.subr.mxu0 0.0
    %1582 = vmatpush1.msra.mxu0 0.0
    %1583 = vmatprep.subr.mxu0 0.0
    %1584 = vmatpush1.msra.mxu0 0.0
    %1585 = vmatprep.subr.mxu0 0.0
    %1586 = vmatpush1.msra.mxu0 0.0
    %1587 = vmatprep.subr.mxu0 0.0
    %1588 = vmatpush1.msra.mxu0 0.0
    %1589 = vmatprep.subr.mxu0 0.0
    %1590 = vmatpush1.msra.mxu0 0.0
    %1591 = vmatprep.subr.mxu0 0.0
    %1592 = vmatpush1.msra.mxu0 0.0
    %1593 = vmatprep.subr.mxu0 0.0
    %1594 = vmatpush1.msra.mxu0 0.0
    %1595 = vmatprep.subr.mxu0 0.0
    %1596 = vmatpush1.msra.mxu0 0.0
    %1597 = vmatprep.subr.mxu0 0.0
    %1598 = vmatpush1.msra.mxu0 0.0
    %1599 = vmatprep.subr.mxu0 0.0
    %1600 = vmatpush1.msra.mxu0 0.0
    %1601 = vmatprep.subr.mxu0 0.0
    %1602 = vmatpush1.msra.mxu0 0.0
    %1603 = vmatprep.subr.mxu0 0.0
    %1604 = vmatpush1.msra.mxu0 0.0
    %1605 = vmatprep.subr.mxu0 0.0
    %1606 = vmatpush1.msra.mxu0 0.0
    %1607 = vmatprep.mubr.f32.mxu0 0.0
    %1608 = vmatmul.mubr.f32.gmra.mrb[0].mxu0 %v1541
    %v1609 = vpop.f32.mrb[0].mxu0
    %v1610 = vadd.f32 0.0, %v1609
    %v1611 = vpop.f32.mrb[0].mxu0
    %1612 = vdwg.mxu0
    %v1613 = vmul.f32 %v1610, %v1538
    %vm1614 = vcmask 523264
    %v1615 = vsel %vm1614, %v1613, 0.0
    %v1616 = vrot.slane %v1615, 4
    %v1617 = vadd.f32 %v1615, %v1616
    %v1618 = vrot.slane %v1617, 2
    %v1619 = vadd.f32 %v1617, %v1618
    %v1620 = vrot.slane %v1619, 1
    %v1621 = vadd.f32 %v1619, %v1620
    %v1622 = vsub.f32 0.0, %v1621
    %v1623 = vld [vmem:[#allocation10] sm:$0xff]
    %v1624 = vld [vmem:[%s5] sm:$0xff]
    %v1625 = vld [vmem:[%s5 + $0x8] sm:$0xff]
    %v1626 = vld [vmem:[%s5 + $0x10] sm:$0xff]
    %v1627 = vld [vmem:[%s5 + $0x18] sm:$0xff]
    %v1628 = vld [vmem:[%s5 + $0x20] sm:$0xff]
    %v1629 = vld [vmem:[%s5 + $0x28] sm:$0xff]
    %v1630 = vld [vmem:[%s5 + $0x30] sm:$0xff]
    %v1631 = vld [vmem:[%s6] sm:$0xff]
    %v1632 = vld [vmem:[%s6 + $0x8] sm:$0xff]
    %v1633 = vld [vmem:[%s6 + $0x10] sm:$0xff]
    %v1634 = vld [vmem:[%s6 + $0x18] sm:$0xff]
    %v1635 = vld [vmem:[%s6 + $0x20] sm:$0xff]
    %v1636 = vld [vmem:[%s6 + $0x28] sm:$0xff]
    %v1637 = vld [vmem:[%s6 + $0x30] sm:$0xff]
    %v1638 = vld [vmem:[%s9] sm:$0xff]
    %v1639 = vld [vmem:[%s9 + $0x8] sm:$0xff]
    %v1640 = vld [vmem:[%s9 + $0x10] sm:$0xff]
    %v1641 = vld [vmem:[%s9 + $0x18] sm:$0xff]
    %v1642 = vld [vmem:[%s9 + $0x20] sm:$0xff]
    %v1643 = vld [vmem:[%s9 + $0x28] sm:$0xff]
    %v1644 = vld [vmem:[%s9 + $0x30] sm:$0xff]
    %v1645 = vld [vmem:[%s7] sm:$0xff]
    %v1646 = vld [vmem:[#allocation11] sm:$0xff]
    %1647 = vmatprep.subr.mxu0 0.0
    %1648 = vmatpush1.msra.mxu0 %v1645
    %1649 = vmatprep.subr.mxu0 0.0
    %1650 = vmatpush1.msra.mxu0 0.0
    %1651 = vmatprep.subr.mxu0 0.0
    %1652 = vmatpush1.msra.mxu0 0.0
    %1653 = vmatprep.subr.mxu0 0.0
    %1654 = vmatpush1.msra.mxu0 0.0
    %1655 = vmatprep.subr.mxu0 0.0
    %1656 = vmatpush1.msra.mxu0 0.0
    %1657 = vmatprep.subr.mxu0 0.0
    %1658 = vmatpush1.msra.mxu0 0.0
    %1659 = vmatprep.subr.mxu0 0.0
    %1660 = vmatpush1.msra.mxu0 0.0
    %1661 = vmatprep.subr.mxu0 0.0
    %1662 = vmatpush1.msra.mxu0 0.0
    %1663 = vmatprep.subr.mxu0 0.0
    %1664 = vmatpush1.msra.mxu0 0.0
    %1665 = vmatprep.subr.mxu0 0.0
    %1666 = vmatpush1.msra.mxu0 0.0
    %1667 = vmatprep.subr.mxu0 0.0
    %1668 = vmatpush1.msra.mxu0 0.0
    %1669 = vmatprep.subr.mxu0 0.0
    %1670 = vmatpush1.msra.mxu0 0.0
    %1671 = vmatprep.subr.mxu0 0.0
    %1672 = vmatpush1.msra.mxu0 0.0
    %1673 = vmatprep.subr.mxu0 0.0
    %1674 = vmatpush1.msra.mxu0 0.0
    %1675 = vmatprep.subr.mxu0 0.0
    %1676 = vmatpush1.msra.mxu0 0.0
    %1677 = vmatprep.subr.mxu0 0.0
    %1678 = vmatpush1.msra.mxu0 0.0
    %1679 = vmatprep.subr.mxu0 0.0
    %1680 = vmatpush1.msra.mxu0 0.0
    %1681 = vmatprep.subr.mxu0 0.0
    %1682 = vmatpush1.msra.mxu0 0.0
    %1683 = vmatprep.subr.mxu0 0.0
    %1684 = vmatpush1.msra.mxu0 0.0
    %1685 = vmatprep.subr.mxu0 0.0
    %1686 = vmatpush1.msra.mxu0 0.0
    %1687 = vmatprep.subr.mxu0 0.0
    %1688 = vmatpush1.msra.mxu0 0.0
    %1689 = vmatprep.subr.mxu0 0.0
    %1690 = vmatpush1.msra.mxu0 0.0
    %1691 = vmatprep.subr.mxu0 0.0
    %1692 = vmatpush1.msra.mxu0 0.0
    %1693 = vmatprep.subr.mxu0 0.0
    %1694 = vmatpush1.msra.mxu0 0.0
    %1695 = vmatprep.subr.mxu0 0.0
    %1696 = vmatpush1.msra.mxu0 0.0
    %1697 = vmatprep.subr.mxu0 0.0
    %1698 = vmatpush1.msra.mxu0 0.0
    %1699 = vmatprep.subr.mxu0 0.0
    %1700 = vmatpush1.msra.mxu0 0.0
    %1701 = vmatprep.subr.mxu0 0.0
    %1702 = vmatpush1.msra.mxu0 0.0
    %1703 = vmatprep.subr.mxu0 0.0
    %1704 = vmatpush1.msra.mxu0 0.0
    %1705 = vmatprep.subr.mxu0 0.0
    %1706 = vmatpush1.msra.mxu0 0.0
    %1707 = vmatprep.subr.mxu0 0.0
    %1708 = vmatpush1.msra.mxu0 0.0
    %1709 = vmatprep.subr.mxu0 0.0
    %1710 = vmatpush1.msra.mxu0 0.0
    %1711 = vmatprep.mubr.f32.mxu0 0.0
    %1712 = vmatmul.mubr.f32.gmra.mrb[0].mxu0 %v1541
    %v1713 = vpop.f32.mrb[0].mxu0
    %v1714 = vadd.f32 0.0, %v1713
    %v1715 = vpop.f32.mrb[0].mxu0
    %1716 = vdwg.mxu0
    %1717 = vmatprep.subr.mxu0 0.0
    %1718 = vmatpush1.msra.mxu0 %v1646
    %1719 = vmatprep.subr.mxu0 0.0
    %1720 = vmatpush1.msra.mxu0 0.0
    %1721 = vmatprep.subr.mxu0 0.0
    %1722 = vmatpush1.msra.mxu0 0.0
    %1723 = vmatprep.subr.mxu0 0.0
    %1724 = vmatpush1.msra.mxu0 0.0
    %1725 = vmatprep.subr.mxu0 0.0
    %1726 = vmatpush1.msra.mxu0 0.0
    %1727 = vmatprep.subr.mxu0 0.0
    %1728 = vmatpush1.msra.mxu0 0.0
    %1729 = vmatprep.subr.mxu0 0.0
    %1730 = vmatpush1.msra.mxu0 0.0
    %1731 = vmatprep.subr.mxu0 0.0
    %1732 = vmatpush1.msra.mxu0 0.0
    %1733 = vmatprep.subr.mxu0 0.0
    %1734 = vmatpush1.msra.mxu0 0.0
    %1735 = vmatprep.subr.mxu0 0.0
    %1736 = vmatpush1.msra.mxu0 0.0
    %1737 = vmatprep.subr.mxu0 0.0
    %1738 = vmatpush1.msra.mxu0 0.0
    %1739 = vmatprep.subr.mxu0 0.0
    %1740 = vmatpush1.msra.mxu0 0.0
    %1741 = vmatprep.subr.mxu0 0.0
    %1742 = vmatpush1.msra.mxu0 0.0
    %1743 = vmatprep.subr.mxu0 0.0
    %1744 = vmatpush1.msra.mxu0 0.0
    %1745 = vmatprep.subr.mxu0 0.0
    %1746 = vmatpush1.msra.mxu0 0.0
    %1747 = vmatprep.subr.mxu0 0.0
    %1748 = vmatpush1.msra.mxu0 0.0
    %1749 = vmatprep.subr.mxu0 0.0
    %1750 = vmatpush1.msra.mxu0 0.0
    %1751 = vmatprep.subr.mxu0 0.0
    %1752 = vmatpush1.msra.mxu0 0.0
    %1753 = vmatprep.subr.mxu0 0.0
    %1754 = vmatpush1.msra.mxu0 0.0
    %1755 = vmatprep.subr.mxu0 0.0
    %1756 = vmatpush1.msra.mxu0 0.0
    %1757 = vmatprep.subr.mxu0 0.0
    %1758 = vmatpush1.msra.mxu0 0.0
    %1759 = vmatprep.subr.mxu0 0.0
    %1760 = vmatpush1.msra.mxu0 0.0
    %1761 = vmatprep.subr.mxu0 0.0
    %1762 = vmatpush1.msra.mxu0 0.0
    %1763 = vmatprep.subr.mxu0 0.0
    %1764 = vmatpush1.msra.mxu0 0.0
    %1765 = vmatprep.subr.mxu0 0.0
    %1766 = vmatpush1.msra.mxu0 0.0
    %1767 = vmatprep.subr.mxu0 0.0
    %1768 = vmatpush1.msra.mxu0 0.0
    %1769 = vmatprep.subr.mxu0 0.0
    %1770 = vmatpush1.msra.mxu0 0.0
    %1771 = vmatprep.subr.mxu0 0.0
    %1772 = vmatpush1.msra.mxu0 0.0
    %1773 = vmatprep.subr.mxu0 0.0
    %1774 = vmatpush1.msra.mxu0 0.0
    %1775 = vmatprep.subr.mxu0 0.0
    %1776 = vmatpush1.msra.mxu0 0.0
    %1777 = vmatprep.subr.mxu0 0.0
    %1778 = vmatpush1.msra.mxu0 0.0
    %1779 = vmatprep.subr.mxu0 0.0
    %1780 = vmatpush1.msra.mxu0 0.0
    %1781 = vmatprep.mubr.f32.mxu0 0.0
    %1782 = vmatmul.mubr.f32.gmra.mrb[0].mxu0 %v1541
    %v1783 = vpop.f32.mrb[0].mxu0
    %v1784 = vadd.f32 0.0, %v1783
    %v1785 = vpop.f32.mrb[0].mxu0
    %1786 = vdwg.mxu0
    %v1788 = vsel %vm668, %v1631, 0
    %v1791 = vsel %vm668, %v1632, 0
    %v1794 = vsel %vm668, %v1633, 0
    %v1797 = vsel %vm668, %v1634, 0
    %v1800 = vsel %vm668, %v1635, 0
    %v1803 = vsel %vm668, %v1636, 0
    %v1806 = vsel %vm668, %v1637, 0
    %1808 = vmatprep.subr.mxu0 0.0
    %1809 = vmatpush1.msra.mxu0 %v1784
    %1810 = vmatprep.subr.mxu0 0.0
    %1811 = vmatpush1.msra.mxu0 0.0
    %1812 = vmatprep.subr.mxu0 0.0
    %1813 = vmatpush1.msra.mxu0 0.0
    %1814 = vmatprep.subr.mxu0 0.0
    %1815 = vmatpush1.msra.mxu0 0.0
    %1816 = vmatprep.subr.mxu0 0.0
    %1817 = vmatpush1.msra.mxu0 0.0
    %1818 = vmatprep.subr.mxu0 0.0
    %1819 = vmatpush1.msra.mxu0 0.0
    %1820 = vmatprep.subr.mxu0 0.0
    %1821 = vmatpush1.msra.mxu0 0.0
    %1822 = vmatprep.subr.mxu0 0.0
    %1823 = vmatpush1.msra.mxu0 0.0
    %1824 = vmatprep.subr.mxu0 0.0
    %1825 = vmatpush1.msra.mxu0 0.0
    %1826 = vmatprep.subr.mxu0 0.0
    %1827 = vmatpush1.msra.mxu0 0.0
    %1828 = vmatprep.subr.mxu0 0.0
    %1829 = vmatpush1.msra.mxu0 0.0
    %1830 = vmatprep.subr.mxu0 0.0
    %1831 = vmatpush1.msra.mxu0 0.0
    %1832 = vmatprep.subr.mxu0 0.0
    %1833 = vmatpush1.msra.mxu0 0.0
    %1834 = vmatprep.subr.mxu0 0.0
    %1835 = vmatpush1.msra.mxu0 0.0
    %1836 = vmatprep.subr.mxu0 0.0
    %1837 = vmatpush1.msra.mxu0 0.0
    %1838 = vmatprep.subr.mxu0 0.0
    %1839 = vmatpush1.msra.mxu0 0.0
    %1840 = vmatprep.subr.mxu0 0.0
    %1841 = vmatpush1.msra.mxu0 0.0
    %1842 = vmatprep.subr.mxu0 0.0
    %1843 = vmatpush1.msra.mxu0 0.0
    %1844 = vmatprep.subr.mxu0 0.0
    %1845 = vmatpush1.msra.mxu0 0.0
    %1846 = vmatprep.subr.mxu0 0.0
    %1847 = vmatpush1.msra.mxu0 0.0
    %1848 = vmatprep.subr.mxu0 0.0
    %1849 = vmatpush1.msra.mxu0 0.0
    %1850 = vmatprep.subr.mxu0 0.0
    %1851 = vmatpush1.msra.mxu0 0.0
    %1852 = vmatprep.subr.mxu0 0.0
    %1853 = vmatpush1.msra.mxu0 0.0
    %1854 = vmatprep.subr.mxu0 0.0
    %1855 = vmatpush1.msra.mxu0 0.0
    %1856 = vmatprep.subr.mxu0 0.0
    %1857 = vmatpush1.msra.mxu0 0.0
    %1858 = vmatprep.subr.mxu0 0.0
    %1859 = vmatpush1.msra.mxu0 0.0
    %1860 = vmatprep.subr.mxu0 0.0
    %1861 = vmatpush1.msra.mxu0 0.0
    %1862 = vmatprep.subr.mxu0 0.0
    %1863 = vmatpush1.msra.mxu0 0.0
    %1864 = vmatprep.subr.mxu0 0.0
    %1865 = vmatpush1.msra.mxu0 0.0
    %1866 = vmatprep.subr.mxu0 0.0
    %1867 = vmatpush1.msra.mxu0 0.0
    %1868 = vmatprep.subr.mxu0 0.0
    %1869 = vmatpush1.msra.mxu0 0.0
    %1870 = vmatprep.subr.mxu0 0.0
    %1871 = vmatpush1.msra.mxu0 0.0
    %1872 = vmatprep.mubr.f32.mxu0 0.0
    %1873 = vmatmul.mubr.f32.gmra.mrb[0].mxu0 %v1788
    %v1874 = vpop.f32.mrb[0].mxu0
    %v1875 = vadd.f32 0.0, %v1874
    %v1876 = vpop.f32.mrb[0].mxu0
    %1877 = vmatprep.mubr.f32.mxu0 0.0
    %1878 = vmatmul.mubr.f32.gmra.mrb[0].mxu0 %v1791
    %v1879 = vpop.f32.mrb[0].mxu0
    %v1880 = vadd.f32 0.0, %v1879
    %v1881 = vpop.f32.mrb[0].mxu0
    %1882 = vmatprep.mubr.f32.mxu0 0.0
    %1883 = vmatmul.mubr.f32.gmra.mrb[0].mxu0 %v1794
    %v1884 = vpop.f32.mrb[0].mxu0
    %v1885 = vadd.f32 0.0, %v1884
    %v1886 = vpop.f32.mrb[0].mxu0
    %1887 = vmatprep.mubr.f32.mxu0 0.0
    %1888 = vmatmul.mubr.f32.gmra.mrb[0].mxu0 %v1797
    %v1889 = vpop.f32.mrb[0].mxu0
    %v1890 = vadd.f32 0.0, %v1889
    %v1891 = vpop.f32.mrb[0].mxu0
    %1892 = vmatprep.mubr.f32.mxu0 0.0
    %1893 = vmatmul.mubr.f32.gmra.mrb[0].mxu0 %v1800
    %v1894 = vpop.f32.mrb[0].mxu0
    %v1895 = vadd.f32 0.0, %v1894
    %v1896 = vpop.f32.mrb[0].mxu0
    %1897 = vmatprep.mubr.f32.mxu0 0.0
    %1898 = vmatmul.mubr.f32.gmra.mrb[0].mxu0 %v1803
    %v1899 = vpop.f32.mrb[0].mxu0
    %v1900 = vadd.f32 0.0, %v1899
    %v1901 = vpop.f32.mrb[0].mxu0
    %1902 = vmatprep.mubr.f32.mxu0 0.0
    %1903 = vmatmul.mubr.f32.gmra.mrb[0].mxu0 %v1806
    %v1904 = vpop.f32.mrb[0].mxu0
    %v1905 = vadd.f32 0.0, %v1904
    %v1906 = vpop.f32.mrb[0].mxu0
    %1907 = vdwg.mxu0
    %v1909 = vsel %vm668, %v1624, 0
    %v1912 = vsel %vm668, %v1625, 0
    %v1915 = vsel %vm668, %v1626, 0
    %v1918 = vsel %vm668, %v1627, 0
    %v1921 = vsel %vm668, %v1628, 0
    %v1924 = vsel %vm668, %v1629, 0
    %v1927 = vsel %vm668, %v1630, 0
    %1929 = vmatprep.subr.mxu0 0.0
    %1930 = vmatpush1.msra.mxu0 %v1714
    %1931 = vmatprep.subr.mxu0 0.0
    %1932 = vmatpush1.msra.mxu0 0.0
    %1933 = vmatprep.subr.mxu0 0.0
    %1934 = vmatpush1.msra.mxu0 0.0
    %1935 = vmatprep.subr.mxu0 0.0
    %1936 = vmatpush1.msra.mxu0 0.0
    %1937 = vmatprep.subr.mxu0 0.0
    %1938 = vmatpush1.msra.mxu0 0.0
    %1939 = vmatprep.subr.mxu0 0.0
    %1940 = vmatpush1.msra.mxu0 0.0
    %1941 = vmatprep.subr.mxu0 0.0
    %1942 = vmatpush1.msra.mxu0 0.0
    %1943 = vmatprep.subr.mxu0 0.0
    %1944 = vmatpush1.msra.mxu0 0.0
    %1945 = vmatprep.subr.mxu0 0.0
    %1946 = vmatpush1.msra.mxu0 0.0
    %1947 = vmatprep.subr.mxu0 0.0
    %1948 = vmatpush1.msra.mxu0 0.0
    %1949 = vmatprep.subr.mxu0 0.0
    %1950 = vmatpush1.msra.mxu0 0.0
    %1951 = vmatprep.subr.mxu0 0.0
    %1952 = vmatpush1.msra.mxu0 0.0
    %1953 = vmatprep.subr.mxu0 0.0
    %1954 = vmatpush1.msra.mxu0 0.0
    %1955 = vmatprep.subr.mxu0 0.0
    %1956 = vmatpush1.msra.mxu0 0.0
    %1957 = vmatprep.subr.mxu0 0.0
    %1958 = vmatpush1.msra.mxu0 0.0
    %1959 = vmatprep.subr.mxu0 0.0
    %1960 = vmatpush1.msra.mxu0 0.0
    %1961 = vmatprep.subr.mxu0 0.0
    %1962 = vmatpush1.msra.mxu0 0.0
    %1963 = vmatprep.subr.mxu0 0.0
    %1964 = vmatpush1.msra.mxu0 0.0
    %1965 = vmatprep.subr.mxu0 0.0
    %1966 = vmatpush1.msra.mxu0 0.0
    %1967 = vmatprep.subr.mxu0 0.0
    %1968 = vmatpush1.msra.mxu0 0.0
    %1969 = vmatprep.subr.mxu0 0.0
    %1970 = vmatpush1.msra.mxu0 0.0
    %1971 = vmatprep.subr.mxu0 0.0
    %1972 = vmatpush1.msra.mxu0 0.0
    %1973 = vmatprep.subr.mxu0 0.0
    %1974 = vmatpush1.msra.mxu0 0.0
    %1975 = vmatprep.subr.mxu0 0.0
    %1976 = vmatpush1.msra.mxu0 0.0
    %1977 = vmatprep.subr.mxu0 0.0
    %1978 = vmatpush1.msra.mxu0 0.0
    %1979 = vmatprep.subr.mxu0 0.0
    %1980 = vmatpush1.msra.mxu0 0.0
    %1981 = vmatprep.subr.mxu0 0.0
    %1982 = vmatpush1.msra.mxu0 0.0
    %1983 = vmatprep.subr.mxu0 0.0
    %1984 = vmatpush1.msra.mxu0 0.0
    %1985 = vmatprep.subr.mxu0 0.0
    %1986 = vmatpush1.msra.mxu0 0.0
    %1987 = vmatprep.subr.mxu0 0.0
    %1988 = vmatpush1.msra.mxu0 0.0
    %1989 = vmatprep.subr.mxu0 0.0
    %1990 = vmatpush1.msra.mxu0 0.0
    %1991 = vmatprep.subr.mxu0 0.0
    %1992 = vmatpush1.msra.mxu0 0.0
    %1993 = vmatprep.mubr.f32.mxu0 0.0
    %1994 = vmatmul.mubr.f32.gmra.mrb[0].mxu0 %v1909
    %v1995 = vpop.f32.mrb[0].mxu0
    %v1996 = vadd.f32 %v1875, %v1995
    %v1997 = vpop.f32.mrb[0].mxu0
    %1998 = vmatprep.mubr.f32.mxu0 0.0
    %1999 = vmatmul.mubr.f32.gmra.mrb[0].mxu0 %v1912
    %v2000 = vpop.f32.mrb[0].mxu0
    %v2001 = vadd.f32 %v1880, %v2000
    %v2002 = vpop.f32.mrb[0].mxu0
    %2003 = vmatprep.mubr.f32.mxu0 0.0
    %2004 = vmatmul.mubr.f32.gmra.mrb[0].mxu0 %v1915
    %v2005 = vpop.f32.mrb[0].mxu0
    %v2006 = vadd.f32 %v1885, %v2005
    %v2007 = vpop.f32.mrb[0].mxu0
    %2008 = vmatprep.mubr.f32.mxu0 0.0
    %2009 = vmatmul.mubr.f32.gmra.mrb[0].mxu0 %v1918
    %v2010 = vpop.f32.mrb[0].mxu0
    %v2011 = vadd.f32 %v1890, %v2010
    %v2012 = vpop.f32.mrb[0].mxu0
    %2013 = vmatprep.mubr.f32.mxu0 0.0
    %2014 = vmatmul.mubr.f32.gmra.mrb[0].mxu0 %v1921
    %v2015 = vpop.f32.mrb[0].mxu0
    %v2016 = vadd.f32 %v1895, %v2015
    %v2017 = vpop.f32.mrb[0].mxu0
    %2018 = vmatprep.mubr.f32.mxu0 0.0
    %2019 = vmatmul.mubr.f32.gmra.mrb[0].mxu0 %v1924
    %v2020 = vpop.f32.mrb[0].mxu0
    %v2021 = vadd.f32 %v1900, %v2020
    %v2022 = vpop.f32.mrb[0].mxu0
    %2023 = vmatprep.mubr.f32.mxu0 0.0
    %2024 = vmatmul.mubr.f32.gmra.mrb[0].mxu0 %v1927
    %v2025 = vpop.f32.mrb[0].mxu0
    %v2026 = vadd.f32 %v1905, %v2025
    %v2027 = vpop.f32.mrb[0].mxu0
    %2028 = vdwg.mxu0
    %v2029 = vmul.f32 %v1996, 0.5
    %v2030 = vmul.f32 %v2001, 0.5
    %v2031 = vmul.f32 %v2006, 0.5
    %v2032 = vmul.f32 %v2011, 0.5
    %v2033 = vmul.f32 %v2016, 0.5
    %v2034 = vmul.f32 %v2021, 0.5
    %v2035 = vmul.f32 %v2026, 0.5
    %v2036 = vmul.f32 %v2029, %v1638
    %v2037 = vmul.f32 %v2030, %v1639
    %v2038 = vmul.f32 %v2031, %v1640
    %v2039 = vmul.f32 %v2032, %v1641
    %v2040 = vmul.f32 %v2033, %v1642
    %v2041 = vmul.f32 %v2034, %v1643
    %v2042 = vmul.f32 %v2035, %v1644
    %vm2043 = vcmask 457728
    %v2045 = vsel %vm2043, %v1623, 0
    %2047 = vmatprep.subr.mxu0 0.0
    %2048 = vmatpush1.msra.mxu0 %v2036
    %2049 = vmatprep.subr.mxu0 0.0
    %2050 = vmatpush1.msra.mxu0 %v2037
    %2051 = vmatprep.subr.mxu0 0.0
    %2052 = vmatpush1.msra.mxu0 %v2038
    %2053 = vmatprep.subr.mxu0 0.0
    %2054 = vmatpush1.msra.mxu0 %v2039
    %2055 = vmatprep.subr.mxu0 0.0
    %2056 = vmatpush1.msra.mxu0 %v2040
    %2057 = vmatprep.subr.mxu0 0.0
    %2058 = vmatpush1.msra.mxu0 %v2041
    %2059 = vmatprep.subr.mxu0 0.0
    %2060 = vmatpush1.msra.mxu0 %v2042
    %2061 = vmatprep.subr.mxu0 0.0
    %2062 = vmatpush1.msra.mxu0 0.0
    %2063 = vmatprep.subr.mxu0 0.0
    %2064 = vmatpush1.msra.mxu0 0.0
    %2065 = vmatprep.subr.mxu0 0.0
    %2066 = vmatpush1.msra.mxu0 0.0
    %2067 = vmatprep.subr.mxu0 0.0
    %2068 = vmatpush1.msra.mxu0 0.0
    %2069 = vmatprep.subr.mxu0 0.0
    %2070 = vmatpush1.msra.mxu0 0.0
    %2071 = vmatprep.subr.mxu0 0.0
    %2072 = vmatpush1.msra.mxu0 0.0
    %2073 = vmatprep.subr.mxu0 0.0
    %2074 = vmatpush1.msra.mxu0 0.0
    %2075 = vmatprep.subr.mxu0 0.0
    %2076 = vmatpush1.msra.mxu0 0.0
    %2077 = vmatprep.subr.mxu0 0.0
    %2078 = vmatpush1.msra.mxu0 0.0
    %2079 = vmatprep.subr.mxu0 0.0
    %2080 = vmatpush1.msra.mxu0 0.0
    %2081 = vmatprep.subr.mxu0 0.0
    %2082 = vmatpush1.msra.mxu0 0.0
    %2083 = vmatprep.subr.mxu0 0.0
    %2084 = vmatpush1.msra.mxu0 0.0
    %2085 = vmatprep.subr.mxu0 0.0
    %2086 = vmatpush1.msra.mxu0 0.0
    %2087 = vmatprep.subr.mxu0 0.0
    %2088 = vmatpush1.msra.mxu0 0.0
    %2089 = vmatprep.subr.mxu0 0.0
    %2090 = vmatpush1.msra.mxu0 0.0
    %2091 = vmatprep.subr.mxu0 0.0
    %2092 = vmatpush1.msra.mxu0 0.0
    %2093 = vmatprep.subr.mxu0 0.0
    %2094 = vmatpush1.msra.mxu0 0.0
    %2095 = vmatprep.subr.mxu0 0.0
    %2096 = vmatpush1.msra.mxu0 0.0
    %2097 = vmatprep.subr.mxu0 0.0
    %2098 = vmatpush1.msra.mxu0 0.0
    %2099 = vmatprep.subr.mxu0 0.0
    %2100 = vmatpush1.msra.mxu0 0.0
    %2101 = vmatprep.subr.mxu0 0.0
    %2102 = vmatpush1.msra.mxu0 0.0
    %2103 = vmatprep.subr.mxu0 0.0
    %2104 = vmatpush1.msra.mxu0 0.0
    %2105 = vmatprep.subr.mxu0 0.0
    %2106 = vmatpush1.msra.mxu0 0.0
    %2107 = vmatprep.subr.mxu0 0.0
    %2108 = vmatpush1.msra.mxu0 0.0
    %2109 = vmatprep.subr.mxu0 0.0
    %2110 = vmatpush1.msra.mxu0 0.0
    %2111 = vmatprep.mubr.f32.mxu0 0.0
    %2112 = vmatmul.mubr.f32.gmra.mrb[0].mxu0 %v2045
    %v2113 = vpop.f32.mrb[0].mxu0
    %v2114 = vadd.f32 0.0, %v2113
    %v2115 = vpop.f32.mrb[0].mxu0
    %2116 = vdwg.mxu0
    %2118 = vrot.lane.b32.xlu0 %v1645, 64
    %v2119 = vpop.permute.xlu0 %2118
    %2121 = vmatprep.subr.mxu0 0.0
    %2122 = vmatpush1.msra.mxu0 %v2119
    %2123 = vmatprep.subr.mxu0 0.0
    %2124 = vmatpush1.msra.mxu0 0.0
    %2125 = vmatprep.subr.mxu0 0.0
    %2126 = vmatpush1.msra.mxu0 0.0
    %2127 = vmatprep.subr.mxu0 0.0
    %2128 = vmatpush1.msra.mxu0 0.0
    %2129 = vmatprep.subr.mxu0 0.0
    %2130 = vmatpush1.msra.mxu0 0.0
    %2131 = vmatprep.subr.mxu0 0.0
    %2132 = vmatpush1.msra.mxu0 0.0
    %2133 = vmatprep.subr.mxu0 0.0
    %2134 = vmatpush1.msra.mxu0 0.0
    %2135 = vmatprep.subr.mxu0 0.0
    %2136 = vmatpush1.msra.mxu0 0.0
    %2137 = vmatprep.subr.mxu0 0.0
    %2138 = vmatpush1.msra.mxu0 0.0
    %2139 = vmatprep.subr.mxu0 0.0
    %2140 = vmatpush1.msra.mxu0 0.0
    %2141 = vmatprep.subr.mxu0 0.0
    %2142 = vmatpush1.msra.mxu0 0.0
    %2143 = vmatprep.subr.mxu0 0.0
    %2144 = vmatpush1.msra.mxu0 0.0
    %2145 = vmatprep.subr.mxu0 0.0
    %2146 = vmatpush1.msra.mxu0 0.0
    %2147 = vmatprep.subr.mxu0 0.0
    %2148 = vmatpush1.msra.mxu0 0.0
    %2149 = vmatprep.subr.mxu0 0.0
    %2150 = vmatpush1.msra.mxu0 0.0
    %2151 = vmatprep.subr.mxu0 0.0
    %2152 = vmatpush1.msra.mxu0 0.0
    %2153 = vmatprep.subr.mxu0 0.0
    %2154 = vmatpush1.msra.mxu0 0.0
    %2155 = vmatprep.subr.mxu0 0.0
    %2156 = vmatpush1.msra.mxu0 0.0
    %2157 = vmatprep.subr.mxu0 0.0
    %2158 = vmatpush1.msra.mxu0 0.0
    %2159 = vmatprep.subr.mxu0 0.0
    %2160 = vmatpush1.msra.mxu0 0.0
    %2161 = vmatprep.subr.mxu0 0.0
    %2162 = vmatpush1.msra.mxu0 0.0
    %2163 = vmatprep.subr.mxu0 0.0
    %2164 = vmatpush1.msra.mxu0 0.0
    %2165 = vmatprep.subr.mxu0 0.0
    %2166 = vmatpush1.msra.mxu0 0.0
    %2167 = vmatprep.subr.mxu0 0.0
    %2168 = vmatpush1.msra.mxu0 0.0
    %2169 = vmatprep.subr.mxu0 0.0
    %2170 = vmatpush1.msra.mxu0 0.0
    %2171 = vmatprep.subr.mxu0 0.0
    %2172 = vmatpush1.msra.mxu0 0.0
    %2173 = vmatprep.subr.mxu0 0.0
    %2174 = vmatpush1.msra.mxu0 0.0
    %2175 = vmatprep.subr.mxu0 0.0
    %2176 = vmatpush1.msra.mxu0 0.0
    %2177 = vmatprep.subr.mxu0 0.0
    %2178 = vmatpush1.msra.mxu0 0.0
    %2179 = vmatprep.subr.mxu0 0.0
    %2180 = vmatpush1.msra.mxu0 0.0
    %2181 = vmatprep.subr.mxu0 0.0
    %2182 = vmatpush1.msra.mxu0 0.0
    %2183 = vmatprep.subr.mxu0 0.0
    %2184 = vmatpush1.msra.mxu0 0.0
    %2185 = vmatprep.mubr.f32.mxu0 0.0
    %2186 = vmatmul.mubr.f32.gmra.mrb[0].mxu0 %v1541
    %v2187 = vpop.f32.mrb[0].mxu0
    %v2188 = vadd.f32 0.0, %v2187
    %v2189 = vpop.f32.mrb[0].mxu0
    %2190 = vdwg.mxu0
    %2192 = vrot.lane.b32.xlu0 %v1646, 64
    %v2193 = vpop.permute.xlu0 %2192
    %2195 = vmatprep.subr.mxu0 0.0
    %2196 = vmatpush1.msra.mxu0 %v2193
    %2197 = vmatprep.subr.mxu0 0.0
    %2198 = vmatpush1.msra.mxu0 0.0
    %2199 = vmatprep.subr.mxu0 0.0
    %2200 = vmatpush1.msra.mxu0 0.0
    %2201 = vmatprep.subr.mxu0 0.0
    %2202 = vmatpush1.msra.mxu0 0.0
    %2203 = vmatprep.subr.mxu0 0.0
    %2204 = vmatpush1.msra.mxu0 0.0
    %2205 = vmatprep.subr.mxu0 0.0
    %2206 = vmatpush1.msra.mxu0 0.0
    %2207 = vmatprep.subr.mxu0 0.0
    %2208 = vmatpush1.msra.mxu0 0.0
    %2209 = vmatprep.subr.mxu0 0.0
    %2210 = vmatpush1.msra.mxu0 0.0
    %2211 = vmatprep.subr.mxu0 0.0
    %2212 = vmatpush1.msra.mxu0 0.0
    %2213 = vmatprep.subr.mxu0 0.0
    %2214 = vmatpush1.msra.mxu0 0.0
    %2215 = vmatprep.subr.mxu0 0.0
    %2216 = vmatpush1.msra.mxu0 0.0
    %2217 = vmatprep.subr.mxu0 0.0
    %2218 = vmatpush1.msra.mxu0 0.0
    %2219 = vmatprep.subr.mxu0 0.0
    %2220 = vmatpush1.msra.mxu0 0.0
    %2221 = vmatprep.subr.mxu0 0.0
    %2222 = vmatpush1.msra.mxu0 0.0
    %2223 = vmatprep.subr.mxu0 0.0
    %2224 = vmatpush1.msra.mxu0 0.0
    %2225 = vmatprep.subr.mxu0 0.0
    %2226 = vmatpush1.msra.mxu0 0.0
    %2227 = vmatprep.subr.mxu0 0.0
    %2228 = vmatpush1.msra.mxu0 0.0
    %2229 = vmatprep.subr.mxu0 0.0
    %2230 = vmatpush1.msra.mxu0 0.0
    %2231 = vmatprep.subr.mxu0 0.0
    %2232 = vmatpush1.msra.mxu0 0.0
    %2233 = vmatprep.subr.mxu0 0.0
    %2234 = vmatpush1.msra.mxu0 0.0
    %2235 = vmatprep.subr.mxu0 0.0
    %2236 = vmatpush1.msra.mxu0 0.0
    %2237 = vmatprep.subr.mxu0 0.0
    %2238 = vmatpush1.msra.mxu0 0.0
    %2239 = vmatprep.subr.mxu0 0.0
    %2240 = vmatpush1.msra.mxu0 0.0
    %2241 = vmatprep.subr.mxu0 0.0
    %2242 = vmatpush1.msra.mxu0 0.0
    %2243 = vmatprep.subr.mxu0 0.0
    %2244 = vmatpush1.msra.mxu0 0.0
    %2245 = vmatprep.subr.mxu0 0.0
    %2246 = vmatpush1.msra.mxu0 0.0
    %2247 = vmatprep.subr.mxu0 0.0
    %2248 = vmatpush1.msra.mxu0 0.0
    %2249 = vmatprep.subr.mxu0 0.0
    %2250 = vmatpush1.msra.mxu0 0.0
    %2251 = vmatprep.subr.mxu0 0.0
    %2252 = vmatpush1.msra.mxu0 0.0
    %2253 = vmatprep.subr.mxu0 0.0
    %2254 = vmatpush1.msra.mxu0 0.0
    %2255 = vmatprep.subr.mxu0 0.0
    %2256 = vmatpush1.msra.mxu0 0.0
    %2257 = vmatprep.subr.mxu0 0.0
    %2258 = vmatpush1.msra.mxu0 0.0
    %2259 = vmatprep.mubr.f32.mxu0 0.0
    %2260 = vmatmul.mubr.f32.gmra.mrb[0].mxu0 %v1541
    %v2261 = vpop.f32.mrb[0].mxu0
    %v2262 = vadd.f32 0.0, %v2261
    %v2263 = vpop.f32.mrb[0].mxu0
    %2264 = vdwg.mxu0
    %2265 = vmatprep.subr.mxu0 0.0
    %2266 = vmatpush1.msra.mxu0 %v2262
    %2267 = vmatprep.subr.mxu0 0.0
    %2268 = vmatpush1.msra.mxu0 0.0
    %2269 = vmatprep.subr.mxu0 0.0
    %2270 = vmatpush1.msra.mxu0 0.0
    %2271 = vmatprep.subr.mxu0 0.0
    %2272 = vmatpush1.msra.mxu0 0.0
    %2273 = vmatprep.subr.mxu0 0.0
    %2274 = vmatpush1.msra.mxu0 0.0
    %2275 = vmatprep.subr.mxu0 0.0
    %2276 = vmatpush1.msra.mxu0 0.0
    %2277 = vmatprep.subr.mxu0 0.0
    %2278 = vmatpush1.msra.mxu0 0.0
    %2279 = vmatprep.subr.mxu0 0.0
    %2280 = vmatpush1.msra.mxu0 0.0
    %2281 = vmatprep.subr.mxu0 0.0
    %2282 = vmatpush1.msra.mxu0 0.0
    %2283 = vmatprep.subr.mxu0 0.0
    %2284 = vmatpush1.msra.mxu0 0.0
    %2285 = vmatprep.subr.mxu0 0.0
    %2286 = vmatpush1.msra.mxu0 0.0
    %2287 = vmatprep.subr.mxu0 0.0
    %2288 = vmatpush1.msra.mxu0 0.0
    %2289 = vmatprep.subr.mxu0 0.0
    %2290 = vmatpush1.msra.mxu0 0.0
    %2291 = vmatprep.subr.mxu0 0.0
    %2292 = vmatpush1.msra.mxu0 0.0
    %2293 = vmatprep.subr.mxu0 0.0
    %2294 = vmatpush1.msra.mxu0 0.0
    %2295 = vmatprep.subr.mxu0 0.0
    %2296 = vmatpush1.msra.mxu0 0.0
    %2297 = vmatprep.subr.mxu0 0.0
    %2298 = vmatpush1.msra.mxu0 0.0
    %2299 = vmatprep.subr.mxu0 0.0
    %2300 = vmatpush1.msra.mxu0 0.0
    %2301 = vmatprep.subr.mxu0 0.0
    %2302 = vmatpush1.msra.mxu0 0.0
    %2303 = vmatprep.subr.mxu0 0.0
    %2304 = vmatpush1.msra.mxu0 0.0
    %2305 = vmatprep.subr.mxu0 0.0
    %2306 = vmatpush1.msra.mxu0 0.0
    %2307 = vmatprep.subr.mxu0 0.0
    %2308 = vmatpush1.msra.mxu0 0.0
    %2309 = vmatprep.subr.mxu0 0.0
    %2310 = vmatpush1.msra.mxu0 0.0
    %2311 = vmatprep.subr.mxu0 0.0
    %2312 = vmatpush1.msra.mxu0 0.0
    %2313 = vmatprep.subr.mxu0 0.0
    %2314 = vmatpush1.msra.mxu0 0.0
    %2315 = vmatprep.subr.mxu0 0.0
    %2316 = vmatpush1.msra.mxu0 0.0
    %2317 = vmatprep.subr.mxu0 0.0
    %2318 = vmatpush1.msra.mxu0 0.0
    %2319 = vmatprep.subr.mxu0 0.0
    %2320 = vmatpush1.msra.mxu0 0.0
    %2321 = vmatprep.subr.mxu0 0.0
    %2322 = vmatpush1.msra.mxu0 0.0
    %2323 = vmatprep.subr.mxu0 0.0
    %2324 = vmatpush1.msra.mxu0 0.0
    %2325 = vmatprep.subr.mxu0 0.0
    %2326 = vmatpush1.msra.mxu0 0.0
    %2327 = vmatprep.subr.mxu0 0.0
    %2328 = vmatpush1.msra.mxu0 0.0
    %2329 = vmatprep.mubr.f32.mxu0 0.0
    %2330 = vmatmul.mubr.f32.gmra.mrb[0].mxu0 %v1788
    %v2331 = vpop.f32.mrb[0].mxu0
    %v2332 = vadd.f32 0.0, %v2331
    %v2333 = vpop.f32.mrb[0].mxu0
    %2334 = vmatprep.mubr.f32.mxu0 0.0
    %2335 = vmatmul.mubr.f32.gmra.mrb[0].mxu0 %v1791
    %v2336 = vpop.f32.mrb[0].mxu0
    %v2337 = vadd.f32 0.0, %v2336
    %v2338 = vpop.f32.mrb[0].mxu0
    %2339 = vmatprep.mubr.f32.mxu0 0.0
    %2340 = vmatmul.mubr.f32.gmra.mrb[0].mxu0 %v1794
    %v2341 = vpop.f32.mrb[0].mxu0
    %v2342 = vadd.f32 0.0, %v2341
    %v2343 = vpop.f32.mrb[0].mxu0
    %2344 = vmatprep.mubr.f32.mxu0 0.0
    %2345 = vmatmul.mubr.f32.gmra.mrb[0].mxu0 %v1797
    %v2346 = vpop.f32.mrb[0].mxu0
    %v2347 = vadd.f32 0.0, %v2346
    %v2348 = vpop.f32.mrb[0].mxu0
    %2349 = vmatprep.mubr.f32.mxu0 0.0
    %2350 = vmatmul.mubr.f32.gmra.mrb[0].mxu0 %v1800
    %v2351 = vpop.f32.mrb[0].mxu0
    %v2352 = vadd.f32 0.0, %v2351
    %v2353 = vpop.f32.mrb[0].mxu0
    %2354 = vmatprep.mubr.f32.mxu0 0.0
    %2355 = vmatmul.mubr.f32.gmra.mrb[0].mxu0 %v1803
    %v2356 = vpop.f32.mrb[0].mxu0
    %v2357 = vadd.f32 0.0, %v2356
    %v2358 = vpop.f32.mrb[0].mxu0
    %2359 = vmatprep.mubr.f32.mxu0 0.0
    %2360 = vmatmul.mubr.f32.gmra.mrb[0].mxu0 %v1806
    %v2361 = vpop.f32.mrb[0].mxu0
    %v2362 = vadd.f32 0.0, %v2361
    %v2363 = vpop.f32.mrb[0].mxu0
    %2364 = vdwg.mxu0
    %2365 = vmatprep.subr.mxu0 0.0
    %2366 = vmatpush1.msra.mxu0 %v2188
    %2367 = vmatprep.subr.mxu0 0.0
    %2368 = vmatpush1.msra.mxu0 0.0
    %2369 = vmatprep.subr.mxu0 0.0
    %2370 = vmatpush1.msra.mxu0 0.0
    %2371 = vmatprep.subr.mxu0 0.0
    %2372 = vmatpush1.msra.mxu0 0.0
    %2373 = vmatprep.subr.mxu0 0.0
    %2374 = vmatpush1.msra.mxu0 0.0
    %2375 = vmatprep.subr.mxu0 0.0
    %2376 = vmatpush1.msra.mxu0 0.0
    %2377 = vmatprep.subr.mxu0 0.0
    %2378 = vmatpush1.msra.mxu0 0.0
    %2379 = vmatprep.subr.mxu0 0.0
    %2380 = vmatpush1.msra.mxu0 0.0
    %2381 = vmatprep.subr.mxu0 0.0
    %2382 = vmatpush1.msra.mxu0 0.0
    %2383 = vmatprep.subr.mxu0 0.0
    %2384 = vmatpush1.msra.mxu0 0.0
    %2385 = vmatprep.subr.mxu0 0.0
    %2386 = vmatpush1.msra.mxu0 0.0
    %2387 = vmatprep.subr.mxu0 0.0
    %2388 = vmatpush1.msra.mxu0 0.0
    %2389 = vmatprep.subr.mxu0 0.0
    %2390 = vmatpush1.msra.mxu0 0.0
    %2391 = vmatprep.subr.mxu0 0.0
    %2392 = vmatpush1.msra.mxu0 0.0
    %2393 = vmatprep.subr.mxu0 0.0
    %2394 = vmatpush1.msra.mxu0 0.0
    %2395 = vmatprep.subr.mxu0 0.0
    %2396 = vmatpush1.msra.mxu0 0.0
    %2397 = vmatprep.subr.mxu0 0.0
    %2398 = vmatpush1.msra.mxu0 0.0
    %2399 = vmatprep.subr.mxu0 0.0
    %2400 = vmatpush1.msra.mxu0 0.0
    %2401 = vmatprep.subr.mxu0 0.0
    %2402 = vmatpush1.msra.mxu0 0.0
    %2403 = vmatprep.subr.mxu0 0.0
    %2404 = vmatpush1.msra.mxu0 0.0
    %2405 = vmatprep.subr.mxu0 0.0
    %2406 = vmatpush1.msra.mxu0 0.0
    %2407 = vmatprep.subr.mxu0 0.0
    %2408 = vmatpush1.msra.mxu0 0.0
    %2409 = vmatprep.subr.mxu0 0.0
    %2410 = vmatpush1.msra.mxu0 0.0
    %2411 = vmatprep.subr.mxu0 0.0
    %2412 = vmatpush1.msra.mxu0 0.0
    %2413 = vmatprep.subr.mxu0 0.0
    %2414 = vmatpush1.msra.mxu0 0.0
    %2415 = vmatprep.subr.mxu0 0.0
    %2416 = vmatpush1.msra.mxu0 0.0
    %2417 = vmatprep.subr.mxu0 0.0
    %2418 = vmatpush1.msra.mxu0 0.0
    %2419 = vmatprep.subr.mxu0 0.0
    %2420 = vmatpush1.msra.mxu0 0.0
    %2421 = vmatprep.subr.mxu0 0.0
    %2422 = vmatpush1.msra.mxu0 0.0
    %2423 = vmatprep.subr.mxu0 0.0
    %2424 = vmatpush1.msra.mxu0 0.0
    %2425 = vmatprep.subr.mxu0 0.0
    %2426 = vmatpush1.msra.mxu0 0.0
    %2427 = vmatprep.subr.mxu0 0.0
    %2428 = vmatpush1.msra.mxu0 0.0
    %2429 = vmatprep.mubr.f32.mxu0 0.0
    %2430 = vmatmul.mubr.f32.gmra.mrb[0].mxu0 %v1909
    %v2431 = vpop.f32.mrb[0].mxu0
    %v2432 = vadd.f32 %v2332, %v2431
    %v2433 = vpop.f32.mrb[0].mxu0
    %2434 = vmatprep.mubr.f32.mxu0 0.0
    %2435 = vmatmul.mubr.f32.gmra.mrb[0].mxu0 %v1912
    %v2436 = vpop.f32.mrb[0].mxu0
    %v2437 = vadd.f32 %v2337, %v2436
    %v2438 = vpop.f32.mrb[0].mxu0
    %2439 = vmatprep.mubr.f32.mxu0 0.0
    %2440 = vmatmul.mubr.f32.gmra.mrb[0].mxu0 %v1915
    %v2441 = vpop.f32.mrb[0].mxu0
    %v2442 = vadd.f32 %v2342, %v2441
    %v2443 = vpop.f32.mrb[0].mxu0
    %2444 = vmatprep.mubr.f32.mxu0 0.0
    %2445 = vmatmul.mubr.f32.gmra.mrb[0].mxu0 %v1918
    %v2446 = vpop.f32.mrb[0].mxu0
    %v2447 = vadd.f32 %v2347, %v2446
    %v2448 = vpop.f32.mrb[0].mxu0
    %2449 = vmatprep.mubr.f32.mxu0 0.0
    %2450 = vmatmul.mubr.f32.gmra.mrb[0].mxu0 %v1921
    %v2451 = vpop.f32.mrb[0].mxu0
    %v2452 = vadd.f32 %v2352, %v2451
    %v2453 = vpop.f32.mrb[0].mxu0
    %2454 = vmatprep.mubr.f32.mxu0 0.0
    %2455 = vmatmul.mubr.f32.gmra.mrb[0].mxu0 %v1924
    %v2456 = vpop.f32.mrb[0].mxu0
    %v2457 = vadd.f32 %v2357, %v2456
    %v2458 = vpop.f32.mrb[0].mxu0
    %2459 = vmatprep.mubr.f32.mxu0 0.0
    %2460 = vmatmul.mubr.f32.gmra.mrb[0].mxu0 %v1927
    %v2461 = vpop.f32.mrb[0].mxu0
    %v2462 = vadd.f32 %v2362, %v2461
    %v2463 = vpop.f32.mrb[0].mxu0
    %2464 = vdwg.mxu0
    %v2465 = vmul.f32 %v2432, 0.5
    %v2466 = vmul.f32 %v2437, 0.5
    %v2467 = vmul.f32 %v2442, 0.5
    %v2468 = vmul.f32 %v2447, 0.5
    %v2469 = vmul.f32 %v2452, 0.5
    %v2470 = vmul.f32 %v2457, 0.5
    %v2471 = vmul.f32 %v2462, 0.5
    %v2472 = vmul.f32 %v2465, %v1638
    %v2473 = vmul.f32 %v2466, %v1639
    %v2474 = vmul.f32 %v2467, %v1640
    %v2475 = vmul.f32 %v2468, %v1641
    %v2476 = vmul.f32 %v2469, %v1642
    %v2477 = vmul.f32 %v2470, %v1643
    %v2478 = vmul.f32 %v2471, %v1644
    %2479 = vmatprep.subr.mxu0 0.0
    %2480 = vmatpush1.msra.mxu0 %v2472
    %2481 = vmatprep.subr.mxu0 0.0
    %2482 = vmatpush1.msra.mxu0 %v2473
    %2483 = vmatprep.subr.mxu0 0.0
    %2484 = vmatpush1.msra.mxu0 %v2474
    %2485 = vmatprep.subr.mxu0 0.0
    %2486 = vmatpush1.msra.mxu0 %v2475
    %2487 = vmatprep.subr.mxu0 0.0
    %2488 = vmatpush1.msra.mxu0 %v2476
    %2489 = vmatprep.subr.mxu0 0.0
    %2490 = vmatpush1.msra.mxu0 %v2477
    %2491 = vmatprep.subr.mxu0 0.0
    %2492 = vmatpush1.msra.mxu0 %v2478
    %2493 = vmatprep.subr.mxu0 0.0
    %2494 = vmatpush1.msra.mxu0 0.0
    %2495 = vmatprep.subr.mxu0 0.0
    %2496 = vmatpush1.msra.mxu0 0.0
    %2497 = vmatprep.subr.mxu0 0.0
    %2498 = vmatpush1.msra.mxu0 0.0
    %2499 = vmatprep.subr.mxu0 0.0
    %2500 = vmatpush1.msra.mxu0 0.0
    %2501 = vmatprep.subr.mxu0 0.0
    %2502 = vmatpush1.msra.mxu0 0.0
    %2503 = vmatprep.subr.mxu0 0.0
    %2504 = vmatpush1.msra.mxu0 0.0
    %2505 = vmatprep.subr.mxu0 0.0
    %2506 = vmatpush1.msra.mxu0 0.0
    %2507 = vmatprep.subr.mxu0 0.0
    %2508 = vmatpush1.msra.mxu0 0.0
    %2509 = vmatprep.subr.mxu0 0.0
    %2510 = vmatpush1.msra.mxu0 0.0
    %2511 = vmatprep.subr.mxu0 0.0
    %2512 = vmatpush1.msra.mxu0 0.0
    %2513 = vmatprep.subr.mxu0 0.0
    %2514 = vmatpush1.msra.mxu0 0.0
    %2515 = vmatprep.subr.mxu0 0.0
    %2516 = vmatpush1.msra.mxu0 0.0
    %2517 = vmatprep.subr.mxu0 0.0
    %2518 = vmatpush1.msra.mxu0 0.0
    %2519 = vmatprep.subr.mxu0 0.0
    %2520 = vmatpush1.msra.mxu0 0.0
    %2521 = vmatprep.subr.mxu0 0.0
    %2522 = vmatpush1.msra.mxu0 0.0
    %2523 = vmatprep.subr.mxu0 0.0
    %2524 = vmatpush1.msra.mxu0 0.0
    %2525 = vmatprep.subr.mxu0 0.0
    %2526 = vmatpush1.msra.mxu0 0.0
    %2527 = vmatprep.subr.mxu0 0.0
    %2528 = vmatpush1.msra.mxu0 0.0
    %2529 = vmatprep.subr.mxu0 0.0
    %2530 = vmatpush1.msra.mxu0 0.0
    %2531 = vmatprep.subr.mxu0 0.0
    %2532 = vmatpush1.msra.mxu0 0.0
    %2533 = vmatprep.subr.mxu0 0.0
    %2534 = vmatpush1.msra.mxu0 0.0
    %2535 = vmatprep.subr.mxu0 0.0
    %2536 = vmatpush1.msra.mxu0 0.0
    %2537 = vmatprep.subr.mxu0 0.0
    %2538 = vmatpush1.msra.mxu0 0.0
    %2539 = vmatprep.subr.mxu0 0.0
    %2540 = vmatpush1.msra.mxu0 0.0
    %2541 = vmatprep.subr.mxu0 0.0
    %2542 = vmatpush1.msra.mxu0 0.0
    %2543 = vmatprep.mubr.f32.mxu0 0.0
    %2544 = vmatmul.mubr.f32.gmra.mrb[0].mxu0 %v2045
    %v2545 = vpop.f32.mrb[0].mxu0
    %v2546 = vadd.f32 0.0, %v2545
    %v2547 = vpop.f32.mrb[0].mxu0
    %2548 = vdwg.mxu0
    %v2549 = vld [vmem:[%s7 + $0x8] sm:$0xff]
    %v2550 = vld [vmem:[#allocation11 + $0x8] sm:$0xff]
    %2551 = vmatprep.subr.mxu0 0.0
    %2552 = vmatpush1.msra.mxu0 %v2549
    %2553 = vmatprep.subr.mxu0 0.0
    %2554 = vmatpush1.msra.mxu0 0.0
    %2555 = vmatprep.subr.mxu0 0.0
    %2556 = vmatpush1.msra.mxu0 0.0
    %2557 = vmatprep.subr.mxu0 0.0
    %2558 = vmatpush1.msra.mxu0 0.0
    %2559 = vmatprep.subr.mxu0 0.0
    %2560 = vmatpush1.msra.mxu0 0.0
    %2561 = vmatprep.subr.mxu0 0.0
    %2562 = vmatpush1.msra.mxu0 0.0
    %2563 = vmatprep.subr.mxu0 0.0
    %2564 = vmatpush1.msra.mxu0 0.0
    %2565 = vmatprep.subr.mxu0 0.0
    %2566 = vmatpush1.msra.mxu0 0.0
    %2567 = vmatprep.subr.mxu0 0.0
    %2568 = vmatpush1.msra.mxu0 0.0
    %2569 = vmatprep.subr.mxu0 0.0
    %2570 = vmatpush1.msra.mxu0 0.0
    %2571 = vmatprep.subr.mxu0 0.0
    %2572 = vmatpush1.msra.mxu0 0.0
    %2573 = vmatprep.subr.mxu0 0.0
    %2574 = vmatpush1.msra.mxu0 0.0
    %2575 = vmatprep.subr.mxu0 0.0
    %2576 = vmatpush1.msra.mxu0 0.0
    %2577 = vmatprep.subr.mxu0 0.0
    %2578 = vmatpush1.msra.mxu0 0.0
    %2579 = vmatprep.subr.mxu0 0.0
    %2580 = vmatpush1.msra.mxu0 0.0
    %2581 = vmatprep.subr.mxu0 0.0
    %2582 = vmatpush1.msra.mxu0 0.0
    %2583 = vmatprep.subr.mxu0 0.0
    %2584 = vmatpush1.msra.mxu0 0.0
    %2585 = vmatprep.subr.mxu0 0.0
    %2586 = vmatpush1.msra.mxu0 0.0
    %2587 = vmatprep.subr.mxu0 0.0
    %2588 = vmatpush1.msra.mxu0 0.0
    %2589 = vmatprep.subr.mxu0 0.0
    %2590 = vmatpush1.msra.mxu0 0.0
    %2591 = vmatprep.subr.mxu0 0.0
    %2592 = vmatpush1.msra.mxu0 0.0
    %2593 = vmatprep.subr.mxu0 0.0
    %2594 = vmatpush1.msra.mxu0 0.0
    %2595 = vmatprep.subr.mxu0 0.0
    %2596 = vmatpush1.msra.mxu0 0.0
    %2597 = vmatprep.subr.mxu0 0.0
    %2598 = vmatpush1.msra.mxu0 0.0
    %2599 = vmatprep.subr.mxu0 0.0
    %2600 = vmatpush1.msra.mxu0 0.0
    %2601 = vmatprep.subr.mxu0 0.0
    %2602 = vmatpush1.msra.mxu0 0.0
    %2603 = vmatprep.subr.mxu0 0.0
    %2604 = vmatpush1.msra.mxu0 0.0
    %2605 = vmatprep.subr.mxu0 0.0
    %2606 = vmatpush1.msra.mxu0 0.0
    %2607 = vmatprep.subr.mxu0 0.0
    %2608 = vmatpush1.msra.mxu0 0.0
    %2609 = vmatprep.subr.mxu0 0.0
    %2610 = vmatpush1.msra.mxu0 0.0
    %2611 = vmatprep.subr.mxu0 0.0
    %2612 = vmatpush1.msra.mxu0 0.0
    %2613 = vmatprep.subr.mxu0 0.0
    %2614 = vmatpush1.msra.mxu0 0.0
    %2615 = vmatprep.mubr.f32.mxu0 0.0
    %2616 = vmatmul.mubr.f32.gmra.mrb[0].mxu0 %v1541
    %v2617 = vpop.f32.mrb[0].mxu0
    %v2618 = vadd.f32 0.0, %v2617
    %v2619 = vpop.f32.mrb[0].mxu0
    %2620 = vdwg.mxu0
    %2621 = vmatprep.subr.mxu0 0.0
    %2622 = vmatpush1.msra.mxu0 %v2550
    %2623 = vmatprep.subr.mxu0 0.0
    %2624 = vmatpush1.msra.mxu0 0.0
    %2625 = vmatprep.subr.mxu0 0.0
    %2626 = vmatpush1.msra.mxu0 0.0
    %2627 = vmatprep.subr.mxu0 0.0
    %2628 = vmatpush1.msra.mxu0 0.0
    %2629 = vmatprep.subr.mxu0 0.0
    %2630 = vmatpush1.msra.mxu0 0.0
    %2631 = vmatprep.subr.mxu0 0.0
    %2632 = vmatpush1.msra.mxu0 0.0
    %2633 = vmatprep.subr.mxu0 0.0
    %2634 = vmatpush1.msra.mxu0 0.0
    %2635 = vmatprep.subr.mxu0 0.0
    %2636 = vmatpush1.msra.mxu0 0.0
    %2637 = vmatprep.subr.mxu0 0.0
    %2638 = vmatpush1.msra.mxu0 0.0
    %2639 = vmatprep.subr.mxu0 0.0
    %2640 = vmatpush1.msra.mxu0 0.0
    %2641 = vmatprep.subr.mxu0 0.0
    %2642 = vmatpush1.msra.mxu0 0.0
    %2643 = vmatprep.subr.mxu0 0.0
    %2644 = vmatpush1.msra.mxu0 0.0
    %2645 = vmatprep.subr.mxu0 0.0
    %2646 = vmatpush1.msra.mxu0 0.0
    %2647 = vmatprep.subr.mxu0 0.0
    %2648 = vmatpush1.msra.mxu0 0.0
    %2649 = vmatprep.subr.mxu0 0.0
    %2650 = vmatpush1.msra.mxu0 0.0
    %2651 = vmatprep.subr.mxu0 0.0
    %2652 = vmatpush1.msra.mxu0 0.0
    %2653 = vmatprep.subr.mxu0 0.0
    %2654 = vmatpush1.msra.mxu0 0.0
    %2655 = vmatprep.subr.mxu0 0.0
    %2656 = vmatpush1.msra.mxu0 0.0
    %2657 = vmatprep.subr.mxu0 0.0
    %2658 = vmatpush1.msra.mxu0 0.0
    %2659 = vmatprep.subr.mxu0 0.0
    %2660 = vmatpush1.msra.mxu0 0.0
    %2661 = vmatprep.subr.mxu0 0.0
    %2662 = vmatpush1.msra.mxu0 0.0
    %2663 = vmatprep.subr.mxu0 0.0
    %2664 = vmatpush1.msra.mxu0 0.0
    %2665 = vmatprep.subr.mxu0 0.0
    %2666 = vmatpush1.msra.mxu0 0.0
    %2667 = vmatprep.subr.mxu0 0.0
    %2668 = vmatpush1.msra.mxu0 0.0
    %2669 = vmatprep.subr.mxu0 0.0
    %2670 = vmatpush1.msra.mxu0 0.0
    %2671 = vmatprep.subr.mxu0 0.0
    %2672 = vmatpush1.msra.mxu0 0.0
    %2673 = vmatprep.subr.mxu0 0.0
    %2674 = vmatpush1.msra.mxu0 0.0
    %2675 = vmatprep.subr.mxu0 0.0
    %2676 = vmatpush1.msra.mxu0 0.0
    %2677 = vmatprep.subr.mxu0 0.0
    %2678 = vmatpush1.msra.mxu0 0.0
    %2679 = vmatprep.subr.mxu0 0.0
    %2680 = vmatpush1.msra.mxu0 0.0
    %2681 = vmatprep.subr.mxu0 0.0
    %2682 = vmatpush1.msra.mxu0 0.0
    %2683 = vmatprep.subr.mxu0 0.0
    %2684 = vmatpush1.msra.mxu0 0.0
    %2685 = vmatprep.mubr.f32.mxu0 0.0
    %2686 = vmatmul.mubr.f32.gmra.mrb[0].mxu0 %v1541
    %v2687 = vpop.f32.mrb[0].mxu0
    %v2688 = vadd.f32 0.0, %v2687
    %v2689 = vpop.f32.mrb[0].mxu0
    %2690 = vdwg.mxu0
    %2691 = vmatprep.subr.mxu0 0.0
    %2692 = vmatpush1.msra.mxu0 %v2688
    %2693 = vmatprep.subr.mxu0 0.0
    %2694 = vmatpush1.msra.mxu0 0.0
    %2695 = vmatprep.subr.mxu0 0.0
    %2696 = vmatpush1.msra.mxu0 0.0
    %2697 = vmatprep.subr.mxu0 0.0
    %2698 = vmatpush1.msra.mxu0 0.0
    %2699 = vmatprep.subr.mxu0 0.0
    %2700 = vmatpush1.msra.mxu0 0.0
    %2701 = vmatprep.subr.mxu0 0.0
    %2702 = vmatpush1.msra.mxu0 0.0
    %2703 = vmatprep.subr.mxu0 0.0
    %2704 = vmatpush1.msra.mxu0 0.0
    %2705 = vmatprep.subr.mxu0 0.0
    %2706 = vmatpush1.msra.mxu0 0.0
    %2707 = vmatprep.subr.mxu0 0.0
    %2708 = vmatpush1.msra.mxu0 0.0
    %2709 = vmatprep.subr.mxu0 0.0
    %2710 = vmatpush1.msra.mxu0 0.0
    %2711 = vmatprep.subr.mxu0 0.0
    %2712 = vmatpush1.msra.mxu0 0.0
    %2713 = vmatprep.subr.mxu0 0.0
    %2714 = vmatpush1.msra.mxu0 0.0
    %2715 = vmatprep.subr.mxu0 0.0
    %2716 = vmatpush1.msra.mxu0 0.0
    %2717 = vmatprep.subr.mxu0 0.0
    %2718 = vmatpush1.msra.mxu0 0.0
    %2719 = vmatprep.subr.mxu0 0.0
    %2720 = vmatpush1.msra.mxu0 0.0
    %2721 = vmatprep.subr.mxu0 0.0
    %2722 = vmatpush1.msra.mxu0 0.0
    %2723 = vmatprep.subr.mxu0 0.0
    %2724 = vmatpush1.msra.mxu0 0.0
    %2725 = vmatprep.subr.mxu0 0.0
    %2726 = vmatpush1.msra.mxu0 0.0
    %2727 = vmatprep.subr.mxu0 0.0
    %2728 = vmatpush1.msra.mxu0 0.0
    %2729 = vmatprep.subr.mxu0 0.0
    %2730 = vmatpush1.msra.mxu0 0.0
    %2731 = vmatprep.subr.mxu0 0.0
    %2732 = vmatpush1.msra.mxu0 0.0
    %2733 = vmatprep.subr.mxu0 0.0
    %2734 = vmatpush1.msra.mxu0 0.0
    %2735 = vmatprep.subr.mxu0 0.0
    %2736 = vmatpush1.msra.mxu0 0.0
    %2737 = vmatprep.subr.mxu0 0.0
    %2738 = vmatpush1.msra.mxu0 0.0
    %2739 = vmatprep.subr.mxu0 0.0
    %2740 = vmatpush1.msra.mxu0 0.0
    %2741 = vmatprep.subr.mxu0 0.0
    %2742 = vmatpush1.msra.mxu0 0.0
    %2743 = vmatprep.subr.mxu0 0.0
    %2744 = vmatpush1.msra.mxu0 0.0
    %2745 = vmatprep.subr.mxu0 0.0
    %2746 = vmatpush1.msra.mxu0 0.0
    %2747 = vmatprep.subr.mxu0 0.0
    %2748 = vmatpush1.msra.mxu0 0.0
    %2749 = vmatprep.subr.mxu0 0.0
    %2750 = vmatpush1.msra.mxu0 0.0
    %2751 = vmatprep.subr.mxu0 0.0
    %2752 = vmatpush1.msra.mxu0 0.0
    %2753 = vmatprep.subr.mxu0 0.0
    %2754 = vmatpush1.msra.mxu0 0.0
    %2755 = vmatprep.mubr.f32.mxu0 0.0
    %2756 = vmatmul.mubr.f32.gmra.mrb[0].mxu0 %v1788
    %v2757 = vpop.f32.mrb[0].mxu0
    %v2758 = vadd.f32 0.0, %v2757
    %v2759 = vpop.f32.mrb[0].mxu0
    %2760 = vmatprep.mubr.f32.mxu0 0.0
    %2761 = vmatmul.mubr.f32.gmra.mrb[0].mxu0 %v1791
    %v2762 = vpop.f32.mrb[0].mxu0
    %v2763 = vadd.f32 0.0, %v2762
    %v2764 = vpop.f32.mrb[0].mxu0
    %2765 = vmatprep.mubr.f32.mxu0 0.0
    %2766 = vmatmul.mubr.f32.gmra.mrb[0].mxu0 %v1794
    %v2767 = vpop.f32.mrb[0].mxu0
    %v2768 = vadd.f32 0.0, %v2767
    %v2769 = vpop.f32.mrb[0].mxu0
    %2770 = vmatprep.mubr.f32.mxu0 0.0
    %2771 = vmatmul.mubr.f32.gmra.mrb[0].mxu0 %v1797
    %v2772 = vpop.f32.mrb[0].mxu0
    %v2773 = vadd.f32 0.0, %v2772
    %v2774 = vpop.f32.mrb[0].mxu0
    %2775 = vmatprep.mubr.f32.mxu0 0.0
    %2776 = vmatmul.mubr.f32.gmra.mrb[0].mxu0 %v1800
    %v2777 = vpop.f32.mrb[0].mxu0
    %v2778 = vadd.f32 0.0, %v2777
    %v2779 = vpop.f32.mrb[0].mxu0
    %2780 = vmatprep.mubr.f32.mxu0 0.0
    %2781 = vmatmul.mubr.f32.gmra.mrb[0].mxu0 %v1803
    %v2782 = vpop.f32.mrb[0].mxu0
    %v2783 = vadd.f32 0.0, %v2782
    %v2784 = vpop.f32.mrb[0].mxu0
    %2785 = vmatprep.mubr.f32.mxu0 0.0
    %2786 = vmatmul.mubr.f32.gmra.mrb[0].mxu0 %v1806
    %v2787 = vpop.f32.mrb[0].mxu0
    %v2788 = vadd.f32 0.0, %v2787
    %v2789 = vpop.f32.mrb[0].mxu0
    %2790 = vdwg.mxu0
    %2791 = vmatprep.subr.mxu0 0.0
    %2792 = vmatpush1.msra.mxu0 %v2618
    %2793 = vmatprep.subr.mxu0 0.0
    %2794 = vmatpush1.msra.mxu0 0.0
    %2795 = vmatprep.subr.mxu0 0.0
    %2796 = vmatpush1.msra.mxu0 0.0
    %2797 = vmatprep.subr.mxu0 0.0
    %2798 = vmatpush1.msra.mxu0 0.0
    %2799 = vmatprep.subr.mxu0 0.0
    %2800 = vmatpush1.msra.mxu0 0.0
    %2801 = vmatprep.subr.mxu0 0.0
    %2802 = vmatpush1.msra.mxu0 0.0
    %2803 = vmatprep.subr.mxu0 0.0
    %2804 = vmatpush1.msra.mxu0 0.0
    %2805 = vmatprep.subr.mxu0 0.0
    %2806 = vmatpush1.msra.mxu0 0.0
    %2807 = vmatprep.subr.mxu0 0.0
    %2808 = vmatpush1.msra.mxu0 0.0
    %2809 = vmatprep.subr.mxu0 0.0
    %2810 = vmatpush1.msra.mxu0 0.0
    %2811 = vmatprep.subr.mxu0 0.0
    %2812 = vmatpush1.msra.mxu0 0.0
    %2813 = vmatprep.subr.mxu0 0.0
    %2814 = vmatpush1.msra.mxu0 0.0
    %2815 = vmatprep.subr.mxu0 0.0
    %2816 = vmatpush1.msra.mxu0 0.0
    %2817 = vmatprep.subr.mxu0 0.0
    %2818 = vmatpush1.msra.mxu0 0.0
    %2819 = vmatprep.subr.mxu0 0.0
    %2820 = vmatpush1.msra.mxu0 0.0
    %2821 = vmatprep.subr.mxu0 0.0
    %2822 = vmatpush1.msra.mxu0 0.0
    %2823 = vmatprep.subr.mxu0 0.0
    %2824 = vmatpush1.msra.mxu0 0.0
    %2825 = vmatprep.subr.mxu0 0.0
    %2826 = vmatpush1.msra.mxu0 0.0
    %2827 = vmatprep.subr.mxu0 0.0
    %2828 = vmatpush1.msra.mxu0 0.0
    %2829 = vmatprep.subr.mxu0 0.0
    %2830 = vmatpush1.msra.mxu0 0.0
    %2831 = vmatprep.subr.mxu0 0.0
    %2832 = vmatpush1.msra.mxu0 0.0
    %2833 = vmatprep.subr.mxu0 0.0
    %2834 = vmatpush1.msra.mxu0 0.0
    %2835 = vmatprep.subr.mxu0 0.0
    %2836 = vmatpush1.msra.mxu0 0.0
    %2837 = vmatprep.subr.mxu0 0.0
    %2838 = vmatpush1.msra.mxu0 0.0
    %2839 = vmatprep.subr.mxu0 0.0
    %2840 = vmatpush1.msra.mxu0 0.0
    %2841 = vmatprep.subr.mxu0 0.0
    %2842 = vmatpush1.msra.mxu0 0.0
    %2843 = vmatprep.subr.mxu0 0.0
    %2844 = vmatpush1.msra.mxu0 0.0
    %2845 = vmatprep.subr.mxu0 0.0
    %2846 = vmatpush1.msra.mxu0 0.0
    %2847 = vmatprep.subr.mxu0 0.0
    %2848 = vmatpush1.msra.mxu0 0.0
    %2849 = vmatprep.subr.mxu0 0.0
    %2850 = vmatpush1.msra.mxu0 0.0
    %2851 = vmatprep.subr.mxu0 0.0
    %2852 = vmatpush1.msra.mxu0 0.0
    %2853 = vmatprep.subr.mxu0 0.0
    %2854 = vmatpush1.msra.mxu0 0.0
    %2855 = vmatprep.mubr.f32.mxu0 0.0
    %2856 = vmatmul.mubr.f32.gmra.mrb[0].mxu0 %v1909
    %v2857 = vpop.f32.mrb[0].mxu0
    %v2858 = vadd.f32 %v2758, %v2857
    %v2859 = vpop.f32.mrb[0].mxu0
    %2860 = vmatprep.mubr.f32.mxu0 0.0
    %2861 = vmatmul.mubr.f32.gmra.mrb[0].mxu0 %v1912
    %v2862 = vpop.f32.mrb[0].mxu0
    %v2863 = vadd.f32 %v2763, %v2862
    %v2864 = vpop.f32.mrb[0].mxu0
    %2865 = vmatprep.mubr.f32.mxu0 0.0
    %2866 = vmatmul.mubr.f32.gmra.mrb[0].mxu0 %v1915
    %v2867 = vpop.f32.mrb[0].mxu0
    %v2868 = vadd.f32 %v2768, %v2867
    %v2869 = vpop.f32.mrb[0].mxu0
    %2870 = vmatprep.mubr.f32.mxu0 0.0
    %2871 = vmatmul.mubr.f32.gmra.mrb[0].mxu0 %v1918
    %v2872 = vpop.f32.mrb[0].mxu0
    %v2873 = vadd.f32 %v2773, %v2872
    %v2874 = vpop.f32.mrb[0].mxu0
    %2875 = vmatprep.mubr.f32.mxu0 0.0
    %2876 = vmatmul.mubr.f32.gmra.mrb[0].mxu0 %v1921
    %v2877 = vpop.f32.mrb[0].mxu0
    %v2878 = vadd.f32 %v2778, %v2877
    %v2879 = vpop.f32.mrb[0].mxu0
    %2880 = vmatprep.mubr.f32.mxu0 0.0
    %2881 = vmatmul.mubr.f32.gmra.mrb[0].mxu0 %v1924
    %v2882 = vpop.f32.mrb[0].mxu0
    %v2883 = vadd.f32 %v2783, %v2882
    %v2884 = vpop.f32.mrb[0].mxu0
    %2885 = vmatprep.mubr.f32.mxu0 0.0
    %2886 = vmatmul.mubr.f32.gmra.mrb[0].mxu0 %v1927
    %v2887 = vpop.f32.mrb[0].mxu0
    %v2888 = vadd.f32 %v2788, %v2887
    %v2889 = vpop.f32.mrb[0].mxu0
    %2890 = vdwg.mxu0
    %v2891 = vmul.f32 %v2858, 0.5
    %v2892 = vmul.f32 %v2863, 0.5
    %v2893 = vmul.f32 %v2868, 0.5
    %v2894 = vmul.f32 %v2873, 0.5
    %v2895 = vmul.f32 %v2878, 0.5
    %v2896 = vmul.f32 %v2883, 0.5
    %v2897 = vmul.f32 %v2888, 0.5
    %v2898 = vmul.f32 %v2891, %v1638
    %v2899 = vmul.f32 %v2892, %v1639
    %v2900 = vmul.f32 %v2893, %v1640
    %v2901 = vmul.f32 %v2894, %v1641
    %v2902 = vmul.f32 %v2895, %v1642
    %v2903 = vmul.f32 %v2896, %v1643
    %v2904 = vmul.f32 %v2897, %v1644
    %2905 = vmatprep.subr.mxu0 0.0
    %2906 = vmatpush1.msra.mxu0 %v2898
    %2907 = vmatprep.subr.mxu0 0.0
    %2908 = vmatpush1.msra.mxu0 %v2899
    %2909 = vmatprep.subr.mxu0 0.0
    %2910 = vmatpush1.msra.mxu0 %v2900
    %2911 = vmatprep.subr.mxu0 0.0
    %2912 = vmatpush1.msra.mxu0 %v2901
    %2913 = vmatprep.subr.mxu0 0.0
    %2914 = vmatpush1.msra.mxu0 %v2902
    %2915 = vmatprep.subr.mxu0 0.0
    %2916 = vmatpush1.msra.mxu0 %v2903
    %2917 = vmatprep.subr.mxu0 0.0
    %2918 = vmatpush1.msra.mxu0 %v2904
    %2919 = vmatprep.subr.mxu0 0.0
    %2920 = vmatpush1.msra.mxu0 0.0
    %2921 = vmatprep.subr.mxu0 0.0
    %2922 = vmatpush1.msra.mxu0 0.0
    %2923 = vmatprep.subr.mxu0 0.0
    %2924 = vmatpush1.msra.mxu0 0.0
    %2925 = vmatprep.subr.mxu0 0.0
    %2926 = vmatpush1.msra.mxu0 0.0
    %2927 = vmatprep.subr.mxu0 0.0
    %2928 = vmatpush1.msra.mxu0 0.0
    %2929 = vmatprep.subr.mxu0 0.0
    %2930 = vmatpush1.msra.mxu0 0.0
    %2931 = vmatprep.subr.mxu0 0.0
    %2932 = vmatpush1.msra.mxu0 0.0
    %2933 = vmatprep.subr.mxu0 0.0
    %2934 = vmatpush1.msra.mxu0 0.0
    %2935 = vmatprep.subr.mxu0 0.0
    %2936 = vmatpush1.msra.mxu0 0.0
    %2937 = vmatprep.subr.mxu0 0.0
    %2938 = vmatpush1.msra.mxu0 0.0
    %2939 = vmatprep.subr.mxu0 0.0
    %2940 = vmatpush1.msra.mxu0 0.0
    %2941 = vmatprep.subr.mxu0 0.0
    %2942 = vmatpush1.msra.mxu0 0.0
    %2943 = vmatprep.subr.mxu0 0.0
    %2944 = vmatpush1.msra.mxu0 0.0
    %2945 = vmatprep.subr.mxu0 0.0
    %2946 = vmatpush1.msra.mxu0 0.0
    %2947 = vmatprep.subr.mxu0 0.0
    %2948 = vmatpush1.msra.mxu0 0.0
    %2949 = vmatprep.subr.mxu0 0.0
    %2950 = vmatpush1.msra.mxu0 0.0
    %2951 = vmatprep.subr.mxu0 0.0
    %2952 = vmatpush1.msra.mxu0 0.0
    %2953 = vmatprep.subr.mxu0 0.0
    %2954 = vmatpush1.msra.mxu0 0.0
    %2955 = vmatprep.subr.mxu0 0.0
    %2956 = vmatpush1.msra.mxu0 0.0
    %2957 = vmatprep.subr.mxu0 0.0
    %2958 = vmatpush1.msra.mxu0 0.0
    %2959 = vmatprep.subr.mxu0 0.0
    %2960 = vmatpush1.msra.mxu0 0.0
    %2961 = vmatprep.subr.mxu0 0.0
    %2962 = vmatpush1.msra.mxu0 0.0
    %2963 = vmatprep.subr.mxu0 0.0
    %2964 = vmatpush1.msra.mxu0 0.0
    %2965 = vmatprep.subr.mxu0 0.0
    %2966 = vmatpush1.msra.mxu0 0.0
    %2967 = vmatprep.subr.mxu0 0.0
    %2968 = vmatpush1.msra.mxu0 0.0
    %2969 = vmatprep.mubr.f32.mxu0 0.0
    %2970 = vmatmul.mubr.f32.gmra.mrb[0].mxu0 %v2045
    %v2971 = vpop.f32.mrb[0].mxu0
    %v2972 = vadd.f32 0.0, %v2971
    %v2973 = vpop.f32.mrb[0].mxu0
    %2974 = vdwg.mxu0
    %2976 = vrot.lane.b32.xlu0 %v2549, 64
    %v2977 = vpop.permute.xlu0 %2976
    %2979 = vmatprep.subr.mxu0 0.0
    %2980 = vmatpush1.msra.mxu0 %v2977
    %2981 = vmatprep.subr.mxu0 0.0
    %2982 = vmatpush1.msra.mxu0 0.0
    %2983 = vmatprep.subr.mxu0 0.0
    %2984 = vmatpush1.msra.mxu0 0.0
    %2985 = vmatprep.subr.mxu0 0.0
    %2986 = vmatpush1.msra.mxu0 0.0
    %2987 = vmatprep.subr.mxu0 0.0
    %2988 = vmatpush1.msra.mxu0 0.0
    %2989 = vmatprep.subr.mxu0 0.0
    %2990 = vmatpush1.msra.mxu0 0.0
    %2991 = vmatprep.subr.mxu0 0.0
    %2992 = vmatpush1.msra.mxu0 0.0
    %2993 = vmatprep.subr.mxu0 0.0
    %2994 = vmatpush1.msra.mxu0 0.0
    %2995 = vmatprep.subr.mxu0 0.0
    %2996 = vmatpush1.msra.mxu0 0.0
    %2997 = vmatprep.subr.mxu0 0.0
    %2998 = vmatpush1.msra.mxu0 0.0
    %2999 = vmatprep.subr.mxu0 0.0
    %3000 = vmatpush1.msra.mxu0 0.0
    %3001 = vmatprep.subr.mxu0 0.0
    %3002 = vmatpush1.msra.mxu0 0.0
    %3003 = vmatprep.subr.mxu0 0.0
    %3004 = vmatpush1.msra.mxu0 0.0
    %3005 = vmatprep.subr.mxu0 0.0
    %3006 = vmatpush1.msra.mxu0 0.0
    %3007 = vmatprep.subr.mxu0 0.0
    %3008 = vmatpush1.msra.mxu0 0.0
    %3009 = vmatprep.subr.mxu0 0.0
    %3010 = vmatpush1.msra.mxu0 0.0
    %3011 = vmatprep.subr.mxu0 0.0
    %3012 = vmatpush1.msra.mxu0 0.0
    %3013 = vmatprep.subr.mxu0 0.0
    %3014 = vmatpush1.msra.mxu0 0.0
    %3015 = vmatprep.subr.mxu0 0.0
    %3016 = vmatpush1.msra.mxu0 0.0
    %3017 = vmatprep.subr.mxu0 0.0
    %3018 = vmatpush1.msra.mxu0 0.0
    %3019 = vmatprep.subr.mxu0 0.0
    %3020 = vmatpush1.msra.mxu0 0.0
    %3021 = vmatprep.subr.mxu0 0.0
    %3022 = vmatpush1.msra.mxu0 0.0
    %3023 = vmatprep.subr.mxu0 0.0
    %3024 = vmatpush1.msra.mxu0 0.0
    %3025 = vmatprep.subr.mxu0 0.0
    %3026 = vmatpush1.msra.mxu0 0.0
    %3027 = vmatprep.subr.mxu0 0.0
    %3028 = vmatpush1.msra.mxu0 0.0
    %3029 = vmatprep.subr.mxu0 0.0
    %3030 = vmatpush1.msra.mxu0 0.0
    %3031 = vmatprep.subr.mxu0 0.0
    %3032 = vmatpush1.msra.mxu0 0.0
    %3033 = vmatprep.subr.mxu0 0.0
    %3034 = vmatpush1.msra.mxu0 0.0
    %3035 = vmatprep.subr.mxu0 0.0
    %3036 = vmatpush1.msra.mxu0 0.0
    %3037 = vmatprep.subr.mxu0 0.0
    %3038 = vmatpush1.msra.mxu0 0.0
    %3039 = vmatprep.subr.mxu0 0.0
    %3040 = vmatpush1.msra.mxu0 0.0
    %3041 = vmatprep.subr.mxu0 0.0
    %3042 = vmatpush1.msra.mxu0 0.0
    %3043 = vmatprep.mubr.f32.mxu0 0.0
    %3044 = vmatmul.mubr.f32.gmra.mrb[0].mxu0 %v1541
    %v3045 = vpop.f32.mrb[0].mxu0
    %v3046 = vadd.f32 0.0, %v3045
    %v3047 = vpop.f32.mrb[0].mxu0
    %3048 = vdwg.mxu0
    %3050 = vrot.lane.b32.xlu0 %v2550, 64
    %v3051 = vpop.permute.xlu0 %3050
    %3053 = vmatprep.subr.mxu0 0.0
    %3054 = vmatpush1.msra.mxu0 %v3051
    %3055 = vmatprep.subr.mxu0 0.0
    %3056 = vmatpush1.msra.mxu0 0.0
    %3057 = vmatprep.subr.mxu0 0.0
    %3058 = vmatpush1.msra.mxu0 0.0
    %3059 = vmatprep.subr.mxu0 0.0
    %3060 = vmatpush1.msra.mxu0 0.0
    %3061 = vmatprep.subr.mxu0 0.0
    %3062 = vmatpush1.msra.mxu0 0.0
    %3063 = vmatprep.subr.mxu0 0.0
    %3064 = vmatpush1.msra.mxu0 0.0
    %3065 = vmatprep.subr.mxu0 0.0
    %3066 = vmatpush1.msra.mxu0 0.0
    %3067 = vmatprep.subr.mxu0 0.0
    %3068 = vmatpush1.msra.mxu0 0.0
    %3069 = vmatprep.subr.mxu0 0.0
    %3070 = vmatpush1.msra.mxu0 0.0
    %3071 = vmatprep.subr.mxu0 0.0
    %3072 = vmatpush1.msra.mxu0 0.0
    %3073 = vmatprep.subr.mxu0 0.0
    %3074 = vmatpush1.msra.mxu0 0.0
    %3075 = vmatprep.subr.mxu0 0.0
    %3076 = vmatpush1.msra.mxu0 0.0
    %3077 = vmatprep.subr.mxu0 0.0
    %3078 = vmatpush1.msra.mxu0 0.0
    %3079 = vmatprep.subr.mxu0 0.0
    %3080 = vmatpush1.msra.mxu0 0.0
    %3081 = vmatprep.subr.mxu0 0.0
    %3082 = vmatpush1.msra.mxu0 0.0
    %3083 = vmatprep.subr.mxu0 0.0
    %3084 = vmatpush1.msra.mxu0 0.0
    %3085 = vmatprep.subr.mxu0 0.0
    %3086 = vmatpush1.msra.mxu0 0.0
    %3087 = vmatprep.subr.mxu0 0.0
    %3088 = vmatpush1.msra.mxu0 0.0
    %3089 = vmatprep.subr.mxu0 0.0
    %3090 = vmatpush1.msra.mxu0 0.0
    %3091 = vmatprep.subr.mxu0 0.0
    %3092 = vmatpush1.msra.mxu0 0.0
    %3093 = vmatprep.subr.mxu0 0.0
    %3094 = vmatpush1.msra.mxu0 0.0
    %3095 = vmatprep.subr.mxu0 0.0
    %3096 = vmatpush1.msra.mxu0 0.0
    %3097 = vmatprep.subr.mxu0 0.0
    %3098 = vmatpush1.msra.mxu0 0.0
    %3099 = vmatprep.subr.mxu0 0.0
    %3100 = vmatpush1.msra.mxu0 0.0
    %3101 = vmatprep.subr.mxu0 0.0
    %3102 = vmatpush1.msra.mxu0 0.0
    %3103 = vmatprep.subr.mxu0 0.0
    %3104 = vmatpush1.msra.mxu0 0.0
    %3105 = vmatprep.subr.mxu0 0.0
    %3106 = vmatpush1.msra.mxu0 0.0
    %3107 = vmatprep.subr.mxu0 0.0
    %3108 = vmatpush1.msra.mxu0 0.0
    %3109 = vmatprep.subr.mxu0 0.0
    %3110 = vmatpush1.msra.mxu0 0.0
    %3111 = vmatprep.subr.mxu0 0.0
    %3112 = vmatpush1.msra.mxu0 0.0
    %3113 = vmatprep.subr.mxu0 0.0
    %3114 = vmatpush1.msra.mxu0 0.0
    %3115 = vmatprep.subr.mxu0 0.0
    %3116 = vmatpush1.msra.mxu0 0.0
    %3117 = vmatprep.mubr.f32.mxu0 0.0
    %3118 = vmatmul.mubr.f32.gmra.mrb[0].mxu0 %v1541
    %v3119 = vpop.f32.mrb[0].mxu0
    %v3120 = vadd.f32 0.0, %v3119
    %v3121 = vpop.f32.mrb[0].mxu0
    %3122 = vdwg.mxu0
    %3123 = vmatprep.subr.mxu0 0.0
    %3124 = vmatpush1.msra.mxu0 %v3120
    %3125 = vmatprep.subr.mxu0 0.0
    %3126 = vmatpush1.msra.mxu0 0.0
    %3127 = vmatprep.subr.mxu0 0.0
    %3128 = vmatpush1.msra.mxu0 0.0
    %3129 = vmatprep.subr.mxu0 0.0
    %3130 = vmatpush1.msra.mxu0 0.0
    %3131 = vmatprep.subr.mxu0 0.0
    %3132 = vmatpush1.msra.mxu0 0.0
    %3133 = vmatprep.subr.mxu0 0.0
    %3134 = vmatpush1.msra.mxu0 0.0
    %3135 = vmatprep.subr.mxu0 0.0
    %3136 = vmatpush1.msra.mxu0 0.0
    %3137 = vmatprep.subr.mxu0 0.0
    %3138 = vmatpush1.msra.mxu0 0.0
    %3139 = vmatprep.subr.mxu0 0.0
    %3140 = vmatpush1.msra.mxu0 0.0
    %3141 = vmatprep.subr.mxu0 0.0
    %3142 = vmatpush1.msra.mxu0 0.0
    %3143 = vmatprep.subr.mxu0 0.0
    %3144 = vmatpush1.msra.mxu0 0.0
    %3145 = vmatprep.subr.mxu0 0.0
    %3146 = vmatpush1.msra.mxu0 0.0
    %3147 = vmatprep.subr.mxu0 0.0
    %3148 = vmatpush1.msra.mxu0 0.0
    %3149 = vmatprep.subr.mxu0 0.0
    %3150 = vmatpush1.msra.mxu0 0.0
    %3151 = vmatprep.subr.mxu0 0.0
    %3152 = vmatpush1.msra.mxu0 0.0
    %3153 = vmatprep.subr.mxu0 0.0
    %3154 = vmatpush1.msra.mxu0 0.0
    %3155 = vmatprep.subr.mxu0 0.0
    %3156 = vmatpush1.msra.mxu0 0.0
    %3157 = vmatprep.subr.mxu0 0.0
    %3158 = vmatpush1.msra.mxu0 0.0
    %3159 = vmatprep.subr.mxu0 0.0
    %3160 = vmatpush1.msra.mxu0 0.0
    %3161 = vmatprep.subr.mxu0 0.0
    %3162 = vmatpush1.msra.mxu0 0.0
    %3163 = vmatprep.subr.mxu0 0.0
    %3164 = vmatpush1.msra.mxu0 0.0
    %3165 = vmatprep.subr.mxu0 0.0
    %3166 = vmatpush1.msra.mxu0 0.0
    %3167 = vmatprep.subr.mxu0 0.0
    %3168 = vmatpush1.msra.mxu0 0.0
    %3169 = vmatprep.subr.mxu0 0.0
    %3170 = vmatpush1.msra.mxu0 0.0
    %3171 = vmatprep.subr.mxu0 0.0
    %3172 = vmatpush1.msra.mxu0 0.0
    %3173 = vmatprep.subr.mxu0 0.0
    %3174 = vmatpush1.msra.mxu0 0.0
    %3175 = vmatprep.subr.mxu0 0.0
    %3176 = vmatpush1.msra.mxu0 0.0
    %3177 = vmatprep.subr.mxu0 0.0
    %3178 = vmatpush1.msra.mxu0 0.0
    %3179 = vmatprep.subr.mxu0 0.0
    %3180 = vmatpush1.msra.mxu0 0.0
    %3181 = vmatprep.subr.mxu0 0.0
    %3182 = vmatpush1.msra.mxu0 0.0
    %3183 = vmatprep.subr.mxu0 0.0
    %3184 = vmatpush1.msra.mxu0 0.0
    %3185 = vmatprep.subr.mxu0 0.0
    %3186 = vmatpush1.msra.mxu0 0.0
    %3187 = vmatprep.mubr.f32.mxu0 0.0
    %3188 = vmatmul.mubr.f32.gmra.mrb[0].mxu0 %v1788
    %v3189 = vpop.f32.mrb[0].mxu0
    %v3190 = vadd.f32 0.0, %v3189
    %v3191 = vpop.f32.mrb[0].mxu0
    %3192 = vmatprep.mubr.f32.mxu0 0.0
    %3193 = vmatmul.mubr.f32.gmra.mrb[0].mxu0 %v1791
    %v3194 = vpop.f32.mrb[0].mxu0
    %v3195 = vadd.f32 0.0, %v3194
    %v3196 = vpop.f32.mrb[0].mxu0
    %3197 = vmatprep.mubr.f32.mxu0 0.0
    %3198 = vmatmul.mubr.f32.gmra.mrb[0].mxu0 %v1794
    %v3199 = vpop.f32.mrb[0].mxu0
    %v3200 = vadd.f32 0.0, %v3199
    %v3201 = vpop.f32.mrb[0].mxu0
    %3202 = vmatprep.mubr.f32.mxu0 0.0
    %3203 = vmatmul.mubr.f32.gmra.mrb[0].mxu0 %v1797
    %v3204 = vpop.f32.mrb[0].mxu0
    %v3205 = vadd.f32 0.0, %v3204
    %v3206 = vpop.f32.mrb[0].mxu0
    %3207 = vmatprep.mubr.f32.mxu0 0.0
    %3208 = vmatmul.mubr.f32.gmra.mrb[0].mxu0 %v1800
    %v3209 = vpop.f32.mrb[0].mxu0
    %v3210 = vadd.f32 0.0, %v3209
    %v3211 = vpop.f32.mrb[0].mxu0
    %3212 = vmatprep.mubr.f32.mxu0 0.0
    %3213 = vmatmul.mubr.f32.gmra.mrb[0].mxu0 %v1803
    %v3214 = vpop.f32.mrb[0].mxu0
    %v3215 = vadd.f32 0.0, %v3214
    %v3216 = vpop.f32.mrb[0].mxu0
    %3217 = vmatprep.mubr.f32.mxu0 0.0
    %3218 = vmatmul.mubr.f32.gmra.mrb[0].mxu0 %v1806
    %v3219 = vpop.f32.mrb[0].mxu0
    %v3220 = vadd.f32 0.0, %v3219
    %v3221 = vpop.f32.mrb[0].mxu0
    %3222 = vdwg.mxu0
    %3223 = vmatprep.subr.mxu0 0.0
    %3224 = vmatpush1.msra.mxu0 %v3046
    %3225 = vmatprep.subr.mxu0 0.0
    %3226 = vmatpush1.msra.mxu0 0.0
    %3227 = vmatprep.subr.mxu0 0.0
    %3228 = vmatpush1.msra.mxu0 0.0
    %3229 = vmatprep.subr.mxu0 0.0
    %3230 = vmatpush1.msra.mxu0 0.0
    %3231 = vmatprep.subr.mxu0 0.0
    %3232 = vmatpush1.msra.mxu0 0.0
    %3233 = vmatprep.subr.mxu0 0.0
    %3234 = vmatpush1.msra.mxu0 0.0
    %3235 = vmatprep.subr.mxu0 0.0
    %3236 = vmatpush1.msra.mxu0 0.0
    %3237 = vmatprep.subr.mxu0 0.0
    %3238 = vmatpush1.msra.mxu0 0.0
    %3239 = vmatprep.subr.mxu0 0.0
    %3240 = vmatpush1.msra.mxu0 0.0
    %3241 = vmatprep.subr.mxu0 0.0
    %3242 = vmatpush1.msra.mxu0 0.0
    %3243 = vmatprep.subr.mxu0 0.0
    %3244 = vmatpush1.msra.mxu0 0.0
    %3245 = vmatprep.subr.mxu0 0.0
    %3246 = vmatpush1.msra.mxu0 0.0
    %3247 = vmatprep.subr.mxu0 0.0
    %3248 = vmatpush1.msra.mxu0 0.0
    %3249 = vmatprep.subr.mxu0 0.0
    %3250 = vmatpush1.msra.mxu0 0.0
    %3251 = vmatprep.subr.mxu0 0.0
    %3252 = vmatpush1.msra.mxu0 0.0
    %3253 = vmatprep.subr.mxu0 0.0
    %3254 = vmatpush1.msra.mxu0 0.0
    %3255 = vmatprep.subr.mxu0 0.0
    %3256 = vmatpush1.msra.mxu0 0.0
    %3257 = vmatprep.subr.mxu0 0.0
    %3258 = vmatpush1.msra.mxu0 0.0
    %3259 = vmatprep.subr.mxu0 0.0
    %3260 = vmatpush1.msra.mxu0 0.0
    %3261 = vmatprep.subr.mxu0 0.0
    %3262 = vmatpush1.msra.mxu0 0.0
    %3263 = vmatprep.subr.mxu0 0.0
    %3264 = vmatpush1.msra.mxu0 0.0
    %3265 = vmatprep.subr.mxu0 0.0
    %3266 = vmatpush1.msra.mxu0 0.0
    %3267 = vmatprep.subr.mxu0 0.0
    %3268 = vmatpush1.msra.mxu0 0.0
    %3269 = vmatprep.subr.mxu0 0.0
    %3270 = vmatpush1.msra.mxu0 0.0
    %3271 = vmatprep.subr.mxu0 0.0
    %3272 = vmatpush1.msra.mxu0 0.0
    %3273 = vmatprep.subr.mxu0 0.0
    %3274 = vmatpush1.msra.mxu0 0.0
    %3275 = vmatprep.subr.mxu0 0.0
    %3276 = vmatpush1.msra.mxu0 0.0
    %3277 = vmatprep.subr.mxu0 0.0
    %3278 = vmatpush1.msra.mxu0 0.0
    %3279 = vmatprep.subr.mxu0 0.0
    %3280 = vmatpush1.msra.mxu0 0.0
    %3281 = vmatprep.subr.mxu0 0.0
    %3282 = vmatpush1.msra.mxu0 0.0
    %3283 = vmatprep.subr.mxu0 0.0
    %3284 = vmatpush1.msra.mxu0 0.0
    %3285 = vmatprep.subr.mxu0 0.0
    %3286 = vmatpush1.msra.mxu0 0.0
    %3287 = vmatprep.mubr.f32.mxu0 0.0
    %3288 = vmatmul.mubr.f32.gmra.mrb[0].mxu0 %v1909
    %v3289 = vpop.f32.mrb[0].mxu0
    %v3290 = vadd.f32 %v3190, %v3289
    %v3291 = vpop.f32.mrb[0].mxu0
    %3292 = vmatprep.mubr.f32.mxu0 0.0
    %3293 = vmatmul.mubr.f32.gmra.mrb[0].mxu0 %v1912
    %v3294 = vpop.f32.mrb[0].mxu0
    %v3295 = vadd.f32 %v3195, %v3294
    %v3296 = vpop.f32.mrb[0].mxu0
    %3297 = vmatprep.mubr.f32.mxu0 0.0
    %3298 = vmatmul.mubr.f32.gmra.mrb[0].mxu0 %v1915
    %v3299 = vpop.f32.mrb[0].mxu0
    %v3300 = vadd.f32 %v3200, %v3299
    %v3301 = vpop.f32.mrb[0].mxu0
    %3302 = vmatprep.mubr.f32.mxu0 0.0
    %3303 = vmatmul.mubr.f32.gmra.mrb[0].mxu0 %v1918
    %v3304 = vpop.f32.mrb[0].mxu0
    %v3305 = vadd.f32 %v3205, %v3304
    %v3306 = vpop.f32.mrb[0].mxu0
    %3307 = vmatprep.mubr.f32.mxu0 0.0
    %3308 = vmatmul.mubr.f32.gmra.mrb[0].mxu0 %v1921
    %v3309 = vpop.f32.mrb[0].mxu0
    %v3310 = vadd.f32 %v3210, %v3309
    %v3311 = vpop.f32.mrb[0].mxu0
    %3312 = vmatprep.mubr.f32.mxu0 0.0
    %3313 = vmatmul.mubr.f32.gmra.mrb[0].mxu0 %v1924
    %v3314 = vpop.f32.mrb[0].mxu0
    %v3315 = vadd.f32 %v3215, %v3314
    %v3316 = vpop.f32.mrb[0].mxu0
    %3317 = vmatprep.mubr.f32.mxu0 0.0
    %3318 = vmatmul.mubr.f32.gmra.mrb[0].mxu0 %v1927
    %v3319 = vpop.f32.mrb[0].mxu0
    %v3320 = vadd.f32 %v3220, %v3319
    %v3321 = vpop.f32.mrb[0].mxu0
    %3322 = vdwg.mxu0
    %v3323 = vmul.f32 %v3290, 0.5
    %v3324 = vmul.f32 %v3295, 0.5
    %v3325 = vmul.f32 %v3300, 0.5
    %v3326 = vmul.f32 %v3305, 0.5
    %v3327 = vmul.f32 %v3310, 0.5
    %v3328 = vmul.f32 %v3315, 0.5
    %v3329 = vmul.f32 %v3320, 0.5
    %v3330 = vmul.f32 %v3323, %v1638
    %v3331 = vmul.f32 %v3324, %v1639
    %v3332 = vmul.f32 %v3325, %v1640
    %v3333 = vmul.f32 %v3326, %v1641
    %v3334 = vmul.f32 %v3327, %v1642
    %v3335 = vmul.f32 %v3328, %v1643
    %v3336 = vmul.f32 %v3329, %v1644
    %3337 = vmatprep.subr.mxu0 0.0
    %3338 = vmatpush1.msra.mxu0 %v3330
    %3339 = vmatprep.subr.mxu0 0.0
    %3340 = vmatpush1.msra.mxu0 %v3331
    %3341 = vmatprep.subr.mxu0 0.0
    %3342 = vmatpush1.msra.mxu0 %v3332
    %3343 = vmatprep.subr.mxu0 0.0
    %3344 = vmatpush1.msra.mxu0 %v3333
    %3345 = vmatprep.subr.mxu0 0.0
    %3346 = vmatpush1.msra.mxu0 %v3334
    %3347 = vmatprep.subr.mxu0 0.0
    %3348 = vmatpush1.msra.mxu0 %v3335
    %3349 = vmatprep.subr.mxu0 0.0
    %3350 = vmatpush1.msra.mxu0 %v3336
    %3351 = vmatprep.subr.mxu0 0.0
    %3352 = vmatpush1.msra.mxu0 0.0
    %3353 = vmatprep.subr.mxu0 0.0
    %3354 = vmatpush1.msra.mxu0 0.0
    %3355 = vmatprep.subr.mxu0 0.0
    %3356 = vmatpush1.msra.mxu0 0.0
    %3357 = vmatprep.subr.mxu0 0.0
    %3358 = vmatpush1.msra.mxu0 0.0
    %3359 = vmatprep.subr.mxu0 0.0
    %3360 = vmatpush1.msra.mxu0 0.0
    %3361 = vmatprep.subr.mxu0 0.0
    %3362 = vmatpush1.msra.mxu0 0.0
    %3363 = vmatprep.subr.mxu0 0.0
    %3364 = vmatpush1.msra.mxu0 0.0
    %3365 = vmatprep.subr.mxu0 0.0
    %3366 = vmatpush1.msra.mxu0 0.0
    %3367 = vmatprep.subr.mxu0 0.0
    %3368 = vmatpush1.msra.mxu0 0.0
    %3369 = vmatprep.subr.mxu0 0.0
    %3370 = vmatpush1.msra.mxu0 0.0
    %3371 = vmatprep.subr.mxu0 0.0
    %3372 = vmatpush1.msra.mxu0 0.0
    %3373 = vmatprep.subr.mxu0 0.0
    %3374 = vmatpush1.msra.mxu0 0.0
    %3375 = vmatprep.subr.mxu0 0.0
    %3376 = vmatpush1.msra.mxu0 0.0
    %3377 = vmatprep.subr.mxu0 0.0
    %3378 = vmatpush1.msra.mxu0 0.0
    %3379 = vmatprep.subr.mxu0 0.0
    %3380 = vmatpush1.msra.mxu0 0.0
    %3381 = vmatprep.subr.mxu0 0.0
    %3382 = vmatpush1.msra.mxu0 0.0
    %3383 = vmatprep.subr.mxu0 0.0
    %3384 = vmatpush1.msra.mxu0 0.0
    %3385 = vmatprep.subr.mxu0 0.0
    %3386 = vmatpush1.msra.mxu0 0.0
    %3387 = vmatprep.subr.mxu0 0.0
    %3388 = vmatpush1.msra.mxu0 0.0
    %3389 = vmatprep.subr.mxu0 0.0
    %3390 = vmatpush1.msra.mxu0 0.0
    %3391 = vmatprep.subr.mxu0 0.0
    %3392 = vmatpush1.msra.mxu0 0.0
    %3393 = vmatprep.subr.mxu0 0.0
    %3394 = vmatpush1.msra.mxu0 0.0
    %3395 = vmatprep.subr.mxu0 0.0
    %3396 = vmatpush1.msra.mxu0 0.0
    %3397 = vmatprep.subr.mxu0 0.0
    %3398 = vmatpush1.msra.mxu0 0.0
    %3399 = vmatprep.subr.mxu0 0.0
    %3400 = vmatpush1.msra.mxu0 0.0
    %3401 = vmatprep.mubr.f32.mxu0 0.0
    %3402 = vmatmul.mubr.f32.gmra.mrb[0].mxu0 %v2045
    %v3403 = vpop.f32.mrb[0].mxu0
    %v3404 = vadd.f32 0.0, %v3403
    %v3405 = vpop.f32.mrb[0].mxu0
    %3406 = vdwg.mxu0
    %v3407 = vld [vmem:[%s7 + $0x10] sm:$0xff]
    %v3408 = vld [vmem:[#allocation11 + $0x10] sm:$0xff]
    %3409 = vmatprep.subr.mxu0 0.0
    %3410 = vmatpush1.msra.mxu0 %v3407
    %3411 = vmatprep.subr.mxu0 0.0
    %3412 = vmatpush1.msra.mxu0 0.0
    %3413 = vmatprep.subr.mxu0 0.0
    %3414 = vmatpush1.msra.mxu0 0.0
    %3415 = vmatprep.subr.mxu0 0.0
    %3416 = vmatpush1.msra.mxu0 0.0
    %3417 = vmatprep.subr.mxu0 0.0
    %3418 = vmatpush1.msra.mxu0 0.0
    %3419 = vmatprep.subr.mxu0 0.0
    %3420 = vmatpush1.msra.mxu0 0.0
    %3421 = vmatprep.subr.mxu0 0.0
    %3422 = vmatpush1.msra.mxu0 0.0
    %3423 = vmatprep.subr.mxu0 0.0
    %3424 = vmatpush1.msra.mxu0 0.0
    %3425 = vmatprep.subr.mxu0 0.0
    %3426 = vmatpush1.msra.mxu0 0.0
    %3427 = vmatprep.subr.mxu0 0.0
    %3428 = vmatpush1.msra.mxu0 0.0
    %3429 = vmatprep.subr.mxu0 0.0
    %3430 = vmatpush1.msra.mxu0 0.0
    %3431 = vmatprep.subr.mxu0 0.0
    %3432 = vmatpush1.msra.mxu0 0.0
    %3433 = vmatprep.subr.mxu0 0.0
    %3434 = vmatpush1.msra.mxu0 0.0
    %3435 = vmatprep.subr.mxu0 0.0
    %3436 = vmatpush1.msra.mxu0 0.0
    %3437 = vmatprep.subr.mxu0 0.0
    %3438 = vmatpush1.msra.mxu0 0.0
    %3439 = vmatprep.subr.mxu0 0.0
    %3440 = vmatpush1.msra.mxu0 0.0
    %3441 = vmatprep.subr.mxu0 0.0
    %3442 = vmatpush1.msra.mxu0 0.0
    %3443 = vmatprep.subr.mxu0 0.0
    %3444 = vmatpush1.msra.mxu0 0.0
    %3445 = vmatprep.subr.mxu0 0.0
    %3446 = vmatpush1.msra.mxu0 0.0
    %3447 = vmatprep.subr.mxu0 0.0
    %3448 = vmatpush1.msra.mxu0 0.0
    %3449 = vmatprep.subr.mxu0 0.0
    %3450 = vmatpush1.msra.mxu0 0.0
    %3451 = vmatprep.subr.mxu0 0.0
    %3452 = vmatpush1.msra.mxu0 0.0
    %3453 = vmatprep.subr.mxu0 0.0
    %3454 = vmatpush1.msra.mxu0 0.0
    %3455 = vmatprep.subr.mxu0 0.0
    %3456 = vmatpush1.msra.mxu0 0.0
    %3457 = vmatprep.subr.mxu0 0.0
    %3458 = vmatpush1.msra.mxu0 0.0
    %3459 = vmatprep.subr.mxu0 0.0
    %3460 = vmatpush1.msra.mxu0 0.0
    %3461 = vmatprep.subr.mxu0 0.0
    %3462 = vmatpush1.msra.mxu0 0.0
    %3463 = vmatprep.subr.mxu0 0.0
    %3464 = vmatpush1.msra.mxu0 0.0
    %3465 = vmatprep.subr.mxu0 0.0
    %3466 = vmatpush1.msra.mxu0 0.0
    %3467 = vmatprep.subr.mxu0 0.0
    %3468 = vmatpush1.msra.mxu0 0.0
    %3469 = vmatprep.subr.mxu0 0.0
    %3470 = vmatpush1.msra.mxu0 0.0
    %3471 = vmatprep.subr.mxu0 0.0
    %3472 = vmatpush1.msra.mxu0 0.0
    %3473 = vmatprep.mubr.f32.mxu0 0.0
    %3474 = vmatmul.mubr.f32.gmra.mrb[0].mxu0 %v1541
    %v3475 = vpop.f32.mrb[0].mxu0
    %v3476 = vadd.f32 0.0, %v3475
    %v3477 = vpop.f32.mrb[0].mxu0
    %3478 = vdwg.mxu0
    %3479 = vmatprep.subr.mxu0 0.0
    %3480 = vmatpush1.msra.mxu0 %v3408
    %3481 = vmatprep.subr.mxu0 0.0
    %3482 = vmatpush1.msra.mxu0 0.0
    %3483 = vmatprep.subr.mxu0 0.0
    %3484 = vmatpush1.msra.mxu0 0.0
    %3485 = vmatprep.subr.mxu0 0.0
    %3486 = vmatpush1.msra.mxu0 0.0
    %3487 = vmatprep.subr.mxu0 0.0
    %3488 = vmatpush1.msra.mxu0 0.0
    %3489 = vmatprep.subr.mxu0 0.0
    %3490 = vmatpush1.msra.mxu0 0.0
    %3491 = vmatprep.subr.mxu0 0.0
    %3492 = vmatpush1.msra.mxu0 0.0
    %3493 = vmatprep.subr.mxu0 0.0
    %3494 = vmatpush1.msra.mxu0 0.0
    %3495 = vmatprep.subr.mxu0 0.0
    %3496 = vmatpush1.msra.mxu0 0.0
    %3497 = vmatprep.subr.mxu0 0.0
    %3498 = vmatpush1.msra.mxu0 0.0
    %3499 = vmatprep.subr.mxu0 0.0
    %3500 = vmatpush1.msra.mxu0 0.0
    %3501 = vmatprep.subr.mxu0 0.0
    %3502 = vmatpush1.msra.mxu0 0.0
    %3503 = vmatprep.subr.mxu0 0.0
    %3504 = vmatpush1.msra.mxu0 0.0
    %3505 = vmatprep.subr.mxu0 0.0
    %3506 = vmatpush1.msra.mxu0 0.0
    %3507 = vmatprep.subr.mxu0 0.0
    %3508 = vmatpush1.msra.mxu0 0.0
    %3509 = vmatprep.subr.mxu0 0.0
    %3510 = vmatpush1.msra.mxu0 0.0
    %3511 = vmatprep.subr.mxu0 0.0
    %3512 = vmatpush1.msra.mxu0 0.0
    %3513 = vmatprep.subr.mxu0 0.0
    %3514 = vmatpush1.msra.mxu0 0.0
    %3515 = vmatprep.subr.mxu0 0.0
    %3516 = vmatpush1.msra.mxu0 0.0
    %3517 = vmatprep.subr.mxu0 0.0
    %3518 = vmatpush1.msra.mxu0 0.0
    %3519 = vmatprep.subr.mxu0 0.0
    %3520 = vmatpush1.msra.mxu0 0.0
    %3521 = vmatprep.subr.mxu0 0.0
    %3522 = vmatpush1.msra.mxu0 0.0
    %3523 = vmatprep.subr.mxu0 0.0
    %3524 = vmatpush1.msra.mxu0 0.0
    %3525 = vmatprep.subr.mxu0 0.0
    %3526 = vmatpush1.msra.mxu0 0.0
    %3527 = vmatprep.subr.mxu0 0.0
    %3528 = vmatpush1.msra.mxu0 0.0
    %3529 = vmatprep.subr.mxu0 0.0
    %3530 = vmatpush1.msra.mxu0 0.0
    %3531 = vmatprep.subr.mxu0 0.0
    %3532 = vmatpush1.msra.mxu0 0.0
    %3533 = vmatprep.subr.mxu0 0.0
    %3534 = vmatpush1.msra.mxu0 0.0
    %3535 = vmatprep.subr.mxu0 0.0
    %3536 = vmatpush1.msra.mxu0 0.0
    %3537 = vmatprep.subr.mxu0 0.0
    %3538 = vmatpush1.msra.mxu0 0.0
    %3539 = vmatprep.subr.mxu0 0.0
    %3540 = vmatpush1.msra.mxu0 0.0
    %3541 = vmatprep.subr.mxu0 0.0
    %3542 = vmatpush1.msra.mxu0 0.0
    %3543 = vmatprep.mubr.f32.mxu0 0.0
    %3544 = vmatmul.mubr.f32.gmra.mrb[0].mxu0 %v1541
    %v3545 = vpop.f32.mrb[0].mxu0
    %v3546 = vadd.f32 0.0, %v3545
    %v3547 = vpop.f32.mrb[0].mxu0
    %3548 = vdwg.mxu0
    %3549 = vmatprep.subr.mxu0 0.0
    %3550 = vmatpush1.msra.mxu0 %v3546
    %3551 = vmatprep.subr.mxu0 0.0
    %3552 = vmatpush1.msra.mxu0 0.0
    %3553 = vmatprep.subr.mxu0 0.0
    %3554 = vmatpush1.msra.mxu0 0.0
    %3555 = vmatprep.subr.mxu0 0.0
    %3556 = vmatpush1.msra.mxu0 0.0
    %3557 = vmatprep.subr.mxu0 0.0
    %3558 = vmatpush1.msra.mxu0 0.0
    %3559 = vmatprep.subr.mxu0 0.0
    %3560 = vmatpush1.msra.mxu0 0.0
    %3561 = vmatprep.subr.mxu0 0.0
    %3562 = vmatpush1.msra.mxu0 0.0
    %3563 = vmatprep.subr.mxu0 0.0
    %3564 = vmatpush1.msra.mxu0 0.0
    %3565 = vmatprep.subr.mxu0 0.0
    %3566 = vmatpush1.msra.mxu0 0.0
    %3567 = vmatprep.subr.mxu0 0.0
    %3568 = vmatpush1.msra.mxu0 0.0
    %3569 = vmatprep.subr.mxu0 0.0
    %3570 = vmatpush1.msra.mxu0 0.0
    %3571 = vmatprep.subr.mxu0 0.0
    %3572 = vmatpush1.msra.mxu0 0.0
    %3573 = vmatprep.subr.mxu0 0.0
    %3574 = vmatpush1.msra.mxu0 0.0
    %3575 = vmatprep.subr.mxu0 0.0
    %3576 = vmatpush1.msra.mxu0 0.0
    %3577 = vmatprep.subr.mxu0 0.0
    %3578 = vmatpush1.msra.mxu0 0.0
    %3579 = vmatprep.subr.mxu0 0.0
    %3580 = vmatpush1.msra.mxu0 0.0
    %3581 = vmatprep.subr.mxu0 0.0
    %3582 = vmatpush1.msra.mxu0 0.0
    %3583 = vmatprep.subr.mxu0 0.0
    %3584 = vmatpush1.msra.mxu0 0.0
    %3585 = vmatprep.subr.mxu0 0.0
    %3586 = vmatpush1.msra.mxu0 0.0
    %3587 = vmatprep.subr.mxu0 0.0
    %3588 = vmatpush1.msra.mxu0 0.0
    %3589 = vmatprep.subr.mxu0 0.0
    %3590 = vmatpush1.msra.mxu0 0.0
    %3591 = vmatprep.subr.mxu0 0.0
    %3592 = vmatpush1.msra.mxu0 0.0
    %3593 = vmatprep.subr.mxu0 0.0
    %3594 = vmatpush1.msra.mxu0 0.0
    %3595 = vmatprep.subr.mxu0 0.0
    %3596 = vmatpush1.msra.mxu0 0.0
    %3597 = vmatprep.subr.mxu0 0.0
    %3598 = vmatpush1.msra.mxu0 0.0
    %3599 = vmatprep.subr.mxu0 0.0
    %3600 = vmatpush1.msra.mxu0 0.0
    %3601 = vmatprep.subr.mxu0 0.0
    %3602 = vmatpush1.msra.mxu0 0.0
    %3603 = vmatprep.subr.mxu0 0.0
    %3604 = vmatpush1.msra.mxu0 0.0
    %3605 = vmatprep.subr.mxu0 0.0
    %3606 = vmatpush1.msra.mxu0 0.0
    %3607 = vmatprep.subr.mxu0 0.0
    %3608 = vmatpush1.msra.mxu0 0.0
    %3609 = vmatprep.subr.mxu0 0.0
    %3610 = vmatpush1.msra.mxu0 0.0
    %3611 = vmatprep.subr.mxu0 0.0
    %3612 = vmatpush1.msra.mxu0 0.0
    %3613 = vmatprep.mubr.f32.mxu0 0.0
    %3614 = vmatmul.mubr.f32.gmra.mrb[0].mxu0 %v1788
    %v3615 = vpop.f32.mrb[0].mxu0
    %v3616 = vadd.f32 0.0, %v3615
    %v3617 = vpop.f32.mrb[0].mxu0
    %3618 = vmatprep.mubr.f32.mxu0 0.0
    %3619 = vmatmul.mubr.f32.gmra.mrb[0].mxu0 %v1791
    %v3620 = vpop.f32.mrb[0].mxu0
    %v3621 = vadd.f32 0.0, %v3620
    %v3622 = vpop.f32.mrb[0].mxu0
    %3623 = vmatprep.mubr.f32.mxu0 0.0
    %3624 = vmatmul.mubr.f32.gmra.mrb[0].mxu0 %v1794
    %v3625 = vpop.f32.mrb[0].mxu0
    %v3626 = vadd.f32 0.0, %v3625
    %v3627 = vpop.f32.mrb[0].mxu0
    %3628 = vmatprep.mubr.f32.mxu0 0.0
    %3629 = vmatmul.mubr.f32.gmra.mrb[0].mxu0 %v1797
    %v3630 = vpop.f32.mrb[0].mxu0
    %v3631 = vadd.f32 0.0, %v3630
    %v3632 = vpop.f32.mrb[0].mxu0
    %3633 = vmatprep.mubr.f32.mxu0 0.0
    %3634 = vmatmul.mubr.f32.gmra.mrb[0].mxu0 %v1800
    %v3635 = vpop.f32.mrb[0].mxu0
    %v3636 = vadd.f32 0.0, %v3635
    %v3637 = vpop.f32.mrb[0].mxu0
    %3638 = vmatprep.mubr.f32.mxu0 0.0
    %3639 = vmatmul.mubr.f32.gmra.mrb[0].mxu0 %v1803
    %v3640 = vpop.f32.mrb[0].mxu0
    %v3641 = vadd.f32 0.0, %v3640
    %v3642 = vpop.f32.mrb[0].mxu0
    %3643 = vmatprep.mubr.f32.mxu0 0.0
    %3644 = vmatmul.mubr.f32.gmra.mrb[0].mxu0 %v1806
    %v3645 = vpop.f32.mrb[0].mxu0
    %v3646 = vadd.f32 0.0, %v3645
    %v3647 = vpop.f32.mrb[0].mxu0
    %3648 = vdwg.mxu0
    %3649 = vmatprep.subr.mxu0 0.0
    %3650 = vmatpush1.msra.mxu0 %v3476
    %3651 = vmatprep.subr.mxu0 0.0
    %3652 = vmatpush1.msra.mxu0 0.0
    %3653 = vmatprep.subr.mxu0 0.0
    %3654 = vmatpush1.msra.mxu0 0.0
    %3655 = vmatprep.subr.mxu0 0.0
    %3656 = vmatpush1.msra.mxu0 0.0
    %3657 = vmatprep.subr.mxu0 0.0
    %3658 = vmatpush1.msra.mxu0 0.0
    %3659 = vmatprep.subr.mxu0 0.0
    %3660 = vmatpush1.msra.mxu0 0.0
    %3661 = vmatprep.subr.mxu0 0.0
    %3662 = vmatpush1.msra.mxu0 0.0
    %3663 = vmatprep.subr.mxu0 0.0
    %3664 = vmatpush1.msra.mxu0 0.0
    %3665 = vmatprep.subr.mxu0 0.0
    %3666 = vmatpush1.msra.mxu0 0.0
    %3667 = vmatprep.subr.mxu0 0.0
    %3668 = vmatpush1.msra.mxu0 0.0
    %3669 = vmatprep.subr.mxu0 0.0
    %3670 = vmatpush1.msra.mxu0 0.0
    %3671 = vmatprep.subr.mxu0 0.0
    %3672 = vmatpush1.msra.mxu0 0.0
    %3673 = vmatprep.subr.mxu0 0.0
    %3674 = vmatpush1.msra.mxu0 0.0
    %3675 = vmatprep.subr.mxu0 0.0
    %3676 = vmatpush1.msra.mxu0 0.0
    %3677 = vmatprep.subr.mxu0 0.0
    %3678 = vmatpush1.msra.mxu0 0.0
    %3679 = vmatprep.subr.mxu0 0.0
    %3680 = vmatpush1.msra.mxu0 0.0
    %3681 = vmatprep.subr.mxu0 0.0
    %3682 = vmatpush1.msra.mxu0 0.0
    %3683 = vmatprep.subr.mxu0 0.0
    %3684 = vmatpush1.msra.mxu0 0.0
    %3685 = vmatprep.subr.mxu0 0.0
    %3686 = vmatpush1.msra.mxu0 0.0
    %3687 = vmatprep.subr.mxu0 0.0
    %3688 = vmatpush1.msra.mxu0 0.0
    %3689 = vmatprep.subr.mxu0 0.0
    %3690 = vmatpush1.msra.mxu0 0.0
    %3691 = vmatprep.subr.mxu0 0.0
    %3692 = vmatpush1.msra.mxu0 0.0
    %3693 = vmatprep.subr.mxu0 0.0
    %3694 = vmatpush1.msra.mxu0 0.0
    %3695 = vmatprep.subr.mxu0 0.0
    %3696 = vmatpush1.msra.mxu0 0.0
    %3697 = vmatprep.subr.mxu0 0.0
    %3698 = vmatpush1.msra.mxu0 0.0
    %3699 = vmatprep.subr.mxu0 0.0
    %3700 = vmatpush1.msra.mxu0 0.0
    %3701 = vmatprep.subr.mxu0 0.0
    %3702 = vmatpush1.msra.mxu0 0.0
    %3703 = vmatprep.subr.mxu0 0.0
    %3704 = vmatpush1.msra.mxu0 0.0
    %3705 = vmatprep.subr.mxu0 0.0
    %3706 = vmatpush1.msra.mxu0 0.0
    %3707 = vmatprep.subr.mxu0 0.0
    %3708 = vmatpush1.msra.mxu0 0.0
    %3709 = vmatprep.subr.mxu0 0.0
    %3710 = vmatpush1.msra.mxu0 0.0
    %3711 = vmatprep.subr.mxu0 0.0
    %3712 = vmatpush1.msra.mxu0 0.0
    %3713 = vmatprep.mubr.f32.mxu0 0.0
    %3714 = vmatmul.mubr.f32.gmra.mrb[0].mxu0 %v1909
    %v3715 = vpop.f32.mrb[0].mxu0
    %v3716 = vadd.f32 %v3616, %v3715
    %v3717 = vpop.f32.mrb[0].mxu0
    %3718 = vmatprep.mubr.f32.mxu0 0.0
    %3719 = vmatmul.mubr.f32.gmra.mrb[0].mxu0 %v1912
    %v3720 = vpop.f32.mrb[0].mxu0
    %v3721 = vadd.f32 %v3621, %v3720
    %v3722 = vpop.f32.mrb[0].mxu0
    %3723 = vmatprep.mubr.f32.mxu0 0.0
    %3724 = vmatmul.mubr.f32.gmra.mrb[0].mxu0 %v1915
    %v3725 = vpop.f32.mrb[0].mxu0
    %v3726 = vadd.f32 %v3626, %v3725
    %v3727 = vpop.f32.mrb[0].mxu0
    %3728 = vmatprep.mubr.f32.mxu0 0.0
    %3729 = vmatmul.mubr.f32.gmra.mrb[0].mxu0 %v1918
    %v3730 = vpop.f32.mrb[0].mxu0
    %v3731 = vadd.f32 %v3631, %v3730
    %v3732 = vpop.f32.mrb[0].mxu0
    %3733 = vmatprep.mubr.f32.mxu0 0.0
    %3734 = vmatmul.mubr.f32.gmra.mrb[0].mxu0 %v1921
    %v3735 = vpop.f32.mrb[0].mxu0
    %v3736 = vadd.f32 %v3636, %v3735
    %v3737 = vpop.f32.mrb[0].mxu0
    %3738 = vmatprep.mubr.f32.mxu0 0.0
    %3739 = vmatmul.mubr.f32.gmra.mrb[0].mxu0 %v1924
    %v3740 = vpop.f32.mrb[0].mxu0
    %v3741 = vadd.f32 %v3641, %v3740
    %v3742 = vpop.f32.mrb[0].mxu0
    %3743 = vmatprep.mubr.f32.mxu0 0.0
    %3744 = vmatmul.mubr.f32.gmra.mrb[0].mxu0 %v1927
    %v3745 = vpop.f32.mrb[0].mxu0
    %v3746 = vadd.f32 %v3646, %v3745
    %v3747 = vpop.f32.mrb[0].mxu0
    %3748 = vdwg.mxu0
    %v3749 = vmul.f32 %v3716, 0.5
    %v3750 = vmul.f32 %v3721, 0.5
    %v3751 = vmul.f32 %v3726, 0.5
    %v3752 = vmul.f32 %v3731, 0.5
    %v3753 = vmul.f32 %v3736, 0.5
    %v3754 = vmul.f32 %v3741, 0.5
    %v3755 = vmul.f32 %v3746, 0.5
    %v3756 = vmul.f32 %v3749, %v1638
    %v3757 = vmul.f32 %v3750, %v1639
    %v3758 = vmul.f32 %v3751, %v1640
    %v3759 = vmul.f32 %v3752, %v1641
    %v3760 = vmul.f32 %v3753, %v1642
    %v3761 = vmul.f32 %v3754, %v1643
    %v3762 = vmul.f32 %v3755, %v1644
    %3763 = vmatprep.subr.mxu0 0.0
    %3764 = vmatpush1.msra.mxu0 %v3756
    %3765 = vmatprep.subr.mxu0 0.0
    %3766 = vmatpush1.msra.mxu0 %v3757
    %3767 = vmatprep.subr.mxu0 0.0
    %3768 = vmatpush1.msra.mxu0 %v3758
    %3769 = vmatprep.subr.mxu0 0.0
    %3770 = vmatpush1.msra.mxu0 %v3759
    %3771 = vmatprep.subr.mxu0 0.0
    %3772 = vmatpush1.msra.mxu0 %v3760
    %3773 = vmatprep.subr.mxu0 0.0
    %3774 = vmatpush1.msra.mxu0 %v3761
    %3775 = vmatprep.subr.mxu0 0.0
    %3776 = vmatpush1.msra.mxu0 %v3762
    %3777 = vmatprep.subr.mxu0 0.0
    %3778 = vmatpush1.msra.mxu0 0.0
    %3779 = vmatprep.subr.mxu0 0.0
    %3780 = vmatpush1.msra.mxu0 0.0
    %3781 = vmatprep.subr.mxu0 0.0
    %3782 = vmatpush1.msra.mxu0 0.0
    %3783 = vmatprep.subr.mxu0 0.0
    %3784 = vmatpush1.msra.mxu0 0.0
    %3785 = vmatprep.subr.mxu0 0.0
    %3786 = vmatpush1.msra.mxu0 0.0
    %3787 = vmatprep.subr.mxu0 0.0
    %3788 = vmatpush1.msra.mxu0 0.0
    %3789 = vmatprep.subr.mxu0 0.0
    %3790 = vmatpush1.msra.mxu0 0.0
    %3791 = vmatprep.subr.mxu0 0.0
    %3792 = vmatpush1.msra.mxu0 0.0
    %3793 = vmatprep.subr.mxu0 0.0
    %3794 = vmatpush1.msra.mxu0 0.0
    %3795 = vmatprep.subr.mxu0 0.0
    %3796 = vmatpush1.msra.mxu0 0.0
    %3797 = vmatprep.subr.mxu0 0.0
    %3798 = vmatpush1.msra.mxu0 0.0
    %3799 = vmatprep.subr.mxu0 0.0
    %3800 = vmatpush1.msra.mxu0 0.0
    %3801 = vmatprep.subr.mxu0 0.0
    %3802 = vmatpush1.msra.mxu0 0.0
    %3803 = vmatprep.subr.mxu0 0.0
    %3804 = vmatpush1.msra.mxu0 0.0
    %3805 = vmatprep.subr.mxu0 0.0
    %3806 = vmatpush1.msra.mxu0 0.0
    %3807 = vmatprep.subr.mxu0 0.0
    %3808 = vmatpush1.msra.mxu0 0.0
    %3809 = vmatprep.subr.mxu0 0.0
    %3810 = vmatpush1.msra.mxu0 0.0
    %3811 = vmatprep.subr.mxu0 0.0
    %3812 = vmatpush1.msra.mxu0 0.0
    %3813 = vmatprep.subr.mxu0 0.0
    %3814 = vmatpush1.msra.mxu0 0.0
    %3815 = vmatprep.subr.mxu0 0.0
    %3816 = vmatpush1.msra.mxu0 0.0
    %3817 = vmatprep.subr.mxu0 0.0
    %3818 = vmatpush1.msra.mxu0 0.0
    %3819 = vmatprep.subr.mxu0 0.0
    %3820 = vmatpush1.msra.mxu0 0.0
    %3821 = vmatprep.subr.mxu0 0.0
    %3822 = vmatpush1.msra.mxu0 0.0
    %3823 = vmatprep.subr.mxu0 0.0
    %3824 = vmatpush1.msra.mxu0 0.0
    %3825 = vmatprep.subr.mxu0 0.0
    %3826 = vmatpush1.msra.mxu0 0.0
    %3827 = vmatprep.mubr.f32.mxu0 0.0
    %3828 = vmatmul.mubr.f32.gmra.mrb[0].mxu0 %v2045
    %v3829 = vpop.f32.mrb[0].mxu0
    %v3830 = vadd.f32 0.0, %v3829
    %v3831 = vpop.f32.mrb[0].mxu0
    %3832 = vdwg.mxu0
    %3834 = vrot.lane.b32.xlu0 %v3407, 64
    %v3835 = vpop.permute.xlu0 %3834
    %3837 = vmatprep.subr.mxu0 0.0
    %3838 = vmatpush1.msra.mxu0 %v3835
    %3839 = vmatprep.subr.mxu0 0.0
    %3840 = vmatpush1.msra.mxu0 0.0
    %3841 = vmatprep.subr.mxu0 0.0
    %3842 = vmatpush1.msra.mxu0 0.0
    %3843 = vmatprep.subr.mxu0 0.0
    %3844 = vmatpush1.msra.mxu0 0.0
    %3845 = vmatprep.subr.mxu0 0.0
    %3846 = vmatpush1.msra.mxu0 0.0
    %3847 = vmatprep.subr.mxu0 0.0
    %3848 = vmatpush1.msra.mxu0 0.0
    %3849 = vmatprep.subr.mxu0 0.0
    %3850 = vmatpush1.msra.mxu0 0.0
    %3851 = vmatprep.subr.mxu0 0.0
    %3852 = vmatpush1.msra.mxu0 0.0
    %3853 = vmatprep.subr.mxu0 0.0
    %3854 = vmatpush1.msra.mxu0 0.0
    %3855 = vmatprep.subr.mxu0 0.0
    %3856 = vmatpush1.msra.mxu0 0.0
    %3857 = vmatprep.subr.mxu0 0.0
    %3858 = vmatpush1.msra.mxu0 0.0
    %3859 = vmatprep.subr.mxu0 0.0
    %3860 = vmatpush1.msra.mxu0 0.0
    %3861 = vmatprep.subr.mxu0 0.0
    %3862 = vmatpush1.msra.mxu0 0.0
    %3863 = vmatprep.subr.mxu0 0.0
    %3864 = vmatpush1.msra.mxu0 0.0
    %3865 = vmatprep.subr.mxu0 0.0
    %3866 = vmatpush1.msra.mxu0 0.0
    %3867 = vmatprep.subr.mxu0 0.0
    %3868 = vmatpush1.msra.mxu0 0.0
    %3869 = vmatprep.subr.mxu0 0.0
    %3870 = vmatpush1.msra.mxu0 0.0
    %3871 = vmatprep.subr.mxu0 0.0
    %3872 = vmatpush1.msra.mxu0 0.0
    %3873 = vmatprep.subr.mxu0 0.0
    %3874 = vmatpush1.msra.mxu0 0.0
    %3875 = vmatprep.subr.mxu0 0.0
    %3876 = vmatpush1.msra.mxu0 0.0
    %3877 = vmatprep.subr.mxu0 0.0
    %3878 = vmatpush1.msra.mxu0 0.0
    %3879 = vmatprep.subr.mxu0 0.0
    %3880 = vmatpush1.msra.mxu0 0.0
    %3881 = vmatprep.subr.mxu0 0.0
    %3882 = vmatpush1.msra.mxu0 0.0
    %3883 = vmatprep.subr.mxu0 0.0
    %3884 = vmatpush1.msra.mxu0 0.0
    %3885 = vmatprep.subr.mxu0 0.0
    %3886 = vmatpush1.msra.mxu0 0.0
    %3887 = vmatprep.subr.mxu0 0.0
    %3888 = vmatpush1.msra.mxu0 0.0
    %3889 = vmatprep.subr.mxu0 0.0
    %3890 = vmatpush1.msra.mxu0 0.0
    %3891 = vmatprep.subr.mxu0 0.0
    %3892 = vmatpush1.msra.mxu0 0.0
    %3893 = vmatprep.subr.mxu0 0.0
    %3894 = vmatpush1.msra.mxu0 0.0
    %3895 = vmatprep.subr.mxu0 0.0
    %3896 = vmatpush1.msra.mxu0 0.0
    %3897 = vmatprep.subr.mxu0 0.0
    %3898 = vmatpush1.msra.mxu0 0.0
    %3899 = vmatprep.subr.mxu0 0.0
    %3900 = vmatpush1.msra.mxu0 0.0
    %3901 = vmatprep.mubr.f32.mxu0 0.0
    %3902 = vmatmul.mubr.f32.gmra.mrb[0].mxu0 %v1541
    %v3903 = vpop.f32.mrb[0].mxu0
    %v3904 = vadd.f32 0.0, %v3903
    %v3905 = vpop.f32.mrb[0].mxu0
    %3906 = vdwg.mxu0
    %3908 = vrot.lane.b32.xlu0 %v3408, 64
    %v3909 = vpop.permute.xlu0 %3908
    %3911 = vmatprep.subr.mxu0 0.0
    %3912 = vmatpush1.msra.mxu0 %v3909
    %3913 = vmatprep.subr.mxu0 0.0
    %3914 = vmatpush1.msra.mxu0 0.0
    %3915 = vmatprep.subr.mxu0 0.0
    %3916 = vmatpush1.msra.mxu0 0.0
    %3917 = vmatprep.subr.mxu0 0.0
    %3918 = vmatpush1.msra.mxu0 0.0
    %3919 = vmatprep.subr.mxu0 0.0
    %3920 = vmatpush1.msra.mxu0 0.0
    %3921 = vmatprep.subr.mxu0 0.0
    %3922 = vmatpush1.msra.mxu0 0.0
    %3923 = vmatprep.subr.mxu0 0.0
    %3924 = vmatpush1.msra.mxu0 0.0
    %3925 = vmatprep.subr.mxu0 0.0
    %3926 = vmatpush1.msra.mxu0 0.0
    %3927 = vmatprep.subr.mxu0 0.0
    %3928 = vmatpush1.msra.mxu0 0.0
    %3929 = vmatprep.subr.mxu0 0.0
    %3930 = vmatpush1.msra.mxu0 0.0
    %3931 = vmatprep.subr.mxu0 0.0
    %3932 = vmatpush1.msra.mxu0 0.0
    %3933 = vmatprep.subr.mxu0 0.0
    %3934 = vmatpush1.msra.mxu0 0.0
    %3935 = vmatprep.subr.mxu0 0.0
    %3936 = vmatpush1.msra.mxu0 0.0
    %3937 = vmatprep.subr.mxu0 0.0
    %3938 = vmatpush1.msra.mxu0 0.0
    %3939 = vmatprep.subr.mxu0 0.0
    %3940 = vmatpush1.msra.mxu0 0.0
    %3941 = vmatprep.subr.mxu0 0.0
    %3942 = vmatpush1.msra.mxu0 0.0
    %3943 = vmatprep.subr.mxu0 0.0
    %3944 = vmatpush1.msra.mxu0 0.0
    %3945 = vmatprep.subr.mxu0 0.0
    %3946 = vmatpush1.msra.mxu0 0.0
    %3947 = vmatprep.subr.mxu0 0.0
    %3948 = vmatpush1.msra.mxu0 0.0
    %3949 = vmatprep.subr.mxu0 0.0
    %3950 = vmatpush1.msra.mxu0 0.0
    %3951 = vmatprep.subr.mxu0 0.0
    %3952 = vmatpush1.msra.mxu0 0.0
    %3953 = vmatprep.subr.mxu0 0.0
    %3954 = vmatpush1.msra.mxu0 0.0
    %3955 = vmatprep.subr.mxu0 0.0
    %3956 = vmatpush1.msra.mxu0 0.0
    %3957 = vmatprep.subr.mxu0 0.0
    %3958 = vmatpush1.msra.mxu0 0.0
    %3959 = vmatprep.subr.mxu0 0.0
    %3960 = vmatpush1.msra.mxu0 0.0
    %3961 = vmatprep.subr.mxu0 0.0
    %3962 = vmatpush1.msra.mxu0 0.0
    %3963 = vmatprep.subr.mxu0 0.0
    %3964 = vmatpush1.msra.mxu0 0.0
    %3965 = vmatprep.subr.mxu0 0.0
    %3966 = vmatpush1.msra.mxu0 0.0
    %3967 = vmatprep.subr.mxu0 0.0
    %3968 = vmatpush1.msra.mxu0 0.0
    %3969 = vmatprep.subr.mxu0 0.0
    %3970 = vmatpush1.msra.mxu0 0.0
    %3971 = vmatprep.subr.mxu0 0.0
    %3972 = vmatpush1.msra.mxu0 0.0
    %3973 = vmatprep.subr.mxu0 0.0
    %3974 = vmatpush1.msra.mxu0 0.0
    %3975 = vmatprep.mubr.f32.mxu0 0.0
    %3976 = vmatmul.mubr.f32.gmra.mrb[0].mxu0 %v1541
    %v3977 = vpop.f32.mrb[0].mxu0
    %v3978 = vadd.f32 0.0, %v3977
    %v3979 = vpop.f32.mrb[0].mxu0
    %3980 = vdwg.mxu0
    %3981 = vmatprep.subr.mxu0 0.0
    %3982 = vmatpush1.msra.mxu0 %v3978
    %3983 = vmatprep.subr.mxu0 0.0
    %3984 = vmatpush1.msra.mxu0 0.0
    %3985 = vmatprep.subr.mxu0 0.0
    %3986 = vmatpush1.msra.mxu0 0.0
    %3987 = vmatprep.subr.mxu0 0.0
    %3988 = vmatpush1.msra.mxu0 0.0
    %3989 = vmatprep.subr.mxu0 0.0
    %3990 = vmatpush1.msra.mxu0 0.0
    %3991 = vmatprep.subr.mxu0 0.0
    %3992 = vmatpush1.msra.mxu0 0.0
    %3993 = vmatprep.subr.mxu0 0.0
    %3994 = vmatpush1.msra.mxu0 0.0
    %3995 = vmatprep.subr.mxu0 0.0
    %3996 = vmatpush1.msra.mxu0 0.0
    %3997 = vmatprep.subr.mxu0 0.0
    %3998 = vmatpush1.msra.mxu0 0.0
    %3999 = vmatprep.subr.mxu0 0.0
    %4000 = vmatpush1.msra.mxu0 0.0
    %4001 = vmatprep.subr.mxu0 0.0
    %4002 = vmatpush1.msra.mxu0 0.0
    %4003 = vmatprep.subr.mxu0 0.0
    %4004 = vmatpush1.msra.mxu0 0.0
    %4005 = vmatprep.subr.mxu0 0.0
    %4006 = vmatpush1.msra.mxu0 0.0
    %4007 = vmatprep.subr.mxu0 0.0
    %4008 = vmatpush1.msra.mxu0 0.0
    %4009 = vmatprep.subr.mxu0 0.0
    %4010 = vmatpush1.msra.mxu0 0.0
    %4011 = vmatprep.subr.mxu0 0.0
    %4012 = vmatpush1.msra.mxu0 0.0
    %4013 = vmatprep.subr.mxu0 0.0
    %4014 = vmatpush1.msra.mxu0 0.0
    %4015 = vmatprep.subr.mxu0 0.0
    %4016 = vmatpush1.msra.mxu0 0.0
    %4017 = vmatprep.subr.mxu0 0.0
    %4018 = vmatpush1.msra.mxu0 0.0
    %4019 = vmatprep.subr.mxu0 0.0
    %4020 = vmatpush1.msra.mxu0 0.0
    %4021 = vmatprep.subr.mxu0 0.0
    %4022 = vmatpush1.msra.mxu0 0.0
    %4023 = vmatprep.subr.mxu0 0.0
    %4024 = vmatpush1.msra.mxu0 0.0
    %4025 = vmatprep.subr.mxu0 0.0
    %4026 = vmatpush1.msra.mxu0 0.0
    %4027 = vmatprep.subr.mxu0 0.0
    %4028 = vmatpush1.msra.mxu0 0.0
    %4029 = vmatprep.subr.mxu0 0.0
    %4030 = vmatpush1.msra.mxu0 0.0
    %4031 = vmatprep.subr.mxu0 0.0
    %4032 = vmatpush1.msra.mxu0 0.0
    %4033 = vmatprep.subr.mxu0 0.0
    %4034 = vmatpush1.msra.mxu0 0.0
    %4035 = vmatprep.subr.mxu0 0.0
    %4036 = vmatpush1.msra.mxu0 0.0
    %4037 = vmatprep.subr.mxu0 0.0
    %4038 = vmatpush1.msra.mxu0 0.0
    %4039 = vmatprep.subr.mxu0 0.0
    %4040 = vmatpush1.msra.mxu0 0.0
    %4041 = vmatprep.subr.mxu0 0.0
    %4042 = vmatpush1.msra.mxu0 0.0
    %4043 = vmatprep.subr.mxu0 0.0
    %4044 = vmatpush1.msra.mxu0 0.0
    %4045 = vmatprep.mubr.f32.mxu0 0.0
    %4046 = vmatmul.mubr.f32.gmra.mrb[0].mxu0 %v1788
    %v4047 = vpop.f32.mrb[0].mxu0
    %v4048 = vadd.f32 0.0, %v4047
    %v4049 = vpop.f32.mrb[0].mxu0
    %4050 = vmatprep.mubr.f32.mxu0 0.0
    %4051 = vmatmul.mubr.f32.gmra.mrb[0].mxu0 %v1791
    %v4052 = vpop.f32.mrb[0].mxu0
    %v4053 = vadd.f32 0.0, %v4052
    %v4054 = vpop.f32.mrb[0].mxu0
    %4055 = vmatprep.mubr.f32.mxu0 0.0
    %4056 = vmatmul.mubr.f32.gmra.mrb[0].mxu0 %v1794
    %v4057 = vpop.f32.mrb[0].mxu0
    %v4058 = vadd.f32 0.0, %v4057
    %v4059 = vpop.f32.mrb[0].mxu0
    %4060 = vmatprep.mubr.f32.mxu0 0.0
    %4061 = vmatmul.mubr.f32.gmra.mrb[0].mxu0 %v1797
    %v4062 = vpop.f32.mrb[0].mxu0
    %v4063 = vadd.f32 0.0, %v4062
    %v4064 = vpop.f32.mrb[0].mxu0
    %4065 = vmatprep.mubr.f32.mxu0 0.0
    %4066 = vmatmul.mubr.f32.gmra.mrb[0].mxu0 %v1800
    %v4067 = vpop.f32.mrb[0].mxu0
    %v4068 = vadd.f32 0.0, %v4067
    %v4069 = vpop.f32.mrb[0].mxu0
    %4070 = vmatprep.mubr.f32.mxu0 0.0
    %4071 = vmatmul.mubr.f32.gmra.mrb[0].mxu0 %v1803
    %v4072 = vpop.f32.mrb[0].mxu0
    %v4073 = vadd.f32 0.0, %v4072
    %v4074 = vpop.f32.mrb[0].mxu0
    %4075 = vmatprep.mubr.f32.mxu0 0.0
    %4076 = vmatmul.mubr.f32.gmra.mrb[0].mxu0 %v1806
    %v4077 = vpop.f32.mrb[0].mxu0
    %v4078 = vadd.f32 0.0, %v4077
    %v4079 = vpop.f32.mrb[0].mxu0
    %4080 = vdwg.mxu0
    %4081 = vmatprep.subr.mxu0 0.0
    %4082 = vmatpush1.msra.mxu0 %v3904
    %4083 = vmatprep.subr.mxu0 0.0
    %4084 = vmatpush1.msra.mxu0 0.0
    %4085 = vmatprep.subr.mxu0 0.0
    %4086 = vmatpush1.msra.mxu0 0.0
    %4087 = vmatprep.subr.mxu0 0.0
    %4088 = vmatpush1.msra.mxu0 0.0
    %4089 = vmatprep.subr.mxu0 0.0
    %4090 = vmatpush1.msra.mxu0 0.0
    %4091 = vmatprep.subr.mxu0 0.0
    %4092 = vmatpush1.msra.mxu0 0.0
    %4093 = vmatprep.subr.mxu0 0.0
    %4094 = vmatpush1.msra.mxu0 0.0
    %4095 = vmatprep.subr.mxu0 0.0
    %4096 = vmatpush1.msra.mxu0 0.0
    %4097 = vmatprep.subr.mxu0 0.0
    %4098 = vmatpush1.msra.mxu0 0.0
    %4099 = vmatprep.subr.mxu0 0.0
    %4100 = vmatpush1.msra.mxu0 0.0
    %4101 = vmatprep.subr.mxu0 0.0
    %4102 = vmatpush1.msra.mxu0 0.0
    %4103 = vmatprep.subr.mxu0 0.0
    %4104 = vmatpush1.msra.mxu0 0.0
    %4105 = vmatprep.subr.mxu0 0.0
    %4106 = vmatpush1.msra.mxu0 0.0
    %4107 = vmatprep.subr.mxu0 0.0
    %4108 = vmatpush1.msra.mxu0 0.0
    %4109 = vmatprep.subr.mxu0 0.0
    %4110 = vmatpush1.msra.mxu0 0.0
    %4111 = vmatprep.subr.mxu0 0.0
    %4112 = vmatpush1.msra.mxu0 0.0
    %4113 = vmatprep.subr.mxu0 0.0
    %4114 = vmatpush1.msra.mxu0 0.0
    %4115 = vmatprep.subr.mxu0 0.0
    %4116 = vmatpush1.msra.mxu0 0.0
    %4117 = vmatprep.subr.mxu0 0.0
    %4118 = vmatpush1.msra.mxu0 0.0
    %4119 = vmatprep.subr.mxu0 0.0
    %4120 = vmatpush1.msra.mxu0 0.0
    %4121 = vmatprep.subr.mxu0 0.0
    %4122 = vmatpush1.msra.mxu0 0.0
    %4123 = vmatprep.subr.mxu0 0.0
    %4124 = vmatpush1.msra.mxu0 0.0
    %4125 = vmatprep.subr.mxu0 0.0
    %4126 = vmatpush1.msra.mxu0 0.0
    %4127 = vmatprep.subr.mxu0 0.0
    %4128 = vmatpush1.msra.mxu0 0.0
    %4129 = vmatprep.subr.mxu0 0.0
    %4130 = vmatpush1.msra.mxu0 0.0
    %4131 = vmatprep.subr.mxu0 0.0
    %4132 = vmatpush1.msra.mxu0 0.0
    %4133 = vmatprep.subr.mxu0 0.0
    %4134 = vmatpush1.msra.mxu0 0.0
    %4135 = vmatprep.subr.mxu0 0.0
    %4136 = vmatpush1.msra.mxu0 0.0
    %4137 = vmatprep.subr.mxu0 0.0
    %4138 = vmatpush1.msra.mxu0 0.0
    %4139 = vmatprep.subr.mxu0 0.0
    %4140 = vmatpush1.msra.mxu0 0.0
    %4141 = vmatprep.subr.mxu0 0.0
    %4142 = vmatpush1.msra.mxu0 0.0
    %4143 = vmatprep.subr.mxu0 0.0
    %4144 = vmatpush1.msra.mxu0 0.0
    %4145 = vmatprep.mubr.f32.mxu0 0.0
    %4146 = vmatmul.mubr.f32.gmra.mrb[0].mxu0 %v1909
    %v4147 = vpop.f32.mrb[0].mxu0
    %v4148 = vadd.f32 %v4048, %v4147
    %v4149 = vpop.f32.mrb[0].mxu0
    %4150 = vmatprep.mubr.f32.mxu0 0.0
    %4151 = vmatmul.mubr.f32.gmra.mrb[0].mxu0 %v1912
    %v4152 = vpop.f32.mrb[0].mxu0
    %v4153 = vadd.f32 %v4053, %v4152
    %v4154 = vpop.f32.mrb[0].mxu0
    %4155 = vmatprep.mubr.f32.mxu0 0.0
    %4156 = vmatmul.mubr.f32.gmra.mrb[0].mxu0 %v1915
    %v4157 = vpop.f32.mrb[0].mxu0
    %v4158 = vadd.f32 %v4058, %v4157
    %v4159 = vpop.f32.mrb[0].mxu0
    %4160 = vmatprep.mubr.f32.mxu0 0.0
    %4161 = vmatmul.mubr.f32.gmra.mrb[0].mxu0 %v1918
    %v4162 = vpop.f32.mrb[0].mxu0
    %v4163 = vadd.f32 %v4063, %v4162
    %v4164 = vpop.f32.mrb[0].mxu0
    %4165 = vmatprep.mubr.f32.mxu0 0.0
    %4166 = vmatmul.mubr.f32.gmra.mrb[0].mxu0 %v1921
    %v4167 = vpop.f32.mrb[0].mxu0
    %v4168 = vadd.f32 %v4068, %v4167
    %v4169 = vpop.f32.mrb[0].mxu0
    %4170 = vmatprep.mubr.f32.mxu0 0.0
    %4171 = vmatmul.mubr.f32.gmra.mrb[0].mxu0 %v1924
    %v4172 = vpop.f32.mrb[0].mxu0
    %v4173 = vadd.f32 %v4073, %v4172
    %v4174 = vpop.f32.mrb[0].mxu0
    %4175 = vmatprep.mubr.f32.mxu0 0.0
    %4176 = vmatmul.mubr.f32.gmra.mrb[0].mxu0 %v1927
    %v4177 = vpop.f32.mrb[0].mxu0
    %v4178 = vadd.f32 %v4078, %v4177
    %v4179 = vpop.f32.mrb[0].mxu0
    %4180 = vdwg.mxu0
    %v4181 = vmul.f32 %v4148, 0.5
    %v4182 = vmul.f32 %v4153, 0.5
    %v4183 = vmul.f32 %v4158, 0.5
    %v4184 = vmul.f32 %v4163, 0.5
    %v4185 = vmul.f32 %v4168, 0.5
    %v4186 = vmul.f32 %v4173, 0.5
    %v4187 = vmul.f32 %v4178, 0.5
    %v4188 = vmul.f32 %v4181, %v1638
    %v4189 = vmul.f32 %v4182, %v1639
    %v4190 = vmul.f32 %v4183, %v1640
    %v4191 = vmul.f32 %v4184, %v1641
    %v4192 = vmul.f32 %v4185, %v1642
    %v4193 = vmul.f32 %v4186, %v1643
    %v4194 = vmul.f32 %v4187, %v1644
    %4195 = vmatprep.subr.mxu0 0.0
    %4196 = vmatpush1.msra.mxu0 %v4188
    %4197 = vmatprep.subr.mxu0 0.0
    %4198 = vmatpush1.msra.mxu0 %v4189
    %4199 = vmatprep.subr.mxu0 0.0
    %4200 = vmatpush1.msra.mxu0 %v4190
    %4201 = vmatprep.subr.mxu0 0.0
    %4202 = vmatpush1.msra.mxu0 %v4191
    %4203 = vmatprep.subr.mxu0 0.0
    %4204 = vmatpush1.msra.mxu0 %v4192
    %4205 = vmatprep.subr.mxu0 0.0
    %4206 = vmatpush1.msra.mxu0 %v4193
    %4207 = vmatprep.subr.mxu0 0.0
    %4208 = vmatpush1.msra.mxu0 %v4194
    %4209 = vmatprep.subr.mxu0 0.0
    %4210 = vmatpush1.msra.mxu0 0.0
    %4211 = vmatprep.subr.mxu0 0.0
    %4212 = vmatpush1.msra.mxu0 0.0
    %4213 = vmatprep.subr.mxu0 0.0
    %4214 = vmatpush1.msra.mxu0 0.0
    %4215 = vmatprep.subr.mxu0 0.0
    %4216 = vmatpush1.msra.mxu0 0.0
    %4217 = vmatprep.subr.mxu0 0.0
    %4218 = vmatpush1.msra.mxu0 0.0
    %4219 = vmatprep.subr.mxu0 0.0
    %4220 = vmatpush1.msra.mxu0 0.0
    %4221 = vmatprep.subr.mxu0 0.0
    %4222 = vmatpush1.msra.mxu0 0.0
    %4223 = vmatprep.subr.mxu0 0.0
    %4224 = vmatpush1.msra.mxu0 0.0
    %4225 = vmatprep.subr.mxu0 0.0
    %4226 = vmatpush1.msra.mxu0 0.0
    %4227 = vmatprep.subr.mxu0 0.0
    %4228 = vmatpush1.msra.mxu0 0.0
    %4229 = vmatprep.subr.mxu0 0.0
    %4230 = vmatpush1.msra.mxu0 0.0
    %4231 = vmatprep.subr.mxu0 0.0
    %4232 = vmatpush1.msra.mxu0 0.0
    %4233 = vmatprep.subr.mxu0 0.0
    %4234 = vmatpush1.msra.mxu0 0.0
    %4235 = vmatprep.subr.mxu0 0.0
    %4236 = vmatpush1.msra.mxu0 0.0
    %4237 = vmatprep.subr.mxu0 0.0
    %4238 = vmatpush1.msra.mxu0 0.0
    %4239 = vmatprep.subr.mxu0 0.0
    %4240 = vmatpush1.msra.mxu0 0.0
    %4241 = vmatprep.subr.mxu0 0.0
    %4242 = vmatpush1.msra.mxu0 0.0
    %4243 = vmatprep.subr.mxu0 0.0
    %4244 = vmatpush1.msra.mxu0 0.0
    %4245 = vmatprep.subr.mxu0 0.0
    %4246 = vmatpush1.msra.mxu0 0.0
    %4247 = vmatprep.subr.mxu0 0.0
    %4248 = vmatpush1.msra.mxu0 0.0
    %4249 = vmatprep.subr.mxu0 0.0
    %4250 = vmatpush1.msra.mxu0 0.0
    %4251 = vmatprep.subr.mxu0 0.0
    %4252 = vmatpush1.msra.mxu0 0.0
    %4253 = vmatprep.subr.mxu0 0.0
    %4254 = vmatpush1.msra.mxu0 0.0
    %4255 = vmatprep.subr.mxu0 0.0
    %4256 = vmatpush1.msra.mxu0 0.0
    %4257 = vmatprep.subr.mxu0 0.0
    %4258 = vmatpush1.msra.mxu0 0.0
    %4259 = vmatprep.mubr.f32.mxu0 0.0
    %4260 = vmatmul.mubr.f32.gmra.mrb[0].mxu0 %v2045
    %v4261 = vpop.f32.mrb[0].mxu0
    %v4262 = vadd.f32 0.0, %v4261
    %v4263 = vpop.f32.mrb[0].mxu0
    %4264 = vdwg.mxu0
    %v4265 = vld [vmem:[%s7 + $0x18] sm:$0xff]
    %v4266 = vld [vmem:[#allocation11 + $0x18] sm:$0xff]
    %4267 = vmatprep.subr.mxu0 0.0
    %4268 = vmatpush1.msra.mxu0 %v4265
    %4269 = vmatprep.subr.mxu0 0.0
    %4270 = vmatpush1.msra.mxu0 0.0
    %4271 = vmatprep.subr.mxu0 0.0
    %4272 = vmatpush1.msra.mxu0 0.0
    %4273 = vmatprep.subr.mxu0 0.0
    %4274 = vmatpush1.msra.mxu0 0.0
    %4275 = vmatprep.subr.mxu0 0.0
    %4276 = vmatpush1.msra.mxu0 0.0
    %4277 = vmatprep.subr.mxu0 0.0
    %4278 = vmatpush1.msra.mxu0 0.0
    %4279 = vmatprep.subr.mxu0 0.0
    %4280 = vmatpush1.msra.mxu0 0.0
    %4281 = vmatprep.subr.mxu0 0.0
    %4282 = vmatpush1.msra.mxu0 0.0
    %4283 = vmatprep.subr.mxu0 0.0
    %4284 = vmatpush1.msra.mxu0 0.0
    %4285 = vmatprep.subr.mxu0 0.0
    %4286 = vmatpush1.msra.mxu0 0.0
    %4287 = vmatprep.subr.mxu0 0.0
    %4288 = vmatpush1.msra.mxu0 0.0
    %4289 = vmatprep.subr.mxu0 0.0
    %4290 = vmatpush1.msra.mxu0 0.0
    %4291 = vmatprep.subr.mxu0 0.0
    %4292 = vmatpush1.msra.mxu0 0.0
    %4293 = vmatprep.subr.mxu0 0.0
    %4294 = vmatpush1.msra.mxu0 0.0
    %4295 = vmatprep.subr.mxu0 0.0
    %4296 = vmatpush1.msra.mxu0 0.0
    %4297 = vmatprep.subr.mxu0 0.0
    %4298 = vmatpush1.msra.mxu0 0.0
    %4299 = vmatprep.subr.mxu0 0.0
    %4300 = vmatpush1.msra.mxu0 0.0
    %4301 = vmatprep.subr.mxu0 0.0
    %4302 = vmatpush1.msra.mxu0 0.0
    %4303 = vmatprep.subr.mxu0 0.0
    %4304 = vmatpush1.msra.mxu0 0.0
    %4305 = vmatprep.subr.mxu0 0.0
    %4306 = vmatpush1.msra.mxu0 0.0
    %4307 = vmatprep.subr.mxu0 0.0
    %4308 = vmatpush1.msra.mxu0 0.0
    %4309 = vmatprep.subr.mxu0 0.0
    %4310 = vmatpush1.msra.mxu0 0.0
    %4311 = vmatprep.subr.mxu0 0.0
    %4312 = vmatpush1.msra.mxu0 0.0
    %4313 = vmatprep.subr.mxu0 0.0
    %4314 = vmatpush1.msra.mxu0 0.0
    %4315 = vmatprep.subr.mxu0 0.0
    %4316 = vmatpush1.msra.mxu0 0.0
    %4317 = vmatprep.subr.mxu0 0.0
    %4318 = vmatpush1.msra.mxu0 0.0
    %4319 = vmatprep.subr.mxu0 0.0
    %4320 = vmatpush1.msra.mxu0 0.0
    %4321 = vmatprep.subr.mxu0 0.0
    %4322 = vmatpush1.msra.mxu0 0.0
    %4323 = vmatprep.subr.mxu0 0.0
    %4324 = vmatpush1.msra.mxu0 0.0
    %4325 = vmatprep.subr.mxu0 0.0
    %4326 = vmatpush1.msra.mxu0 0.0
    %4327 = vmatprep.subr.mxu0 0.0
    %4328 = vmatpush1.msra.mxu0 0.0
    %4329 = vmatprep.subr.mxu0 0.0
    %4330 = vmatpush1.msra.mxu0 0.0
    %4331 = vmatprep.mubr.f32.mxu0 0.0
    %4332 = vmatmul.mubr.f32.gmra.mrb[0].mxu0 %v1541
    %v4333 = vpop.f32.mrb[0].mxu0
    %v4334 = vadd.f32 0.0, %v4333
    %v4335 = vpop.f32.mrb[0].mxu0
    %4336 = vdwg.mxu0
    %4337 = vmatprep.subr.mxu0 0.0
    %4338 = vmatpush1.msra.mxu0 %v4266
    %4339 = vmatprep.subr.mxu0 0.0
    %4340 = vmatpush1.msra.mxu0 0.0
    %4341 = vmatprep.subr.mxu0 0.0
    %4342 = vmatpush1.msra.mxu0 0.0
    %4343 = vmatprep.subr.mxu0 0.0
    %4344 = vmatpush1.msra.mxu0 0.0
    %4345 = vmatprep.subr.mxu0 0.0
    %4346 = vmatpush1.msra.mxu0 0.0
    %4347 = vmatprep.subr.mxu0 0.0
    %4348 = vmatpush1.msra.mxu0 0.0
    %4349 = vmatprep.subr.mxu0 0.0
    %4350 = vmatpush1.msra.mxu0 0.0
    %4351 = vmatprep.subr.mxu0 0.0
    %4352 = vmatpush1.msra.mxu0 0.0
    %4353 = vmatprep.subr.mxu0 0.0
    %4354 = vmatpush1.msra.mxu0 0.0
    %4355 = vmatprep.subr.mxu0 0.0
    %4356 = vmatpush1.msra.mxu0 0.0
    %4357 = vmatprep.subr.mxu0 0.0
    %4358 = vmatpush1.msra.mxu0 0.0
    %4359 = vmatprep.subr.mxu0 0.0
    %4360 = vmatpush1.msra.mxu0 0.0
    %4361 = vmatprep.subr.mxu0 0.0
    %4362 = vmatpush1.msra.mxu0 0.0
    %4363 = vmatprep.subr.mxu0 0.0
    %4364 = vmatpush1.msra.mxu0 0.0
    %4365 = vmatprep.subr.mxu0 0.0
    %4366 = vmatpush1.msra.mxu0 0.0
    %4367 = vmatprep.subr.mxu0 0.0
    %4368 = vmatpush1.msra.mxu0 0.0
    %4369 = vmatprep.subr.mxu0 0.0
    %4370 = vmatpush1.msra.mxu0 0.0
    %4371 = vmatprep.subr.mxu0 0.0
    %4372 = vmatpush1.msra.mxu0 0.0
    %4373 = vmatprep.subr.mxu0 0.0
    %4374 = vmatpush1.msra.mxu0 0.0
    %4375 = vmatprep.subr.mxu0 0.0
    %4376 = vmatpush1.msra.mxu0 0.0
    %4377 = vmatprep.subr.mxu0 0.0
    %4378 = vmatpush1.msra.mxu0 0.0
    %4379 = vmatprep.subr.mxu0 0.0
    %4380 = vmatpush1.msra.mxu0 0.0
    %4381 = vmatprep.subr.mxu0 0.0
    %4382 = vmatpush1.msra.mxu0 0.0
    %4383 = vmatprep.subr.mxu0 0.0
    %4384 = vmatpush1.msra.mxu0 0.0
    %4385 = vmatprep.subr.mxu0 0.0
    %4386 = vmatpush1.msra.mxu0 0.0
    %4387 = vmatprep.subr.mxu0 0.0
    %4388 = vmatpush1.msra.mxu0 0.0
    %4389 = vmatprep.subr.mxu0 0.0
    %4390 = vmatpush1.msra.mxu0 0.0
    %4391 = vmatprep.subr.mxu0 0.0
    %4392 = vmatpush1.msra.mxu0 0.0
    %4393 = vmatprep.subr.mxu0 0.0
    %4394 = vmatpush1.msra.mxu0 0.0
    %4395 = vmatprep.subr.mxu0 0.0
    %4396 = vmatpush1.msra.mxu0 0.0
    %4397 = vmatprep.subr.mxu0 0.0
    %4398 = vmatpush1.msra.mxu0 0.0
    %4399 = vmatprep.subr.mxu0 0.0
    %4400 = vmatpush1.msra.mxu0 0.0
    %4401 = vmatprep.mubr.f32.mxu0 0.0
    %4402 = vmatmul.mubr.f32.gmra.mrb[0].mxu0 %v1541
    %v4403 = vpop.f32.mrb[0].mxu0
    %v4404 = vadd.f32 0.0, %v4403
    %v4405 = vpop.f32.mrb[0].mxu0
    %4406 = vdwg.mxu0
    %4407 = vmatprep.subr.mxu0 0.0
    %4408 = vmatpush1.msra.mxu0 %v4404
    %4409 = vmatprep.subr.mxu0 0.0
    %4410 = vmatpush1.msra.mxu0 0.0
    %4411 = vmatprep.subr.mxu0 0.0
    %4412 = vmatpush1.msra.mxu0 0.0
    %4413 = vmatprep.subr.mxu0 0.0
    %4414 = vmatpush1.msra.mxu0 0.0
    %4415 = vmatprep.subr.mxu0 0.0
    %4416 = vmatpush1.msra.mxu0 0.0
    %4417 = vmatprep.subr.mxu0 0.0
    %4418 = vmatpush1.msra.mxu0 0.0
    %4419 = vmatprep.subr.mxu0 0.0
    %4420 = vmatpush1.msra.mxu0 0.0
    %4421 = vmatprep.subr.mxu0 0.0
    %4422 = vmatpush1.msra.mxu0 0.0
    %4423 = vmatprep.subr.mxu0 0.0
    %4424 = vmatpush1.msra.mxu0 0.0
    %4425 = vmatprep.subr.mxu0 0.0
    %4426 = vmatpush1.msra.mxu0 0.0
    %4427 = vmatprep.subr.mxu0 0.0
    %4428 = vmatpush1.msra.mxu0 0.0
    %4429 = vmatprep.subr.mxu0 0.0
    %4430 = vmatpush1.msra.mxu0 0.0
    %4431 = vmatprep.subr.mxu0 0.0
    %4432 = vmatpush1.msra.mxu0 0.0
    %4433 = vmatprep.subr.mxu0 0.0
    %4434 = vmatpush1.msra.mxu0 0.0
    %4435 = vmatprep.subr.mxu0 0.0
    %4436 = vmatpush1.msra.mxu0 0.0
    %4437 = vmatprep.subr.mxu0 0.0
    %4438 = vmatpush1.msra.mxu0 0.0
    %4439 = vmatprep.subr.mxu0 0.0
    %4440 = vmatpush1.msra.mxu0 0.0
    %4441 = vmatprep.subr.mxu0 0.0
    %4442 = vmatpush1.msra.mxu0 0.0
    %4443 = vmatprep.subr.mxu0 0.0
    %4444 = vmatpush1.msra.mxu0 0.0
    %4445 = vmatprep.subr.mxu0 0.0
    %4446 = vmatpush1.msra.mxu0 0.0
    %4447 = vmatprep.subr.mxu0 0.0
    %4448 = vmatpush1.msra.mxu0 0.0
    %4449 = vmatprep.subr.mxu0 0.0
    %4450 = vmatpush1.msra.mxu0 0.0
    %4451 = vmatprep.subr.mxu0 0.0
    %4452 = vmatpush1.msra.mxu0 0.0
    %4453 = vmatprep.subr.mxu0 0.0
    %4454 = vmatpush1.msra.mxu0 0.0
    %4455 = vmatprep.subr.mxu0 0.0
    %4456 = vmatpush1.msra.mxu0 0.0
    %4457 = vmatprep.subr.mxu0 0.0
    %4458 = vmatpush1.msra.mxu0 0.0
    %4459 = vmatprep.subr.mxu0 0.0
    %4460 = vmatpush1.msra.mxu0 0.0
    %4461 = vmatprep.subr.mxu0 0.0
    %4462 = vmatpush1.msra.mxu0 0.0
    %4463 = vmatprep.subr.mxu0 0.0
    %4464 = vmatpush1.msra.mxu0 0.0
    %4465 = vmatprep.subr.mxu0 0.0
    %4466 = vmatpush1.msra.mxu0 0.0
    %4467 = vmatprep.subr.mxu0 0.0
    %4468 = vmatpush1.msra.mxu0 0.0
    %4469 = vmatprep.subr.mxu0 0.0
    %4470 = vmatpush1.msra.mxu0 0.0
    %4471 = vmatprep.mubr.f32.mxu0 0.0
    %4472 = vmatmul.mubr.f32.gmra.mrb[0].mxu0 %v1788
    %v4473 = vpop.f32.mrb[0].mxu0
    %v4474 = vadd.f32 0.0, %v4473
    %v4475 = vpop.f32.mrb[0].mxu0
    %4476 = vmatprep.mubr.f32.mxu0 0.0
    %4477 = vmatmul.mubr.f32.gmra.mrb[0].mxu0 %v1791
    %v4478 = vpop.f32.mrb[0].mxu0
    %v4479 = vadd.f32 0.0, %v4478
    %v4480 = vpop.f32.mrb[0].mxu0
    %4481 = vmatprep.mubr.f32.mxu0 0.0
    %4482 = vmatmul.mubr.f32.gmra.mrb[0].mxu0 %v1794
    %v4483 = vpop.f32.mrb[0].mxu0
    %v4484 = vadd.f32 0.0, %v4483
    %v4485 = vpop.f32.mrb[0].mxu0
    %4486 = vmatprep.mubr.f32.mxu0 0.0
    %4487 = vmatmul.mubr.f32.gmra.mrb[0].mxu0 %v1797
    %v4488 = vpop.f32.mrb[0].mxu0
    %v4489 = vadd.f32 0.0, %v4488
    %v4490 = vpop.f32.mrb[0].mxu0
    %4491 = vmatprep.mubr.f32.mxu0 0.0
    %4492 = vmatmul.mubr.f32.gmra.mrb[0].mxu0 %v1800
    %v4493 = vpop.f32.mrb[0].mxu0
    %v4494 = vadd.f32 0.0, %v4493
    %v4495 = vpop.f32.mrb[0].mxu0
    %4496 = vmatprep.mubr.f32.mxu0 0.0
    %4497 = vmatmul.mubr.f32.gmra.mrb[0].mxu0 %v1803
    %v4498 = vpop.f32.mrb[0].mxu0
    %v4499 = vadd.f32 0.0, %v4498
    %v4500 = vpop.f32.mrb[0].mxu0
    %4501 = vmatprep.mubr.f32.mxu0 0.0
    %4502 = vmatmul.mubr.f32.gmra.mrb[0].mxu0 %v1806
    %v4503 = vpop.f32.mrb[0].mxu0
    %v4504 = vadd.f32 0.0, %v4503
    %v4505 = vpop.f32.mrb[0].mxu0
    %4506 = vdwg.mxu0
    %4507 = vmatprep.subr.mxu0 0.0
    %4508 = vmatpush1.msra.mxu0 %v4334
    %4509 = vmatprep.subr.mxu0 0.0
    %4510 = vmatpush1.msra.mxu0 0.0
    %4511 = vmatprep.subr.mxu0 0.0
    %4512 = vmatpush1.msra.mxu0 0.0
    %4513 = vmatprep.subr.mxu0 0.0
    %4514 = vmatpush1.msra.mxu0 0.0
    %4515 = vmatprep.subr.mxu0 0.0
    %4516 = vmatpush1.msra.mxu0 0.0
    %4517 = vmatprep.subr.mxu0 0.0
    %4518 = vmatpush1.msra.mxu0 0.0
    %4519 = vmatprep.subr.mxu0 0.0
    %4520 = vmatpush1.msra.mxu0 0.0
    %4521 = vmatprep.subr.mxu0 0.0
    %4522 = vmatpush1.msra.mxu0 0.0
    %4523 = vmatprep.subr.mxu0 0.0
    %4524 = vmatpush1.msra.mxu0 0.0
    %4525 = vmatprep.subr.mxu0 0.0
    %4526 = vmatpush1.msra.mxu0 0.0
    %4527 = vmatprep.subr.mxu0 0.0
    %4528 = vmatpush1.msra.mxu0 0.0
    %4529 = vmatprep.subr.mxu0 0.0
    %4530 = vmatpush1.msra.mxu0 0.0
    %4531 = vmatprep.subr.mxu0 0.0
    %4532 = vmatpush1.msra.mxu0 0.0
    %4533 = vmatprep.subr.mxu0 0.0
    %4534 = vmatpush1.msra.mxu0 0.0
    %4535 = vmatprep.subr.mxu0 0.0
    %4536 = vmatpush1.msra.mxu0 0.0
    %4537 = vmatprep.subr.mxu0 0.0
    %4538 = vmatpush1.msra.mxu0 0.0
    %4539 = vmatprep.subr.mxu0 0.0
    %4540 = vmatpush1.msra.mxu0 0.0
    %4541 = vmatprep.subr.mxu0 0.0
    %4542 = vmatpush1.msra.mxu0 0.0
    %4543 = vmatprep.subr.mxu0 0.0
    %4544 = vmatpush1.msra.mxu0 0.0
    %4545 = vmatprep.subr.mxu0 0.0
    %4546 = vmatpush1.msra.mxu0 0.0
    %4547 = vmatprep.subr.mxu0 0.0
    %4548 = vmatpush1.msra.mxu0 0.0
    %4549 = vmatprep.subr.mxu0 0.0
    %4550 = vmatpush1.msra.mxu0 0.0
    %4551 = vmatprep.subr.mxu0 0.0
    %4552 = vmatpush1.msra.mxu0 0.0
    %4553 = vmatprep.subr.mxu0 0.0
    %4554 = vmatpush1.msra.mxu0 0.0
    %4555 = vmatprep.subr.mxu0 0.0
    %4556 = vmatpush1.msra.mxu0 0.0
    %4557 = vmatprep.subr.mxu0 0.0
    %4558 = vmatpush1.msra.mxu0 0.0
    %4559 = vmatprep.subr.mxu0 0.0
    %4560 = vmatpush1.msra.mxu0 0.0
    %4561 = vmatprep.subr.mxu0 0.0
    %4562 = vmatpush1.msra.mxu0 0.0
    %4563 = vmatprep.subr.mxu0 0.0
    %4564 = vmatpush1.msra.mxu0 0.0
    %4565 = vmatprep.subr.mxu0 0.0
    %4566 = vmatpush1.msra.mxu0 0.0
    %4567 = vmatprep.subr.mxu0 0.0
    %4568 = vmatpush1.msra.mxu0 0.0
    %4569 = vmatprep.subr.mxu0 0.0
    %4570 = vmatpush1.msra.mxu0 0.0
    %4571 = vmatprep.mubr.f32.mxu0 0.0
    %4572 = vmatmul.mubr.f32.gmra.mrb[0].mxu0 %v1909
    %v4573 = vpop.f32.mrb[0].mxu0
    %v4574 = vadd.f32 %v4474, %v4573
    %v4575 = vpop.f32.mrb[0].mxu0
    %4576 = vmatprep.mubr.f32.mxu0 0.0
    %4577 = vmatmul.mubr.f32.gmra.mrb[0].mxu0 %v1912
    %v4578 = vpop.f32.mrb[0].mxu0
    %v4579 = vadd.f32 %v4479, %v4578
    %v4580 = vpop.f32.mrb[0].mxu0
    %4581 = vmatprep.mubr.f32.mxu0 0.0
    %4582 = vmatmul.mubr.f32.gmra.mrb[0].mxu0 %v1915
    %v4583 = vpop.f32.mrb[0].mxu0
    %v4584 = vadd.f32 %v4484, %v4583
    %v4585 = vpop.f32.mrb[0].mxu0
    %4586 = vmatprep.mubr.f32.mxu0 0.0
    %4587 = vmatmul.mubr.f32.gmra.mrb[0].mxu0 %v1918
    %v4588 = vpop.f32.mrb[0].mxu0
    %v4589 = vadd.f32 %v4489, %v4588
    %v4590 = vpop.f32.mrb[0].mxu0
    %4591 = vmatprep.mubr.f32.mxu0 0.0
    %4592 = vmatmul.mubr.f32.gmra.mrb[0].mxu0 %v1921
    %v4593 = vpop.f32.mrb[0].mxu0
    %v4594 = vadd.f32 %v4494, %v4593
    %v4595 = vpop.f32.mrb[0].mxu0
    %4596 = vmatprep.mubr.f32.mxu0 0.0
    %4597 = vmatmul.mubr.f32.gmra.mrb[0].mxu0 %v1924
    %v4598 = vpop.f32.mrb[0].mxu0
    %v4599 = vadd.f32 %v4499, %v4598
    %v4600 = vpop.f32.mrb[0].mxu0
    %4601 = vmatprep.mubr.f32.mxu0 0.0
    %4602 = vmatmul.mubr.f32.gmra.mrb[0].mxu0 %v1927
    %v4603 = vpop.f32.mrb[0].mxu0
    %v4604 = vadd.f32 %v4504, %v4603
    %v4605 = vpop.f32.mrb[0].mxu0
    %4606 = vdwg.mxu0
    %v4607 = vmul.f32 %v4574, 0.5
    %v4608 = vmul.f32 %v4579, 0.5
    %v4609 = vmul.f32 %v4584, 0.5
    %v4610 = vmul.f32 %v4589, 0.5
    %v4611 = vmul.f32 %v4594, 0.5
    %v4612 = vmul.f32 %v4599, 0.5
    %v4613 = vmul.f32 %v4604, 0.5
    %v4614 = vmul.f32 %v4607, %v1638
    %v4615 = vmul.f32 %v4608, %v1639
    %v4616 = vmul.f32 %v4609, %v1640
    %v4617 = vmul.f32 %v4610, %v1641
    %v4618 = vmul.f32 %v4611, %v1642
    %v4619 = vmul.f32 %v4612, %v1643
    %v4620 = vmul.f32 %v4613, %v1644
    %4621 = vmatprep.subr.mxu0 0.0
    %4622 = vmatpush1.msra.mxu0 %v4614
    %4623 = vmatprep.subr.mxu0 0.0
    %4624 = vmatpush1.msra.mxu0 %v4615
    %4625 = vmatprep.subr.mxu0 0.0
    %4626 = vmatpush1.msra.mxu0 %v4616
    %4627 = vmatprep.subr.mxu0 0.0
    %4628 = vmatpush1.msra.mxu0 %v4617
    %4629 = vmatprep.subr.mxu0 0.0
    %4630 = vmatpush1.msra.mxu0 %v4618
    %4631 = vmatprep.subr.mxu0 0.0
    %4632 = vmatpush1.msra.mxu0 %v4619
    %4633 = vmatprep.subr.mxu0 0.0
    %4634 = vmatpush1.msra.mxu0 %v4620
    %4635 = vmatprep.subr.mxu0 0.0
    %4636 = vmatpush1.msra.mxu0 0.0
    %4637 = vmatprep.subr.mxu0 0.0
    %4638 = vmatpush1.msra.mxu0 0.0
    %4639 = vmatprep.subr.mxu0 0.0
    %4640 = vmatpush1.msra.mxu0 0.0
    %4641 = vmatprep.subr.mxu0 0.0
    %4642 = vmatpush1.msra.mxu0 0.0
    %4643 = vmatprep.subr.mxu0 0.0
    %4644 = vmatpush1.msra.mxu0 0.0
    %4645 = vmatprep.subr.mxu0 0.0
    %4646 = vmatpush1.msra.mxu0 0.0
    %4647 = vmatprep.subr.mxu0 0.0
    %4648 = vmatpush1.msra.mxu0 0.0
    %4649 = vmatprep.subr.mxu0 0.0
    %4650 = vmatpush1.msra.mxu0 0.0
    %4651 = vmatprep.subr.mxu0 0.0
    %4652 = vmatpush1.msra.mxu0 0.0
    %4653 = vmatprep.subr.mxu0 0.0
    %4654 = vmatpush1.msra.mxu0 0.0
    %4655 = vmatprep.subr.mxu0 0.0
    %4656 = vmatpush1.msra.mxu0 0.0
    %4657 = vmatprep.subr.mxu0 0.0
    %4658 = vmatpush1.msra.mxu0 0.0
    %4659 = vmatprep.subr.mxu0 0.0
    %4660 = vmatpush1.msra.mxu0 0.0
    %4661 = vmatprep.subr.mxu0 0.0
    %4662 = vmatpush1.msra.mxu0 0.0
    %4663 = vmatprep.subr.mxu0 0.0
    %4664 = vmatpush1.msra.mxu0 0.0
    %4665 = vmatprep.subr.mxu0 0.0
    %4666 = vmatpush1.msra.mxu0 0.0
    %4667 = vmatprep.subr.mxu0 0.0
    %4668 = vmatpush1.msra.mxu0 0.0
    %4669 = vmatprep.subr.mxu0 0.0
    %4670 = vmatpush1.msra.mxu0 0.0
    %4671 = vmatprep.subr.mxu0 0.0
    %4672 = vmatpush1.msra.mxu0 0.0
    %4673 = vmatprep.subr.mxu0 0.0
    %4674 = vmatpush1.msra.mxu0 0.0
    %4675 = vmatprep.subr.mxu0 0.0
    %4676 = vmatpush1.msra.mxu0 0.0
    %4677 = vmatprep.subr.mxu0 0.0
    %4678 = vmatpush1.msra.mxu0 0.0
    %4679 = vmatprep.subr.mxu0 0.0
    %4680 = vmatpush1.msra.mxu0 0.0
    %4681 = vmatprep.subr.mxu0 0.0
    %4682 = vmatpush1.msra.mxu0 0.0
    %4683 = vmatprep.subr.mxu0 0.0
    %4684 = vmatpush1.msra.mxu0 0.0
    %4685 = vmatprep.mubr.f32.mxu0 0.0
    %4686 = vmatmul.mubr.f32.gmra.mrb[0].mxu0 %v2045
    %v4687 = vpop.f32.mrb[0].mxu0
    %v4688 = vadd.f32 0.0, %v4687
    %v4689 = vpop.f32.mrb[0].mxu0
    %4690 = vdwg.mxu0
    %4692 = vrot.lane.b32.xlu0 %v4265, 64
    %v4693 = vpop.permute.xlu0 %4692
    %4695 = vmatprep.subr.mxu0 0.0
    %4696 = vmatpush1.msra.mxu0 %v4693
    %4697 = vmatprep.subr.mxu0 0.0
    %4698 = vmatpush1.msra.mxu0 0.0
    %4699 = vmatprep.subr.mxu0 0.0
    %4700 = vmatpush1.msra.mxu0 0.0
    %4701 = vmatprep.subr.mxu0 0.0
    %4702 = vmatpush1.msra.mxu0 0.0
    %4703 = vmatprep.subr.mxu0 0.0
    %4704 = vmatpush1.msra.mxu0 0.0
    %4705 = vmatprep.subr.mxu0 0.0
    %4706 = vmatpush1.msra.mxu0 0.0
    %4707 = vmatprep.subr.mxu0 0.0
    %4708 = vmatpush1.msra.mxu0 0.0
    %4709 = vmatprep.subr.mxu0 0.0
    %4710 = vmatpush1.msra.mxu0 0.0
    %4711 = vmatprep.subr.mxu0 0.0
    %4712 = vmatpush1.msra.mxu0 0.0
    %4713 = vmatprep.subr.mxu0 0.0
    %4714 = vmatpush1.msra.mxu0 0.0
    %4715 = vmatprep.subr.mxu0 0.0
    %4716 = vmatpush1.msra.mxu0 0.0
    %4717 = vmatprep.subr.mxu0 0.0
    %4718 = vmatpush1.msra.mxu0 0.0
    %4719 = vmatprep.subr.mxu0 0.0
    %4720 = vmatpush1.msra.mxu0 0.0
    %4721 = vmatprep.subr.mxu0 0.0
    %4722 = vmatpush1.msra.mxu0 0.0
    %4723 = vmatprep.subr.mxu0 0.0
    %4724 = vmatpush1.msra.mxu0 0.0
    %4725 = vmatprep.subr.mxu0 0.0
    %4726 = vmatpush1.msra.mxu0 0.0
    %4727 = vmatprep.subr.mxu0 0.0
    %4728 = vmatpush1.msra.mxu0 0.0
    %4729 = vmatprep.subr.mxu0 0.0
    %4730 = vmatpush1.msra.mxu0 0.0
    %4731 = vmatprep.subr.mxu0 0.0
    %4732 = vmatpush1.msra.mxu0 0.0
    %4733 = vmatprep.subr.mxu0 0.0
    %4734 = vmatpush1.msra.mxu0 0.0
    %4735 = vmatprep.subr.mxu0 0.0
    %4736 = vmatpush1.msra.mxu0 0.0
    %4737 = vmatprep.subr.mxu0 0.0
    %4738 = vmatpush1.msra.mxu0 0.0
    %4739 = vmatprep.subr.mxu0 0.0
    %4740 = vmatpush1.msra.mxu0 0.0
    %4741 = vmatprep.subr.mxu0 0.0
    %4742 = vmatpush1.msra.mxu0 0.0
    %4743 = vmatprep.subr.mxu0 0.0
    %4744 = vmatpush1.msra.mxu0 0.0
    %4745 = vmatprep.subr.mxu0 0.0
    %4746 = vmatpush1.msra.mxu0 0.0
    %4747 = vmatprep.subr.mxu0 0.0
    %4748 = vmatpush1.msra.mxu0 0.0
    %4749 = vmatprep.subr.mxu0 0.0
    %4750 = vmatpush1.msra.mxu0 0.0
    %4751 = vmatprep.subr.mxu0 0.0
    %4752 = vmatpush1.msra.mxu0 0.0
    %4753 = vmatprep.subr.mxu0 0.0
    %4754 = vmatpush1.msra.mxu0 0.0
    %4755 = vmatprep.subr.mxu0 0.0
    %4756 = vmatpush1.msra.mxu0 0.0
    %4757 = vmatprep.subr.mxu0 0.0
    %4758 = vmatpush1.msra.mxu0 0.0
    %4759 = vmatprep.mubr.f32.mxu0 0.0
    %4760 = vmatmul.mubr.f32.gmra.mrb[0].mxu0 %v1541
    %v4761 = vpop.f32.mrb[0].mxu0
    %v4762 = vadd.f32 0.0, %v4761
    %v4763 = vpop.f32.mrb[0].mxu0
    %4764 = vdwg.mxu0
    %4766 = vrot.lane.b32.xlu0 %v4266, 64
    %v4767 = vpop.permute.xlu0 %4766
    %4769 = vmatprep.subr.mxu0 0.0
    %4770 = vmatpush1.msra.mxu0 %v4767
    %4771 = vmatprep.subr.mxu0 0.0
    %4772 = vmatpush1.msra.mxu0 0.0
    %4773 = vmatprep.subr.mxu0 0.0
    %4774 = vmatpush1.msra.mxu0 0.0
    %4775 = vmatprep.subr.mxu0 0.0
    %4776 = vmatpush1.msra.mxu0 0.0
    %4777 = vmatprep.subr.mxu0 0.0
    %4778 = vmatpush1.msra.mxu0 0.0
    %4779 = vmatprep.subr.mxu0 0.0
    %4780 = vmatpush1.msra.mxu0 0.0
    %4781 = vmatprep.subr.mxu0 0.0
    %4782 = vmatpush1.msra.mxu0 0.0
    %4783 = vmatprep.subr.mxu0 0.0
    %4784 = vmatpush1.msra.mxu0 0.0
    %4785 = vmatprep.subr.mxu0 0.0
    %4786 = vmatpush1.msra.mxu0 0.0
    %4787 = vmatprep.subr.mxu0 0.0
    %4788 = vmatpush1.msra.mxu0 0.0
    %4789 = vmatprep.subr.mxu0 0.0
    %4790 = vmatpush1.msra.mxu0 0.0
    %4791 = vmatprep.subr.mxu0 0.0
    %4792 = vmatpush1.msra.mxu0 0.0
    %4793 = vmatprep.subr.mxu0 0.0
    %4794 = vmatpush1.msra.mxu0 0.0
    %4795 = vmatprep.subr.mxu0 0.0
    %4796 = vmatpush1.msra.mxu0 0.0
    %4797 = vmatprep.subr.mxu0 0.0
    %4798 = vmatpush1.msra.mxu0 0.0
    %4799 = vmatprep.subr.mxu0 0.0
    %4800 = vmatpush1.msra.mxu0 0.0
    %4801 = vmatprep.subr.mxu0 0.0
    %4802 = vmatpush1.msra.mxu0 0.0
    %4803 = vmatprep.subr.mxu0 0.0
    %4804 = vmatpush1.msra.mxu0 0.0
    %4805 = vmatprep.subr.mxu0 0.0
    %4806 = vmatpush1.msra.mxu0 0.0
    %4807 = vmatprep.subr.mxu0 0.0
    %4808 = vmatpush1.msra.mxu0 0.0
    %4809 = vmatprep.subr.mxu0 0.0
    %4810 = vmatpush1.msra.mxu0 0.0
    %4811 = vmatprep.subr.mxu0 0.0
    %4812 = vmatpush1.msra.mxu0 0.0
    %4813 = vmatprep.subr.mxu0 0.0
    %4814 = vmatpush1.msra.mxu0 0.0
    %4815 = vmatprep.subr.mxu0 0.0
    %4816 = vmatpush1.msra.mxu0 0.0
    %4817 = vmatprep.subr.mxu0 0.0
    %4818 = vmatpush1.msra.mxu0 0.0
    %4819 = vmatprep.subr.mxu0 0.0
    %4820 = vmatpush1.msra.mxu0 0.0
    %4821 = vmatprep.subr.mxu0 0.0
    %4822 = vmatpush1.msra.mxu0 0.0
    %4823 = vmatprep.subr.mxu0 0.0
    %4824 = vmatpush1.msra.mxu0 0.0
    %4825 = vmatprep.subr.mxu0 0.0
    %4826 = vmatpush1.msra.mxu0 0.0
    %4827 = vmatprep.subr.mxu0 0.0
    %4828 = vmatpush1.msra.mxu0 0.0
    %4829 = vmatprep.subr.mxu0 0.0
    %4830 = vmatpush1.msra.mxu0 0.0
    %4831 = vmatprep.subr.mxu0 0.0
    %4832 = vmatpush1.msra.mxu0 0.0
    %4833 = vmatprep.mubr.f32.mxu0 0.0
    %4834 = vmatmul.mubr.f32.gmra.mrb[0].mxu0 %v1541
    %v4835 = vpop.f32.mrb[0].mxu0
    %v4836 = vadd.f32 0.0, %v4835
    %v4837 = vpop.f32.mrb[0].mxu0
    %4838 = vdwg.mxu0
    %4839 = vmatprep.subr.mxu0 0.0
    %4840 = vmatpush1.msra.mxu0 %v4836
    %4841 = vmatprep.subr.mxu0 0.0
    %4842 = vmatpush1.msra.mxu0 0.0
    %4843 = vmatprep.subr.mxu0 0.0
    %4844 = vmatpush1.msra.mxu0 0.0
    %4845 = vmatprep.subr.mxu0 0.0
    %4846 = vmatpush1.msra.mxu0 0.0
    %4847 = vmatprep.subr.mxu0 0.0
    %4848 = vmatpush1.msra.mxu0 0.0
    %4849 = vmatprep.subr.mxu0 0.0
    %4850 = vmatpush1.msra.mxu0 0.0
    %4851 = vmatprep.subr.mxu0 0.0
    %4852 = vmatpush1.msra.mxu0 0.0
    %4853 = vmatprep.subr.mxu0 0.0
    %4854 = vmatpush1.msra.mxu0 0.0
    %4855 = vmatprep.subr.mxu0 0.0
    %4856 = vmatpush1.msra.mxu0 0.0
    %4857 = vmatprep.subr.mxu0 0.0
    %4858 = vmatpush1.msra.mxu0 0.0
    %4859 = vmatprep.subr.mxu0 0.0
    %4860 = vmatpush1.msra.mxu0 0.0
    %4861 = vmatprep.subr.mxu0 0.0
    %4862 = vmatpush1.msra.mxu0 0.0
    %4863 = vmatprep.subr.mxu0 0.0
    %4864 = vmatpush1.msra.mxu0 0.0
    %4865 = vmatprep.subr.mxu0 0.0
    %4866 = vmatpush1.msra.mxu0 0.0
    %4867 = vmatprep.subr.mxu0 0.0
    %4868 = vmatpush1.msra.mxu0 0.0
    %4869 = vmatprep.subr.mxu0 0.0
    %4870 = vmatpush1.msra.mxu0 0.0
    %4871 = vmatprep.subr.mxu0 0.0
    %4872 = vmatpush1.msra.mxu0 0.0
    %4873 = vmatprep.subr.mxu0 0.0
    %4874 = vmatpush1.msra.mxu0 0.0
    %4875 = vmatprep.subr.mxu0 0.0
    %4876 = vmatpush1.msra.mxu0 0.0
    %4877 = vmatprep.subr.mxu0 0.0
    %4878 = vmatpush1.msra.mxu0 0.0
    %4879 = vmatprep.subr.mxu0 0.0
    %4880 = vmatpush1.msra.mxu0 0.0
    %4881 = vmatprep.subr.mxu0 0.0
    %4882 = vmatpush1.msra.mxu0 0.0
    %4883 = vmatprep.subr.mxu0 0.0
    %4884 = vmatpush1.msra.mxu0 0.0
    %4885 = vmatprep.subr.mxu0 0.0
    %4886 = vmatpush1.msra.mxu0 0.0
    %4887 = vmatprep.subr.mxu0 0.0
    %4888 = vmatpush1.msra.mxu0 0.0
    %4889 = vmatprep.subr.mxu0 0.0
    %4890 = vmatpush1.msra.mxu0 0.0
    %4891 = vmatprep.subr.mxu0 0.0
    %4892 = vmatpush1.msra.mxu0 0.0
    %4893 = vmatprep.subr.mxu0 0.0
    %4894 = vmatpush1.msra.mxu0 0.0
    %4895 = vmatprep.subr.mxu0 0.0
    %4896 = vmatpush1.msra.mxu0 0.0
    %4897 = vmatprep.subr.mxu0 0.0
    %4898 = vmatpush1.msra.mxu0 0.0
    %4899 = vmatprep.subr.mxu0 0.0
    %4900 = vmatpush1.msra.mxu0 0.0
    %4901 = vmatprep.subr.mxu0 0.0
    %4902 = vmatpush1.msra.mxu0 0.0
    %4903 = vmatprep.mubr.f32.mxu0 0.0
    %4904 = vmatmul.mubr.f32.gmra.mrb[0].mxu0 %v1788
    %v4905 = vpop.f32.mrb[0].mxu0
    %v4906 = vadd.f32 0.0, %v4905
    %v4907 = vpop.f32.mrb[0].mxu0
    %4908 = vmatprep.mubr.f32.mxu0 0.0
    %4909 = vmatmul.mubr.f32.gmra.mrb[0].mxu0 %v1791
    %v4910 = vpop.f32.mrb[0].mxu0
    %v4911 = vadd.f32 0.0, %v4910
    %v4912 = vpop.f32.mrb[0].mxu0
    %4913 = vmatprep.mubr.f32.mxu0 0.0
    %4914 = vmatmul.mubr.f32.gmra.mrb[0].mxu0 %v1794
    %v4915 = vpop.f32.mrb[0].mxu0
    %v4916 = vadd.f32 0.0, %v4915
    %v4917 = vpop.f32.mrb[0].mxu0
    %4918 = vmatprep.mubr.f32.mxu0 0.0
    %4919 = vmatmul.mubr.f32.gmra.mrb[0].mxu0 %v1797
    %v4920 = vpop.f32.mrb[0].mxu0
    %v4921 = vadd.f32 0.0, %v4920
    %v4922 = vpop.f32.mrb[0].mxu0
    %4923 = vmatprep.mubr.f32.mxu0 0.0
    %4924 = vmatmul.mubr.f32.gmra.mrb[0].mxu0 %v1800
    %v4925 = vpop.f32.mrb[0].mxu0
    %v4926 = vadd.f32 0.0, %v4925
    %v4927 = vpop.f32.mrb[0].mxu0
    %4928 = vmatprep.mubr.f32.mxu0 0.0
    %4929 = vmatmul.mubr.f32.gmra.mrb[0].mxu0 %v1803
    %v4930 = vpop.f32.mrb[0].mxu0
    %v4931 = vadd.f32 0.0, %v4930
    %v4932 = vpop.f32.mrb[0].mxu0
    %4933 = vmatprep.mubr.f32.mxu0 0.0
    %4934 = vmatmul.mubr.f32.gmra.mrb[0].mxu0 %v1806
    %v4935 = vpop.f32.mrb[0].mxu0
    %v4936 = vadd.f32 0.0, %v4935
    %v4937 = vpop.f32.mrb[0].mxu0
    %4938 = vdwg.mxu0
    %4939 = vmatprep.subr.mxu0 0.0
    %4940 = vmatpush1.msra.mxu0 %v4762
    %4941 = vmatprep.subr.mxu0 0.0
    %4942 = vmatpush1.msra.mxu0 0.0
    %4943 = vmatprep.subr.mxu0 0.0
    %4944 = vmatpush1.msra.mxu0 0.0
    %4945 = vmatprep.subr.mxu0 0.0
    %4946 = vmatpush1.msra.mxu0 0.0
    %4947 = vmatprep.subr.mxu0 0.0
    %4948 = vmatpush1.msra.mxu0 0.0
    %4949 = vmatprep.subr.mxu0 0.0
    %4950 = vmatpush1.msra.mxu0 0.0
    %4951 = vmatprep.subr.mxu0 0.0
    %4952 = vmatpush1.msra.mxu0 0.0
    %4953 = vmatprep.subr.mxu0 0.0
    %4954 = vmatpush1.msra.mxu0 0.0
    %4955 = vmatprep.subr.mxu0 0.0
    %4956 = vmatpush1.msra.mxu0 0.0
    %4957 = vmatprep.subr.mxu0 0.0
    %4958 = vmatpush1.msra.mxu0 0.0
    %4959 = vmatprep.subr.mxu0 0.0
    %4960 = vmatpush1.msra.mxu0 0.0
    %4961 = vmatprep.subr.mxu0 0.0
    %4962 = vmatpush1.msra.mxu0 0.0
    %4963 = vmatprep.subr.mxu0 0.0
    %4964 = vmatpush1.msra.mxu0 0.0
    %4965 = vmatprep.subr.mxu0 0.0
    %4966 = vmatpush1.msra.mxu0 0.0
    %4967 = vmatprep.subr.mxu0 0.0
    %4968 = vmatpush1.msra.mxu0 0.0
    %4969 = vmatprep.subr.mxu0 0.0
    %4970 = vmatpush1.msra.mxu0 0.0
    %4971 = vmatprep.subr.mxu0 0.0
    %4972 = vmatpush1.msra.mxu0 0.0
    %4973 = vmatprep.subr.mxu0 0.0
    %4974 = vmatpush1.msra.mxu0 0.0
    %4975 = vmatprep.subr.mxu0 0.0
    %4976 = vmatpush1.msra.mxu0 0.0
    %4977 = vmatprep.subr.mxu0 0.0
    %4978 = vmatpush1.msra.mxu0 0.0
    %4979 = vmatprep.subr.mxu0 0.0
    %4980 = vmatpush1.msra.mxu0 0.0
    %4981 = vmatprep.subr.mxu0 0.0
    %4982 = vmatpush1.msra.mxu0 0.0
    %4983 = vmatprep.subr.mxu0 0.0
    %4984 = vmatpush1.msra.mxu0 0.0
    %4985 = vmatprep.subr.mxu0 0.0
    %4986 = vmatpush1.msra.mxu0 0.0
    %4987 = vmatprep.subr.mxu0 0.0
    %4988 = vmatpush1.msra.mxu0 0.0
    %4989 = vmatprep.subr.mxu0 0.0
    %4990 = vmatpush1.msra.mxu0 0.0
    %4991 = vmatprep.subr.mxu0 0.0
    %4992 = vmatpush1.msra.mxu0 0.0
    %4993 = vmatprep.subr.mxu0 0.0
    %4994 = vmatpush1.msra.mxu0 0.0
    %4995 = vmatprep.subr.mxu0 0.0
    %4996 = vmatpush1.msra.mxu0 0.0
    %4997 = vmatprep.subr.mxu0 0.0
    %4998 = vmatpush1.msra.mxu0 0.0
    %4999 = vmatprep.subr.mxu0 0.0
    %5000 = vmatpush1.msra.mxu0 0.0
    %5001 = vmatprep.subr.mxu0 0.0
    %5002 = vmatpush1.msra.mxu0 0.0
    %5003 = vmatprep.mubr.f32.mxu0 0.0
    %5004 = vmatmul.mubr.f32.gmra.mrb[0].mxu0 %v1909
    %v5005 = vpop.f32.mrb[0].mxu0
    %v5006 = vadd.f32 %v4906, %v5005
    %v5007 = vpop.f32.mrb[0].mxu0
    %5008 = vmatprep.mubr.f32.mxu0 0.0
    %5009 = vmatmul.mubr.f32.gmra.mrb[0].mxu0 %v1912
    %v5010 = vpop.f32.mrb[0].mxu0
    %v5011 = vadd.f32 %v4911, %v5010
    %v5012 = vpop.f32.mrb[0].mxu0
    %5013 = vmatprep.mubr.f32.mxu0 0.0
    %5014 = vmatmul.mubr.f32.gmra.mrb[0].mxu0 %v1915
    %v5015 = vpop.f32.mrb[0].mxu0
    %v5016 = vadd.f32 %v4916, %v5015
    %v5017 = vpop.f32.mrb[0].mxu0
    %5018 = vmatprep.mubr.f32.mxu0 0.0
    %5019 = vmatmul.mubr.f32.gmra.mrb[0].mxu0 %v1918
    %v5020 = vpop.f32.mrb[0].mxu0
    %v5021 = vadd.f32 %v4921, %v5020
    %v5022 = vpop.f32.mrb[0].mxu0
    %5023 = vmatprep.mubr.f32.mxu0 0.0
    %5024 = vmatmul.mubr.f32.gmra.mrb[0].mxu0 %v1921
    %v5025 = vpop.f32.mrb[0].mxu0
    %v5026 = vadd.f32 %v4926, %v5025
    %v5027 = vpop.f32.mrb[0].mxu0
    %5028 = vmatprep.mubr.f32.mxu0 0.0
    %5029 = vmatmul.mubr.f32.gmra.mrb[0].mxu0 %v1924
    %v5030 = vpop.f32.mrb[0].mxu0
    %v5031 = vadd.f32 %v4931, %v5030
    %v5032 = vpop.f32.mrb[0].mxu0
    %5033 = vmatprep.mubr.f32.mxu0 0.0
    %5034 = vmatmul.mubr.f32.gmra.mrb[0].mxu0 %v1927
    %v5035 = vpop.f32.mrb[0].mxu0
    %v5036 = vadd.f32 %v4936, %v5035
    %v5037 = vpop.f32.mrb[0].mxu0
    %5038 = vdwg.mxu0
    %v5039 = vmul.f32 %v5006, 0.5
    %v5040 = vmul.f32 %v5011, 0.5
    %v5041 = vmul.f32 %v5016, 0.5
    %v5042 = vmul.f32 %v5021, 0.5
    %v5043 = vmul.f32 %v5026, 0.5
    %v5044 = vmul.f32 %v5031, 0.5
    %v5045 = vmul.f32 %v5036, 0.5
    %v5046 = vmul.f32 %v5039, %v1638
    %v5047 = vmul.f32 %v5040, %v1639
    %v5048 = vmul.f32 %v5041, %v1640
    %v5049 = vmul.f32 %v5042, %v1641
    %v5050 = vmul.f32 %v5043, %v1642
    %v5051 = vmul.f32 %v5044, %v1643
    %v5052 = vmul.f32 %v5045, %v1644
    %5053 = vmatprep.subr.mxu0 0.0
    %5054 = vmatpush1.msra.mxu0 %v5046
    %5055 = vmatprep.subr.mxu0 0.0
    %5056 = vmatpush1.msra.mxu0 %v5047
    %5057 = vmatprep.subr.mxu0 0.0
    %5058 = vmatpush1.msra.mxu0 %v5048
    %5059 = vmatprep.subr.mxu0 0.0
    %5060 = vmatpush1.msra.mxu0 %v5049
    %5061 = vmatprep.subr.mxu0 0.0
    %5062 = vmatpush1.msra.mxu0 %v5050
    %5063 = vmatprep.subr.mxu0 0.0
    %5064 = vmatpush1.msra.mxu0 %v5051
    %5065 = vmatprep.subr.mxu0 0.0
    %5066 = vmatpush1.msra.mxu0 %v5052
    %5067 = vmatprep.subr.mxu0 0.0
    %5068 = vmatpush1.msra.mxu0 0.0
    %5069 = vmatprep.subr.mxu0 0.0
    %5070 = vmatpush1.msra.mxu0 0.0
    %5071 = vmatprep.subr.mxu0 0.0
    %5072 = vmatpush1.msra.mxu0 0.0
    %5073 = vmatprep.subr.mxu0 0.0
    %5074 = vmatpush1.msra.mxu0 0.0
    %5075 = vmatprep.subr.mxu0 0.0
    %5076 = vmatpush1.msra.mxu0 0.0
    %5077 = vmatprep.subr.mxu0 0.0
    %5078 = vmatpush1.msra.mxu0 0.0
    %5079 = vmatprep.subr.mxu0 0.0
    %5080 = vmatpush1.msra.mxu0 0.0
    %5081 = vmatprep.subr.mxu0 0.0
    %5082 = vmatpush1.msra.mxu0 0.0
    %5083 = vmatprep.subr.mxu0 0.0
    %5084 = vmatpush1.msra.mxu0 0.0
    %5085 = vmatprep.subr.mxu0 0.0
    %5086 = vmatpush1.msra.mxu0 0.0
    %5087 = vmatprep.subr.mxu0 0.0
    %5088 = vmatpush1.msra.mxu0 0.0
    %5089 = vmatprep.subr.mxu0 0.0
    %5090 = vmatpush1.msra.mxu0 0.0
    %5091 = vmatprep.subr.mxu0 0.0
    %5092 = vmatpush1.msra.mxu0 0.0
    %5093 = vmatprep.subr.mxu0 0.0
    %5094 = vmatpush1.msra.mxu0 0.0
    %5095 = vmatprep.subr.mxu0 0.0
    %5096 = vmatpush1.msra.mxu0 0.0
    %5097 = vmatprep.subr.mxu0 0.0
    %5098 = vmatpush1.msra.mxu0 0.0
    %5099 = vmatprep.subr.mxu0 0.0
    %5100 = vmatpush1.msra.mxu0 0.0
    %5101 = vmatprep.subr.mxu0 0.0
    %5102 = vmatpush1.msra.mxu0 0.0
    %5103 = vmatprep.subr.mxu0 0.0
    %5104 = vmatpush1.msra.mxu0 0.0
    %5105 = vmatprep.subr.mxu0 0.0
    %5106 = vmatpush1.msra.mxu0 0.0
    %5107 = vmatprep.subr.mxu0 0.0
    %5108 = vmatpush1.msra.mxu0 0.0
    %5109 = vmatprep.subr.mxu0 0.0
    %5110 = vmatpush1.msra.mxu0 0.0
    %5111 = vmatprep.subr.mxu0 0.0
    %5112 = vmatpush1.msra.mxu0 0.0
    %5113 = vmatprep.subr.mxu0 0.0
    %5114 = vmatpush1.msra.mxu0 0.0
    %5115 = vmatprep.subr.mxu0 0.0
    %5116 = vmatpush1.msra.mxu0 0.0
    %5117 = vmatprep.mubr.f32.mxu0 0.0
    %5118 = vmatmul.mubr.f32.gmra.mrb[0].mxu0 %v2045
    %v5119 = vpop.f32.mrb[0].mxu0
    %v5120 = vadd.f32 0.0, %v5119
    %v5121 = vpop.f32.mrb[0].mxu0
    %5122 = vdwg.mxu0
    %v5123 = vlaneseq
    %v5124 = vshrl.u32 %v5123, 7
    %v5125 = vadd.s32 %v5124, 8
    %v5126 = vadd.s32 %v5124, 16
    %v5127 = vadd.s32 %v5124, 24
    %v5128 = vadd.s32 %v5124, 32
    %v5129 = vadd.s32 %v5124, 40
    %v5130 = vadd.s32 %v5124, 48
    %v5131 = vadd.s32 %v5124, 56
    %v5132 = vlaneseq
    %v5133 = vand.u32 %v5132, 127
    %vm5134 = vcmp.eq.s32.totalorder %v5124, %v5133
    %vm5135 = vcmp.eq.s32.totalorder %v5125, %v5133
    %vm5136 = vcmp.eq.s32.totalorder %v5126, %v5133
    %vm5137 = vcmp.eq.s32.totalorder %v5127, %v5133
    %vm5138 = vcmp.eq.s32.totalorder %v5128, %v5133
    %vm5139 = vcmp.eq.s32.totalorder %v5129, %v5133
    %vm5140 = vcmp.eq.s32.totalorder %v5130, %v5133
    %vm5141 = vcmp.eq.s32.totalorder %v5131, %v5133
    %v5142 = vsel %vm5134, 1, 0
    %v5143 = vsel %vm5135, 1, 0
    %v5144 = vsel %vm5136, 1, 0
    %v5145 = vsel %vm5137, 1, 0
    %v5146 = vsel %vm5138, 1, 0
    %v5147 = vsel %vm5139, 1, 0
    %v5148 = vsel %vm5140, 1, 0
    %v5149 = vsel %vm5141, 1, 0
    %v5150 = vcvt.s32.f32 %v5142
    %v5151 = vcvt.s32.f32 %v5143
    %v5152 = vcvt.s32.f32 %v5144
    %v5153 = vcvt.s32.f32 %v5145
    %v5154 = vcvt.s32.f32 %v5146
    %v5155 = vcvt.s32.f32 %v5147
    %v5156 = vcvt.s32.f32 %v5148
    %v5157 = vcvt.s32.f32 %v5149
    %v5158 = vmul.f32 %v5150, 49.0
    %v5159 = vmul.f32 %v5151, 49.0
    %v5160 = vmul.f32 %v5152, 49.0
    %v5161 = vmul.f32 %v5153, 49.0
    %v5162 = vmul.f32 %v5154, 49.0
    %v5163 = vmul.f32 %v5155, 49.0
    %v5164 = vmul.f32 %v5156, 49.0
    %v5165 = vmul.f32 %v5157, 49.0
    %v5166 = vsub.f32 %v5158, %v2114
    %v5167 = vsub.f32 %v5159, %v2546
    %v5168 = vsub.f32 %v5160, %v2972
    %v5169 = vsub.f32 %v5161, %v3404
    %v5170 = vsub.f32 %v5162, %v3830
    %v5171 = vsub.f32 %v5163, %v4262
    %v5172 = vsub.f32 %v5164, %v4688
    %v5173 = vsub.f32 %v5165, %v5120
    %v5174 = vld [vmem:[%s13] sm:$0xff]
    %v5175 = vld [vmem:[%s13 + $0x8] sm:$0xff]
    %v5176 = vld [vmem:[%s13 + $0x10] sm:$0xff]
    %v5177 = vld [vmem:[%s13 + $0x18] sm:$0xff]
    %v5178 = vld [vmem:[%s13 + $0x20] sm:$0xff]
    %v5179 = vld [vmem:[%s13 + $0x28] sm:$0xff]
    %v5180 = vld [vmem:[%s13 + $0x30] sm:$0xff]
    %v5181 = vld [vmem:[%s13 + $0x38] sm:$0xff]
    %v5182 = vld [vmem:[%s14] sm:$0xff]
    %v5183 = vld [vmem:[%s14 + $0x8] sm:$0xff]
    %v5184 = vld [vmem:[%s14 + $0x10] sm:$0xff]
    %v5185 = vld [vmem:[%s14 + $0x18] sm:$0xff]
    %v5186 = vld [vmem:[%s14 + $0x20] sm:$0xff]
    %v5187 = vld [vmem:[%s14 + $0x28] sm:$0xff]
    %v5188 = vld [vmem:[%s14 + $0x30] sm:$0xff]
    %v5189 = vld [vmem:[%s14 + $0x38] sm:$0xff]
    %v5190 = vand.u32 2147483647, %v5166
    %v5191 = vand.u32 2147483647, %v5167
    %v5192 = vand.u32 2147483647, %v5168
    %v5193 = vand.u32 2147483647, %v5169
    %v5194 = vand.u32 2147483647, %v5170
    %v5195 = vand.u32 2147483647, %v5171
    %v5196 = vand.u32 2147483647, %v5172
    %v5197 = vand.u32 2147483647, %v5173
    %v5198 = vsel %vm1614, %v5190, 0.0
    %5199 = vadd.xlane.f32.xlu0 %v5198
    %v5200 = vpop.xlane.xlu0 %5199
    %v5201 = vsel %vm1614, %v5191, 0.0
    %5202 = vadd.xlane.f32.xlu0 %v5201
    %v5203 = vpop.xlane.xlu0 %5202
    %v5204 = vsel %vm1614, %v5192, 0.0
    %5205 = vadd.xlane.f32.xlu0 %v5204
    %v5206 = vpop.xlane.xlu0 %5205
    %v5207 = vsel %vm1614, %v5193, 0.0
    %5208 = vadd.xlane.f32.xlu0 %v5207
    %v5209 = vpop.xlane.xlu0 %5208
    %v5210 = vsel %vm1614, %v5194, 0.0
    %5211 = vadd.xlane.f32.xlu0 %v5210
    %v5212 = vpop.xlane.xlu0 %5211
    %v5213 = vsel %vm1614, %v5195, 0.0
    %5214 = vadd.xlane.f32.xlu0 %v5213
    %v5215 = vpop.xlane.xlu0 %5214
    %v5216 = vsel %vm1614, %v5196, 0.0
    %5217 = vadd.xlane.f32.xlu0 %v5216
    %v5218 = vpop.xlane.xlu0 %5217
    %v5219 = vsel %vm1614, %v5197, 0.0
    %5220 = vadd.xlane.f32.xlu0 %v5219
    %v5221 = vpop.xlane.xlu0 %5220
    %v5222 = vmax.f32 %v5200, %v5212
    %v5223 = vmax.f32 %v5203, %v5215
    %v5224 = vmax.f32 %v5206, %v5218
    %v5225 = vmax.f32 %v5209, %v5221
    %v5226 = vmax.f32 %v5222, %v5223
    %v5227 = vmax.f32 %v5224, %v5225
    %v5228 = vmax.f32 %v5226, %v5227
    %v5229 = vrot.slane %v5228, 4
    %v5230 = vmax.f32 %v5228, %v5229
    %v5231 = vrot.slane %v5230, 2
    %v5232 = vmax.f32 %v5230, %v5231
    %v5233 = vrot.slane %v5232, 1
    %v5234 = vmax.f32 %v5232, %v5233
    %v5235 = vadd.f32 %v5234, 1.0
    %v5236 = vrcp.pop %v5235
    %v5237 = vmul.f32 1.0, %v5236
    loop: start=0, step=1, limit=400
    $region86: #{tpu_custom_call.1} parent=1 // loop_pre_header
      _
    $region87: #{tpu_custom_call.1} parent=1 // loop_header
      %s5239 = sphi 0, %s5243
      %p5240 = scmp.ge.s32.totalorder %s5239, 400
      %v5244 = vphi 0.125, %v5351
    $region88: #{tpu_custom_call.1} parent=1 // loop_header_branch
      %5242 = sbr.rel (%p5240) target = $region92
    $region89: #{tpu_custom_call.1} parent=1 // loop_body
      %v5246 = vsel %vm1614, %v5244, 0
      %v5249 = vsel %vm1614, %v5166, 0
      %v5252 = vsel %vm1614, %v5167, 0
      %v5255 = vsel %vm1614, %v5168, 0
      %v5258 = vsel %vm1614, %v5169, 0
      %v5261 = vsel %vm1614, %v5170, 0
      %v5264 = vsel %vm1614, %v5171, 0
      %v5267 = vsel %vm1614, %v5172, 0
      %v5270 = vsel %vm1614, %v5173, 0
      %5272 = vmatprep.subr.mxu0 0.0
      %5273 = vmatpush1.xpose.msra.mxu0 %v5249
      %5274 = vmatprep.subr.mxu0 0.0
      %5275 = vmatpush1.xpose.msra.mxu0 %v5252
      %5276 = vmatprep.subr.mxu0 0.0
      %5277 = vmatpush1.xpose.msra.mxu0 %v5255
      %5278 = vmatprep.subr.mxu0 0.0
      %5279 = vmatpush1.xpose.msra.mxu0 %v5258
      %5280 = vmatprep.subr.mxu0 0.0
      %5281 = vmatpush1.xpose.msra.mxu0 %v5261
      %5282 = vmatprep.subr.mxu0 0.0
      %5283 = vmatpush1.xpose.msra.mxu0 %v5264
      %5284 = vmatprep.subr.mxu0 0.0
      %5285 = vmatpush1.xpose.msra.mxu0 %v5267
      %5286 = vmatprep.subr.mxu0 0.0
      %5287 = vmatpush1.xpose.msra.mxu0 %v5270
      %5288 = vmatprep.subr.mxu0 0.0
      %5289 = vmatpush1.xpose.msra.mxu0 0.0
      %5290 = vmatprep.subr.mxu0 0.0
      %5291 = vmatpush1.xpose.msra.mxu0 0.0
      %5292 = vmatprep.subr.mxu0 0.0
      %5293 = vmatpush1.xpose.msra.mxu0 0.0
      %5294 = vmatprep.subr.mxu0 0.0
      %5295 = vmatpush1.xpose.msra.mxu0 0.0
      %5296 = vmatprep.subr.mxu0 0.0
      %5297 = vmatpush1.xpose.msra.mxu0 0.0
      %5298 = vmatprep.subr.mxu0 0.0
      %5299 = vmatpush1.xpose.msra.mxu0 0.0
      %5300 = vmatprep.subr.mxu0 0.0
      %5301 = vmatpush1.xpose.msra.mxu0 0.0
      %5302 = vmatprep.subr.mxu0 0.0
      %5303 = vmatpush1.xpose.msra.mxu0 0.0
      %5304 = vmatprep.subr.mxu0 0.0
      %5305 = vmatpush1.xpose.msra.mxu0 0.0
      %5306 = vmatprep.subr.mxu0 0.0
      %5307 = vmatpush1.xpose.msra.mxu0 0.0
      %5308 = vmatprep.subr.mxu0 0.0
      %5309 = vmatpush1.xpose.msra.mxu0 0.0
      %5310 = vmatprep.subr.mxu0 0.0
      %5311 = vmatpush1.xpose.msra.mxu0 0.0
      %5312 = vmatprep.subr.mxu0 0.0
      %5313 = vmatpush1.xpose.msra.mxu0 0.0
      %5314 = vmatprep.subr.mxu0 0.0
      %5315 = vmatpush1.xpose.msra.mxu0 0.0
      %5316 = vmatprep.subr.mxu0 0.0
      %5317 = vmatpush1.xpose.msra.mxu0 0.0
      %5318 = vmatprep.subr.mxu0 0.0
      %5319 = vmatpush1.xpose.msra.mxu0 0.0
      %5320 = vmatprep.subr.mxu0 0.0
      %5321 = vmatpush1.xpose.msra.mxu0 0.0
      %5322 = vmatprep.subr.mxu0 0.0
      %5323 = vmatpush1.xpose.msra.mxu0 0.0
      %5324 = vmatprep.subr.mxu0 0.0
      %5325 = vmatpush1.xpose.msra.mxu0 0.0
      %5326 = vmatprep.subr.mxu0 0.0
      %5327 = vmatpush1.xpose.msra.mxu0 0.0
      %5328 = vmatprep.subr.mxu0 0.0
      %5329 = vmatpush1.xpose.msra.mxu0 0.0
      %5330 = vmatprep.subr.mxu0 0.0
      %5331 = vmatpush1.xpose.msra.mxu0 0.0
      %5332 = vmatprep.subr.mxu0 0.0
      %5333 = vmatpush1.xpose.msra.mxu0 0.0
      %5334 = vmatprep.subr.mxu0 0.0
      %5335 = vmatpush1.xpose.msra.mxu0 0.0
      %5336 = vmatprep.mubr.f32.mxu0 0.0
      %5337 = vmatmul.mubr.f32.gmra.mrb[0].mxu0 %v5246
      %v5338 = vpop.f32.mrb[0].mxu0
      %v5339 = vadd.f32 %v1622, %v5338
      %v5340 = vpop.f32.mrb[0].mxu0
      %5341 = vdwg.mxu0
      %v5342 = vmul.f32 %v5237, %v5339
      %v5343 = vsub.f32 %v5244, %v5342
      %v5344 = vmax.f32 %v5343, 1e-09
      loop: start=0, step=1, limit=15
      $region93: #{tpu_custom_call.1} parent=89 // loop_pre_header
        _
      $region94: #{tpu_custom_call.1} parent=89 // loop_header
        %s5346 = sphi 0, %s5350
        %p5347 = scmp.ge.s32.totalorder %s5346, 15
        %v5351 = vphi %v5344, %v5501
      $region95: #{tpu_custom_call.1} parent=89 // loop_header_branch
        %5349 = sbr.rel (%p5347) target = $region99
      $region96: #{tpu_custom_call.1} parent=89 // loop_body
        %v5353 = vsel %vm1614, %v5351, 0
        %5355 = vmatprep.subr.mxu0 0.0
        %5356 = vmatpush1.msra.mxu0 %v5174
        %5357 = vmatprep.subr.mxu0 0.0
        %5358 = vmatpush1.msra.mxu0 %v5175
        %5359 = vmatprep.subr.mxu0 0.0
        %5360 = vmatpush1.msra.mxu0 %v5176
        %5361 = vmatprep.subr.mxu0 0.0
        %5362 = vmatpush1.msra.mxu0 %v5177
        %5363 = vmatprep.subr.mxu0 0.0
        %5364 = vmatpush1.msra.mxu0 %v5178
        %5365 = vmatprep.subr.mxu0 0.0
        %5366 = vmatpush1.msra.mxu0 %v5179
        %5367 = vmatprep.subr.mxu0 0.0
        %5368 = vmatpush1.msra.mxu0 %v5180
        %5369 = vmatprep.subr.mxu0 0.0
        %5370 = vmatpush1.msra.mxu0 %v5181
        %5371 = vmatprep.subr.mxu0 0.0
        %5372 = vmatpush1.msra.mxu0 0.0
        %5373 = vmatprep.subr.mxu0 0.0
        %5374 = vmatpush1.msra.mxu0 0.0
        %5375 = vmatprep.subr.mxu0 0.0
        %5376 = vmatpush1.msra.mxu0 0.0
        %5377 = vmatprep.subr.mxu0 0.0
        %5378 = vmatpush1.msra.mxu0 0.0
        %5379 = vmatprep.subr.mxu0 0.0
        %5380 = vmatpush1.msra.mxu0 0.0
        %5381 = vmatprep.subr.mxu0 0.0
        %5382 = vmatpush1.msra.mxu0 0.0
        %5383 = vmatprep.subr.mxu0 0.0
        %5384 = vmatpush1.msra.mxu0 0.0
        %5385 = vmatprep.subr.mxu0 0.0
        %5386 = vmatpush1.msra.mxu0 0.0
        %5387 = vmatprep.subr.mxu0 0.0
        %5388 = vmatpush1.msra.mxu0 0.0
        %5389 = vmatprep.subr.mxu0 0.0
        %5390 = vmatpush1.msra.mxu0 0.0
        %5391 = vmatprep.subr.mxu0 0.0
        %5392 = vmatpush1.msra.mxu0 0.0
        %5393 = vmatprep.subr.mxu0 0.0
        %5394 = vmatpush1.msra.mxu0 0.0
        %5395 = vmatprep.subr.mxu0 0.0
        %5396 = vmatpush1.msra.mxu0 0.0
        %5397 = vmatprep.subr.mxu0 0.0
        %5398 = vmatpush1.msra.mxu0 0.0
        %5399 = vmatprep.subr.mxu0 0.0
        %5400 = vmatpush1.msra.mxu0 0.0
        %5401 = vmatprep.subr.mxu0 0.0
        %5402 = vmatpush1.msra.mxu0 0.0
        %5403 = vmatprep.subr.mxu0 0.0
        %5404 = vmatpush1.msra.mxu0 0.0
        %5405 = vmatprep.subr.mxu0 0.0
        %5406 = vmatpush1.msra.mxu0 0.0
        %5407 = vmatprep.subr.mxu0 0.0
        %5408 = vmatpush1.msra.mxu0 0.0
        %5409 = vmatprep.subr.mxu0 0.0
        %5410 = vmatpush1.msra.mxu0 0.0
        %5411 = vmatprep.subr.mxu0 0.0
        %5412 = vmatpush1.msra.mxu0 0.0
        %5413 = vmatprep.subr.mxu0 0.0
        %5414 = vmatpush1.msra.mxu0 0.0
        %5415 = vmatprep.subr.mxu0 0.0
        %5416 = vmatpush1.msra.mxu0 0.0
        %5417 = vmatprep.subr.mxu0 0.0
        %5418 = vmatpush1.msra.mxu0 0.0
        %5419 = vmatprep.mubr.f32.mxu0 0.0
        %5420 = vmatmul.mubr.f32.gmra.mrb[0].mxu0 %v5353
        %v5421 = vpop.f32.mrb[0].mxu0
        %v5422 = vadd.f32 0.0, %v5421
        %v5423 = vpop.f32.mrb[0].mxu0
        %5424 = vdwg.mxu0
        %v5425 = vrcp.pop %v5422
        %v5426 = vmul.f32 %v5351, %v5425
        %v5428 = vsel %vm1614, %v5426, 0
        %5430 = vmatprep.subr.mxu0 0.0
        %5431 = vmatpush1.msra.mxu0 %v5182
        %5432 = vmatprep.subr.mxu0 0.0
        %5433 = vmatpush1.msra.mxu0 %v5183
        %5434 = vmatprep.subr.mxu0 0.0
        %5435 = vmatpush1.msra.mxu0 %v5184
        %5436 = vmatprep.subr.mxu0 0.0
        %5437 = vmatpush1.msra.mxu0 %v5185
        %5438 = vmatprep.subr.mxu0 0.0
        %5439 = vmatpush1.msra.mxu0 %v5186
        %5440 = vmatprep.subr.mxu0 0.0
        %5441 = vmatpush1.msra.mxu0 %v5187
        %5442 = vmatprep.subr.mxu0 0.0
        %5443 = vmatpush1.msra.mxu0 %v5188
        %5444 = vmatprep.subr.mxu0 0.0
        %5445 = vmatpush1.msra.mxu0 %v5189
        %5446 = vmatprep.subr.mxu0 0.0
        %5447 = vmatpush1.msra.mxu0 0.0
        %5448 = vmatprep.subr.mxu0 0.0
        %5449 = vmatpush1.msra.mxu0 0.0
        %5450 = vmatprep.subr.mxu0 0.0
        %5451 = vmatpush1.msra.mxu0 0.0
        %5452 = vmatprep.subr.mxu0 0.0
        %5453 = vmatpush1.msra.mxu0 0.0
        %5454 = vmatprep.subr.mxu0 0.0
        %5455 = vmatpush1.msra.mxu0 0.0
        %5456 = vmatprep.subr.mxu0 0.0
        %5457 = vmatpush1.msra.mxu0 0.0
        %5458 = vmatprep.subr.mxu0 0.0
        %5459 = vmatpush1.msra.mxu0 0.0
        %5460 = vmatprep.subr.mxu0 0.0
        %5461 = vmatpush1.msra.mxu0 0.0
        %5462 = vmatprep.subr.mxu0 0.0
        %5463 = vmatpush1.msra.mxu0 0.0
        %5464 = vmatprep.subr.mxu0 0.0
        %5465 = vmatpush1.msra.mxu0 0.0
        %5466 = vmatprep.subr.mxu0 0.0
        %5467 = vmatpush1.msra.mxu0 0.0
        %5468 = vmatprep.subr.mxu0 0.0
        %5469 = vmatpush1.msra.mxu0 0.0
        %5470 = vmatprep.subr.mxu0 0.0
        %5471 = vmatpush1.msra.mxu0 0.0
        %5472 = vmatprep.subr.mxu0 0.0
        %5473 = vmatpush1.msra.mxu0 0.0
        %5474 = vmatprep.subr.mxu0 0.0
        %5475 = vmatpush1.msra.mxu0 0.0
        %5476 = vmatprep.subr.mxu0 0.0
        %5477 = vmatpush1.msra.mxu0 0.0
        %5478 = vmatprep.subr.mxu0 0.0
        %5479 = vmatpush1.msra.mxu0 0.0
        %5480 = vmatprep.subr.mxu0 0.0
        %5481 = vmatpush1.msra.mxu0 0.0
        %5482 = vmatprep.subr.mxu0 0.0
        %5483 = vmatpush1.msra.mxu0 0.0
        %5484 = vmatprep.subr.mxu0 0.0
        %5485 = vmatpush1.msra.mxu0 0.0
        %5486 = vmatprep.subr.mxu0 0.0
        %5487 = vmatpush1.msra.mxu0 0.0
        %5488 = vmatprep.subr.mxu0 0.0
        %5489 = vmatpush1.msra.mxu0 0.0
        %5490 = vmatprep.subr.mxu0 0.0
        %5491 = vmatpush1.msra.mxu0 0.0
        %5492 = vmatprep.subr.mxu0 0.0
        %5493 = vmatpush1.msra.mxu0 0.0
        %5494 = vmatprep.mubr.f32.mxu0 0.0
        %5495 = vmatmul.mubr.f32.gmra.mrb[0].mxu0 %v5428
        %v5496 = vpop.f32.mrb[0].mxu0
        %v5497 = vadd.f32 0.0, %v5496
        %v5498 = vpop.f32.mrb[0].mxu0
        %5499 = vdwg.mxu0
        %v5500 = vrcp.pop %v5497
        %v5501 = vmul.f32 %v5426, %v5500
      $region97: #{tpu_custom_call.1} parent=89 // loop_footer
        %s5350 = sadd.s32 1, %s5346
      $region98: #{tpu_custom_call.1} parent=89 // loop_footer_branch
        %5345 = sbr.rel target = $region94
      $region99: #{tpu_custom_call.1} parent=89 // loop_exit
        _
    $region90: #{tpu_custom_call.1} parent=1 // loop_footer
      %s5243 = sadd.s32 1, %s5239
    $region91: #{tpu_custom_call.1} parent=1 // loop_footer_branch
      %5238 = sbr.rel target = $region87
    $region92: #{tpu_custom_call.1} parent=1 // loop_exit
      _
    %v5502 = vlaneseq
    %v5503 = vshrl.u32 %v5502, 7
    %v5504 = vsub.s32 0, %v5503
    %v5505 = vrot.slane %v5244, %v5504
    %v5506 = vmul.f32 %v5505, %v1539
    %v5507 = vld [vmem:[%s12] sm:$0xff]
    %v5508 = vld [vmem:[%s12 + $0x8] sm:$0xff]
    %v5509 = vld [vmem:[%s12 + $0x10] sm:$0xff]
    %v5510 = vld [vmem:[%s12 + $0x18] sm:$0xff]
    %v5511 = vld [vmem:[%s12 + $0x20] sm:$0xff]
    %v5512 = vld [vmem:[%s12 + $0x28] sm:$0xff]
    %v5513 = vld [vmem:[%s12 + $0x30] sm:$0xff]
    %v5514 = vld [vmem:[%s12 + $0x38] sm:$0xff]
    %v5516 = vsel %vm1614, %v5506, 0
    %5518 = vmatprep.subr.mxu0 0.0
    %5519 = vmatpush1.msra.mxu0 %v5507
    %5520 = vmatprep.subr.mxu0 0.0
    %5521 = vmatpush1.msra.mxu0 %v5508
    %5522 = vmatprep.subr.mxu0 0.0
    %5523 = vmatpush1.msra.mxu0 %v5509
    %5524 = vmatprep.subr.mxu0 0.0
    %5525 = vmatpush1.msra.mxu0 %v5510
    %5526 = vmatprep.subr.mxu0 0.0
    %5527 = vmatpush1.msra.mxu0 %v5511
    %5528 = vmatprep.subr.mxu0 0.0
    %5529 = vmatpush1.msra.mxu0 %v5512
    %5530 = vmatprep.subr.mxu0 0.0
    %5531 = vmatpush1.msra.mxu0 %v5513
    %5532 = vmatprep.subr.mxu0 0.0
    %5533 = vmatpush1.msra.mxu0 %v5514
    %5534 = vmatprep.subr.mxu0 0.0
    %5535 = vmatpush1.msra.mxu0 0.0
    %5536 = vmatprep.subr.mxu0 0.0
    %5537 = vmatpush1.msra.mxu0 0.0
    %5538 = vmatprep.subr.mxu0 0.0
    %5539 = vmatpush1.msra.mxu0 0.0
    %5540 = vmatprep.subr.mxu0 0.0
    %5541 = vmatpush1.msra.mxu0 0.0
    %5542 = vmatprep.subr.mxu0 0.0
    %5543 = vmatpush1.msra.mxu0 0.0
    %5544 = vmatprep.subr.mxu0 0.0
    %5545 = vmatpush1.msra.mxu0 0.0
    %5546 = vmatprep.subr.mxu0 0.0
    %5547 = vmatpush1.msra.mxu0 0.0
    %5548 = vmatprep.subr.mxu0 0.0
    %5549 = vmatpush1.msra.mxu0 0.0
    %5550 = vmatprep.subr.mxu0 0.0
    %5551 = vmatpush1.msra.mxu0 0.0
    %5552 = vmatprep.subr.mxu0 0.0
    %5553 = vmatpush1.msra.mxu0 0.0
    %5554 = vmatprep.subr.mxu0 0.0
    %5555 = vmatpush1.msra.mxu0 0.0
    %5556 = vmatprep.subr.mxu0 0.0
    %5557 = vmatpush1.msra.mxu0 0.0
    %5558 = vmatprep.subr.mxu0 0.0
    %5559 = vmatpush1.msra.mxu0 0.0
    %5560 = vmatprep.subr.mxu0 0.0
    %5561 = vmatpush1.msra.mxu0 0.0
    %5562 = vmatprep.subr.mxu0 0.0
    %5563 = vmatpush1.msra.mxu0 0.0
    %5564 = vmatprep.subr.mxu0 0.0
    %5565 = vmatpush1.msra.mxu0 0.0
    %5566 = vmatprep.subr.mxu0 0.0
    %5567 = vmatpush1.msra.mxu0 0.0
    %5568 = vmatprep.subr.mxu0 0.0
    %5569 = vmatpush1.msra.mxu0 0.0
    %5570 = vmatprep.subr.mxu0 0.0
    %5571 = vmatpush1.msra.mxu0 0.0
    %5572 = vmatprep.subr.mxu0 0.0
    %5573 = vmatpush1.msra.mxu0 0.0
    %5574 = vmatprep.subr.mxu0 0.0
    %5575 = vmatpush1.msra.mxu0 0.0
    %5576 = vmatprep.subr.mxu0 0.0
    %5577 = vmatpush1.msra.mxu0 0.0
    %5578 = vmatprep.subr.mxu0 0.0
    %5579 = vmatpush1.msra.mxu0 0.0
    %5580 = vmatprep.subr.mxu0 0.0
    %5581 = vmatpush1.msra.mxu0 0.0
    %5582 = vmatprep.mubr.f32.mxu0 0.0
    %5583 = vmatmul.mubr.f32.gmra.mrb[0].mxu0 %v5516
    %v5584 = vpop.f32.mrb[0].mxu0
    %v5585 = vadd.f32 0.0, %v5584
    %v5586 = vpop.f32.mrb[0].mxu0
    %5587 = vdwg.mxu0
    %5588 = vxpose.xlu0.b32.start [1/16] %v5585, 128
    %5589 = vxpose.xlu0.b32.cont [2/16] 0.0, 128
    %5590 = vxpose.xlu0.b32.cont [3/16] 0.0, 128
    %5591 = vxpose.xlu0.b32.cont [4/16] 0.0, 128
    %5592 = vxpose.xlu0.b32.cont [5/16] 0.0, 128
    %5593 = vxpose.xlu0.b32.cont [6/16] 0.0, 128
    %5594 = vxpose.xlu0.b32.cont [7/16] 0.0, 128
    %5595 = vxpose.xlu0.b32.cont [8/16] 0.0, 128
    %5596 = vxpose.xlu0.b32.cont [9/16] 0.0, 128
    %5597 = vxpose.xlu0.b32.cont [10/16] 0.0, 128
    %5598 = vxpose.xlu0.b32.cont [11/16] 0.0, 128
    %5599 = vxpose.xlu0.b32.cont [12/16] 0.0, 128
    %5600 = vxpose.xlu0.b32.cont [13/16] 0.0, 128
    %5601 = vxpose.xlu0.b32.cont [14/16] 0.0, 128
    %5602 = vxpose.xlu0.b32.cont [15/16] 0.0, 128
    %5603 = vxpose.xlu0.b32.end [16/16] 0.0, 128
    %v5604 = vpop.trf.xlu0
    %v5605 = vpop.trf.xlu0
    %v5606 = vpop.trf.xlu0
    %v5607 = vpop.trf.xlu0
    %v5608 = vpop.trf.xlu0
    %v5609 = vpop.trf.xlu0
    %v5610 = vpop.trf.xlu0
    %v5611 = vpop.trf.xlu0
    %v5612 = vpop.trf.xlu0
    %v5613 = vpop.trf.xlu0
    %v5614 = vpop.trf.xlu0
    %v5615 = vpop.trf.xlu0
    %v5616 = vpop.trf.xlu0
    %v5617 = vpop.trf.xlu0
    %v5618 = vpop.trf.xlu0
    %v5619 = vpop.trf.xlu0
    %v5620 = vmax.f32 %v5604, 0.0
    %v5621 = vsub.f32 %v5604, 1.0
    %v5622 = vmax.f32 %v5621, 0.0
    %v5623 = vsub.f32 %v5620, %v5622
    %v5624 = vmul.f32 %v5623, 1000.0
    %v5625 = vsel %vm668, %v5624, -inf
    %5626 = vmax.xlane.f32.xlu0 %v5625
    %v5627 = vpop.xlane.xlu0 %5626
    %v5628 = vsub.f32 %v5624, %v5627
    %v5629 = vmul.f32 %v5628, 1.442695
    %v5630 = vpow.pop %v5629
    %v5631 = vsel %vm668, %v5630, 0.0
    %5632 = vadd.xlane.f32.xlu0 %v5631
    %v5633 = vpop.xlane.xlu0 %5632
    %v5634 = vrcp.pop %v5633
    %v5635 = vmul.f32 %v5630, %v5634
    %5636 = vst.msk [vmem:[#allocation13] sm:$0xff] %vm668, %v5635
    // Predicated region
    $region100: #{tpu_custom_call.1} parent=1 // pred_check
      _
    $region101: #{tpu_custom_call.1} parent=1 // pred_check_branch
      %5638 = sbr.rel (0) target = $region103
    $region102: #{tpu_custom_call.1} parent=1 // pred_region
      %s5640 = ssub.s32 128, 128
      %5641 = vsyncadd [#allocation4], %s5640
      %s5643 = sshll.u32 [#allocation13], 4
      %s5644 = int_to_ptr.vmem [resolvable:$true] %s5643
      %5646 = dma.vmem_to_hbm [thread:$0]  %s5644, 128, %s15, [#allocation4]
    $region103: #{tpu_custom_call.1} parent=1 // pred_fallthru
      _
    // Predicated region
    $region104: #{tpu_custom_call.1} parent=1 // pred_check
      _
    $region105: #{tpu_custom_call.1} parent=1 // pred_check_branch
      %5648 = sbr.rel (0) target = $region107
    $region106: #{tpu_custom_call.1} parent=1 // pred_region
      %5649 = dma.done [#allocation4], 128
    $region107: #{tpu_custom_call.1} parent=1 // pred_fallthru
      _
    %5650 = vsyncpa [#allocation3], 1
    %5651 = vsyncpa [#allocation6], 1
    %5652 = vsyncpa [#allocation9], 1
    %5653 = vsyncpa [#allocation12], 1
    %5654 = vsyncpa [#allocation4], 1

</llo_original>
